<compile_context>
chip_gen: v7x
topology: tpu7x:2x2x1
jax: 0.10.0
libtpu: 0.0.40
codegen_flags: <defaults>
</compile_context>

<pallas_src>
import math

import jax
import jax.numpy as jnp
from jax.experimental import pallas as pl
from jax.experimental.pallas import tpu as pltpu


# ---------------------------------------------------------------------------
# Small math helpers (pure jnp -> usable inside Pallas kernels and in the ref)
# ---------------------------------------------------------------------------
def _silu(x):
    return x / (1.0 + jnp.exp(-x))


def _softplus(x):
    return jnp.maximum(x, 0.0) + jnp.log(1.0 + jnp.exp(-jnp.abs(x)))


def _pick_tile(dim, cap, mult):
    """Largest tile <= cap that is a multiple of `mult` and divides `dim`.
    Falls back to the full dimension (always a legal block)."""
    if dim <= cap:
        return dim
    t = (cap // mult) * mult
    while t >= mult:
        if dim % t == 0:
            return t
        t -= mult
    return dim


# ---------------------------------------------------------------------------
# Kernel 1: grouped / tiled matmul    out[g] = (x[g] (+ x2[g])) @ w[g]
#   f32 VMEM accumulator, K innermost; the K grid axis is skipped when K fits
#   one block.  The optional second input folds the bidirectional combine into
#   the output projection.
# ---------------------------------------------------------------------------
def grouped_linear(x, w, x2=None):
    G, M, K = x.shape
    N = w.shape[2]
    tm = _pick_tile(M, 512, 8)
    tn = _pick_tile(N, 256, 128)
    tk = _pick_tile(K, 512, 128)
    two = x2 is not None

    if K == tk:  # single K block: no reduction axis, no accumulator scratch
        def kernel(*refs):
            if two:
                a_ref, b_ref, w_ref, o_ref = refs
                xt = a_ref[0] + b_ref[0]
            else:
                a_ref, w_ref, o_ref = refs
                xt = a_ref[0]
            o_ref[0] = jnp.dot(
                xt, w_ref[0], preferred_element_type=jnp.float32).astype(o_ref.dtype)

        grid = (G, M // tm, N // tn)
        x_spec = pl.BlockSpec((1, tm, tk), lambda g, i, j: (g, i, 0))
        w_spec = pl.BlockSpec((1, tk, tn), lambda g, i, j: (g, 0, j))
        o_spec = pl.BlockSpec((1, tm, tn), lambda g, i, j: (g, i, j))
        scratch = []
        sem = ("parallel", "parallel", "parallel")
    else:
        def kernel(*refs):
            if two:
                a_ref, b_ref, w_ref, o_ref, acc_ref = refs
                xt = a_ref[0] + b_ref[0]
            else:
                a_ref, w_ref, o_ref, acc_ref = refs
                xt = a_ref[0]

            @pl.when(pl.program_id(3) == 0)
            def _init():
                acc_ref[...] = jnp.zeros_like(acc_ref)

            acc_ref[...] += jnp.dot(xt, w_ref[0],
                                    preferred_element_type=jnp.float32)

            @pl.when(pl.program_id(3) == pl.num_programs(3) - 1)
            def _store():
                o_ref[0] = acc_ref[...].astype(o_ref.dtype)

        grid = (G, M // tm, N // tn, K // tk)
        x_spec = pl.BlockSpec((1, tm, tk), lambda g, i, j, k: (g, i, k))
        w_spec = pl.BlockSpec((1, tk, tn), lambda g, i, j, k: (g, k, j))
        o_spec = pl.BlockSpec((1, tm, tn), lambda g, i, j, k: (g, i, j))
        scratch = [pltpu.VMEM((tm, tn), jnp.float32)]
        sem = ("parallel", "parallel", "parallel", "arbitrary")

    in_specs = [x_spec, x_spec, w_spec] if two else [x_spec, w_spec]
    args = (x, x2, w) if two else (x, w)
    return pl.pallas_call(
        kernel,
        out_shape=jax.ShapeDtypeStruct((G, M, N), x.dtype),
        grid=grid,
        in_specs=in_specs,
        out_specs=o_spec,
        scratch_shapes=scratch,
        compiler_params=pltpu.CompilerParams(dimension_semantics=sem),
    )(*args)


# ---------------------------------------------------------------------------
# Kernel 2: depthwise conv1d + SiLU over a symmetrically padded input.
#   base=0       -> causal conv (forward scans)
#   base=d_conv-1-> anti-causal conv with pre-reversed taps (backward scans,
#                   i.e. flip -> causal conv -> flip without any flipped copy)
# ---------------------------------------------------------------------------
def conv1d_silu(x_pad, w, b, L, base):
    """x_pad: [S,B,L+2*(dc-1),D]; w: [S,dc,D]; b: [S,1,D] -> [S,B,L,D]."""
    S, B, Lp, D = x_pad.shape
    dc = w.shape[1]
    td = _pick_tile(D, 256, 128)

    def kernel(xp_ref, w_ref, b_ref, o_ref):
        x = xp_ref[0, 0].astype(jnp.float32)             # single (Lp, td) load
        acc = x[base:base + L, :] * w_ref[0, 0:1, :].astype(jnp.float32)
        for k in range(1, dc):
            acc = acc + (x[base + k:base + k + L, :]
                         * w_ref[0, k:k + 1, :].astype(jnp.float32))
        acc = acc + b_ref[0].astype(jnp.float32)
        o_ref[0, 0] = _silu(acc).astype(o_ref.dtype)

    # TODO(synk): for very large L an L-chunk axis with a (d_conv-1) halo would
    # bound the per-block VMEM further; not needed at these block sizes.
    return pl.pallas_call(
        kernel,
        out_shape=jax.ShapeDtypeStruct((S, B, L, D), x_pad.dtype),
        grid=(S, B, D // td),
        in_specs=[
            pl.BlockSpec((1, 1, Lp, td), lambda s, b_, d: (s, b_, 0, d)),
            pl.BlockSpec((1, dc, td), lambda s, b_, d: (s, 0, d)),
            pl.BlockSpec((1, 1, td), lambda s, b_, d: (s, 0, d)),
        ],
        out_specs=pl.BlockSpec((1, 1, L, td), lambda s, b_, d: (s, b_, 0, d)),
        compiler_params=pltpu.CompilerParams(
            dimension_semantics=("parallel", "parallel", "parallel")),
    )(x_pad, w, b)


# ---------------------------------------------------------------------------
# Kernel 3: selective scan (Mamba SSM) + SiLU(z) gating.
#   grid = (S, B, d_inner/tile_d, L/L_blk); h carried in VMEM scratch across
#   the L-chunk axis; time processed in 8-step sublane slabs (unrolled) with
#   hoisted softplus/gate and a single (8, tile_d) store per slab.
#   reverse=True runs the recurrence from t=L-1 down to 0 and writes outputs
#   at their original positions (no flips materialized).
# ---------------------------------------------------------------------------
def selective_scan(u, dt_pre, bc, z, A_T, dt_bias, D_vec, *, reverse):
    """u/dt_pre/z: [S,B,L,Din] (original time order); bc: [S,B,L,2*Nst]
    (= [B | C]); A_T: [1,Nst,Din] (= -exp(A_log), shared across streams);
    dt_bias/D_vec: [S,1,Din] -> [S,B,L,Din]."""
    S, B, L, Din = u.shape
    Nst = bc.shape[-1] // 2
    td = _pick_tile(Din, 256, 128)
    lb = _pick_tile(L, 512, 8)
    nt = 8
    while lb % nt:
        nt //= 2
    n_sub = lb // nt
    nlc = L // lb

    def kernel(u_ref, dt_ref, bc_ref, z_ref, at_ref, dtb_ref, dvec_ref,
               o_ref, h_ref):
        @pl.when(pl.program_id(3) == 0)
        def _init():
            h_ref[...] = jnp.zeros_like(h_ref)

        A_Tb = at_ref[0].astype(jnp.float32)            # (Nst, td)
        bias = dtb_ref[0].astype(jnp.float32)           # (1, td)
        Dv = dvec_ref[0].astype(jnp.float32)            # (1, td)

        def sub_chunk(c, h):
            cs = (n_sub - 1 - c) if reverse else c
            r0 = pl.multiple_of(cs * nt, nt)
            u_s = u_ref[0, 0, pl.ds(r0, nt), :].astype(jnp.float32)    # (nt, td)
            dt_s = dt_ref[0, 0, pl.ds(r0, nt), :].astype(jnp.float32)  # (nt, td)
            z_s = z_ref[0, 0, pl.ds(r0, nt), :].astype(jnp.float32)    # (nt, td)
            bc_s = bc_ref[0, 0, pl.ds(r0, nt), :].astype(jnp.float32)  # (nt, 2*Nst)
            B_s, C_s = bc_s[:, :Nst], bc_s[:, Nst:]
            delta = _softplus(dt_s + bias)               # hoisted per slab
            du = delta * u_s
            gate = _silu(z_s)

            ys = [None] * nt
            order = range(nt - 1, -1, -1) if reverse else range(nt)
            for i in order:                              # unrolled recurrence
                dA = jnp.exp(delta[i:i + 1, :] * A_Tb)                 # (Nst, td)
                dBu = jax.lax.dot_general(                             # outer prod
                    B_s[i:i + 1, :], du[i:i + 1, :],
                    (((0,), (0,)), ((), ())),
                    preferred_element_type=jnp.float32)                # (Nst, td)
                h = dA * h + dBu
                ys[i] = jax.lax.dot_general(                           # C . h
                    C_s[i:i + 1, :], h,
                    (((1,), (0,)), ((), ())),
                    preferred_element_type=jnp.float32)                # (1, td)

            y_blk = jnp.concatenate(ys, axis=0)                        # (nt, td)
            y_blk = (y_blk + Dv * u_s) * gate
            o_ref[0, 0, pl.ds(r0, nt), :] = y_blk.astype(o_ref.dtype)
            return h

        h_ref[...] = jax.lax.fori_loop(0, n_sub, sub_chunk, h_ref[...])

    def lmap(l):
        return (nlc - 1 - l) if reverse else l

    seq_spec = pl.BlockSpec((1, 1, lb, td), lambda s, b, d, l: (s, b, lmap(l), d))
    bc_spec = pl.BlockSpec((1, 1, lb, 2 * Nst),
                           lambda s, b, d, l: (s, b, lmap(l), 0))
    vec_spec = pl.BlockSpec((1, 1, td), lambda s, b, d, l: (s, 0, d))
    a_spec = pl.BlockSpec((1, Nst, td), lambda s, b, d, l: (0, 0, d))

    return pl.pallas_call(
        kernel,
        out_shape=jax.ShapeDtypeStruct((S, B, L, Din), u.dtype),
        grid=(S, B, Din // td, nlc),
        in_specs=[seq_spec, seq_spec, bc_spec, seq_spec, a_spec, vec_spec,
                  vec_spec],
        out_specs=seq_spec,
        scratch_shapes=[pltpu.VMEM((Nst, td), jnp.float32)],
        compiler_params=pltpu.CompilerParams(
            dimension_semantics=("parallel", "parallel", "parallel",
                                 "arbitrary")),
    )(u, dt_pre, bc, z, A_T, dt_bias, D_vec)


# ---------------------------------------------------------------------------
# CoSSM forward (Pallas): fast path, no inference cache, if_devide_out=True,
# bias=False, conv_bias=True, init_layer_scale=None.
# ---------------------------------------------------------------------------
def cossm_forward(g_hidden, r_hidden, params):
    assert g_hidden.shape == r_hidden.shape
    B, L, d_model = g_hidden.shape
    d_inner = params["w_g_in"].shape[1] // 2
    d_state = params["A_logT"].shape[0]
    dt_rank = params["w_dtproj"].shape[1]
    dc = params["conv_w"].shape[1]

    # --- tiny weight preprocessing (XLA, once per call) ---------------------
    w_in = jnp.stack([params["w_g_in"], params["w_r_in"]], axis=0)
    w_x_in, w_z_in = w_in[:, :, :d_inner], w_in[:, :, d_inner:]
    # dt_proj fused into x_proj (linear @ linear, no nonlinearity in between)
    w_dt_fused = jnp.einsum("sdr,sre->sde",
                            params["w_xproj"][:, :, :dt_rank],
                            params["w_dtproj"])                    # [4,Din,Din]
    w_bc = params["w_xproj"][:, :, dt_rank:]                       # [4,Din,2*Nst]
    fwd = jnp.array([0, 2])   # scan order: [g_fwd, g_bwd, r_fwd, r_bwd]
    bwd = jnp.array([1, 3])
    conv_w_f = params["conv_w"][fwd]
    conv_w_b = params["conv_w"][bwd][:, ::-1, :]    # reversed taps (anti-causal)
    conv_b_f, conv_b_b = params["conv_b"][fwd], params["conv_b"][bwd]
    A_f = -jnp.exp(params["A_logT"])[None]          # [1,Nst,Din], shared g/r
    A_b = -jnp.exp(params["A_b_logT"])[None]
    dtb_f, dtb_b = params["dt_bias"][fwd], params["dt_bias"][bwd]
    D_f, D_b = params["D_all"][fwd], params["D_all"][bwd]
    w_out = 0.5 * jnp.stack([params["w_g_out"], params["w_r_out"]], axis=0)

    # 1) input projections: separate x / z grouped matmuls (no wrapper slices)
    h_in = jnp.stack([g_hidden, r_hidden], axis=0).reshape(2, B * L, d_model)
    x_st = grouped_linear(h_in, w_x_in).reshape(2, B, L, d_inner)
    z_st = grouped_linear(h_in, w_z_in).reshape(2, B, L, d_inner)

    # 2) depthwise conv + SiLU; fwd = causal taps, bwd = reversed taps on the
    #    right-padded side (equivalent to flip -> causal conv -> flip).
    x_pad = jnp.pad(x_st, ((0, 0), (0, 0), (dc - 1, dc - 1), (0, 0)))
    xc_f = conv1d_silu(x_pad, conv_w_f, conv_b_f, L, base=0)
    xc_b = conv1d_silu(x_pad, conv_w_b, conv_b_b, L, base=dc - 1)

    # 3) fused dt projection (N = d_inner, lane dense) and B/C projection
    xc_f2 = xc_f.reshape(2, B * L, d_inner)
    xc_b2 = xc_b.reshape(2, B * L, d_inner)
    dt_f = grouped_linear(xc_f2, w_dt_fused[fwd]).reshape(2, B, L, d_inner)
    dt_b = grouped_linear(xc_b2, w_dt_fused[bwd]).reshape(2, B, L, d_inner)
    bc_f = grouped_linear(xc_f2, w_bc[fwd]).reshape(2, B, L, 2 * d_state)
    bc_b = grouped_linear(xc_b2, w_bc[bwd]).reshape(2, B, L, 2 * d_state)

    # 4) selective scans + SiLU(z) gating (bwd runs the recurrence in reverse
    #    time order and writes unflipped; z is shared, never copied).
    y_f = selective_scan(xc_f, dt_f, bc_f, z_st, A_f, dtb_f, D_f, reverse=False)
    y_b = selective_scan(xc_b, dt_b, bc_b, z_st, A_b, dtb_b, D_b, reverse=True)

    # 5) bidirectional combine folded into the output projection:
    #    out = (y_f + y_b) @ (0.5 * W_out)    (if_devide_out=True, bias=False)
    out = grouped_linear(y_f.reshape(2, B * L, d_inner), w_out,
                         x2=y_b.reshape(2, B * L, d_inner))
    out = out.reshape(2, B, L, d_model)
    # TODO(synk): init_layer_scale (g_gamma/r_gamma) and the inference-cache
    # path are not implemented; both are disabled in the default config.
    return out[0], out[1]


# ---------------------------------------------------------------------------
# Pure-JAX reference (same math as the torch module, flip-based) for checking
# ---------------------------------------------------------------------------
def _ref_conv_silu(x, w, b):
    dc, L = w.shape[0], x.shape[1]
    xp = jnp.pad(x, ((0, 0), (dc - 1, 0), (0, 0)))
    acc = jnp.zeros_like(x)
    for k in range(dc):
        acc = acc + xp[:, k:k + L, :] * w[k]
    return _silu(acc + b)


def _ref_selective_scan(u, dt_pre, Bm, Cm, z, A_T, dt_bias, D_vec):
    delta = _softplus(dt_pre + dt_bias)
    dA = jnp.exp(delta[:, :, None, :] * A_T[None, None])
    dBu = (delta * u)[:, :, None, :] * Bm[:, :, :, None]

    def step(h, xs):
        dA_t, dBu_t = xs
        h = dA_t * h + dBu_t
        return h, h

    h0 = jnp.zeros((u.shape[0], A_T.shape[0], A_T.shape[1]), jnp.float32)
    _, hs = jax.lax.scan(step, h0,
                         (jnp.swapaxes(dA, 0, 1), jnp.swapaxes(dBu, 0, 1)))
    hs = jnp.swapaxes(hs, 0, 1)
    y = jnp.einsum("blnd,bln->bld", hs, Cm,
                   precision=jax.lax.Precision.HIGHEST)
    y = y + u * D_vec
    return y * _silu(z)


def cossm_reference(g_hidden, r_hidden, params):
    d_inner = params["w_g_in"].shape[1] // 2
    d_state = params["A_logT"].shape[0]
    dt_rank = params["w_dtproj"].shape[1]
    hp = jax.lax.Precision.HIGHEST

    def one_stream(h, w_in, w_out, scan_ids):
        xz = jnp.einsum("bld,de->ble", h, w_in, precision=hp)
        x, z = xz[..., :d_inner], xz[..., d_inner:]
        ys = []
        for direction, sid in enumerate(scan_ids):
            xs = x if direction == 0 else x[:, ::-1]
            zs = z if direction == 0 else z[:, ::-1]
            xc = _ref_conv_silu(xs, params["conv_w"][sid], params["conv_b"][sid])
            x_dbl = jnp.einsum("bld,dr->blr", xc, params["w_xproj"][sid],
                               precision=hp)
            dt_pre = jnp.einsum("blr,rd->bld", x_dbl[..., :dt_rank],
                                params["w_dtproj"][sid], precision=hp)
            Bm = x_dbl[..., dt_rank:dt_rank + d_state]
            Cm = x_dbl[..., dt_rank + d_state:]
            A_logT = params["A_logT"] if direction == 0 else params["A_b_logT"]
            y = _ref_selective_scan(xc, dt_pre, Bm, Cm, zs, -jnp.exp(A_logT),
                                    params["dt_bias"][sid], params["D_all"][sid])
            ys.append(y if direction == 0 else y[:, ::-1])
        comb = 0.5 * ys[0] + 0.5 * ys[1]
        return jnp.einsum("bld,de->ble", comb, w_out, precision=hp)

    g_out = one_stream(g_hidden, params["w_g_in"], params["w_g_out"], (0, 1))
    r_out = one_stream(r_hidden, params["w_r_in"], params["w_r_out"], (2, 3))
    return g_out, r_out


if __name__ == "__main__":
    # Small shapes consistent with the module defaults:
    #   d_model=32, d_state=16, d_conv=4, expand=2 -> d_inner=64, dt_rank=2
    B, L = 2, 16
    d_model, d_state, d_conv, expand = 32, 16, 4, 2
    d_inner = expand * d_model
    dt_rank = math.ceil(d_model / 16)          # 'auto'
    R = dt_rank + 2 * d_state

    key = jax.random.PRNGKey(0)
    ks = jax.random.split(key, 12)
    f32 = jnp.float32

    g_hidden = jax.random.normal(ks[0], (B, L, d_model), f32)
    r_hidden = jax.random.normal(ks[1], (B, L, d_model), f32)

    def rnd(k, shape, scale):
        return jax.random.normal(k, shape, f32) * scale

    # Parameter layout (weights stored transposed for x @ W; leading axis of
    # size 4 is the scan order [g_fwd, g_bwd, r_fwd, r_bwd]).
    a_row = jnp.log(jnp.arange(1, d_state + 1, dtype=f32))     # torch A_log init
    dt = jax.random.uniform(ks[8], (4, 1, d_inner), f32, minval=1e-3, maxval=1e-1)
    params = {
        "w_g_in": rnd(ks[2], (d_model, 2 * d_inner), d_model ** -0.5),
        "w_r_in": rnd(ks[3], (d_model, 2 * d_inner), d_model ** -0.5),
        "conv_w": rnd(ks[4], (4, d_conv, d_inner), d_conv ** -0.5),
        "conv_b": rnd(ks[5], (4, 1, d_inner), 0.02),
        "w_xproj": rnd(ks[6], (4, d_inner, R), d_inner ** -0.5),
        "w_dtproj": rnd(ks[7], (4, dt_rank, d_inner), dt_rank ** -0.5),
        "dt_bias": jnp.log(jnp.expm1(dt)),                     # inverse-softplus init
        "A_logT": jnp.tile(a_row[:, None], (1, d_inner)),      # [d_state, d_inner]
        "A_b_logT": jnp.tile(a_row[:, None], (1, d_inner)),
        "D_all": jnp.ones((4, 1, d_inner), f32),
        "w_g_out": rnd(ks[9], (d_inner, d_model), d_inner ** -0.5),
        "w_r_out": rnd(ks[10], (d_inner, d_model), d_inner ** -0.5),
    }

    g_out, r_out = jax.jit(cossm_forward)(g_hidden, r_hidden, params)
    g_out, r_out = jax.block_until_ready((g_out, r_out))

    g_ref, r_ref = cossm_reference(g_hidden, r_hidden, params)
    assert g_out.shape == (B, L, d_model) and r_out.shape == (B, L, d_model)
    assert jnp.allclose(g_out, g_ref, atol=2e-3, rtol=2e-3), "g_out mismatch"
    assert jnp.allclose(r_out, r_ref, atol=2e-3, rtol=2e-3), "r_out mismatch"

    print("KERNEL_OK")
</pallas_src>

<mosaic_0001>
module attributes {stable_mosaic.version = 11 : i64} {
  func.func @kernel(%arg0: i32, %arg1: i32, %arg2: i32, %arg3: memref<1x32x32xf32, #tpu.memory_space<vmem>>, %arg4: memref<1x32x64xf32, #tpu.memory_space<vmem>>, %arg5: memref<1x32x64xf32, #tpu.memory_space<vmem>>) attributes {dimension_semantics = [#tpu.dimension_semantics<parallel>, #tpu.dimension_semantics<parallel>, #tpu.dimension_semantics<parallel>], iteration_bounds = array<i64: 2, 1, 1>, scalar_prefetch = 0 : i64, scratch_operands = 0 : i64, tpu.core_type = #tpu.core_type<tc>, window_params = [{transform_indices = @transform_0, window_bounds = array<i64: 1, 32, 32>}, {transform_indices = @transform_1, window_bounds = array<i64: 1, 32, 64>}, {transform_indices = @transform_2, window_bounds = array<i64: 1, 32, 64>}]} {
    %c0 = arith.constant 0 : index
    %c0_0 = arith.constant 0 : index
    %c0_1 = arith.constant 0 : index
    %0 = vector.load %arg3[%c0, %c0_0, %c0_1] : memref<1x32x32xf32, #tpu.memory_space<vmem>>, vector<1x32x32xf32>
    %1 = vector.shape_cast %0 : vector<1x32x32xf32> to vector<32x32xf32>
    %c0_2 = arith.constant 0 : index
    %c0_3 = arith.constant 0 : index
    %c0_4 = arith.constant 0 : index
    %2 = vector.load %arg4[%c0_2, %c0_3, %c0_4] : memref<1x32x64xf32, #tpu.memory_space<vmem>>, vector<1x32x64xf32>
    %3 = vector.shape_cast %2 : vector<1x32x64xf32> to vector<32x64xf32>
    %cst = arith.constant dense<0.000000e+00> : vector<32x64xf32>
    %4 = tpu.matmul %1, %3, %cst {dimension_numbers = #tpu.dot_dimension_numbers<[1], [0], [0], [1], [0, 0, 1, 1], [], []>} : vector<32x32xf32>, vector<32x64xf32>, vector<32x64xf32> -> vector<32x64xf32>
    %c0_5 = arith.constant 0 : index
    %c0_6 = arith.constant 0 : index
    %c0_7 = arith.constant 0 : index
    %5 = vector.load %arg5[%c0_5, %c0_6, %c0_7] : memref<1x32x64xf32, #tpu.memory_space<vmem>>, vector<1x32x64xf32>
    %6 = vector.shape_cast %5 : vector<1x32x64xf32> to vector<32x64xf32>
    %7 = vector.shape_cast %4 : vector<32x64xf32> to vector<1x32x64xf32>
    tpu.vector_store %arg5[%c0_5, %c0_6, %c0_7], %7 {strides = array<i32>} : memref<1x32x64xf32, #tpu.memory_space<vmem>>, vector<1x32x64xf32>,
    return
  }
  func.func @transform_0(%arg0: i32, %arg1: i32, %arg2: i32) -> (i32, i32, i32) {
    %c0_i32 = arith.constant 0 : i32
    %c0_i32_0 = arith.constant 0 : i32
    return %arg0, %arg1, %c0_i32 : i32, i32, i32
  }
  func.func @transform_1(%arg0: i32, %arg1: i32, %arg2: i32) -> (i32, i32, i32) {
    %c0_i32 = arith.constant 0 : i32
    %c0_i32_0 = arith.constant 0 : i32
    return %arg0, %c0_i32, %arg2 : i32, i32, i32
  }
  func.func @transform_2(%arg0: i32, %arg1: i32, %arg2: i32) -> (i32, i32, i32) {
    %c0_i32 = arith.constant 0 : i32
    return %arg0, %arg1, %arg2 : i32, i32, i32
  }
}

module attributes {stable_mosaic.version = 11 : i64} {
  func.func @kernel(%arg0: i32, %arg1: i32, %arg2: i32, %arg3: memref<1x1x22x64xf32, #tpu.memory_space<vmem>>, %arg4: memref<1x4x64xf32, #tpu.memory_space<vmem>>, %arg5: memref<1x1x64xf32, #tpu.memory_space<vmem>>, %arg6: memref<1x1x16x64xf32, #tpu.memory_space<vmem>>) attributes {dimension_semantics = [#tpu.dimension_semantics<parallel>, #tpu.dimension_semantics<parallel>, #tpu.dimension_semantics<parallel>], iteration_bounds = array<i64: 2, 2, 1>, scalar_prefetch = 0 : i64, scratch_operands = 0 : i64, tpu.core_type = #tpu.core_type<tc>, window_params = [{transform_indices = @transform_0, window_bounds = array<i64: 1, 1, 22, 64>}, {transform_indices = @transform_1, window_bounds = array<i64: 1, 4, 64>}, {transform_indices = @transform_2, window_bounds = array<i64: 1, 1, 64>}, {transform_indices = @transform_3, window_bounds = array<i64: 1, 1, 16, 64>}]} {
    %c0 = arith.constant 0 : index
    %c0_0 = arith.constant 0 : index
    %c0_1 = arith.constant 0 : index
    %c0_2 = arith.constant 0 : index
    %0 = vector.load %arg3[%c0, %c0_0, %c0_1, %c0_2] : memref<1x1x22x64xf32, #tpu.memory_space<vmem>>, vector<1x1x22x64xf32>
    %1 = vector.shape_cast %0 : vector<1x1x22x64xf32> to vector<22x64xf32>
    %2 = vector.extract_strided_slice %1 {offsets = [3, 0], sizes = [16, 64], strides = [1, 1]} : vector<22x64xf32> to vector<16x64xf32>
    %c0_3 = arith.constant 0 : index
    %c0_4 = arith.constant 0 : index
    %c0_5 = arith.constant 0 : index
    %3 = vector.load %arg4[%c0_3, %c0_4, %c0_5] : memref<1x4x64xf32, #tpu.memory_space<vmem>>, vector<1x1x64xf32>
    %4 = vector.shape_cast %3 : vector<1x1x64xf32> to vector<1x64xf32>
    %5 = vector.broadcast %4 : vector<1x64xf32> to vector<16x64xf32>
    %6 = arith.mulf %2, %5 : vector<16x64xf32>
    %7 = vector.extract_strided_slice %1 {offsets = [4, 0], sizes = [16, 64], strides = [1, 1]} : vector<22x64xf32> to vector<16x64xf32>
    %c0_6 = arith.constant 0 : index
    %c1 = arith.constant 1 : index
    %c0_7 = arith.constant 0 : index
    %8 = vector.load %arg4[%c0_6, %c1, %c0_7] : memref<1x4x64xf32, #tpu.memory_space<vmem>>, vector<1x1x64xf32>
    %9 = vector.shape_cast %8 : vector<1x1x64xf32> to vector<1x64xf32>
    %10 = vector.broadcast %9 : vector<1x64xf32> to vector<16x64xf32>
    %11 = arith.mulf %7, %10 : vector<16x64xf32>
    %12 = arith.addf %6, %11 : vector<16x64xf32>
    %13 = vector.extract_strided_slice %1 {offsets = [5, 0], sizes = [16, 64], strides = [1, 1]} : vector<22x64xf32> to vector<16x64xf32>
    %c0_8 = arith.constant 0 : index
    %c2 = arith.constant 2 : index
    %c0_9 = arith.constant 0 : index
    %14 = vector.load %arg4[%c0_8, %c2, %c0_9] : memref<1x4x64xf32, #tpu.memory_space<vmem>>, vector<1x1x64xf32>
    %15 = vector.shape_cast %14 : vector<1x1x64xf32> to vector<1x64xf32>
    %16 = vector.broadcast %15 : vector<1x64xf32> to vector<16x64xf32>
    %17 = arith.mulf %13, %16 : vector<16x64xf32>
    %18 = arith.addf %12, %17 : vector<16x64xf32>
    %19 = vector.extract_strided_slice %1 {offsets = [6, 0], sizes = [16, 64], strides = [1, 1]} : vector<22x64xf32> to vector<16x64xf32>
    %c0_10 = arith.constant 0 : index
    %c3 = arith.constant 3 : index
    %c0_11 = arith.constant 0 : index
    %20 = vector.load %arg4[%c0_10, %c3, %c0_11] : memref<1x4x64xf32, #tpu.memory_space<vmem>>, vector<1x1x64xf32>
    %21 = vector.shape_cast %20 : vector<1x1x64xf32> to vector<1x64xf32>
    %22 = vector.broadcast %21 : vector<1x64xf32> to vector<16x64xf32>
    %23 = arith.mulf %19, %22 : vector<16x64xf32>
    %24 = arith.addf %18, %23 : vector<16x64xf32>
    %c0_12 = arith.constant 0 : index
    %c0_13 = arith.constant 0 : index
    %c0_14 = arith.constant 0 : index
    %25 = vector.load %arg5[%c0_12, %c0_13, %c0_14] : memref<1x1x64xf32, #tpu.memory_space<vmem>>, vector<1x1x64xf32>
    %26 = vector.shape_cast %25 : vector<1x1x64xf32> to vector<1x64xf32>
    %27 = vector.broadcast %26 : vector<1x64xf32> to vector<16x64xf32>
    %28 = arith.addf %24, %27 : vector<16x64xf32>
    %cst = arith.constant 0.000000e+00 : f32
    %29 = vector.broadcast %cst : f32 to vector<16x64xf32>
    %30 = arith.subf %29, %28 : vector<16x64xf32>
    %31 = math.exp %30 : vector<16x64xf32>
    %cst_15 = arith.constant 1.000000e+00 : f32
    %32 = vector.broadcast %cst_15 : f32 to vector<16x64xf32>
    %33 = arith.addf %32, %31 : vector<16x64xf32>
    %34 = arith.divf %28, %33 : vector<16x64xf32>
    %c0_16 = arith.constant 0 : index
    %c0_17 = arith.constant 0 : index
    %c0_18 = arith.constant 0 : index
    %c0_19 = arith.constant 0 : index
    %35 = vector.load %arg6[%c0_16, %c0_17, %c0_18, %c0_19] : memref<1x1x16x64xf32, #tpu.memory_space<vmem>>, vector<1x1x16x64xf32>
    %36 = vector.shape_cast %35 : vector<1x1x16x64xf32> to vector<16x64xf32>
    %37 = vector.shape_cast %34 : vector<16x64xf32> to vector<1x1x16x64xf32>
    tpu.vector_store %arg6[%c0_16, %c0_17, %c0_18, %c0_19], %37 {strides = array<i32>} : memref<1x1x16x64xf32, #tpu.memory_space<vmem>>, vector<1x1x16x64xf32>,
    return
  }
  func.func @transform_0(%arg0: i32, %arg1: i32, %arg2: i32) -> (i32, i32, i32, i32) {
    %c0_i32 = arith.constant 0 : i32
    %c0_i32_0 = arith.constant 0 : i32
    return %arg0, %arg1, %c0_i32, %arg2 : i32, i32, i32, i32
  }
  func.func @transform_1(%arg0: i32, %arg1: i32, %arg2: i32) -> (i32, i32, i32) {
    %c0_i32 = arith.constant 0 : i32
    %c0_i32_0 = arith.constant 0 : i32
    return %arg0, %c0_i32, %arg2 : i32, i32, i32
  }
  func.func @transform_2(%arg0: i32, %arg1: i32, %arg2: i32) -> (i32, i32, i32) {
    %c0_i32 = arith.constant 0 : i32
    %c0_i32_0 = arith.constant 0 : i32
    return %arg0, %c0_i32, %arg2 : i32, i32, i32
  }
  func.func @transform_3(%arg0: i32, %arg1: i32, %arg2: i32) -> (i32, i32, i32, i32) {
    %c0_i32 = arith.constant 0 : i32
    %c0_i32_0 = arith.constant 0 : i32
    return %arg0, %arg1, %c0_i32, %arg2 : i32, i32, i32, i32
  }
}

module attributes {stable_mosaic.version = 11 : i64} {
  func.func @kernel(%arg0: i32, %arg1: i32, %arg2: i32, %arg3: memref<1x32x64xf32, #tpu.memory_space<vmem>>, %arg4: memref<1x64x32xf32, #tpu.memory_space<vmem>>, %arg5: memref<1x32x32xf32, #tpu.memory_space<vmem>>) attributes {dimension_semantics = [#tpu.dimension_semantics<parallel>, #tpu.dimension_semantics<parallel>, #tpu.dimension_semantics<parallel>], iteration_bounds = array<i64: 2, 1, 1>, scalar_prefetch = 0 : i64, scratch_operands = 0 : i64, tpu.core_type = #tpu.core_type<tc>, window_params = [{transform_indices = @transform_0, window_bounds = array<i64: 1, 32, 64>}, {transform_indices = @transform_1, window_bounds = array<i64: 1, 64, 32>}, {transform_indices = @transform_2, window_bounds = array<i64: 1, 32, 32>}]} {
    %c0 = arith.constant 0 : index
    %c0_0 = arith.constant 0 : index
    %c0_1 = arith.constant 0 : index
    %0 = vector.load %arg3[%c0, %c0_0, %c0_1] : memref<1x32x64xf32, #tpu.memory_space<vmem>>, vector<1x32x64xf32>
    %1 = vector.shape_cast %0 : vector<1x32x64xf32> to vector<32x64xf32>
    %c0_2 = arith.constant 0 : index
    %c0_3 = arith.constant 0 : index
    %c0_4 = arith.constant 0 : index
    %2 = vector.load %arg4[%c0_2, %c0_3, %c0_4] : memref<1x64x32xf32, #tpu.memory_space<vmem>>, vector<1x64x32xf32>
    %3 = vector.shape_cast %2 : vector<1x64x32xf32> to vector<64x32xf32>
    %cst = arith.constant dense<0.000000e+00> : vector<32x32xf32>
    %4 = tpu.matmul %1, %3, %cst {dimension_numbers = #tpu.dot_dimension_numbers<[1], [0], [0], [1], [0, 0, 1, 1], [], []>} : vector<32x64xf32>, vector<64x32xf32>, vector<32x32xf32> -> vector<32x32xf32>
    %c0_5 = arith.constant 0 : index
    %c0_6 = arith.constant 0 : index
    %c0_7 = arith.constant 0 : index
    %5 = vector.load %arg5[%c0_5, %c0_6, %c0_7] : memref<1x32x32xf32, #tpu.memory_space<vmem>>, vector<1x32x32xf32>
    %6 = vector.shape_cast %5 : vector<1x32x32xf32> to vector<32x32xf32>
    %7 = vector.shape_cast %4 : vector<32x32xf32> to vector<1x32x32xf32>
    tpu.vector_store %arg5[%c0_5, %c0_6, %c0_7], %7 {strides = array<i32>} : memref<1x32x32xf32, #tpu.memory_space<vmem>>, vector<1x32x32xf32>,
    return
  }
  func.func @transform_0(%arg0: i32, %arg1: i32, %arg2: i32) -> (i32, i32, i32) {
    %c0_i32 = arith.constant 0 : i32
    %c0_i32_0 = arith.constant 0 : i32
    return %arg0, %arg1, %c0_i32 : i32, i32, i32
  }
  func.func @transform_1(%arg0: i32, %arg1: i32, %arg2: i32) -> (i32, i32, i32) {
    %c0_i32 = arith.constant 0 : i32
    %c0_i32_0 = arith.constant 0 : i32
    return %arg0, %c0_i32, %arg2 : i32, i32, i32
  }
  func.func @transform_2(%arg0: i32, %arg1: i32, %arg2: i32) -> (i32, i32, i32) {
    %c0_i32 = arith.constant 0 : i32
    return %arg0, %arg1, %arg2 : i32, i32, i32
  }
}

module attributes {stable_mosaic.version = 11 : i64} {
  func.func @kernel(%arg0: i32, %arg1: i32, %arg2: i32, %arg3: memref<1x32x64xf32, #tpu.memory_space<vmem>>, %arg4: memref<1x64x64xf32, #tpu.memory_space<vmem>>, %arg5: memref<1x32x64xf32, #tpu.memory_space<vmem>>) attributes {dimension_semantics = [#tpu.dimension_semantics<parallel>, #tpu.dimension_semantics<parallel>, #tpu.dimension_semantics<parallel>], iteration_bounds = array<i64: 2, 1, 1>, scalar_prefetch = 0 : i64, scratch_operands = 0 : i64, tpu.core_type = #tpu.core_type<tc>, window_params = [{transform_indices = @transform_0, window_bounds = array<i64: 1, 32, 64>}, {transform_indices = @transform_1, window_bounds = array<i64: 1, 64, 64>}, {transform_indices = @transform_2, window_bounds = array<i64: 1, 32, 64>}]} {
    %c0 = arith.constant 0 : index
    %c0_0 = arith.constant 0 : index
    %c0_1 = arith.constant 0 : index
    %0 = vector.load %arg3[%c0, %c0_0, %c0_1] : memref<1x32x64xf32, #tpu.memory_space<vmem>>, vector<1x32x64xf32>
    %1 = vector.shape_cast %0 : vector<1x32x64xf32> to vector<32x64xf32>
    %c0_2 = arith.constant 0 : index
    %c0_3 = arith.constant 0 : index
    %c0_4 = arith.constant 0 : index
    %2 = vector.load %arg4[%c0_2, %c0_3, %c0_4] : memref<1x64x64xf32, #tpu.memory_space<vmem>>, vector<1x64x64xf32>
    %3 = vector.shape_cast %2 : vector<1x64x64xf32> to vector<64x64xf32>
    %cst = arith.constant dense<0.000000e+00> : vector<32x64xf32>
    %4 = tpu.matmul %1, %3, %cst {dimension_numbers = #tpu.dot_dimension_numbers<[1], [0], [0], [1], [0, 0, 1, 1], [], []>} : vector<32x64xf32>, vector<64x64xf32>, vector<32x64xf32> -> vector<32x64xf32>
    %c0_5 = arith.constant 0 : index
    %c0_6 = arith.constant 0 : index
    %c0_7 = arith.constant 0 : index
    %5 = vector.load %arg5[%c0_5, %c0_6, %c0_7] : memref<1x32x64xf32, #tpu.memory_space<vmem>>, vector<1x32x64xf32>
    %6 = vector.shape_cast %5 : vector<1x32x64xf32> to vector<32x64xf32>
    %7 = vector.shape_cast %4 : vector<32x64xf32> to vector<1x32x64xf32>
    tpu.vector_store %arg5[%c0_5, %c0_6, %c0_7], %7 {strides = array<i32>} : memref<1x32x64xf32, #tpu.memory_space<vmem>>, vector<1x32x64xf32>,
    return
  }
  func.func @transform_0(%arg0: i32, %arg1: i32, %arg2: i32) -> (i32, i32, i32) {
    %c0_i32 = arith.constant 0 : i32
    %c0_i32_0 = arith.constant 0 : i32
    return %arg0, %arg1, %c0_i32 : i32, i32, i32
  }
  func.func @transform_1(%arg0: i32, %arg1: i32, %arg2: i32) -> (i32, i32, i32) {
    %c0_i32 = arith.constant 0 : i32
    %c0_i32_0 = arith.constant 0 : i32
    return %arg0, %c0_i32, %arg2 : i32, i32, i32
  }
  func.func @transform_2(%arg0: i32, %arg1: i32, %arg2: i32) -> (i32, i32, i32) {
    %c0_i32 = arith.constant 0 : i32
    return %arg0, %arg1, %arg2 : i32, i32, i32
  }
}

module attributes {stable_mosaic.version = 11 : i64} {
  func.func @kernel(%arg0: i32, %arg1: i32, %arg2: i32, %arg3: i32, %arg4: memref<1x1x16x64xf32, #tpu.memory_space<vmem>>, %arg5: memref<1x1x16x64xf32, #tpu.memory_space<vmem>>, %arg6: memref<1x1x16x32xf32, #tpu.memory_space<vmem>>, %arg7: memref<1x1x16x64xf32, #tpu.memory_space<vmem>>, %arg8: memref<1x16x64xf32, #tpu.memory_space<vmem>>, %arg9: memref<1x1x64xf32, #tpu.memory_space<vmem>>, %arg10: memref<1x1x64xf32, #tpu.memory_space<vmem>>, %arg11: memref<1x1x16x64xf32, #tpu.memory_space<vmem>>, %arg12: memref<16x64xf32, #tpu.memory_space<vmem>>) attributes {dimension_semantics = [#tpu.dimension_semantics<parallel>, #tpu.dimension_semantics<parallel>, #tpu.dimension_semantics<parallel>, #tpu.dimension_semantics<arbitrary>], iteration_bounds = array<i64: 2, 2, 1, 1>, scalar_prefetch = 0 : i64, scratch_operands = 1 : i64, tpu.core_type = #tpu.core_type<tc>, window_params = [{transform_indices = @transform_0, window_bounds = array<i64: 1, 1, 16, 64>}, {transform_indices = @transform_1, window_bounds = array<i64: 1, 1, 16, 64>}, {transform_indices = @transform_2, window_bounds = array<i64: 1, 1, 16, 32>}, {transform_indices = @transform_3, window_bounds = array<i64: 1, 1, 16, 64>}, {transform_indices = @transform_4, window_bounds = array<i64: 1, 16, 64>}, {transform_indices = @transform_5, window_bounds = array<i64: 1, 1, 64>}, {transform_indices = @transform_6, window_bounds = array<i64: 1, 1, 64>}, {transform_indices = @transform_7, window_bounds = array<i64: 1, 1, 16, 64>}]} {
    %c0_i32 = arith.constant 0 : i32
    %0 = arith.cmpi eq, %arg3, %c0_i32 : i32
    %1 = arith.extui %0 : i1 to i32
    %c0_i32_0 = arith.constant 0 : i32
    %2 = arith.cmpi ne, %1, %c0_i32_0 : i32
    scf.if %2 {
      %cst = arith.constant 0.000000e+00 : f32
      %13 = vector.broadcast %cst : f32 to vector<16x64xf32>
      %c0_15 = arith.constant 0 : index
      %c0_16 = arith.constant 0 : index
      %14 = vector.load %arg12[%c0_15, %c0_16] : memref<16x64xf32, #tpu.memory_space<vmem>>, vector<16x64xf32>
      tpu.vector_store %arg12[%c0_15, %c0_16], %13 {strides = array<i32>} : memref<16x64xf32, #tpu.memory_space<vmem>>, vector<16x64xf32>,
    } else {
    }
    %c0 = arith.constant 0 : index
    %c0_1 = arith.constant 0 : index
    %c0_2 = arith.constant 0 : index
    %3 = vector.load %arg8[%c0, %c0_1, %c0_2] : memref<1x16x64xf32, #tpu.memory_space<vmem>>, vector<1x16x64xf32>
    %4 = vector.shape_cast %3 : vector<1x16x64xf32> to vector<16x64xf32>
    %c0_3 = arith.constant 0 : index
    %c0_4 = arith.constant 0 : index
    %c0_5 = arith.constant 0 : index
    %5 = vector.load %arg9[%c0_3, %c0_4, %c0_5] : memref<1x1x64xf32, #tpu.memory_space<vmem>>, vector<1x1x64xf32>
    %6 = vector.shape_cast %5 : vector<1x1x64xf32> to vector<1x64xf32>
    %c0_6 = arith.constant 0 : index
    %c0_7 = arith.constant 0 : index
    %c0_8 = arith.constant 0 : index
    %7 = vector.load %arg10[%c0_6, %c0_7, %c0_8] : memref<1x1x64xf32, #tpu.memory_space<vmem>>, vector<1x1x64xf32>
    %8 = vector.shape_cast %7 : vector<1x1x64xf32> to vector<1x64xf32>
    %c0_9 = arith.constant 0 : index
    %c0_10 = arith.constant 0 : index
    %9 = vector.load %arg12[%c0_9, %c0_10] : memref<16x64xf32, #tpu.memory_space<vmem>>, vector<16x64xf32>
    %c0_i32_11 = arith.constant 0 : i32
    %c2_i32 = arith.constant 2 : i32
    %10 = arith.addi %c0_i32_11, %c2_i32 : i32
    %c1_i32 = arith.constant 1 : i32
    %11 = scf.for %arg13 = %c0_i32_11 to %10 step %c1_i32 iter_args(%arg14 = %9) -> (vector<16x64xf32>)  : i32 {
      %c1_i32_15 = arith.constant 1 : i32
      %13 = arith.subi %c1_i32_15, %arg13 : i32
      %c8_i32 = arith.constant 8 : i32
      %14 = arith.muli %13, %c8_i32 : i32
      %15 = tpu.assume_multiple %14, 8 : i32
      %c0_16 = arith.constant 0 : index
      %c0_17 = arith.constant 0 : index
      %16 = arith.index_cast %15 : i32 to index
      %c0_18 = arith.constant 0 : index
      %17 = vector.load %arg4[%c0_16, %c0_17, %16, %c0_18] : memref<1x1x16x64xf32, #tpu.memory_space<vmem>>, vector<1x1x8x64xf32>
      %18 = vector.shape_cast %17 : vector<1x1x8x64xf32> to vector<8x64xf32>
      %c0_19 = arith.constant 0 : index
      %c0_20 = arith.constant 0 : index
      %19 = arith.index_cast %15 : i32 to index
      %c0_21 = arith.constant 0 : index
      %20 = vector.load %arg5[%c0_19, %c0_20, %19, %c0_21] : memref<1x1x16x64xf32, #tpu.memory_space<vmem>>, vector<1x1x8x64xf32>
      %21 = vector.shape_cast %20 : vector<1x1x8x64xf32> to vector<8x64xf32>
      %c0_22 = arith.constant 0 : index
      %c0_23 = arith.constant 0 : index
      %22 = arith.index_cast %15 : i32 to index
      %c0_24 = arith.constant 0 : index
      %23 = vector.load %arg7[%c0_22, %c0_23, %22, %c0_24] : memref<1x1x16x64xf32, #tpu.memory_space<vmem>>, vector<1x1x8x64xf32>
      %24 = vector.shape_cast %23 : vector<1x1x8x64xf32> to vector<8x64xf32>
      %c0_25 = arith.constant 0 : index
      %c0_26 = arith.constant 0 : index
      %25 = arith.index_cast %15 : i32 to index
      %c0_27 = arith.constant 0 : index
      %26 = vector.load %arg6[%c0_25, %c0_26, %25, %c0_27] : memref<1x1x16x32xf32, #tpu.memory_space<vmem>>, vector<1x1x8x32xf32>
      %27 = vector.shape_cast %26 : vector<1x1x8x32xf32> to vector<8x32xf32>
      %28 = vector.extract_strided_slice %27 {offsets = [0, 0], sizes = [8, 16], strides = [1, 1]} : vector<8x32xf32> to vector<8x16xf32>
      %29 = vector.extract_strided_slice %27 {offsets = [0, 16], sizes = [8, 16], strides = [1, 1]} : vector<8x32xf32> to vector<8x16xf32>
      %30 = vector.broadcast %6 : vector<1x64xf32> to vector<8x64xf32>
      %31 = arith.addf %21, %30 : vector<8x64xf32>
      %cst = arith.constant 0.000000e+00 : f32
      %32 = vector.broadcast %cst : f32 to vector<8x64xf32>
      %33 = arith.maximumf %31, %32 : vector<8x64xf32>
      %34 = math.absf %31 : vector<8x64xf32>
      %cst_28 = arith.constant 0.000000e+00 : f32
      %35 = vector.broadcast %cst_28 : f32 to vector<8x64xf32>
      %36 = arith.subf %35, %34 : vector<8x64xf32>
      %37 = math.exp %36 : vector<8x64xf32>
      %cst_29 = arith.constant 1.000000e+00 : f32
      %38 = vector.broadcast %cst_29 : f32 to vector<8x64xf32>
      %39 = arith.addf %38, %37 : vector<8x64xf32>
      %40 = math.log %39 : vector<8x64xf32>
      %41 = arith.addf %33, %40 : vector<8x64xf32>
      %42 = arith.mulf %41, %18 : vector<8x64xf32>
      %cst_30 = arith.constant 0.000000e+00 : f32
      %43 = vector.broadcast %cst_30 : f32 to vector<8x64xf32>
      %44 = arith.subf %43, %24 : vector<8x64xf32>
      %45 = math.exp %44 : vector<8x64xf32>
      %cst_31 = arith.constant 1.000000e+00 : f32
      %46 = vector.broadcast %cst_31 : f32 to vector<8x64xf32>
      %47 = arith.addf %46, %45 : vector<8x64xf32>
      %48 = arith.divf %24, %47 : vector<8x64xf32>
      %49 = vector.extract_strided_slice %41 {offsets = [7, 0], sizes = [1, 64], strides = [1, 1]} : vector<8x64xf32> to vector<1x64xf32>
      %50 = vector.broadcast %49 : vector<1x64xf32> to vector<16x64xf32>
      %51 = arith.mulf %50, %4 : vector<16x64xf32>
      %52 = math.exp %51 : vector<16x64xf32>
      %53 = vector.extract_strided_slice %28 {offsets = [7, 0], sizes = [1, 16], strides = [1, 1]} : vector<8x16xf32> to vector<1x16xf32>
      %54 = vector.extract_strided_slice %42 {offsets = [7, 0], sizes = [1, 64], strides = [1, 1]} : vector<8x64xf32> to vector<1x64xf32>
      %cst_32 = arith.constant dense<0.000000e+00> : vector<16x64xf32>
      %55 = tpu.matmul %53, %54, %cst_32 {dimension_numbers = #tpu.dot_dimension_numbers<[0], [0], [1], [1], [0, 1, 1, 1], [], []>} : vector<1x16xf32>, vector<1x64xf32>, vector<16x64xf32> -> vector<16x64xf32>
      %56 = arith.mulf %52, %arg14 : vector<16x64xf32>
      %57 = arith.addf %56, %55 : vector<16x64xf32>
      %58 = vector.extract_strided_slice %29 {offsets = [7, 0], sizes = [1, 16], strides = [1, 1]} : vector<8x16xf32> to vector<1x16xf32>
      %cst_33 = arith.constant dense<0.000000e+00> : vector<1x64xf32>
      %59 = tpu.matmul %58, %57, %cst_33 {dimension_numbers = #tpu.dot_dimension_numbers<[1], [0], [0], [1], [0, 0, 1, 1], [], []>} : vector<1x16xf32>, vector<16x64xf32>, vector<1x64xf32> -> vector<1x64xf32>
      %60 = vector.extract_strided_slice %41 {offsets = [6, 0], sizes = [1, 64], strides = [1, 1]} : vector<8x64xf32> to vector<1x64xf32>
      %61 = vector.broadcast %60 : vector<1x64xf32> to vector<16x64xf32>
      %62 = arith.mulf %61, %4 : vector<16x64xf32>
      %63 = math.exp %62 : vector<16x64xf32>
      %64 = vector.extract_strided_slice %28 {offsets = [6, 0], sizes = [1, 16], strides = [1, 1]} : vector<8x16xf32> to vector<1x16xf32>
      %65 = vector.extract_strided_slice %42 {offsets = [6, 0], sizes = [1, 64], strides = [1, 1]} : vector<8x64xf32> to vector<1x64xf32>
      %cst_34 = arith.constant dense<0.000000e+00> : vector<16x64xf32>
      %66 = tpu.matmul %64, %65, %cst_34 {dimension_numbers = #tpu.dot_dimension_numbers<[0], [0], [1], [1], [0, 1, 1, 1], [], []>} : vector<1x16xf32>, vector<1x64xf32>, vector<16x64xf32> -> vector<16x64xf32>
      %67 = arith.mulf %63, %57 : vector<16x64xf32>
      %68 = arith.addf %67, %66 : vector<16x64xf32>
      %69 = vector.extract_strided_slice %29 {offsets = [6, 0], sizes = [1, 16], strides = [1, 1]} : vector<8x16xf32> to vector<1x16xf32>
      %cst_35 = arith.constant dense<0.000000e+00> : vector<1x64xf32>
      %70 = tpu.matmul %69, %68, %cst_35 {dimension_numbers = #tpu.dot_dimension_numbers<[1], [0], [0], [1], [0, 0, 1, 1], [], []>} : vector<1x16xf32>, vector<16x64xf32>, vector<1x64xf32> -> vector<1x64xf32>
      %71 = vector.extract_strided_slice %41 {offsets = [5, 0], sizes = [1, 64], strides = [1, 1]} : vector<8x64xf32> to vector<1x64xf32>
      %72 = vector.broadcast %71 : vector<1x64xf32> to vector<16x64xf32>
      %73 = arith.mulf %72, %4 : vector<16x64xf32>
      %74 = math.exp %73 : vector<16x64xf32>
      %75 = vector.extract_strided_slice %28 {offsets = [5, 0], sizes = [1, 16], strides = [1, 1]} : vector<8x16xf32> to vector<1x16xf32>
      %76 = vector.extract_strided_slice %42 {offsets = [5, 0], sizes = [1, 64], strides = [1, 1]} : vector<8x64xf32> to vector<1x64xf32>
      %cst_36 = arith.constant dense<0.000000e+00> : vector<16x64xf32>
      %77 = tpu.matmul %75, %76, %cst_36 {dimension_numbers = #tpu.dot_dimension_numbers<[0], [0], [1], [1], [0, 1, 1, 1], [], []>} : vector<1x16xf32>, vector<1x64xf32>, vector<16x64xf32> -> vector<16x64xf32>
      %78 = arith.mulf %74, %68 : vector<16x64xf32>
      %79 = arith.addf %78, %77 : vector<16x64xf32>
      %80 = vector.extract_strided_slice %29 {offsets = [5, 0], sizes = [1, 16], strides = [1, 1]} : vector<8x16xf32> to vector<1x16xf32>
      %cst_37 = arith.constant dense<0.000000e+00> : vector<1x64xf32>
      %81 = tpu.matmul %80, %79, %cst_37 {dimension_numbers = #tpu.dot_dimension_numbers<[1], [0], [0], [1], [0, 0, 1, 1], [], []>} : vector<1x16xf32>, vector<16x64xf32>, vector<1x64xf32> -> vector<1x64xf32>
      %82 = vector.extract_strided_slice %41 {offsets = [4, 0], sizes = [1, 64], strides = [1, 1]} : vector<8x64xf32> to vector<1x64xf32>
      %83 = vector.broadcast %82 : vector<1x64xf32> to vector<16x64xf32>
      %84 = arith.mulf %83, %4 : vector<16x64xf32>
      %85 = math.exp %84 : vector<16x64xf32>
      %86 = vector.extract_strided_slice %28 {offsets = [4, 0], sizes = [1, 16], strides = [1, 1]} : vector<8x16xf32> to vector<1x16xf32>
      %87 = vector.extract_strided_slice %42 {offsets = [4, 0], sizes = [1, 64], strides = [1, 1]} : vector<8x64xf32> to vector<1x64xf32>
      %cst_38 = arith.constant dense<0.000000e+00> : vector<16x64xf32>
      %88 = tpu.matmul %86, %87, %cst_38 {dimension_numbers = #tpu.dot_dimension_numbers<[0], [0], [1], [1], [0, 1, 1, 1], [], []>} : vector<1x16xf32>, vector<1x64xf32>, vector<16x64xf32> -> vector<16x64xf32>
      %89 = arith.mulf %85, %79 : vector<16x64xf32>
      %90 = arith.addf %89, %88 : vector<16x64xf32>
      %91 = vector.extract_strided_slice %29 {offsets = [4, 0], sizes = [1, 16], strides = [1, 1]} : vector<8x16xf32> to vector<1x16xf32>
      %cst_39 = arith.constant dense<0.000000e+00> : vector<1x64xf32>
      %92 = tpu.matmul %91, %90, %cst_39 {dimension_numbers = #tpu.dot_dimension_numbers<[1], [0], [0], [1], [0, 0, 1, 1], [], []>} : vector<1x16xf32>, vector<16x64xf32>, vector<1x64xf32> -> vector<1x64xf32>
      %93 = vector.extract_strided_slice %41 {offsets = [3, 0], sizes = [1, 64], strides = [1, 1]} : vector<8x64xf32> to vector<1x64xf32>
      %94 = vector.broadcast %93 : vector<1x64xf32> to vector<16x64xf32>
      %95 = arith.mulf %94, %4 : vector<16x64xf32>
      %96 = math.exp %95 : vector<16x64xf32>
      %97 = vector.extract_strided_slice %28 {offsets = [3, 0], sizes = [1, 16], strides = [1, 1]} : vector<8x16xf32> to vector<1x16xf32>
      %98 = vector.extract_strided_slice %42 {offsets = [3, 0], sizes = [1, 64], strides = [1, 1]} : vector<8x64xf32> to vector<1x64xf32>
      %cst_40 = arith.constant dense<0.000000e+00> : vector<16x64xf32>
      %99 = tpu.matmul %97, %98, %cst_40 {dimension_numbers = #tpu.dot_dimension_numbers<[0], [0], [1], [1], [0, 1, 1, 1], [], []>} : vector<1x16xf32>, vector<1x64xf32>, vector<16x64xf32> -> vector<16x64xf32>
      %100 = arith.mulf %96, %90 : vector<16x64xf32>
      %101 = arith.addf %100, %99 : vector<16x64xf32>
      %102 = vector.extract_strided_slice %29 {offsets = [3, 0], sizes = [1, 16], strides = [1, 1]} : vector<8x16xf32> to vector<1x16xf32>
      %cst_41 = arith.constant dense<0.000000e+00> : vector<1x64xf32>
      %103 = tpu.matmul %102, %101, %cst_41 {dimension_numbers = #tpu.dot_dimension_numbers<[1], [0], [0], [1], [0, 0, 1, 1], [], []>} : vector<1x16xf32>, vector<16x64xf32>, vector<1x64xf32> -> vector<1x64xf32>
      %104 = vector.extract_strided_slice %41 {offsets = [2, 0], sizes = [1, 64], strides = [1, 1]} : vector<8x64xf32> to vector<1x64xf32>
      %105 = vector.broadcast %104 : vector<1x64xf32> to vector<16x64xf32>
      %106 = arith.mulf %105, %4 : vector<16x64xf32>
      %107 = math.exp %106 : vector<16x64xf32>
      %108 = vector.extract_strided_slice %28 {offsets = [2, 0], sizes = [1, 16], strides = [1, 1]} : vector<8x16xf32> to vector<1x16xf32>
      %109 = vector.extract_strided_slice %42 {offsets = [2, 0], sizes = [1, 64], strides = [1, 1]} : vector<8x64xf32> to vector<1x64xf32>
      %cst_42 = arith.constant dense<0.000000e+00> : vector<16x64xf32>
      %110 = tpu.matmul %108, %109, %cst_42 {dimension_numbers = #tpu.dot_dimension_numbers<[0], [0], [1], [1], [0, 1, 1, 1], [], []>} : vector<1x16xf32>, vector<1x64xf32>, vector<16x64xf32> -> vector<16x64xf32>
      %111 = arith.mulf %107, %101 : vector<16x64xf32>
      %112 = arith.addf %111, %110 : vector<16x64xf32>
      %113 = vector.extract_strided_slice %29 {offsets = [2, 0], sizes = [1, 16], strides = [1, 1]} : vector<8x16xf32> to vector<1x16xf32>
      %cst_43 = arith.constant dense<0.000000e+00> : vector<1x64xf32>
      %114 = tpu.matmul %113, %112, %cst_43 {dimension_numbers = #tpu.dot_dimension_numbers<[1], [0], [0], [1], [0, 0, 1, 1], [], []>} : vector<1x16xf32>, vector<16x64xf32>, vector<1x64xf32> -> vector<1x64xf32>
      %115 = vector.extract_strided_slice %41 {offsets = [1, 0], sizes = [1, 64], strides = [1, 1]} : vector<8x64xf32> to vector<1x64xf32>
      %116 = vector.broadcast %115 : vector<1x64xf32> to vector<16x64xf32>
      %117 = arith.mulf %116, %4 : vector<16x64xf32>
      %118 = math.exp %117 : vector<16x64xf32>
      %119 = vector.extract_strided_slice %28 {offsets = [1, 0], sizes = [1, 16], strides = [1, 1]} : vector<8x16xf32> to vector<1x16xf32>
      %120 = vector.extract_strided_slice %42 {offsets = [1, 0], sizes = [1, 64], strides = [1, 1]} : vector<8x64xf32> to vector<1x64xf32>
      %cst_44 = arith.constant dense<0.000000e+00> : vector<16x64xf32>
      %121 = tpu.matmul %119, %120, %cst_44 {dimension_numbers = #tpu.dot_dimension_numbers<[0], [0], [1], [1], [0, 1, 1, 1], [], []>} : vector<1x16xf32>, vector<1x64xf32>, vector<16x64xf32> -> vector<16x64xf32>
      %122 = arith.mulf %118, %112 : vector<16x64xf32>
      %123 = arith.addf %122, %121 : vector<16x64xf32>
      %124 = vector.extract_strided_slice %29 {offsets = [1, 0], sizes = [1, 16], strides = [1, 1]} : vector<8x16xf32> to vector<1x16xf32>
      %cst_45 = arith.constant dense<0.000000e+00> : vector<1x64xf32>
      %125 = tpu.matmul %124, %123, %cst_45 {dimension_numbers = #tpu.dot_dimension_numbers<[1], [0], [0], [1], [0, 0, 1, 1], [], []>} : vector<1x16xf32>, vector<16x64xf32>, vector<1x64xf32> -> vector<1x64xf32>
      %126 = vector.extract_strided_slice %41 {offsets = [0, 0], sizes = [1, 64], strides = [1, 1]} : vector<8x64xf32> to vector<1x64xf32>
      %127 = vector.broadcast %126 : vector<1x64xf32> to vector<16x64xf32>
      %128 = arith.mulf %127, %4 : vector<16x64xf32>
      %129 = math.exp %128 : vector<16x64xf32>
      %130 = vector.extract_strided_slice %28 {offsets = [0, 0], sizes = [1, 16], strides = [1, 1]} : vector<8x16xf32> to vector<1x16xf32>
      %131 = vector.extract_strided_slice %42 {offsets = [0, 0], sizes = [1, 64], strides = [1, 1]} : vector<8x64xf32> to vector<1x64xf32>
      %cst_46 = arith.constant dense<0.000000e+00> : vector<16x64xf32>
      %132 = tpu.matmul %130, %131, %cst_46 {dimension_numbers = #tpu.dot_dimension_numbers<[0], [0], [1], [1], [0, 1, 1, 1], [], []>} : vector<1x16xf32>, vector<1x64xf32>, vector<16x64xf32> -> vector<16x64xf32>
      %133 = arith.mulf %129, %123 : vector<16x64xf32>
      %134 = arith.addf %133, %132 : vector<16x64xf32>
      %135 = vector.extract_strided_slice %29 {offsets = [0, 0], sizes = [1, 16], strides = [1, 1]} : vector<8x16xf32> to vector<1x16xf32>
      %cst_47 = arith.constant dense<0.000000e+00> : vector<1x64xf32>
      %136 = tpu.matmul %135, %134, %cst_47 {dimension_numbers = #tpu.dot_dimension_numbers<[1], [0], [0], [1], [0, 0, 1, 1], [], []>} : vector<1x16xf32>, vector<16x64xf32>, vector<1x64xf32> -> vector<1x64xf32>
      %137 = tpu.concatenate %136, %125, %114, %103, %92, %81, %70, %59 in 0 : vector<1x64xf32>, vector<1x64xf32>, vector<1x64xf32>, vector<1x64xf32>, vector<1x64xf32>, vector<1x64xf32>, vector<1x64xf32>, vector<1x64xf32> -> vector<8x64xf32>
      %138 = vector.broadcast %8 : vector<1x64xf32> to vector<8x64xf32>
      %139 = arith.mulf %138, %18 : vector<8x64xf32>
      %140 = arith.addf %137, %139 : vector<8x64xf32>
      %141 = arith.mulf %140, %48 : vector<8x64xf32>
      %c0_48 = arith.constant 0 : index
      %c0_49 = arith.constant 0 : index
      %142 = arith.index_cast %15 : i32 to index
      %c0_50 = arith.constant 0 : index
      %143 = vector.load %arg11[%c0_48, %c0_49, %142, %c0_50] : memref<1x1x16x64xf32, #tpu.memory_space<vmem>>, vector<1x1x8x64xf32>
      %144 = vector.shape_cast %143 : vector<1x1x8x64xf32> to vector<8x64xf32>
      %145 = vector.shape_cast %141 : vector<8x64xf32> to vector<1x1x8x64xf32>
      tpu.vector_store %arg11[%c0_48, %c0_49, %142, %c0_50], %145 {strides = array<i32>} : memref<1x1x16x64xf32, #tpu.memory_space<vmem>>, vector<1x1x8x64xf32>,
      scf.yield %134 : vector<16x64xf32>
    }
    %c2_i32_12 = arith.constant 2 : i32
    %c0_13 = arith.constant 0 : index
    %c0_14 = arith.constant 0 : index
    %12 = vector.load %arg12[%c0_13, %c0_14] : memref<16x64xf32, #tpu.memory_space<vmem>>, vector<16x64xf32>
    tpu.vector_store %arg12[%c0_13, %c0_14], %11 {strides = array<i32>} : memref<16x64xf32, #tpu.memory_space<vmem>>, vector<16x64xf32>,
    return
  }
  func.func @transform_0(%arg0: i32, %arg1: i32, %arg2: i32, %arg3: i32) -> (i32, i32, i32, i32) {
    %c0_i32 = arith.constant 0 : i32
    %0 = arith.subi %c0_i32, %arg3 : i32
    %c0_i32_0 = arith.constant 0 : i32
    return %arg0, %arg1, %0, %arg2 : i32, i32, i32, i32
  }
  func.func @transform_1(%arg0: i32, %arg1: i32, %arg2: i32, %arg3: i32) -> (i32, i32, i32, i32) {
    %c0_i32 = arith.constant 0 : i32
    %0 = arith.subi %c0_i32, %arg3 : i32
    %c0_i32_0 = arith.constant 0 : i32
    return %arg0, %arg1, %0, %arg2 : i32, i32, i32, i32
  }
  func.func @transform_2(%arg0: i32, %arg1: i32, %arg2: i32, %arg3: i32) -> (i32, i32, i32, i32) {
    %c0_i32 = arith.constant 0 : i32
    %0 = arith.subi %c0_i32, %arg3 : i32
    %c0_i32_0 = arith.constant 0 : i32
    %c0_i32_1 = arith.constant 0 : i32
    return %arg0, %arg1, %0, %c0_i32_0 : i32, i32, i32, i32
  }
  func.func @transform_3(%arg0: i32, %arg1: i32, %arg2: i32, %arg3: i32) -> (i32, i32, i32, i32) {
    %c0_i32 = arith.constant 0 : i32
    %0 = arith.subi %c0_i32, %arg3 : i32
    %c0_i32_0 = arith.constant 0 : i32
    return %arg0, %arg1, %0, %arg2 : i32, i32, i32, i32
  }
  func.func @transform_4(%arg0: i32, %arg1: i32, %arg2: i32, %arg3: i32) -> (i32, i32, i32) {
    %c0_i32 = arith.constant 0 : i32
    %c0_i32_0 = arith.constant 0 : i32
    %c0_i32_1 = arith.constant 0 : i32
    return %c0_i32, %c0_i32_0, %arg2 : i32, i32, i32
  }
  func.func @transform_5(%arg0: i32, %arg1: i32, %arg2: i32, %arg3: i32) -> (i32, i32, i32) {
    %c0_i32 = arith.constant 0 : i32
    %c0_i32_0 = arith.constant 0 : i32
    return %arg0, %c0_i32, %arg2 : i32, i32, i32
  }
  func.func @transform_6(%arg0: i32, %arg1: i32, %arg2: i32, %arg3: i32) -> (i32, i32, i32) {
    %c0_i32 = arith.constant 0 : i32
    %c0_i32_0 = arith.constant 0 : i32
    return %arg0, %c0_i32, %arg2 : i32, i32, i32
  }
  func.func @transform_7(%arg0: i32, %arg1: i32, %arg2: i32, %arg3: i32) -> (i32, i32, i32, i32) {
    %c0_i32 = arith.constant 0 : i32
    %0 = arith.subi %c0_i32, %arg3 : i32
    %c0_i32_0 = arith.constant 0 : i32
    return %arg0, %arg1, %0, %arg2 : i32, i32, i32, i32
  }
}

module attributes {stable_mosaic.version = 11 : i64} {
  func.func @kernel(%arg0: i32, %arg1: i32, %arg2: i32, %arg3: i32, %arg4: memref<1x1x16x64xf32, #tpu.memory_space<vmem>>, %arg5: memref<1x1x16x64xf32, #tpu.memory_space<vmem>>, %arg6: memref<1x1x16x32xf32, #tpu.memory_space<vmem>>, %arg7: memref<1x1x16x64xf32, #tpu.memory_space<vmem>>, %arg8: memref<1x16x64xf32, #tpu.memory_space<vmem>>, %arg9: memref<1x1x64xf32, #tpu.memory_space<vmem>>, %arg10: memref<1x1x64xf32, #tpu.memory_space<vmem>>, %arg11: memref<1x1x16x64xf32, #tpu.memory_space<vmem>>, %arg12: memref<16x64xf32, #tpu.memory_space<vmem>>) attributes {dimension_semantics = [#tpu.dimension_semantics<parallel>, #tpu.dimension_semantics<parallel>, #tpu.dimension_semantics<parallel>, #tpu.dimension_semantics<arbitrary>], iteration_bounds = array<i64: 2, 2, 1, 1>, scalar_prefetch = 0 : i64, scratch_operands = 1 : i64, tpu.core_type = #tpu.core_type<tc>, window_params = [{transform_indices = @transform_0, window_bounds = array<i64: 1, 1, 16, 64>}, {transform_indices = @transform_1, window_bounds = array<i64: 1, 1, 16, 64>}, {transform_indices = @transform_2, window_bounds = array<i64: 1, 1, 16, 32>}, {transform_indices = @transform_3, window_bounds = array<i64: 1, 1, 16, 64>}, {transform_indices = @transform_4, window_bounds = array<i64: 1, 16, 64>}, {transform_indices = @transform_5, window_bounds = array<i64: 1, 1, 64>}, {transform_indices = @transform_6, window_bounds = array<i64: 1, 1, 64>}, {transform_indices = @transform_7, window_bounds = array<i64: 1, 1, 16, 64>}]} {
    %c0_i32 = arith.constant 0 : i32
    %0 = arith.cmpi eq, %arg3, %c0_i32 : i32
    %1 = arith.extui %0 : i1 to i32
    %c0_i32_0 = arith.constant 0 : i32
    %2 = arith.cmpi ne, %1, %c0_i32_0 : i32
    scf.if %2 {
      %cst = arith.constant 0.000000e+00 : f32
      %13 = vector.broadcast %cst : f32 to vector<16x64xf32>
      %c0_15 = arith.constant 0 : index
      %c0_16 = arith.constant 0 : index
      %14 = vector.load %arg12[%c0_15, %c0_16] : memref<16x64xf32, #tpu.memory_space<vmem>>, vector<16x64xf32>
      tpu.vector_store %arg12[%c0_15, %c0_16], %13 {strides = array<i32>} : memref<16x64xf32, #tpu.memory_space<vmem>>, vector<16x64xf32>,
    } else {
    }
    %c0 = arith.constant 0 : index
    %c0_1 = arith.constant 0 : index
    %c0_2 = arith.constant 0 : index
    %3 = vector.load %arg8[%c0, %c0_1, %c0_2] : memref<1x16x64xf32, #tpu.memory_space<vmem>>, vector<1x16x64xf32>
    %4 = vector.shape_cast %3 : vector<1x16x64xf32> to vector<16x64xf32>
    %c0_3 = arith.constant 0 : index
    %c0_4 = arith.constant 0 : index
    %c0_5 = arith.constant 0 : index
    %5 = vector.load %arg9[%c0_3, %c0_4, %c0_5] : memref<1x1x64xf32, #tpu.memory_space<vmem>>, vector<1x1x64xf32>
    %6 = vector.shape_cast %5 : vector<1x1x64xf32> to vector<1x64xf32>
    %c0_6 = arith.constant 0 : index
    %c0_7 = arith.constant 0 : index
    %c0_8 = arith.constant 0 : index
    %7 = vector.load %arg10[%c0_6, %c0_7, %c0_8] : memref<1x1x64xf32, #tpu.memory_space<vmem>>, vector<1x1x64xf32>
    %8 = vector.shape_cast %7 : vector<1x1x64xf32> to vector<1x64xf32>
    %c0_9 = arith.constant 0 : index
    %c0_10 = arith.constant 0 : index
    %9 = vector.load %arg12[%c0_9, %c0_10] : memref<16x64xf32, #tpu.memory_space<vmem>>, vector<16x64xf32>
    %c0_i32_11 = arith.constant 0 : i32
    %c2_i32 = arith.constant 2 : i32
    %10 = arith.addi %c0_i32_11, %c2_i32 : i32
    %c1_i32 = arith.constant 1 : i32
    %11 = scf.for %arg13 = %c0_i32_11 to %10 step %c1_i32 iter_args(%arg14 = %9) -> (vector<16x64xf32>)  : i32 {
      %c8_i32 = arith.constant 8 : i32
      %13 = arith.muli %arg13, %c8_i32 : i32
      %14 = tpu.assume_multiple %13, 8 : i32
      %c0_15 = arith.constant 0 : index
      %c0_16 = arith.constant 0 : index
      %15 = arith.index_cast %14 : i32 to index
      %c0_17 = arith.constant 0 : index
      %16 = vector.load %arg4[%c0_15, %c0_16, %15, %c0_17] : memref<1x1x16x64xf32, #tpu.memory_space<vmem>>, vector<1x1x8x64xf32>
      %17 = vector.shape_cast %16 : vector<1x1x8x64xf32> to vector<8x64xf32>
      %c0_18 = arith.constant 0 : index
      %c0_19 = arith.constant 0 : index
      %18 = arith.index_cast %14 : i32 to index
      %c0_20 = arith.constant 0 : index
      %19 = vector.load %arg5[%c0_18, %c0_19, %18, %c0_20] : memref<1x1x16x64xf32, #tpu.memory_space<vmem>>, vector<1x1x8x64xf32>
      %20 = vector.shape_cast %19 : vector<1x1x8x64xf32> to vector<8x64xf32>
      %c0_21 = arith.constant 0 : index
      %c0_22 = arith.constant 0 : index
      %21 = arith.index_cast %14 : i32 to index
      %c0_23 = arith.constant 0 : index
      %22 = vector.load %arg7[%c0_21, %c0_22, %21, %c0_23] : memref<1x1x16x64xf32, #tpu.memory_space<vmem>>, vector<1x1x8x64xf32>
      %23 = vector.shape_cast %22 : vector<1x1x8x64xf32> to vector<8x64xf32>
      %c0_24 = arith.constant 0 : index
      %c0_25 = arith.constant 0 : index
      %24 = arith.index_cast %14 : i32 to index
      %c0_26 = arith.constant 0 : index
      %25 = vector.load %arg6[%c0_24, %c0_25, %24, %c0_26] : memref<1x1x16x32xf32, #tpu.memory_space<vmem>>, vector<1x1x8x32xf32>
      %26 = vector.shape_cast %25 : vector<1x1x8x32xf32> to vector<8x32xf32>
      %27 = vector.extract_strided_slice %26 {offsets = [0, 0], sizes = [8, 16], strides = [1, 1]} : vector<8x32xf32> to vector<8x16xf32>
      %28 = vector.extract_strided_slice %26 {offsets = [0, 16], sizes = [8, 16], strides = [1, 1]} : vector<8x32xf32> to vector<8x16xf32>
      %29 = vector.broadcast %6 : vector<1x64xf32> to vector<8x64xf32>
      %30 = arith.addf %20, %29 : vector<8x64xf32>
      %cst = arith.constant 0.000000e+00 : f32
      %31 = vector.broadcast %cst : f32 to vector<8x64xf32>
      %32 = arith.maximumf %30, %31 : vector<8x64xf32>
      %33 = math.absf %30 : vector<8x64xf32>
      %cst_27 = arith.constant 0.000000e+00 : f32
      %34 = vector.broadcast %cst_27 : f32 to vector<8x64xf32>
      %35 = arith.subf %34, %33 : vector<8x64xf32>
      %36 = math.exp %35 : vector<8x64xf32>
      %cst_28 = arith.constant 1.000000e+00 : f32
      %37 = vector.broadcast %cst_28 : f32 to vector<8x64xf32>
      %38 = arith.addf %37, %36 : vector<8x64xf32>
      %39 = math.log %38 : vector<8x64xf32>
      %40 = arith.addf %32, %39 : vector<8x64xf32>
      %41 = arith.mulf %40, %17 : vector<8x64xf32>
      %cst_29 = arith.constant 0.000000e+00 : f32
      %42 = vector.broadcast %cst_29 : f32 to vector<8x64xf32>
      %43 = arith.subf %42, %23 : vector<8x64xf32>
      %44 = math.exp %43 : vector<8x64xf32>
      %cst_30 = arith.constant 1.000000e+00 : f32
      %45 = vector.broadcast %cst_30 : f32 to vector<8x64xf32>
      %46 = arith.addf %45, %44 : vector<8x64xf32>
      %47 = arith.divf %23, %46 : vector<8x64xf32>
      %48 = vector.extract_strided_slice %40 {offsets = [0, 0], sizes = [1, 64], strides = [1, 1]} : vector<8x64xf32> to vector<1x64xf32>
      %49 = vector.broadcast %48 : vector<1x64xf32> to vector<16x64xf32>
      %50 = arith.mulf %49, %4 : vector<16x64xf32>
      %51 = math.exp %50 : vector<16x64xf32>
      %52 = vector.extract_strided_slice %27 {offsets = [0, 0], sizes = [1, 16], strides = [1, 1]} : vector<8x16xf32> to vector<1x16xf32>
      %53 = vector.extract_strided_slice %41 {offsets = [0, 0], sizes = [1, 64], strides = [1, 1]} : vector<8x64xf32> to vector<1x64xf32>
      %cst_31 = arith.constant dense<0.000000e+00> : vector<16x64xf32>
      %54 = tpu.matmul %52, %53, %cst_31 {dimension_numbers = #tpu.dot_dimension_numbers<[0], [0], [1], [1], [0, 1, 1, 1], [], []>} : vector<1x16xf32>, vector<1x64xf32>, vector<16x64xf32> -> vector<16x64xf32>
      %55 = arith.mulf %51, %arg14 : vector<16x64xf32>
      %56 = arith.addf %55, %54 : vector<16x64xf32>
      %57 = vector.extract_strided_slice %28 {offsets = [0, 0], sizes = [1, 16], strides = [1, 1]} : vector<8x16xf32> to vector<1x16xf32>
      %cst_32 = arith.constant dense<0.000000e+00> : vector<1x64xf32>
      %58 = tpu.matmul %57, %56, %cst_32 {dimension_numbers = #tpu.dot_dimension_numbers<[1], [0], [0], [1], [0, 0, 1, 1], [], []>} : vector<1x16xf32>, vector<16x64xf32>, vector<1x64xf32> -> vector<1x64xf32>
      %59 = vector.extract_strided_slice %40 {offsets = [1, 0], sizes = [1, 64], strides = [1, 1]} : vector<8x64xf32> to vector<1x64xf32>
      %60 = vector.broadcast %59 : vector<1x64xf32> to vector<16x64xf32>
      %61 = arith.mulf %60, %4 : vector<16x64xf32>
      %62 = math.exp %61 : vector<16x64xf32>
      %63 = vector.extract_strided_slice %27 {offsets = [1, 0], sizes = [1, 16], strides = [1, 1]} : vector<8x16xf32> to vector<1x16xf32>
      %64 = vector.extract_strided_slice %41 {offsets = [1, 0], sizes = [1, 64], strides = [1, 1]} : vector<8x64xf32> to vector<1x64xf32>
      %cst_33 = arith.constant dense<0.000000e+00> : vector<16x64xf32>
      %65 = tpu.matmul %63, %64, %cst_33 {dimension_numbers = #tpu.dot_dimension_numbers<[0], [0], [1], [1], [0, 1, 1, 1], [], []>} : vector<1x16xf32>, vector<1x64xf32>, vector<16x64xf32> -> vector<16x64xf32>
      %66 = arith.mulf %62, %56 : vector<16x64xf32>
      %67 = arith.addf %66, %65 : vector<16x64xf32>
      %68 = vector.extract_strided_slice %28 {offsets = [1, 0], sizes = [1, 16], strides = [1, 1]} : vector<8x16xf32> to vector<1x16xf32>
      %cst_34 = arith.constant dense<0.000000e+00> : vector<1x64xf32>
      %69 = tpu.matmul %68, %67, %cst_34 {dimension_numbers = #tpu.dot_dimension_numbers<[1], [0], [0], [1], [0, 0, 1, 1], [], []>} : vector<1x16xf32>, vector<16x64xf32>, vector<1x64xf32> -> vector<1x64xf32>
      %70 = vector.extract_strided_slice %40 {offsets = [2, 0], sizes = [1, 64], strides = [1, 1]} : vector<8x64xf32> to vector<1x64xf32>
      %71 = vector.broadcast %70 : vector<1x64xf32> to vector<16x64xf32>
      %72 = arith.mulf %71, %4 : vector<16x64xf32>
      %73 = math.exp %72 : vector<16x64xf32>
      %74 = vector.extract_strided_slice %27 {offsets = [2, 0], sizes = [1, 16], strides = [1, 1]} : vector<8x16xf32> to vector<1x16xf32>
      %75 = vector.extract_strided_slice %41 {offsets = [2, 0], sizes = [1, 64], strides = [1, 1]} : vector<8x64xf32> to vector<1x64xf32>
      %cst_35 = arith.constant dense<0.000000e+00> : vector<16x64xf32>
      %76 = tpu.matmul %74, %75, %cst_35 {dimension_numbers = #tpu.dot_dimension_numbers<[0], [0], [1], [1], [0, 1, 1, 1], [], []>} : vector<1x16xf32>, vector<1x64xf32>, vector<16x64xf32> -> vector<16x64xf32>
      %77 = arith.mulf %73, %67 : vector<16x64xf32>
      %78 = arith.addf %77, %76 : vector<16x64xf32>
      %79 = vector.extract_strided_slice %28 {offsets = [2, 0], sizes = [1, 16], strides = [1, 1]} : vector<8x16xf32> to vector<1x16xf32>
      %cst_36 = arith.constant dense<0.000000e+00> : vector<1x64xf32>
      %80 = tpu.matmul %79, %78, %cst_36 {dimension_numbers = #tpu.dot_dimension_numbers<[1], [0], [0], [1], [0, 0, 1, 1], [], []>} : vector<1x16xf32>, vector<16x64xf32>, vector<1x64xf32> -> vector<1x64xf32>
      %81 = vector.extract_strided_slice %40 {offsets = [3, 0], sizes = [1, 64], strides = [1, 1]} : vector<8x64xf32> to vector<1x64xf32>
      %82 = vector.broadcast %81 : vector<1x64xf32> to vector<16x64xf32>
      %83 = arith.mulf %82, %4 : vector<16x64xf32>
      %84 = math.exp %83 : vector<16x64xf32>
      %85 = vector.extract_strided_slice %27 {offsets = [3, 0], sizes = [1, 16], strides = [1, 1]} : vector<8x16xf32> to vector<1x16xf32>
      %86 = vector.extract_strided_slice %41 {offsets = [3, 0], sizes = [1, 64], strides = [1, 1]} : vector<8x64xf32> to vector<1x64xf32>
      %cst_37 = arith.constant dense<0.000000e+00> : vector<16x64xf32>
      %87 = tpu.matmul %85, %86, %cst_37 {dimension_numbers = #tpu.dot_dimension_numbers<[0], [0], [1], [1], [0, 1, 1, 1], [], []>} : vector<1x16xf32>, vector<1x64xf32>, vector<16x64xf32> -> vector<16x64xf32>
      %88 = arith.mulf %84, %78 : vector<16x64xf32>
      %89 = arith.addf %88, %87 : vector<16x64xf32>
      %90 = vector.extract_strided_slice %28 {offsets = [3, 0], sizes = [1, 16], strides = [1, 1]} : vector<8x16xf32> to vector<1x16xf32>
      %cst_38 = arith.constant dense<0.000000e+00> : vector<1x64xf32>
      %91 = tpu.matmul %90, %89, %cst_38 {dimension_numbers = #tpu.dot_dimension_numbers<[1], [0], [0], [1], [0, 0, 1, 1], [], []>} : vector<1x16xf32>, vector<16x64xf32>, vector<1x64xf32> -> vector<1x64xf32>
      %92 = vector.extract_strided_slice %40 {offsets = [4, 0], sizes = [1, 64], strides = [1, 1]} : vector<8x64xf32> to vector<1x64xf32>
      %93 = vector.broadcast %92 : vector<1x64xf32> to vector<16x64xf32>
      %94 = arith.mulf %93, %4 : vector<16x64xf32>
      %95 = math.exp %94 : vector<16x64xf32>
      %96 = vector.extract_strided_slice %27 {offsets = [4, 0], sizes = [1, 16], strides = [1, 1]} : vector<8x16xf32> to vector<1x16xf32>
      %97 = vector.extract_strided_slice %41 {offsets = [4, 0], sizes = [1, 64], strides = [1, 1]} : vector<8x64xf32> to vector<1x64xf32>
      %cst_39 = arith.constant dense<0.000000e+00> : vector<16x64xf32>
      %98 = tpu.matmul %96, %97, %cst_39 {dimension_numbers = #tpu.dot_dimension_numbers<[0], [0], [1], [1], [0, 1, 1, 1], [], []>} : vector<1x16xf32>, vector<1x64xf32>, vector<16x64xf32> -> vector<16x64xf32>
      %99 = arith.mulf %95, %89 : vector<16x64xf32>
      %100 = arith.addf %99, %98 : vector<16x64xf32>
      %101 = vector.extract_strided_slice %28 {offsets = [4, 0], sizes = [1, 16], strides = [1, 1]} : vector<8x16xf32> to vector<1x16xf32>
      %cst_40 = arith.constant dense<0.000000e+00> : vector<1x64xf32>
      %102 = tpu.matmul %101, %100, %cst_40 {dimension_numbers = #tpu.dot_dimension_numbers<[1], [0], [0], [1], [0, 0, 1, 1], [], []>} : vector<1x16xf32>, vector<16x64xf32>, vector<1x64xf32> -> vector<1x64xf32>
      %103 = vector.extract_strided_slice %40 {offsets = [5, 0], sizes = [1, 64], strides = [1, 1]} : vector<8x64xf32> to vector<1x64xf32>
      %104 = vector.broadcast %103 : vector<1x64xf32> to vector<16x64xf32>
      %105 = arith.mulf %104, %4 : vector<16x64xf32>
      %106 = math.exp %105 : vector<16x64xf32>
      %107 = vector.extract_strided_slice %27 {offsets = [5, 0], sizes = [1, 16], strides = [1, 1]} : vector<8x16xf32> to vector<1x16xf32>
      %108 = vector.extract_strided_slice %41 {offsets = [5, 0], sizes = [1, 64], strides = [1, 1]} : vector<8x64xf32> to vector<1x64xf32>
      %cst_41 = arith.constant dense<0.000000e+00> : vector<16x64xf32>
      %109 = tpu.matmul %107, %108, %cst_41 {dimension_numbers = #tpu.dot_dimension_numbers<[0], [0], [1], [1], [0, 1, 1, 1], [], []>} : vector<1x16xf32>, vector<1x64xf32>, vector<16x64xf32> -> vector<16x64xf32>
      %110 = arith.mulf %106, %100 : vector<16x64xf32>
      %111 = arith.addf %110, %109 : vector<16x64xf32>
      %112 = vector.extract_strided_slice %28 {offsets = [5, 0], sizes = [1, 16], strides = [1, 1]} : vector<8x16xf32> to vector<1x16xf32>
      %cst_42 = arith.constant dense<0.000000e+00> : vector<1x64xf32>
      %113 = tpu.matmul %112, %111, %cst_42 {dimension_numbers = #tpu.dot_dimension_numbers<[1], [0], [0], [1], [0, 0, 1, 1], [], []>} : vector<1x16xf32>, vector<16x64xf32>, vector<1x64xf32> -> vector<1x64xf32>
      %114 = vector.extract_strided_slice %40 {offsets = [6, 0], sizes = [1, 64], strides = [1, 1]} : vector<8x64xf32> to vector<1x64xf32>
      %115 = vector.broadcast %114 : vector<1x64xf32> to vector<16x64xf32>
      %116 = arith.mulf %115, %4 : vector<16x64xf32>
      %117 = math.exp %116 : vector<16x64xf32>
      %118 = vector.extract_strided_slice %27 {offsets = [6, 0], sizes = [1, 16], strides = [1, 1]} : vector<8x16xf32> to vector<1x16xf32>
      %119 = vector.extract_strided_slice %41 {offsets = [6, 0], sizes = [1, 64], strides = [1, 1]} : vector<8x64xf32> to vector<1x64xf32>
      %cst_43 = arith.constant dense<0.000000e+00> : vector<16x64xf32>
      %120 = tpu.matmul %118, %119, %cst_43 {dimension_numbers = #tpu.dot_dimension_numbers<[0], [0], [1], [1], [0, 1, 1, 1], [], []>} : vector<1x16xf32>, vector<1x64xf32>, vector<16x64xf32> -> vector<16x64xf32>
      %121 = arith.mulf %117, %111 : vector<16x64xf32>
      %122 = arith.addf %121, %120 : vector<16x64xf32>
      %123 = vector.extract_strided_slice %28 {offsets = [6, 0], sizes = [1, 16], strides = [1, 1]} : vector<8x16xf32> to vector<1x16xf32>
      %cst_44 = arith.constant dense<0.000000e+00> : vector<1x64xf32>
      %124 = tpu.matmul %123, %122, %cst_44 {dimension_numbers = #tpu.dot_dimension_numbers<[1], [0], [0], [1], [0, 0, 1, 1], [], []>} : vector<1x16xf32>, vector<16x64xf32>, vector<1x64xf32> -> vector<1x64xf32>
      %125 = vector.extract_strided_slice %40 {offsets = [7, 0], sizes = [1, 64], strides = [1, 1]} : vector<8x64xf32> to vector<1x64xf32>
      %126 = vector.broadcast %125 : vector<1x64xf32> to vector<16x64xf32>
      %127 = arith.mulf %126, %4 : vector<16x64xf32>
      %128 = math.exp %127 : vector<16x64xf32>
      %129 = vector.extract_strided_slice %27 {offsets = [7, 0], sizes = [1, 16], strides = [1, 1]} : vector<8x16xf32> to vector<1x16xf32>
      %130 = vector.extract_strided_slice %41 {offsets = [7, 0], sizes = [1, 64], strides = [1, 1]} : vector<8x64xf32> to vector<1x64xf32>
      %cst_45 = arith.constant dense<0.000000e+00> : vector<16x64xf32>
      %131 = tpu.matmul %129, %130, %cst_45 {dimension_numbers = #tpu.dot_dimension_numbers<[0], [0], [1], [1], [0, 1, 1, 1], [], []>} : vector<1x16xf32>, vector<1x64xf32>, vector<16x64xf32> -> vector<16x64xf32>
      %132 = arith.mulf %128, %122 : vector<16x64xf32>
      %133 = arith.addf %132, %131 : vector<16x64xf32>
      %134 = vector.extract_strided_slice %28 {offsets = [7, 0], sizes = [1, 16], strides = [1, 1]} : vector<8x16xf32> to vector<1x16xf32>
      %cst_46 = arith.constant dense<0.000000e+00> : vector<1x64xf32>
      %135 = tpu.matmul %134, %133, %cst_46 {dimension_numbers = #tpu.dot_dimension_numbers<[1], [0], [0], [1], [0, 0, 1, 1], [], []>} : vector<1x16xf32>, vector<16x64xf32>, vector<1x64xf32> -> vector<1x64xf32>
      %136 = tpu.concatenate %58, %69, %80, %91, %102, %113, %124, %135 in 0 : vector<1x64xf32>, vector<1x64xf32>, vector<1x64xf32>, vector<1x64xf32>, vector<1x64xf32>, vector<1x64xf32>, vector<1x64xf32>, vector<1x64xf32> -> vector<8x64xf32>
      %137 = vector.broadcast %8 : vector<1x64xf32> to vector<8x64xf32>
      %138 = arith.mulf %137, %17 : vector<8x64xf32>
      %139 = arith.addf %136, %138 : vector<8x64xf32>
      %140 = arith.mulf %139, %47 : vector<8x64xf32>
      %c0_47 = arith.constant 0 : index
      %c0_48 = arith.constant 0 : index
      %141 = arith.index_cast %14 : i32 to index
      %c0_49 = arith.constant 0 : index
      %142 = vector.load %arg11[%c0_47, %c0_48, %141, %c0_49] : memref<1x1x16x64xf32, #tpu.memory_space<vmem>>, vector<1x1x8x64xf32>
      %143 = vector.shape_cast %142 : vector<1x1x8x64xf32> to vector<8x64xf32>
      %144 = vector.shape_cast %140 : vector<8x64xf32> to vector<1x1x8x64xf32>
      tpu.vector_store %arg11[%c0_47, %c0_48, %141, %c0_49], %144 {strides = array<i32>} : memref<1x1x16x64xf32, #tpu.memory_space<vmem>>, vector<1x1x8x64xf32>,
      scf.yield %133 : vector<16x64xf32>
    }
    %c2_i32_12 = arith.constant 2 : i32
    %c0_13 = arith.constant 0 : index
    %c0_14 = arith.constant 0 : index
    %12 = vector.load %arg12[%c0_13, %c0_14] : memref<16x64xf32, #tpu.memory_space<vmem>>, vector<16x64xf32>
    tpu.vector_store %arg12[%c0_13, %c0_14], %11 {strides = array<i32>} : memref<16x64xf32, #tpu.memory_space<vmem>>, vector<16x64xf32>,
    return
  }
  func.func @transform_0(%arg0: i32, %arg1: i32, %arg2: i32, %arg3: i32) -> (i32, i32, i32, i32) {
    %c0_i32 = arith.constant 0 : i32
    return %arg0, %arg1, %arg3, %arg2 : i32, i32, i32, i32
  }
  func.func @transform_1(%arg0: i32, %arg1: i32, %arg2: i32, %arg3: i32) -> (i32, i32, i32, i32) {
    %c0_i32 = arith.constant 0 : i32
    return %arg0, %arg1, %arg3, %arg2 : i32, i32, i32, i32
  }
  func.func @transform_2(%arg0: i32, %arg1: i32, %arg2: i32, %arg3: i32) -> (i32, i32, i32, i32) {
    %c0_i32 = arith.constant 0 : i32
    %c0_i32_0 = arith.constant 0 : i32
    return %arg0, %arg1, %arg3, %c0_i32 : i32, i32, i32, i32
  }
  func.func @transform_3(%arg0: i32, %arg1: i32, %arg2: i32, %arg3: i32) -> (i32, i32, i32, i32) {
    %c0_i32 = arith.constant 0 : i32
    return %arg0, %arg1, %arg3, %arg2 : i32, i32, i32, i32
  }
  func.func @transform_4(%arg0: i32, %arg1: i32, %arg2: i32, %arg3: i32) -> (i32, i32, i32) {
    %c0_i32 = arith.constant 0 : i32
    %c0_i32_0 = arith.constant 0 : i32
    %c0_i32_1 = arith.constant 0 : i32
    return %c0_i32, %c0_i32_0, %arg2 : i32, i32, i32
  }
  func.func @transform_5(%arg0: i32, %arg1: i32, %arg2: i32, %arg3: i32) -> (i32, i32, i32) {
    %c0_i32 = arith.constant 0 : i32
    %c0_i32_0 = arith.constant 0 : i32
    return %arg0, %c0_i32, %arg2 : i32, i32, i32
  }
  func.func @transform_6(%arg0: i32, %arg1: i32, %arg2: i32, %arg3: i32) -> (i32, i32, i32) {
    %c0_i32 = arith.constant 0 : i32
    %c0_i32_0 = arith.constant 0 : i32
    return %arg0, %c0_i32, %arg2 : i32, i32, i32
  }
  func.func @transform_7(%arg0: i32, %arg1: i32, %arg2: i32, %arg3: i32) -> (i32, i32, i32, i32) {
    %c0_i32 = arith.constant 0 : i32
    return %arg0, %arg1, %arg3, %arg2 : i32, i32, i32, i32
  }
}

module attributes {stable_mosaic.version = 11 : i64} {
  func.func @kernel(%arg0: i32, %arg1: i32, %arg2: i32, %arg3: memref<1x1x22x64xf32, #tpu.memory_space<vmem>>, %arg4: memref<1x4x64xf32, #tpu.memory_space<vmem>>, %arg5: memref<1x1x64xf32, #tpu.memory_space<vmem>>, %arg6: memref<1x1x16x64xf32, #tpu.memory_space<vmem>>) attributes {dimension_semantics = [#tpu.dimension_semantics<parallel>, #tpu.dimension_semantics<parallel>, #tpu.dimension_semantics<parallel>], iteration_bounds = array<i64: 2, 2, 1>, scalar_prefetch = 0 : i64, scratch_operands = 0 : i64, tpu.core_type = #tpu.core_type<tc>, window_params = [{transform_indices = @transform_0, window_bounds = array<i64: 1, 1, 22, 64>}, {transform_indices = @transform_1, window_bounds = array<i64: 1, 4, 64>}, {transform_indices = @transform_2, window_bounds = array<i64: 1, 1, 64>}, {transform_indices = @transform_3, window_bounds = array<i64: 1, 1, 16, 64>}]} {
    %c0 = arith.constant 0 : index
    %c0_0 = arith.constant 0 : index
    %c0_1 = arith.constant 0 : index
    %c0_2 = arith.constant 0 : index
    %0 = vector.load %arg3[%c0, %c0_0, %c0_1, %c0_2] : memref<1x1x22x64xf32, #tpu.memory_space<vmem>>, vector<1x1x22x64xf32>
    %1 = vector.shape_cast %0 : vector<1x1x22x64xf32> to vector<22x64xf32>
    %2 = vector.extract_strided_slice %1 {offsets = [0, 0], sizes = [16, 64], strides = [1, 1]} : vector<22x64xf32> to vector<16x64xf32>
    %c0_3 = arith.constant 0 : index
    %c0_4 = arith.constant 0 : index
    %c0_5 = arith.constant 0 : index
    %3 = vector.load %arg4[%c0_3, %c0_4, %c0_5] : memref<1x4x64xf32, #tpu.memory_space<vmem>>, vector<1x1x64xf32>
    %4 = vector.shape_cast %3 : vector<1x1x64xf32> to vector<1x64xf32>
    %5 = vector.broadcast %4 : vector<1x64xf32> to vector<16x64xf32>
    %6 = arith.mulf %2, %5 : vector<16x64xf32>
    %7 = vector.extract_strided_slice %1 {offsets = [1, 0], sizes = [16, 64], strides = [1, 1]} : vector<22x64xf32> to vector<16x64xf32>
    %c0_6 = arith.constant 0 : index
    %c1 = arith.constant 1 : index
    %c0_7 = arith.constant 0 : index
    %8 = vector.load %arg4[%c0_6, %c1, %c0_7] : memref<1x4x64xf32, #tpu.memory_space<vmem>>, vector<1x1x64xf32>
    %9 = vector.shape_cast %8 : vector<1x1x64xf32> to vector<1x64xf32>
    %10 = vector.broadcast %9 : vector<1x64xf32> to vector<16x64xf32>
    %11 = arith.mulf %7, %10 : vector<16x64xf32>
    %12 = arith.addf %6, %11 : vector<16x64xf32>
    %13 = vector.extract_strided_slice %1 {offsets = [2, 0], sizes = [16, 64], strides = [1, 1]} : vector<22x64xf32> to vector<16x64xf32>
    %c0_8 = arith.constant 0 : index
    %c2 = arith.constant 2 : index
    %c0_9 = arith.constant 0 : index
    %14 = vector.load %arg4[%c0_8, %c2, %c0_9] : memref<1x4x64xf32, #tpu.memory_space<vmem>>, vector<1x1x64xf32>
    %15 = vector.shape_cast %14 : vector<1x1x64xf32> to vector<1x64xf32>
    %16 = vector.broadcast %15 : vector<1x64xf32> to vector<16x64xf32>
    %17 = arith.mulf %13, %16 : vector<16x64xf32>
    %18 = arith.addf %12, %17 : vector<16x64xf32>
    %19 = vector.extract_strided_slice %1 {offsets = [3, 0], sizes = [16, 64], strides = [1, 1]} : vector<22x64xf32> to vector<16x64xf32>
    %c0_10 = arith.constant 0 : index
    %c3 = arith.constant 3 : index
    %c0_11 = arith.constant 0 : index
    %20 = vector.load %arg4[%c0_10, %c3, %c0_11] : memref<1x4x64xf32, #tpu.memory_space<vmem>>, vector<1x1x64xf32>
    %21 = vector.shape_cast %20 : vector<1x1x64xf32> to vector<1x64xf32>
    %22 = vector.broadcast %21 : vector<1x64xf32> to vector<16x64xf32>
    %23 = arith.mulf %19, %22 : vector<16x64xf32>
    %24 = arith.addf %18, %23 : vector<16x64xf32>
    %c0_12 = arith.constant 0 : index
    %c0_13 = arith.constant 0 : index
    %c0_14 = arith.constant 0 : index
    %25 = vector.load %arg5[%c0_12, %c0_13, %c0_14] : memref<1x1x64xf32, #tpu.memory_space<vmem>>, vector<1x1x64xf32>
    %26 = vector.shape_cast %25 : vector<1x1x64xf32> to vector<1x64xf32>
    %27 = vector.broadcast %26 : vector<1x64xf32> to vector<16x64xf32>
    %28 = arith.addf %24, %27 : vector<16x64xf32>
    %cst = arith.constant 0.000000e+00 : f32
    %29 = vector.broadcast %cst : f32 to vector<16x64xf32>
    %30 = arith.subf %29, %28 : vector<16x64xf32>
    %31 = math.exp %30 : vector<16x64xf32>
    %cst_15 = arith.constant 1.000000e+00 : f32
    %32 = vector.broadcast %cst_15 : f32 to vector<16x64xf32>
    %33 = arith.addf %32, %31 : vector<16x64xf32>
    %34 = arith.divf %28, %33 : vector<16x64xf32>
    %c0_16 = arith.constant 0 : index
    %c0_17 = arith.constant 0 : index
    %c0_18 = arith.constant 0 : index
    %c0_19 = arith.constant 0 : index
    %35 = vector.load %arg6[%c0_16, %c0_17, %c0_18, %c0_19] : memref<1x1x16x64xf32, #tpu.memory_space<vmem>>, vector<1x1x16x64xf32>
    %36 = vector.shape_cast %35 : vector<1x1x16x64xf32> to vector<16x64xf32>
    %37 = vector.shape_cast %34 : vector<16x64xf32> to vector<1x1x16x64xf32>
    tpu.vector_store %arg6[%c0_16, %c0_17, %c0_18, %c0_19], %37 {strides = array<i32>} : memref<1x1x16x64xf32, #tpu.memory_space<vmem>>, vector<1x1x16x64xf32>,
    return
  }
  func.func @transform_0(%arg0: i32, %arg1: i32, %arg2: i32) -> (i32, i32, i32, i32) {
    %c0_i32 = arith.constant 0 : i32
    %c0_i32_0 = arith.constant 0 : i32
    return %arg0, %arg1, %c0_i32, %arg2 : i32, i32, i32, i32
  }
  func.func @transform_1(%arg0: i32, %arg1: i32, %arg2: i32) -> (i32, i32, i32) {
    %c0_i32 = arith.constant 0 : i32
    %c0_i32_0 = arith.constant 0 : i32
    return %arg0, %c0_i32, %arg2 : i32, i32, i32
  }
  func.func @transform_2(%arg0: i32, %arg1: i32, %arg2: i32) -> (i32, i32, i32) {
    %c0_i32 = arith.constant 0 : i32
    %c0_i32_0 = arith.constant 0 : i32
    return %arg0, %c0_i32, %arg2 : i32, i32, i32
  }
  func.func @transform_3(%arg0: i32, %arg1: i32, %arg2: i32) -> (i32, i32, i32, i32) {
    %c0_i32 = arith.constant 0 : i32
    %c0_i32_0 = arith.constant 0 : i32
    return %arg0, %arg1, %c0_i32, %arg2 : i32, i32, i32, i32
  }
}

module attributes {stable_mosaic.version = 11 : i64} {
  func.func @kernel(%arg0: i32, %arg1: i32, %arg2: i32, %arg3: memref<1x32x64xf32, #tpu.memory_space<vmem>>, %arg4: memref<1x32x64xf32, #tpu.memory_space<vmem>>, %arg5: memref<1x64x32xf32, #tpu.memory_space<vmem>>, %arg6: memref<1x32x32xf32, #tpu.memory_space<vmem>>) attributes {dimension_semantics = [#tpu.dimension_semantics<parallel>, #tpu.dimension_semantics<parallel>, #tpu.dimension_semantics<parallel>], iteration_bounds = array<i64: 2, 1, 1>, scalar_prefetch = 0 : i64, scratch_operands = 0 : i64, tpu.core_type = #tpu.core_type<tc>, window_params = [{transform_indices = @transform_0, window_bounds = array<i64: 1, 32, 64>}, {transform_indices = @transform_1, window_bounds = array<i64: 1, 32, 64>}, {transform_indices = @transform_2, window_bounds = array<i64: 1, 64, 32>}, {transform_indices = @transform_3, window_bounds = array<i64: 1, 32, 32>}]} {
    %c0 = arith.constant 0 : index
    %c0_0 = arith.constant 0 : index
    %c0_1 = arith.constant 0 : index
    %0 = vector.load %arg3[%c0, %c0_0, %c0_1] : memref<1x32x64xf32, #tpu.memory_space<vmem>>, vector<1x32x64xf32>
    %1 = vector.shape_cast %0 : vector<1x32x64xf32> to vector<32x64xf32>
    %c0_2 = arith.constant 0 : index
    %c0_3 = arith.constant 0 : index
    %c0_4 = arith.constant 0 : index
    %2 = vector.load %arg4[%c0_2, %c0_3, %c0_4] : memref<1x32x64xf32, #tpu.memory_space<vmem>>, vector<1x32x64xf32>
    %3 = vector.shape_cast %2 : vector<1x32x64xf32> to vector<32x64xf32>
    %4 = arith.addf %1, %3 : vector<32x64xf32>
    %c0_5 = arith.constant 0 : index
    %c0_6 = arith.constant 0 : index
    %c0_7 = arith.constant 0 : index
    %5 = vector.load %arg5[%c0_5, %c0_6, %c0_7] : memref<1x64x32xf32, #tpu.memory_space<vmem>>, vector<1x64x32xf32>
    %6 = vector.shape_cast %5 : vector<1x64x32xf32> to vector<64x32xf32>
    %cst = arith.constant dense<0.000000e+00> : vector<32x32xf32>
    %7 = tpu.matmul %4, %6, %cst {dimension_numbers = #tpu.dot_dimension_numbers<[1], [0], [0], [1], [0, 0, 1, 1], [], []>} : vector<32x64xf32>, vector<64x32xf32>, vector<32x32xf32> -> vector<32x32xf32>
    %c0_8 = arith.constant 0 : index
    %c0_9 = arith.constant 0 : index
    %c0_10 = arith.constant 0 : index
    %8 = vector.load %arg6[%c0_8, %c0_9, %c0_10] : memref<1x32x32xf32, #tpu.memory_space<vmem>>, vector<1x32x32xf32>
    %9 = vector.shape_cast %8 : vector<1x32x32xf32> to vector<32x32xf32>
    %10 = vector.shape_cast %7 : vector<32x32xf32> to vector<1x32x32xf32>
    tpu.vector_store %arg6[%c0_8, %c0_9, %c0_10], %10 {strides = array<i32>} : memref<1x32x32xf32, #tpu.memory_space<vmem>>, vector<1x32x32xf32>,
    return
  }
  func.func @transform_0(%arg0: i32, %arg1: i32, %arg2: i32) -> (i32, i32, i32) {
    %c0_i32 = arith.constant 0 : i32
    %c0_i32_0 = arith.constant 0 : i32
    return %arg0, %arg1, %c0_i32 : i32, i32, i32
  }
  func.func @transform_1(%arg0: i32, %arg1: i32, %arg2: i32) -> (i32, i32, i32) {
    %c0_i32 = arith.constant 0 : i32
    %c0_i32_0 = arith.constant 0 : i32
    return %arg0, %arg1, %c0_i32 : i32, i32, i32
  }
  func.func @transform_2(%arg0: i32, %arg1: i32, %arg2: i32) -> (i32, i32, i32) {
    %c0_i32 = arith.constant 0 : i32
    %c0_i32_0 = arith.constant 0 : i32
    return %arg0, %c0_i32, %arg2 : i32, i32, i32
  }
  func.func @transform_3(%arg0: i32, %arg1: i32, %arg2: i32) -> (i32, i32, i32) {
    %c0_i32 = arith.constant 0 : i32
    return %arg0, %arg1, %arg2 : i32, i32, i32
  }
}

</mosaic_0001>

<llo_original>
// kernel: cossm_forward.11
$region0: #{cossm_forward.11}
  #allocation0 [shape = 'u32[]', space=smem, size = 0x4, offset = 0x4, fixed_abs, tag = 'smem constant byte address 0x4 - core index']
  #allocation1 [shape = 'u32[144,128]{1,0:T(1,128)}', space=vmem, size = 0x12000, scoped, tag = 'internal scratch']
  %s0 = inlined_call_operand.vmem [shape: f32[2,32,32], index: 0, kind: input, shape index: {}]
  %s1 = inlined_call_operand.vmem [shape: f32[2,32,64], index: 1, kind: input, shape index: {}]
  %s2 = inlined_call_operand.vmem [shape: f32[2,32,64], index: 2, kind: output, shape index: {}]
  %s3 = sld [smem:[#allocation0]]
  $region41: #{cossm_forward.11} parent=0
    _
  %s5 = ssub.s32 1, %s3
  %s6 = scalar_select 0, %s5, %s3
  loop: start=0, step=1, limit=4
  $region2: #{cossm_forward.11} parent=0 // loop_pre_header
    _
  $region3: #{cossm_forward.11} parent=0 // loop_header
    %s8 = sphi 0, %s12
    %p9 = scmp.ge.s32.totalorder %s8, 4
    %s15 = sphi 0, %s34
    %s16 = sphi 0, %s30
    %s17 = sphi 0, %s26
    %s18 = sphi 0, %s15
    %s19 = sphi 0, %s16
    %s20 = sphi 0, %s17
    %s21 = sphi 0, %s18
    %s22 = sphi 0, %s19
    %s23 = sphi 0, %s20
    %s39 = sphi 0, %s41
    %s42 = sphi 0, %s39
    %s43 = sphi 0, %s42
    %s59 = sphi 0, %s43
    %s67 = sphi 0, %s69
    %s70 = sphi 0, %s67
    %s71 = sphi 0, %s70
    %s87 = sphi 0, %s71
    %s97 = sphi 0, %s99
    %s100 = sphi 0, %s97
    %s101 = sphi 0, %s100
    %s117 = sphi 0, %s101
  $region4: #{cossm_forward.11} parent=0 // loop_header_branch
    %11 = sbr.rel (%p9) target = $region8
  $region5: #{cossm_forward.11} parent=0 // loop_body
    %s13 = ssub.s32 %s8, 1
    %s14 = ssub.s32 %s8, 2
    %s24 = sadd.s32 1, %s17
    %p25 = scmp.ge.s32.totalorder %s24, 1
    %s26 = scalar_select %p25, 0, %s24
    %s27 = sadd.s32 1, %s16
    %s28 = scalar_select %p25, %s27, %s16
    %p29 = scmp.ge.s32.totalorder %s28, 1
    %s30 = scalar_select %p29, 0, %s28
    %s31 = sadd.s32 1, %s15
    %s32 = scalar_select %p29, %s31, %s15
    %p33 = scmp.ge.s32.totalorder %s32, 2
    %s34 = scalar_select %p33, 0, %s32
    %s35 = ssub.s32 %s15, %s34
    %s36 = ssub.s32 %s16, %s30
    %s37 = sor.u32 %s35, %s36
    %p38 = scmp.eq.s32.totalorder %s37, 0
    %s40 = sadd.s32 %s39, 1
    %s41 = scalar_select %p38, %s39, %s40
    %p44 = pneg %p38
    %p45 = scmp.eq.s32.totalorder %s8, 1
    %p46 = por %p44, %p45
    %p47 = scmp.ne.s32.totalorder %s39, %s42
    %p48 = scmp.eq.s32.totalorder %s8, 0
    %p49 = por %p47, %p48
    %p50 = scmp.ne.s32.totalorder %s39, %s42
    %p51 = scmp.eq.s32.totalorder %s13, 1
    %p52 = por %p50, %p51
    %p53 = scmp.ne.s32.totalorder %s42, %s43
    %p54 = scmp.eq.s32.totalorder %s13, 0
    %p55 = por %p53, %p54
    %p56 = scmp.ne.s32.totalorder %s42, %s43
    %p57 = scmp.eq.s32.totalorder %s14, 1
    %p58 = por %p56, %p57
    %p60 = scmp.ne.s32.totalorder %s43, %s59
    %p61 = scmp.eq.s32.totalorder %s14, 0
    %p62 = por %p60, %p61
    %s63 = ssub.s32 %s15, %s34
    %s64 = ssub.s32 %s17, %s26
    %s65 = sor.u32 %s63, %s64
    %p66 = scmp.eq.s32.totalorder %s65, 0
    %s68 = sadd.s32 %s67, 1
    %s69 = scalar_select %p66, %s67, %s68
    %p72 = pneg %p66
    %p73 = scmp.eq.s32.totalorder %s8, 1
    %p74 = por %p72, %p73
    %p75 = scmp.ne.s32.totalorder %s67, %s70
    %p76 = scmp.eq.s32.totalorder %s8, 0
    %p77 = por %p75, %p76
    %p78 = scmp.ne.s32.totalorder %s67, %s70
    %p79 = scmp.eq.s32.totalorder %s13, 1
    %p80 = por %p78, %p79
    %p81 = scmp.ne.s32.totalorder %s70, %s71
    %p82 = scmp.eq.s32.totalorder %s13, 0
    %p83 = por %p81, %p82
    %p84 = scmp.ne.s32.totalorder %s70, %s71
    %p85 = scmp.eq.s32.totalorder %s14, 1
    %p86 = por %p84, %p85
    %p88 = scmp.ne.s32.totalorder %s71, %s87
    %p89 = scmp.eq.s32.totalorder %s14, 0
    %p90 = por %p88, %p89
    %s91 = ssub.s32 %s15, %s34
    %s92 = ssub.s32 %s16, %s30
    %s93 = sor.u32 %s91, %s92
    %s94 = ssub.s32 %s17, %s26
    %s95 = sor.u32 %s93, %s94
    %p96 = scmp.eq.s32.totalorder %s95, 0
    %s98 = sadd.s32 %s97, 1
    %s99 = scalar_select %p96, %s97, %s98
    %p102 = pneg %p96
    %p103 = scmp.eq.s32.totalorder %s8, 1
    %p104 = por %p102, %p103
    %p105 = scmp.ne.s32.totalorder %s97, %s100
    %p106 = scmp.eq.s32.totalorder %s8, 0
    %p107 = por %p105, %p106
    %p108 = scmp.ne.s32.totalorder %s97, %s100
    %p109 = scmp.eq.s32.totalorder %s13, 1
    %p110 = por %p108, %p109
    %p111 = scmp.ne.s32.totalorder %s100, %s101
    %p112 = scmp.eq.s32.totalorder %s13, 0
    %p113 = por %p111, %p112
    %p114 = scmp.ne.s32.totalorder %s100, %s101
    %p115 = scmp.eq.s32.totalorder %s14, 1
    %p116 = por %p114, %p115
    %p118 = scmp.ne.s32.totalorder %s101, %s117
    %p119 = scmp.eq.s32.totalorder %s14, 0
    %p120 = por %p118, %p119
    %p121 = scmp.le.s32.totalorder 1, %s8
    %p122 = scmp.lt.s32.totalorder %s8, 3
    %p123 = pnand %p121, %p122
    %p124 = pneg %p123
    // Predicated region
    $region9: #{cossm_forward.11} parent=5 // pred_check
      _
    $region10: #{cossm_forward.11} parent=5 // pred_check_branch
      %126 = sbr.rel (%p123) target = $region12
    $region11: #{cossm_forward.11} parent=5 // pred_region
      %s127 = ssub.s32 %s8, 1
    $region12: #{cossm_forward.11} parent=5 // pred_fallthru
      _
    %p128 = scmp.lt.s32.totalorder %s8, 2
    // Predicated region
    $region13: #{cossm_forward.11} parent=5 // pred_check
      %p129 = pneg %p128
    $region14: #{cossm_forward.11} parent=5 // pred_check_branch
      %131 = sbr.rel (%p129) target = $region16
    $region15: #{cossm_forward.11} parent=5 // pred_region
      // Predicated region
      $region17: #{cossm_forward.11} parent=15 // pred_check
        %p132 = pneg %p49
      $region18: #{cossm_forward.11} parent=15 // pred_check_branch
        %134 = sbr.rel (%p132) target = $region20
      $region19: #{cossm_forward.11} parent=15 // pred_region
        %s135 = smul.u32 4, %s16
        %p136 = scmp.lt.s32.totalorder %s15, 1
        %s137 = scalar_select %p136, %s15, 1
        %p138 = scmp.lt.s32.totalorder %s135, 3
        %s139 = scalar_select %p138, %s135, 3
        %s140 = smul.addr %s137, 4
        %s141 = sadd.s32 %s139, %s140
        %s142 = smul.addr %s141, 8
        %s143 = scalar_lea.vmem %s0, %s142
        %s144 = smul.u32 4, %s16
      $region20: #{cossm_forward.11} parent=15 // pred_fallthru
        _
      // Predicated region
      $region21: #{cossm_forward.11} parent=15 // pred_check
        %p145 = pneg %p77
      $region22: #{cossm_forward.11} parent=15 // pred_check_branch
        %147 = sbr.rel (%p145) target = $region24
      $region23: #{cossm_forward.11} parent=15 // pred_region
        %p148 = scmp.lt.s32.totalorder %s15, 1
        %s149 = scalar_select %p148, %s15, 1
        %p150 = scmp.lt.s32.totalorder %s17, 0
        %s151 = scalar_select %p150, %s17, 0
        %s152 = smul.addr %s149, 4
        %s153 = sadd.s32 %s151, %s152
        %s154 = smul.addr %s153, 8
        %s155 = scalar_lea.vmem %s1, %s154
      $region24: #{cossm_forward.11} parent=15 // pred_fallthru
        _
    $region16: #{cossm_forward.11} parent=5 // pred_fallthru
      _
    %p156 = scmp.le.s32.totalorder 1, %s8
    %p157 = scmp.lt.s32.totalorder %s8, 3
    %p158 = pnand %p156, %p157
    %p159 = pneg %p158
    // Predicated region
    $region25: #{cossm_forward.11} parent=5 // pred_check
      _
    $region26: #{cossm_forward.11} parent=5 // pred_check_branch
      %161 = sbr.rel (%p158) target = $region28
    $region27: #{cossm_forward.11} parent=5 // pred_region
      %s162 = ssub.s32 %s8, 1
      %s163 = smul.u32 4, %s19
      %p164 = scmp.lt.s32.totalorder %s18, 1
      %s165 = scalar_select %p164, %s18, 1
      %p166 = scmp.lt.s32.totalorder %s163, 3
      %s167 = scalar_select %p166, %s163, 3
      %s168 = smul.addr %s165, 4
      %s169 = sadd.s32 %s167, %s168
      %s170 = smul.addr %s169, 8
      %s171 = scalar_lea.vmem %s0, %s170
      %p172 = pneg %p55
      %p173 = pneg %p52
      %p174 = scmp.lt.s32.totalorder %s18, 1
      %s175 = scalar_select %p174, %s18, 1
      %p176 = scmp.lt.s32.totalorder %s20, 0
      %s177 = scalar_select %p176, %s20, 0
      %s178 = smul.addr %s175, 4
      %s179 = sadd.s32 %s177, %s178
      %s180 = smul.addr %s179, 8
      %s181 = scalar_lea.vmem %s1, %s180
      %p182 = pneg %p83
      %p183 = pneg %p80
      %p184 = pneg %p113
      %p185 = pneg %p110
      %s186 = smul.u32 4, %s19
      %p187 = scmp.lt.s32.totalorder %s18, 1
      %s188 = scalar_select %p187, %s18, 1
      %p189 = scmp.lt.s32.totalorder %s186, 3
      %s190 = scalar_select %p189, %s186, 3
      %p191 = scmp.lt.s32.totalorder %s20, 0
      %s192 = scalar_select %p191, %s20, 0
      %s193 = sadd.s32 %s192, %s190
      %s194 = smul.addr %s188, 4
      %s195 = sadd.s32 %s193, %s194
      %s196 = smul.addr %s195, 8
      %s197 = scalar_lea.vmem %s2, %s196
      %s198 = smul.u32 4, %s19
      %p199 = scmp.lt.s32.totalorder %s18, 1
      %s200 = scalar_select %p199, %s18, 1
      %p201 = scmp.lt.s32.totalorder %s198, 3
      %s202 = scalar_select %p201, %s198, 3
      %s203 = smul.addr %s200, 4
      %s204 = sadd.s32 %s202, %s203
      %s205 = smul.addr %s204, 8
      %s206 = scalar_lea.vmem %s0, %s205
      %s207 = smul.u32 4, %s19
      %p208 = scmp.lt.s32.totalorder %s18, 1
      %s209 = scalar_select %p208, %s18, 1
      %p210 = scmp.lt.s32.totalorder %s20, 0
      %s211 = scalar_select %p210, %s20, 0
      %s212 = smul.addr %s209, 4
      %s213 = sadd.s32 %s211, %s212
      %s214 = smul.addr %s213, 8
      %s215 = scalar_lea.vmem %s1, %s214
      %s216 = smul.u32 4, %s19
      %p217 = scmp.lt.s32.totalorder %s18, 1
      %s218 = scalar_select %p217, %s18, 1
      %p219 = scmp.lt.s32.totalorder %s216, 3
      %s220 = scalar_select %p219, %s216, 3
      %p221 = scmp.lt.s32.totalorder %s20, 0
      %s222 = scalar_select %p221, %s20, 0
      %s223 = sadd.s32 %s222, %s220
      %s224 = smul.addr %s218, 4
      %s225 = sadd.s32 %s223, %s224
      %s226 = smul.addr %s225, 8
      %s227 = scalar_lea.vmem %s2, %s226
      %s228 = smul.u32 4, %s19
      %v229 = vld [vmem:[%s206] sm:$0xff]
      %v230 = vld [vmem:[%s206 + $0x8] sm:$0xff]
      %v231 = vld [vmem:[%s206 + $0x10] sm:$0xff]
      %v232 = vld [vmem:[%s206 + $0x18] sm:$0xff]
      %v233 = vld [vmem:[%s215] sm:$0xff]
      %v234 = vld [vmem:[%s215 + $0x8] sm:$0xff]
      %v235 = vld [vmem:[%s215 + $0x10] sm:$0xff]
      %v236 = vld [vmem:[%s215 + $0x18] sm:$0xff]
      %vm237 = vcmask 261120
      %v239 = vsel %vm237, %v229, 0
      %v242 = vsel %vm237, %v230, 0
      %v245 = vsel %vm237, %v231, 0
      %v248 = vsel %vm237, %v232, 0
      %250 = vmatprep.subr.mxu0 0.0
      %251 = vmatpush1.msra.mxu0 %v233
      %252 = vmatprep.subr.mxu0 0.0
      %253 = vmatpush1.msra.mxu0 %v234
      %254 = vmatprep.subr.mxu0 0.0
      %255 = vmatpush1.msra.mxu0 %v235
      %256 = vmatprep.subr.mxu0 0.0
      %257 = vmatpush1.msra.mxu0 %v236
      %258 = vmatprep.subr.mxu0 0.0
      %259 = vmatpush1.msra.mxu0 0.0
      %260 = vmatprep.subr.mxu0 0.0
      %261 = vmatpush1.msra.mxu0 0.0
      %262 = vmatprep.subr.mxu0 0.0
      %263 = vmatpush1.msra.mxu0 0.0
      %264 = vmatprep.subr.mxu0 0.0
      %265 = vmatpush1.msra.mxu0 0.0
      %266 = vmatprep.subr.mxu0 0.0
      %267 = vmatpush1.msra.mxu0 0.0
      %268 = vmatprep.subr.mxu0 0.0
      %269 = vmatpush1.msra.mxu0 0.0
      %270 = vmatprep.subr.mxu0 0.0
      %271 = vmatpush1.msra.mxu0 0.0
      %272 = vmatprep.subr.mxu0 0.0
      %273 = vmatpush1.msra.mxu0 0.0
      %274 = vmatprep.subr.mxu0 0.0
      %275 = vmatpush1.msra.mxu0 0.0
      %276 = vmatprep.subr.mxu0 0.0
      %277 = vmatpush1.msra.mxu0 0.0
      %278 = vmatprep.subr.mxu0 0.0
      %279 = vmatpush1.msra.mxu0 0.0
      %280 = vmatprep.subr.mxu0 0.0
      %281 = vmatpush1.msra.mxu0 0.0
      %282 = vmatprep.subr.mxu0 0.0
      %283 = vmatpush1.msra.mxu0 0.0
      %284 = vmatprep.subr.mxu0 0.0
      %285 = vmatpush1.msra.mxu0 0.0
      %286 = vmatprep.subr.mxu0 0.0
      %287 = vmatpush1.msra.mxu0 0.0
      %288 = vmatprep.subr.mxu0 0.0
      %289 = vmatpush1.msra.mxu0 0.0
      %290 = vmatprep.subr.mxu0 0.0
      %291 = vmatpush1.msra.mxu0 0.0
      %292 = vmatprep.subr.mxu0 0.0
      %293 = vmatpush1.msra.mxu0 0.0
      %294 = vmatprep.subr.mxu0 0.0
      %295 = vmatpush1.msra.mxu0 0.0
      %296 = vmatprep.subr.mxu0 0.0
      %297 = vmatpush1.msra.mxu0 0.0
      %298 = vmatprep.subr.mxu0 0.0
      %299 = vmatpush1.msra.mxu0 0.0
      %300 = vmatprep.subr.mxu0 0.0
      %301 = vmatpush1.msra.mxu0 0.0
      %302 = vmatprep.subr.mxu0 0.0
      %303 = vmatpush1.msra.mxu0 0.0
      %304 = vmatprep.subr.mxu0 0.0
      %305 = vmatpush1.msra.mxu0 0.0
      %306 = vmatprep.subr.mxu0 0.0
      %307 = vmatpush1.msra.mxu0 0.0
      %308 = vmatprep.subr.mxu0 0.0
      %309 = vmatpush1.msra.mxu0 0.0
      %310 = vmatprep.subr.mxu0 0.0
      %311 = vmatpush1.msra.mxu0 0.0
      %312 = vmatprep.subr.mxu0 0.0
      %313 = vmatpush1.msra.mxu0 0.0
      %314 = vmatprep.mubr.f32.mxu0 0.0
      %315 = vmatmul.mubr.f32.gmra.mrb[0].mxu0 %v239
      %v316 = vpop.f32.mrb[0].mxu0
      %v317 = vadd.f32 0.0, %v316
      %v318 = vpop.f32.mrb[0].mxu0
      %319 = vmatprep.mubr.f32.mxu0 0.0
      %320 = vmatmul.mubr.f32.gmra.mrb[0].mxu0 %v242
      %v321 = vpop.f32.mrb[0].mxu0
      %v322 = vadd.f32 0.0, %v321
      %v323 = vpop.f32.mrb[0].mxu0
      %324 = vmatprep.mubr.f32.mxu0 0.0
      %325 = vmatmul.mubr.f32.gmra.mrb[0].mxu0 %v245
      %v326 = vpop.f32.mrb[0].mxu0
      %v327 = vadd.f32 0.0, %v326
      %v328 = vpop.f32.mrb[0].mxu0
      %329 = vmatprep.mubr.f32.mxu0 0.0
      %330 = vmatmul.mubr.f32.gmra.mrb[0].mxu0 %v248
      %v331 = vpop.f32.mrb[0].mxu0
      %v332 = vadd.f32 0.0, %v331
      %v333 = vpop.f32.mrb[0].mxu0
      %334 = vdwg.mxu0
      %vm335 = vcmask 523264
      %336 = vst.msk [vmem:[%s227] sm:$0xff] %vm335, %v317
      %337 = vst.msk [vmem:[%s227 + $0x8] sm:$0xff] %vm335, %v322
      %338 = vst.msk [vmem:[%s227 + $0x10] sm:$0xff] %vm335, %v327
      %339 = vst.msk [vmem:[%s227 + $0x18] sm:$0xff] %vm335, %v332
      %s340 = smul.u32 4, %s19
      %p341 = scmp.lt.s32.totalorder %s18, 1
      %s342 = scalar_select %p341, %s18, 1
      %p343 = scmp.lt.s32.totalorder %s340, 3
      %s344 = scalar_select %p343, %s340, 3
      %p345 = scmp.lt.s32.totalorder %s20, 0
      %s346 = scalar_select %p345, %s20, 0
      %s347 = sadd.s32 %s346, %s344
      %s348 = smul.addr %s342, 4
      %s349 = sadd.s32 %s347, %s348
      %s350 = smul.addr %s349, 8
      %s351 = scalar_lea.vmem %s2, %s350
      // Predicated region
      $region29: #{cossm_forward.11} parent=27 // pred_check
        %p352 = pneg %p110
      $region30: #{cossm_forward.11} parent=27 // pred_check_branch
        %354 = sbr.rel (%p352) target = $region32
      $region31: #{cossm_forward.11} parent=27 // pred_region
        %s355 = smul.u32 4, %s19
      $region32: #{cossm_forward.11} parent=27 // pred_fallthru
        _
    $region28: #{cossm_forward.11} parent=5 // pred_fallthru
      _
    %p356 = scmp.le.s32.totalorder 2, %s8
    // Predicated region
    $region33: #{cossm_forward.11} parent=5 // pred_check
      %p357 = pneg %p356
    $region34: #{cossm_forward.11} parent=5 // pred_check_branch
      %359 = sbr.rel (%p357) target = $region36
    $region35: #{cossm_forward.11} parent=5 // pred_region
      %s360 = ssub.s32 %s8, 2
      // Predicated region
      $region37: #{cossm_forward.11} parent=35 // pred_check
        %p361 = pneg %p116
      $region38: #{cossm_forward.11} parent=35 // pred_check_branch
        %363 = sbr.rel (%p361) target = $region40
      $region39: #{cossm_forward.11} parent=35 // pred_region
        %s364 = smul.u32 4, %s22
        %p365 = scmp.lt.s32.totalorder %s21, 1
        %s366 = scalar_select %p365, %s21, 1
        %p367 = scmp.lt.s32.totalorder %s364, 3
        %s368 = scalar_select %p367, %s364, 3
        %p369 = scmp.lt.s32.totalorder %s23, 0
        %s370 = scalar_select %p369, %s23, 0
        %s371 = sadd.s32 %s370, %s368
        %s372 = smul.addr %s366, 4
        %s373 = sadd.s32 %s371, %s372
        %s374 = smul.addr %s373, 8
        %s375 = scalar_lea.vmem %s2, %s374
      $region40: #{cossm_forward.11} parent=35 // pred_fallthru
        _
    $region36: #{cossm_forward.11} parent=5 // pred_fallthru
      _
  $region6: #{cossm_forward.11} parent=0 // loop_footer
    %s12 = sadd.s32 1, %s8
  $region7: #{cossm_forward.11} parent=0 // loop_footer_branch
    %7 = sbr.rel target = $region3
  $region8: #{cossm_forward.11} parent=0 // loop_exit
    _

// kernel: cossm_forward.18
$region0: #{cossm_forward.18}
  #allocation0 [shape = 'u32[]', space=smem, size = 0x4, offset = 0x4, fixed_abs, tag = 'smem constant byte address 0x4 - core index']
  #allocation1 [shape = 'u32[144,128]{1,0:T(1,128)}', space=vmem, size = 0x12000, scoped, tag = 'internal scratch']
  %s0 = inlined_call_operand.vmem [shape: f32[2,32,64], index: 0, kind: input, shape index: {}]
  %s1 = inlined_call_operand.vmem [shape: f32[2,64,32], index: 1, kind: input, shape index: {}]
  %s2 = inlined_call_operand.vmem [shape: f32[2,32,32], index: 2, kind: output, shape index: {}]
  %s3 = sld [smem:[#allocation0]]
  $region41: #{cossm_forward.18} parent=0
    _
  %s5 = ssub.s32 1, %s3
  %s6 = scalar_select 0, %s5, %s3
  loop: start=0, step=1, limit=4
  $region2: #{cossm_forward.18} parent=0 // loop_pre_header
    _
  $region3: #{cossm_forward.18} parent=0 // loop_header
    %s8 = sphi 0, %s12
    %p9 = scmp.ge.s32.totalorder %s8, 4
    %s15 = sphi 0, %s34
    %s16 = sphi 0, %s30
    %s17 = sphi 0, %s26
    %s18 = sphi 0, %s15
    %s19 = sphi 0, %s16
    %s20 = sphi 0, %s17
    %s21 = sphi 0, %s18
    %s22 = sphi 0, %s19
    %s23 = sphi 0, %s20
    %s39 = sphi 0, %s41
    %s42 = sphi 0, %s39
    %s43 = sphi 0, %s42
    %s59 = sphi 0, %s43
    %s67 = sphi 0, %s69
    %s70 = sphi 0, %s67
    %s71 = sphi 0, %s70
    %s87 = sphi 0, %s71
    %s97 = sphi 0, %s99
    %s100 = sphi 0, %s97
    %s101 = sphi 0, %s100
    %s117 = sphi 0, %s101
  $region4: #{cossm_forward.18} parent=0 // loop_header_branch
    %11 = sbr.rel (%p9) target = $region8
  $region5: #{cossm_forward.18} parent=0 // loop_body
    %s13 = ssub.s32 %s8, 1
    %s14 = ssub.s32 %s8, 2
    %s24 = sadd.s32 1, %s17
    %p25 = scmp.ge.s32.totalorder %s24, 1
    %s26 = scalar_select %p25, 0, %s24
    %s27 = sadd.s32 1, %s16
    %s28 = scalar_select %p25, %s27, %s16
    %p29 = scmp.ge.s32.totalorder %s28, 1
    %s30 = scalar_select %p29, 0, %s28
    %s31 = sadd.s32 1, %s15
    %s32 = scalar_select %p29, %s31, %s15
    %p33 = scmp.ge.s32.totalorder %s32, 2
    %s34 = scalar_select %p33, 0, %s32
    %s35 = ssub.s32 %s15, %s34
    %s36 = ssub.s32 %s16, %s30
    %s37 = sor.u32 %s35, %s36
    %p38 = scmp.eq.s32.totalorder %s37, 0
    %s40 = sadd.s32 %s39, 1
    %s41 = scalar_select %p38, %s39, %s40
    %p44 = pneg %p38
    %p45 = scmp.eq.s32.totalorder %s8, 1
    %p46 = por %p44, %p45
    %p47 = scmp.ne.s32.totalorder %s39, %s42
    %p48 = scmp.eq.s32.totalorder %s8, 0
    %p49 = por %p47, %p48
    %p50 = scmp.ne.s32.totalorder %s39, %s42
    %p51 = scmp.eq.s32.totalorder %s13, 1
    %p52 = por %p50, %p51
    %p53 = scmp.ne.s32.totalorder %s42, %s43
    %p54 = scmp.eq.s32.totalorder %s13, 0
    %p55 = por %p53, %p54
    %p56 = scmp.ne.s32.totalorder %s42, %s43
    %p57 = scmp.eq.s32.totalorder %s14, 1
    %p58 = por %p56, %p57
    %p60 = scmp.ne.s32.totalorder %s43, %s59
    %p61 = scmp.eq.s32.totalorder %s14, 0
    %p62 = por %p60, %p61
    %s63 = ssub.s32 %s15, %s34
    %s64 = ssub.s32 %s17, %s26
    %s65 = sor.u32 %s63, %s64
    %p66 = scmp.eq.s32.totalorder %s65, 0
    %s68 = sadd.s32 %s67, 1
    %s69 = scalar_select %p66, %s67, %s68
    %p72 = pneg %p66
    %p73 = scmp.eq.s32.totalorder %s8, 1
    %p74 = por %p72, %p73
    %p75 = scmp.ne.s32.totalorder %s67, %s70
    %p76 = scmp.eq.s32.totalorder %s8, 0
    %p77 = por %p75, %p76
    %p78 = scmp.ne.s32.totalorder %s67, %s70
    %p79 = scmp.eq.s32.totalorder %s13, 1
    %p80 = por %p78, %p79
    %p81 = scmp.ne.s32.totalorder %s70, %s71
    %p82 = scmp.eq.s32.totalorder %s13, 0
    %p83 = por %p81, %p82
    %p84 = scmp.ne.s32.totalorder %s70, %s71
    %p85 = scmp.eq.s32.totalorder %s14, 1
    %p86 = por %p84, %p85
    %p88 = scmp.ne.s32.totalorder %s71, %s87
    %p89 = scmp.eq.s32.totalorder %s14, 0
    %p90 = por %p88, %p89
    %s91 = ssub.s32 %s15, %s34
    %s92 = ssub.s32 %s16, %s30
    %s93 = sor.u32 %s91, %s92
    %s94 = ssub.s32 %s17, %s26
    %s95 = sor.u32 %s93, %s94
    %p96 = scmp.eq.s32.totalorder %s95, 0
    %s98 = sadd.s32 %s97, 1
    %s99 = scalar_select %p96, %s97, %s98
    %p102 = pneg %p96
    %p103 = scmp.eq.s32.totalorder %s8, 1
    %p104 = por %p102, %p103
    %p105 = scmp.ne.s32.totalorder %s97, %s100
    %p106 = scmp.eq.s32.totalorder %s8, 0
    %p107 = por %p105, %p106
    %p108 = scmp.ne.s32.totalorder %s97, %s100
    %p109 = scmp.eq.s32.totalorder %s13, 1
    %p110 = por %p108, %p109
    %p111 = scmp.ne.s32.totalorder %s100, %s101
    %p112 = scmp.eq.s32.totalorder %s13, 0
    %p113 = por %p111, %p112
    %p114 = scmp.ne.s32.totalorder %s100, %s101
    %p115 = scmp.eq.s32.totalorder %s14, 1
    %p116 = por %p114, %p115
    %p118 = scmp.ne.s32.totalorder %s101, %s117
    %p119 = scmp.eq.s32.totalorder %s14, 0
    %p120 = por %p118, %p119
    %p121 = scmp.le.s32.totalorder 1, %s8
    %p122 = scmp.lt.s32.totalorder %s8, 3
    %p123 = pnand %p121, %p122
    %p124 = pneg %p123
    // Predicated region
    $region9: #{cossm_forward.18} parent=5 // pred_check
      _
    $region10: #{cossm_forward.18} parent=5 // pred_check_branch
      %126 = sbr.rel (%p123) target = $region12
    $region11: #{cossm_forward.18} parent=5 // pred_region
      %s127 = ssub.s32 %s8, 1
    $region12: #{cossm_forward.18} parent=5 // pred_fallthru
      _
    %p128 = scmp.lt.s32.totalorder %s8, 2
    // Predicated region
    $region13: #{cossm_forward.18} parent=5 // pred_check
      %p129 = pneg %p128
    $region14: #{cossm_forward.18} parent=5 // pred_check_branch
      %131 = sbr.rel (%p129) target = $region16
    $region15: #{cossm_forward.18} parent=5 // pred_region
      // Predicated region
      $region17: #{cossm_forward.18} parent=15 // pred_check
        %p132 = pneg %p49
      $region18: #{cossm_forward.18} parent=15 // pred_check_branch
        %134 = sbr.rel (%p132) target = $region20
      $region19: #{cossm_forward.18} parent=15 // pred_region
        %s135 = smul.u32 4, %s16
        %p136 = scmp.lt.s32.totalorder %s15, 1
        %s137 = scalar_select %p136, %s15, 1
        %p138 = scmp.lt.s32.totalorder %s135, 3
        %s139 = scalar_select %p138, %s135, 3
        %s140 = smul.addr %s137, 4
        %s141 = sadd.s32 %s139, %s140
        %s142 = smul.addr %s141, 8
        %s143 = scalar_lea.vmem %s0, %s142
        %s144 = smul.u32 4, %s16
      $region20: #{cossm_forward.18} parent=15 // pred_fallthru
        _
      // Predicated region
      $region21: #{cossm_forward.18} parent=15 // pred_check
        %p145 = pneg %p77
      $region22: #{cossm_forward.18} parent=15 // pred_check_branch
        %147 = sbr.rel (%p145) target = $region24
      $region23: #{cossm_forward.18} parent=15 // pred_region
        %p148 = scmp.lt.s32.totalorder %s15, 1
        %s149 = scalar_select %p148, %s15, 1
        %p150 = scmp.lt.s32.totalorder %s17, 0
        %s151 = scalar_select %p150, %s17, 0
        %s152 = smul.addr %s149, 8
        %s153 = sadd.s32 %s151, %s152
        %s154 = smul.addr %s153, 8
        %s155 = scalar_lea.vmem %s1, %s154
      $region24: #{cossm_forward.18} parent=15 // pred_fallthru
        _
    $region16: #{cossm_forward.18} parent=5 // pred_fallthru
      _
    %p156 = scmp.le.s32.totalorder 1, %s8
    %p157 = scmp.lt.s32.totalorder %s8, 3
    %p158 = pnand %p156, %p157
    %p159 = pneg %p158
    // Predicated region
    $region25: #{cossm_forward.18} parent=5 // pred_check
      _
    $region26: #{cossm_forward.18} parent=5 // pred_check_branch
      %161 = sbr.rel (%p158) target = $region28
    $region27: #{cossm_forward.18} parent=5 // pred_region
      %s162 = ssub.s32 %s8, 1
      %s163 = smul.u32 4, %s19
      %p164 = scmp.lt.s32.totalorder %s18, 1
      %s165 = scalar_select %p164, %s18, 1
      %p166 = scmp.lt.s32.totalorder %s163, 3
      %s167 = scalar_select %p166, %s163, 3
      %s168 = smul.addr %s165, 4
      %s169 = sadd.s32 %s167, %s168
      %s170 = smul.addr %s169, 8
      %s171 = scalar_lea.vmem %s0, %s170
      %p172 = pneg %p55
      %p173 = pneg %p52
      %p174 = scmp.lt.s32.totalorder %s18, 1
      %s175 = scalar_select %p174, %s18, 1
      %p176 = scmp.lt.s32.totalorder %s20, 0
      %s177 = scalar_select %p176, %s20, 0
      %s178 = smul.addr %s175, 8
      %s179 = sadd.s32 %s177, %s178
      %s180 = smul.addr %s179, 8
      %s181 = scalar_lea.vmem %s1, %s180
      %p182 = pneg %p83
      %p183 = pneg %p80
      %p184 = pneg %p113
      %p185 = pneg %p110
      %s186 = smul.u32 4, %s19
      %p187 = scmp.lt.s32.totalorder %s18, 1
      %s188 = scalar_select %p187, %s18, 1
      %p189 = scmp.lt.s32.totalorder %s186, 3
      %s190 = scalar_select %p189, %s186, 3
      %p191 = scmp.lt.s32.totalorder %s20, 0
      %s192 = scalar_select %p191, %s20, 0
      %s193 = sadd.s32 %s192, %s190
      %s194 = smul.addr %s188, 4
      %s195 = sadd.s32 %s193, %s194
      %s196 = smul.addr %s195, 8
      %s197 = scalar_lea.vmem %s2, %s196
      %s198 = smul.u32 4, %s19
      %p199 = scmp.lt.s32.totalorder %s18, 1
      %s200 = scalar_select %p199, %s18, 1
      %p201 = scmp.lt.s32.totalorder %s198, 3
      %s202 = scalar_select %p201, %s198, 3
      %s203 = smul.addr %s200, 4
      %s204 = sadd.s32 %s202, %s203
      %s205 = smul.addr %s204, 8
      %s206 = scalar_lea.vmem %s0, %s205
      %s207 = smul.u32 4, %s19
      %p208 = scmp.lt.s32.totalorder %s18, 1
      %s209 = scalar_select %p208, %s18, 1
      %p210 = scmp.lt.s32.totalorder %s20, 0
      %s211 = scalar_select %p210, %s20, 0
      %s212 = smul.addr %s209, 8
      %s213 = sadd.s32 %s211, %s212
      %s214 = smul.addr %s213, 8
      %s215 = scalar_lea.vmem %s1, %s214
      %s216 = smul.u32 4, %s19
      %p217 = scmp.lt.s32.totalorder %s18, 1
      %s218 = scalar_select %p217, %s18, 1
      %p219 = scmp.lt.s32.totalorder %s216, 3
      %s220 = scalar_select %p219, %s216, 3
      %p221 = scmp.lt.s32.totalorder %s20, 0
      %s222 = scalar_select %p221, %s20, 0
      %s223 = sadd.s32 %s222, %s220
      %s224 = smul.addr %s218, 4
      %s225 = sadd.s32 %s223, %s224
      %s226 = smul.addr %s225, 8
      %s227 = scalar_lea.vmem %s2, %s226
      %s228 = smul.u32 4, %s19
      %v229 = vld [vmem:[%s206] sm:$0xff]
      %v230 = vld [vmem:[%s206 + $0x8] sm:$0xff]
      %v231 = vld [vmem:[%s206 + $0x10] sm:$0xff]
      %v232 = vld [vmem:[%s206 + $0x18] sm:$0xff]
      %v233 = vld [vmem:[%s215] sm:$0xff]
      %v234 = vld [vmem:[%s215 + $0x8] sm:$0xff]
      %v235 = vld [vmem:[%s215 + $0x10] sm:$0xff]
      %v236 = vld [vmem:[%s215 + $0x18] sm:$0xff]
      %v237 = vld [vmem:[%s215 + $0x20] sm:$0xff]
      %v238 = vld [vmem:[%s215 + $0x28] sm:$0xff]
      %v239 = vld [vmem:[%s215 + $0x30] sm:$0xff]
      %v240 = vld [vmem:[%s215 + $0x38] sm:$0xff]
      %vm241 = vcmask 523264
      %v243 = vsel %vm241, %v229, 0
      %v246 = vsel %vm241, %v230, 0
      %v249 = vsel %vm241, %v231, 0
      %v252 = vsel %vm241, %v232, 0
      %254 = vmatprep.subr.mxu0 0.0
      %255 = vmatpush1.msra.mxu0 %v233
      %256 = vmatprep.subr.mxu0 0.0
      %257 = vmatpush1.msra.mxu0 %v234
      %258 = vmatprep.subr.mxu0 0.0
      %259 = vmatpush1.msra.mxu0 %v235
      %260 = vmatprep.subr.mxu0 0.0
      %261 = vmatpush1.msra.mxu0 %v236
      %262 = vmatprep.subr.mxu0 0.0
      %263 = vmatpush1.msra.mxu0 %v237
      %264 = vmatprep.subr.mxu0 0.0
      %265 = vmatpush1.msra.mxu0 %v238
      %266 = vmatprep.subr.mxu0 0.0
      %267 = vmatpush1.msra.mxu0 %v239
      %268 = vmatprep.subr.mxu0 0.0
      %269 = vmatpush1.msra.mxu0 %v240
      %270 = vmatprep.subr.mxu0 0.0
      %271 = vmatpush1.msra.mxu0 0.0
      %272 = vmatprep.subr.mxu0 0.0
      %273 = vmatpush1.msra.mxu0 0.0
      %274 = vmatprep.subr.mxu0 0.0
      %275 = vmatpush1.msra.mxu0 0.0
      %276 = vmatprep.subr.mxu0 0.0
      %277 = vmatpush1.msra.mxu0 0.0
      %278 = vmatprep.subr.mxu0 0.0
      %279 = vmatpush1.msra.mxu0 0.0
      %280 = vmatprep.subr.mxu0 0.0
      %281 = vmatpush1.msra.mxu0 0.0
      %282 = vmatprep.subr.mxu0 0.0
      %283 = vmatpush1.msra.mxu0 0.0
      %284 = vmatprep.subr.mxu0 0.0
      %285 = vmatpush1.msra.mxu0 0.0
      %286 = vmatprep.subr.mxu0 0.0
      %287 = vmatpush1.msra.mxu0 0.0
      %288 = vmatprep.subr.mxu0 0.0
      %289 = vmatpush1.msra.mxu0 0.0
      %290 = vmatprep.subr.mxu0 0.0
      %291 = vmatpush1.msra.mxu0 0.0
      %292 = vmatprep.subr.mxu0 0.0
      %293 = vmatpush1.msra.mxu0 0.0
      %294 = vmatprep.subr.mxu0 0.0
      %295 = vmatpush1.msra.mxu0 0.0
      %296 = vmatprep.subr.mxu0 0.0
      %297 = vmatpush1.msra.mxu0 0.0
      %298 = vmatprep.subr.mxu0 0.0
      %299 = vmatpush1.msra.mxu0 0.0
      %300 = vmatprep.subr.mxu0 0.0
      %301 = vmatpush1.msra.mxu0 0.0
      %302 = vmatprep.subr.mxu0 0.0
      %303 = vmatpush1.msra.mxu0 0.0
      %304 = vmatprep.subr.mxu0 0.0
      %305 = vmatpush1.msra.mxu0 0.0
      %306 = vmatprep.subr.mxu0 0.0
      %307 = vmatpush1.msra.mxu0 0.0
      %308 = vmatprep.subr.mxu0 0.0
      %309 = vmatpush1.msra.mxu0 0.0
      %310 = vmatprep.subr.mxu0 0.0
      %311 = vmatpush1.msra.mxu0 0.0
      %312 = vmatprep.subr.mxu0 0.0
      %313 = vmatpush1.msra.mxu0 0.0
      %314 = vmatprep.subr.mxu0 0.0
      %315 = vmatpush1.msra.mxu0 0.0
      %316 = vmatprep.subr.mxu0 0.0
      %317 = vmatpush1.msra.mxu0 0.0
      %318 = vmatprep.mubr.f32.mxu0 0.0
      %319 = vmatmul.mubr.f32.gmra.mrb[0].mxu0 %v243
      %v320 = vpop.f32.mrb[0].mxu0
      %v321 = vadd.f32 0.0, %v320
      %v322 = vpop.f32.mrb[0].mxu0
      %323 = vmatprep.mubr.f32.mxu0 0.0
      %324 = vmatmul.mubr.f32.gmra.mrb[0].mxu0 %v246
      %v325 = vpop.f32.mrb[0].mxu0
      %v326 = vadd.f32 0.0, %v325
      %v327 = vpop.f32.mrb[0].mxu0
      %328 = vmatprep.mubr.f32.mxu0 0.0
      %329 = vmatmul.mubr.f32.gmra.mrb[0].mxu0 %v249
      %v330 = vpop.f32.mrb[0].mxu0
      %v331 = vadd.f32 0.0, %v330
      %v332 = vpop.f32.mrb[0].mxu0
      %333 = vmatprep.mubr.f32.mxu0 0.0
      %334 = vmatmul.mubr.f32.gmra.mrb[0].mxu0 %v252
      %v335 = vpop.f32.mrb[0].mxu0
      %v336 = vadd.f32 0.0, %v335
      %v337 = vpop.f32.mrb[0].mxu0
      %338 = vdwg.mxu0
      %vm339 = vcmask 261120
      %340 = vst.msk [vmem:[%s227] sm:$0xff] %vm339, %v321
      %341 = vst.msk [vmem:[%s227 + $0x8] sm:$0xff] %vm339, %v326
      %342 = vst.msk [vmem:[%s227 + $0x10] sm:$0xff] %vm339, %v331
      %343 = vst.msk [vmem:[%s227 + $0x18] sm:$0xff] %vm339, %v336
      %s344 = smul.u32 4, %s19
      %p345 = scmp.lt.s32.totalorder %s18, 1
      %s346 = scalar_select %p345, %s18, 1
      %p347 = scmp.lt.s32.totalorder %s344, 3
      %s348 = scalar_select %p347, %s344, 3
      %p349 = scmp.lt.s32.totalorder %s20, 0
      %s350 = scalar_select %p349, %s20, 0
      %s351 = sadd.s32 %s350, %s348
      %s352 = smul.addr %s346, 4
      %s353 = sadd.s32 %s351, %s352
      %s354 = smul.addr %s353, 8
      %s355 = scalar_lea.vmem %s2, %s354
      // Predicated region
      $region29: #{cossm_forward.18} parent=27 // pred_check
        %p356 = pneg %p110
      $region30: #{cossm_forward.18} parent=27 // pred_check_branch
        %358 = sbr.rel (%p356) target = $region32
      $region31: #{cossm_forward.18} parent=27 // pred_region
        %s359 = smul.u32 4, %s19
      $region32: #{cossm_forward.18} parent=27 // pred_fallthru
        _
    $region28: #{cossm_forward.18} parent=5 // pred_fallthru
      _
    %p360 = scmp.le.s32.totalorder 2, %s8
    // Predicated region
    $region33: #{cossm_forward.18} parent=5 // pred_check
      %p361 = pneg %p360
    $region34: #{cossm_forward.18} parent=5 // pred_check_branch
      %363 = sbr.rel (%p361) target = $region36
    $region35: #{cossm_forward.18} parent=5 // pred_region
      %s364 = ssub.s32 %s8, 2
      // Predicated region
      $region37: #{cossm_forward.18} parent=35 // pred_check
        %p365 = pneg %p116
      $region38: #{cossm_forward.18} parent=35 // pred_check_branch
        %367 = sbr.rel (%p365) target = $region40
      $region39: #{cossm_forward.18} parent=35 // pred_region
        %s368 = smul.u32 4, %s22
        %p369 = scmp.lt.s32.totalorder %s21, 1
        %s370 = scalar_select %p369, %s21, 1
        %p371 = scmp.lt.s32.totalorder %s368, 3
        %s372 = scalar_select %p371, %s368, 3
        %p373 = scmp.lt.s32.totalorder %s23, 0
        %s374 = scalar_select %p373, %s23, 0
        %s375 = sadd.s32 %s374, %s372
        %s376 = smul.addr %s370, 4
        %s377 = sadd.s32 %s375, %s376
        %s378 = smul.addr %s377, 8
        %s379 = scalar_lea.vmem %s2, %s378
      $region40: #{cossm_forward.18} parent=35 // pred_fallthru
        _
    $region36: #{cossm_forward.18} parent=5 // pred_fallthru
      _
  $region6: #{cossm_forward.18} parent=0 // loop_footer
    %s12 = sadd.s32 1, %s8
  $region7: #{cossm_forward.18} parent=0 // loop_footer_branch
    %7 = sbr.rel target = $region3
  $region8: #{cossm_forward.18} parent=0 // loop_exit
    _

// kernel: cossm_forward.14
$region0: #{cossm_forward.14}
  #allocation0 [shape = 'u32[]', space=smem, size = 0x4, offset = 0x4, fixed_abs, tag = 'smem constant byte address 0x4 - core index']
  #allocation1 [shape = 'u32[144,128]{1,0:T(1,128)}', space=vmem, size = 0x12000, scoped, tag = 'internal scratch']
  %s0 = inlined_call_operand.vmem [shape: f32[2,2,22,64], index: 0, kind: input, shape index: {}]
  %s1 = inlined_call_operand.vmem [shape: f32[2,4,64], index: 1, kind: input, shape index: {}]
  %s2 = inlined_call_operand.vmem [shape: f32[2,1,64], index: 2, kind: input, shape index: {}]
  %s3 = inlined_call_operand.vmem [shape: f32[2,2,16,64], index: 3, kind: output, shape index: {}]
  %s4 = sld [smem:[#allocation0]]
  $region45: #{cossm_forward.14} parent=0
    _
  %s6 = ssub.s32 1, %s4
  %s7 = scalar_select 0, %s6, %s4
  loop: start=0, step=1, limit=6
  $region2: #{cossm_forward.14} parent=0 // loop_pre_header
    _
  $region3: #{cossm_forward.14} parent=0 // loop_header
    %s9 = sphi 0, %s13
    %p10 = scmp.ge.s32.totalorder %s9, 6
    %s16 = sphi 0, %s35
    %s17 = sphi 0, %s31
    %s18 = sphi 0, %s27
    %s19 = sphi 0, %s16
    %s20 = sphi 0, %s17
    %s21 = sphi 0, %s18
    %s22 = sphi 0, %s19
    %s23 = sphi 0, %s20
    %s24 = sphi 0, %s21
    %s42 = sphi 0, %s44
    %s45 = sphi 0, %s42
    %s46 = sphi 0, %s45
    %s62 = sphi 0, %s46
    %s70 = sphi 0, %s72
    %s73 = sphi 0, %s70
    %s74 = sphi 0, %s73
    %s90 = sphi 0, %s74
    %s98 = sphi 0, %s100
    %s101 = sphi 0, %s98
    %s102 = sphi 0, %s101
    %s118 = sphi 0, %s102
    %s128 = sphi 0, %s130
    %s131 = sphi 0, %s128
    %s132 = sphi 0, %s131
    %s148 = sphi 0, %s132
  $region4: #{cossm_forward.14} parent=0 // loop_header_branch
    %12 = sbr.rel (%p10) target = $region8
  $region5: #{cossm_forward.14} parent=0 // loop_body
    %s14 = ssub.s32 %s9, 1
    %s15 = ssub.s32 %s9, 2
    %s25 = sadd.s32 1, %s18
    %p26 = scmp.ge.s32.totalorder %s25, 1
    %s27 = scalar_select %p26, 0, %s25
    %s28 = sadd.s32 1, %s17
    %s29 = scalar_select %p26, %s28, %s17
    %p30 = scmp.ge.s32.totalorder %s29, 2
    %s31 = scalar_select %p30, 0, %s29
    %s32 = sadd.s32 1, %s16
    %s33 = scalar_select %p30, %s32, %s16
    %p34 = scmp.ge.s32.totalorder %s33, 2
    %s35 = scalar_select %p34, 0, %s33
    %s36 = ssub.s32 %s16, %s35
    %s37 = ssub.s32 %s17, %s31
    %s38 = sor.u32 %s36, %s37
    %s39 = ssub.s32 %s18, %s27
    %s40 = sor.u32 %s38, %s39
    %p41 = scmp.eq.s32.totalorder %s40, 0
    %s43 = sadd.s32 %s42, 1
    %s44 = scalar_select %p41, %s42, %s43
    %p47 = pneg %p41
    %p48 = scmp.eq.s32.totalorder %s9, 3
    %p49 = por %p47, %p48
    %p50 = scmp.ne.s32.totalorder %s42, %s45
    %p51 = scmp.eq.s32.totalorder %s9, 0
    %p52 = por %p50, %p51
    %p53 = scmp.ne.s32.totalorder %s42, %s45
    %p54 = scmp.eq.s32.totalorder %s14, 3
    %p55 = por %p53, %p54
    %p56 = scmp.ne.s32.totalorder %s45, %s46
    %p57 = scmp.eq.s32.totalorder %s14, 0
    %p58 = por %p56, %p57
    %p59 = scmp.ne.s32.totalorder %s45, %s46
    %p60 = scmp.eq.s32.totalorder %s15, 3
    %p61 = por %p59, %p60
    %p63 = scmp.ne.s32.totalorder %s46, %s62
    %p64 = scmp.eq.s32.totalorder %s15, 0
    %p65 = por %p63, %p64
    %s66 = ssub.s32 %s16, %s35
    %s67 = ssub.s32 %s18, %s27
    %s68 = sor.u32 %s66, %s67
    %p69 = scmp.eq.s32.totalorder %s68, 0
    %s71 = sadd.s32 %s70, 1
    %s72 = scalar_select %p69, %s70, %s71
    %p75 = pneg %p69
    %p76 = scmp.eq.s32.totalorder %s9, 3
    %p77 = por %p75, %p76
    %p78 = scmp.ne.s32.totalorder %s70, %s73
    %p79 = scmp.eq.s32.totalorder %s9, 0
    %p80 = por %p78, %p79
    %p81 = scmp.ne.s32.totalorder %s70, %s73
    %p82 = scmp.eq.s32.totalorder %s14, 3
    %p83 = por %p81, %p82
    %p84 = scmp.ne.s32.totalorder %s73, %s74
    %p85 = scmp.eq.s32.totalorder %s14, 0
    %p86 = por %p84, %p85
    %p87 = scmp.ne.s32.totalorder %s73, %s74
    %p88 = scmp.eq.s32.totalorder %s15, 3
    %p89 = por %p87, %p88
    %p91 = scmp.ne.s32.totalorder %s74, %s90
    %p92 = scmp.eq.s32.totalorder %s15, 0
    %p93 = por %p91, %p92
    %s94 = ssub.s32 %s16, %s35
    %s95 = ssub.s32 %s18, %s27
    %s96 = sor.u32 %s94, %s95
    %p97 = scmp.eq.s32.totalorder %s96, 0
    %s99 = sadd.s32 %s98, 1
    %s100 = scalar_select %p97, %s98, %s99
    %p103 = pneg %p97
    %p104 = scmp.eq.s32.totalorder %s9, 3
    %p105 = por %p103, %p104
    %p106 = scmp.ne.s32.totalorder %s98, %s101
    %p107 = scmp.eq.s32.totalorder %s9, 0
    %p108 = por %p106, %p107
    %p109 = scmp.ne.s32.totalorder %s98, %s101
    %p110 = scmp.eq.s32.totalorder %s14, 3
    %p111 = por %p109, %p110
    %p112 = scmp.ne.s32.totalorder %s101, %s102
    %p113 = scmp.eq.s32.totalorder %s14, 0
    %p114 = por %p112, %p113
    %p115 = scmp.ne.s32.totalorder %s101, %s102
    %p116 = scmp.eq.s32.totalorder %s15, 3
    %p117 = por %p115, %p116
    %p119 = scmp.ne.s32.totalorder %s102, %s118
    %p120 = scmp.eq.s32.totalorder %s15, 0
    %p121 = por %p119, %p120
    %s122 = ssub.s32 %s16, %s35
    %s123 = ssub.s32 %s17, %s31
    %s124 = sor.u32 %s122, %s123
    %s125 = ssub.s32 %s18, %s27
    %s126 = sor.u32 %s124, %s125
    %p127 = scmp.eq.s32.totalorder %s126, 0
    %s129 = sadd.s32 %s128, 1
    %s130 = scalar_select %p127, %s128, %s129
    %p133 = pneg %p127
    %p134 = scmp.eq.s32.totalorder %s9, 3
    %p135 = por %p133, %p134
    %p136 = scmp.ne.s32.totalorder %s128, %s131
    %p137 = scmp.eq.s32.totalorder %s9, 0
    %p138 = por %p136, %p137
    %p139 = scmp.ne.s32.totalorder %s128, %s131
    %p140 = scmp.eq.s32.totalorder %s14, 3
    %p141 = por %p139, %p140
    %p142 = scmp.ne.s32.totalorder %s131, %s132
    %p143 = scmp.eq.s32.totalorder %s14, 0
    %p144 = por %p142, %p143
    %p145 = scmp.ne.s32.totalorder %s131, %s132
    %p146 = scmp.eq.s32.totalorder %s15, 3
    %p147 = por %p145, %p146
    %p149 = scmp.ne.s32.totalorder %s132, %s148
    %p150 = scmp.eq.s32.totalorder %s15, 0
    %p151 = por %p149, %p150
    %p152 = scmp.le.s32.totalorder 1, %s9
    %p153 = scmp.lt.s32.totalorder %s9, 5
    %p154 = pnand %p152, %p153
    %p155 = pneg %p154
    // Predicated region
    $region9: #{cossm_forward.14} parent=5 // pred_check
      _
    $region10: #{cossm_forward.14} parent=5 // pred_check_branch
      %157 = sbr.rel (%p154) target = $region12
    $region11: #{cossm_forward.14} parent=5 // pred_region
      %s158 = ssub.s32 %s9, 1
    $region12: #{cossm_forward.14} parent=5 // pred_fallthru
      _
    %p159 = scmp.lt.s32.totalorder %s9, 4
    // Predicated region
    $region13: #{cossm_forward.14} parent=5 // pred_check
      %p160 = pneg %p159
    $region14: #{cossm_forward.14} parent=5 // pred_check_branch
      %162 = sbr.rel (%p160) target = $region16
    $region15: #{cossm_forward.14} parent=5 // pred_region
      // Predicated region
      $region17: #{cossm_forward.14} parent=15 // pred_check
        %p163 = pneg %p52
      $region18: #{cossm_forward.14} parent=15 // pred_check_branch
        %165 = sbr.rel (%p163) target = $region20
      $region19: #{cossm_forward.14} parent=15 // pred_region
        %p166 = scmp.lt.s32.totalorder %s16, 1
        %s167 = scalar_select %p166, %s16, 1
        %p168 = scmp.lt.s32.totalorder %s17, 1
        %s169 = scalar_select %p168, %s17, 1
        %p170 = scmp.lt.s32.totalorder %s18, 0
        %s171 = scalar_select %p170, %s18, 0
        %s172 = smul.addr %s169, 3
        %s173 = sadd.s32 %s171, %s172
        %s174 = smul.addr %s167, 6
        %s175 = sadd.s32 %s173, %s174
        %s176 = smul.addr %s175, 8
        %s177 = scalar_lea.vmem %s0, %s176
      $region20: #{cossm_forward.14} parent=15 // pred_fallthru
        _
      // Predicated region
      $region21: #{cossm_forward.14} parent=15 // pred_check
        %p178 = pneg %p80
      $region22: #{cossm_forward.14} parent=15 // pred_check_branch
        %180 = sbr.rel (%p178) target = $region24
      $region23: #{cossm_forward.14} parent=15 // pred_region
        %p181 = scmp.lt.s32.totalorder %s16, 1
        %s182 = scalar_select %p181, %s16, 1
        %p183 = scmp.lt.s32.totalorder %s18, 0
        %s184 = scalar_select %p183, %s18, 0
        %s185 = sadd.s32 %s184, %s182
        %s186 = smul.addr %s185, 4
        %s187 = scalar_lea.vmem %s1, %s186
      $region24: #{cossm_forward.14} parent=15 // pred_fallthru
        _
      // Predicated region
      $region25: #{cossm_forward.14} parent=15 // pred_check
        %p188 = pneg %p108
      $region26: #{cossm_forward.14} parent=15 // pred_check_branch
        %190 = sbr.rel (%p188) target = $region28
      $region27: #{cossm_forward.14} parent=15 // pred_region
        %p191 = scmp.lt.s32.totalorder %s16, 1
        %s192 = scalar_select %p191, %s16, 1
        %p193 = scmp.lt.s32.totalorder %s18, 0
        %s194 = scalar_select %p193, %s18, 0
        %s195 = sadd.s32 %s194, %s192
        %s196 = scalar_lea.vmem %s2, %s195
      $region28: #{cossm_forward.14} parent=15 // pred_fallthru
        _
    $region16: #{cossm_forward.14} parent=5 // pred_fallthru
      _
    %p197 = scmp.le.s32.totalorder 1, %s9
    %p198 = scmp.lt.s32.totalorder %s9, 5
    %p199 = pnand %p197, %p198
    %p200 = pneg %p199
    // Predicated region
    $region29: #{cossm_forward.14} parent=5 // pred_check
      _
    $region30: #{cossm_forward.14} parent=5 // pred_check_branch
      %202 = sbr.rel (%p199) target = $region32
    $region31: #{cossm_forward.14} parent=5 // pred_region
      %s203 = ssub.s32 %s9, 1
      %p204 = scmp.lt.s32.totalorder %s19, 1
      %s205 = scalar_select %p204, %s19, 1
      %p206 = scmp.lt.s32.totalorder %s20, 1
      %s207 = scalar_select %p206, %s20, 1
      %p208 = scmp.lt.s32.totalorder %s21, 0
      %s209 = scalar_select %p208, %s21, 0
      %s210 = smul.addr %s207, 3
      %s211 = sadd.s32 %s209, %s210
      %s212 = smul.addr %s205, 6
      %s213 = sadd.s32 %s211, %s212
      %s214 = smul.addr %s213, 8
      %s215 = scalar_lea.vmem %s0, %s214
      %p216 = pneg %p58
      %p217 = pneg %p55
      %p218 = scmp.lt.s32.totalorder %s19, 1
      %s219 = scalar_select %p218, %s19, 1
      %p220 = scmp.lt.s32.totalorder %s21, 0
      %s221 = scalar_select %p220, %s21, 0
      %s222 = sadd.s32 %s221, %s219
      %s223 = smul.addr %s222, 4
      %s224 = scalar_lea.vmem %s1, %s223
      %p225 = pneg %p86
      %p226 = pneg %p83
      %p227 = scmp.lt.s32.totalorder %s19, 1
      %s228 = scalar_select %p227, %s19, 1
      %p229 = scmp.lt.s32.totalorder %s21, 0
      %s230 = scalar_select %p229, %s21, 0
      %s231 = sadd.s32 %s230, %s228
      %s232 = scalar_lea.vmem %s2, %s231
      %p233 = pneg %p114
      %p234 = pneg %p111
      %p235 = pneg %p144
      %p236 = pneg %p141
      %p237 = scmp.lt.s32.totalorder %s19, 1
      %s238 = scalar_select %p237, %s19, 1
      %p239 = scmp.lt.s32.totalorder %s20, 1
      %s240 = scalar_select %p239, %s20, 1
      %p241 = scmp.lt.s32.totalorder %s21, 0
      %s242 = scalar_select %p241, %s21, 0
      %s243 = smul.addr %s240, 2
      %s244 = sadd.s32 %s242, %s243
      %s245 = smul.addr %s238, 4
      %s246 = sadd.s32 %s244, %s245
      %s247 = smul.addr %s246, 8
      %s248 = scalar_lea.vmem %s3, %s247
      %p249 = scmp.lt.s32.totalorder %s19, 1
      %s250 = scalar_select %p249, %s19, 1
      %p251 = scmp.lt.s32.totalorder %s20, 1
      %s252 = scalar_select %p251, %s20, 1
      %p253 = scmp.lt.s32.totalorder %s21, 0
      %s254 = scalar_select %p253, %s21, 0
      %s255 = smul.addr %s252, 3
      %s256 = sadd.s32 %s254, %s255
      %s257 = smul.addr %s250, 6
      %s258 = sadd.s32 %s256, %s257
      %s259 = smul.addr %s258, 8
      %s260 = scalar_lea.vmem %s0, %s259
      %p261 = scmp.lt.s32.totalorder %s19, 1
      %s262 = scalar_select %p261, %s19, 1
      %p263 = scmp.lt.s32.totalorder %s21, 0
      %s264 = scalar_select %p263, %s21, 0
      %s265 = sadd.s32 %s264, %s262
      %s266 = smul.addr %s265, 4
      %s267 = scalar_lea.vmem %s1, %s266
      %p268 = scmp.lt.s32.totalorder %s19, 1
      %s269 = scalar_select %p268, %s19, 1
      %p270 = scmp.lt.s32.totalorder %s21, 0
      %s271 = scalar_select %p270, %s21, 0
      %s272 = sadd.s32 %s271, %s269
      %s273 = scalar_lea.vmem %s2, %s272
      %p274 = scmp.lt.s32.totalorder %s19, 1
      %s275 = scalar_select %p274, %s19, 1
      %p276 = scmp.lt.s32.totalorder %s20, 1
      %s277 = scalar_select %p276, %s20, 1
      %p278 = scmp.lt.s32.totalorder %s21, 0
      %s279 = scalar_select %p278, %s21, 0
      %s280 = smul.addr %s277, 2
      %s281 = sadd.s32 %s279, %s280
      %s282 = smul.addr %s275, 4
      %s283 = sadd.s32 %s281, %s282
      %s284 = smul.addr %s283, 8
      %s285 = scalar_lea.vmem %s3, %s284
      %v286 = vld [vmem:[%s260] sm:$0xff]
      %v287 = vld [vmem:[%s260 + $0x8] sm:$0xff]
      %v288 = vld [vmem:[%s260 + $0x10] sm:$0x3f]
      %v289 = vld [vmem:[%s267] sm:$0x1]
      %v290 = vlaneseq
      %v291 = vshrl.u32 %v290, 7
      %v292 = vsub.s32 0, %v291
      %v293 = vrot.slane %v289, %v292
      %v294 = vmul.f32 %v286, %v293
      %v295 = vmul.f32 %v287, %v293
      %v296 = vmul.f32 %v288, %v293
      %v297 = vld [vmem:[%s267 + $0x1] sm:$0x1]
      %v298 = vlaneseq
      %v299 = vshrl.u32 %v298, 7
      %v300 = vsub.s32 0, %v299
      %v301 = vrot.slane %v297, %v300
      %v302 = vmul.f32 %v286, %v301
      %v303 = vmul.f32 %v287, %v301
      %v304 = vmul.f32 %v288, %v301
      %vm308 = vcmask 1046528
      %v309 = vrot.slane %v302, 1
      %v310 = vrot.slane %v303, 1
      %v311 = vsel %vm308, %v309, %v310
      %v312 = vrot.slane %v304, 1
      %v313 = vsel %vm308, %v310, %v312
      %v317 = vadd.f32 %v294, %v311
      %v318 = vadd.f32 %v295, %v313
      %v319 = vadd.f32 %v296, %v312
      %v320 = vld [vmem:[%s267 + $0x2] sm:$0x1]
      %v321 = vlaneseq
      %v322 = vshrl.u32 %v321, 7
      %v323 = vsub.s32 0, %v322
      %v324 = vrot.slane %v320, %v323
      %v325 = vmul.f32 %v286, %v324
      %v326 = vmul.f32 %v287, %v324
      %v327 = vmul.f32 %v288, %v324
      %vm331 = vcmask 1045504
      %v332 = vrot.slane %v325, 2
      %v333 = vrot.slane %v326, 2
      %v334 = vsel %vm331, %v332, %v333
      %v335 = vrot.slane %v327, 2
      %v336 = vsel %vm331, %v333, %v335
      %v340 = vadd.f32 %v317, %v334
      %v341 = vadd.f32 %v318, %v336
      %v342 = vadd.f32 %v319, %v335
      %v343 = vld [vmem:[%s267 + $0x3] sm:$0x1]
      %v344 = vlaneseq
      %v345 = vshrl.u32 %v344, 7
      %v346 = vsub.s32 0, %v345
      %v347 = vrot.slane %v343, %v346
      %v348 = vmul.f32 %v286, %v347
      %v349 = vmul.f32 %v287, %v347
      %v350 = vmul.f32 %v288, %v347
      %vm354 = vcmask 1044480
      %v355 = vrot.slane %v348, 3
      %v356 = vrot.slane %v349, 3
      %v357 = vsel %vm354, %v355, %v356
      %v358 = vrot.slane %v350, 3
      %v359 = vsel %vm354, %v356, %v358
      %v363 = vadd.f32 %v340, %v357
      %v364 = vadd.f32 %v341, %v359
      %v365 = vadd.f32 %v342, %v358
      %v366 = vld [vmem:[%s273] sm:$0x1]
      %v368 = vlaneseq
      %v369 = vshrl.u32 %v368, 7
      %v370 = vsub.s32 0, %v369
      %v371 = vrot.slane %v366, %v370
      %v373 = vadd.f32 %v363, %v371
      %v374 = vadd.f32 %v364, %v371
      %v375 = vadd.f32 %v365, %v371
      %v376 = vsub.f32 0.0, %v373
      %v377 = vsub.f32 0.0, %v374
      %v378 = vsub.f32 0.0, %v375
      %v379 = vmul.f32 %v376, 1.442695
      %v380 = vpow.pop %v379
      %v381 = vmul.f32 %v377, 1.442695
      %v382 = vpow.pop %v381
      %v383 = vmul.f32 %v378, 1.442695
      %v384 = vpow.pop %v383
      %v385 = vadd.f32 %v380, 1.0
      %v386 = vadd.f32 %v382, 1.0
      %v387 = vadd.f32 %v384, 1.0
      %v388 = vrcp.pop %v385
      %v389 = vmul.f32 %v373, %v388
      %v390 = vrcp.pop %v386
      %v391 = vmul.f32 %v374, %v390
      %v392 = vrcp.pop %v387
      %v393 = vmul.f32 %v375, %v392
      %vm394 = vcmask 523267
      %395 = vst.msk [vmem:[%s285 - $0x3] sm:$0xf8] %vm394, %v389
      %vm396 = vcmask 523264
      %397 = vst.msk [vmem:[%s285 + $0x5] sm:$0xff] %vm396, %v391
      %vm398 = vcmask 518144
      %399 = vst.msk [vmem:[%s285 + $0xd] sm:$0x7] %vm398, %v393
      %p400 = scmp.lt.s32.totalorder %s19, 1
      %s401 = scalar_select %p400, %s19, 1
      %p402 = scmp.lt.s32.totalorder %s20, 1
      %s403 = scalar_select %p402, %s20, 1
      %p404 = scmp.lt.s32.totalorder %s21, 0
      %s405 = scalar_select %p404, %s21, 0
      %s406 = smul.addr %s403, 2
      %s407 = sadd.s32 %s405, %s406
      %s408 = smul.addr %s401, 4
      %s409 = sadd.s32 %s407, %s408
      %s410 = smul.addr %s409, 8
      %s411 = scalar_lea.vmem %s3, %s410
      // Predicated region
      $region33: #{cossm_forward.14} parent=31 // pred_check
        %p412 = pneg %p141
      $region34: #{cossm_forward.14} parent=31 // pred_check_branch
        %414 = sbr.rel (%p412) target = $region36
      $region35: #{cossm_forward.14} parent=31 // pred_region
        _
      $region36: #{cossm_forward.14} parent=31 // pred_fallthru
        _
    $region32: #{cossm_forward.14} parent=5 // pred_fallthru
      _
    %p415 = scmp.le.s32.totalorder 2, %s9
    // Predicated region
    $region37: #{cossm_forward.14} parent=5 // pred_check
      %p416 = pneg %p415
    $region38: #{cossm_forward.14} parent=5 // pred_check_branch
      %418 = sbr.rel (%p416) target = $region40
    $region39: #{cossm_forward.14} parent=5 // pred_region
      %s419 = ssub.s32 %s9, 2
      // Predicated region
      $region41: #{cossm_forward.14} parent=39 // pred_check
        %p420 = pneg %p147
      $region42: #{cossm_forward.14} parent=39 // pred_check_branch
        %422 = sbr.rel (%p420) target = $region44
      $region43: #{cossm_forward.14} parent=39 // pred_region
        %p423 = scmp.lt.s32.totalorder %s22, 1
        %s424 = scalar_select %p423, %s22, 1
        %p425 = scmp.lt.s32.totalorder %s23, 1
        %s426 = scalar_select %p425, %s23, 1
        %p427 = scmp.lt.s32.totalorder %s24, 0
        %s428 = scalar_select %p427, %s24, 0
        %s429 = smul.addr %s426, 2
        %s430 = sadd.s32 %s428, %s429
        %s431 = smul.addr %s424, 4
        %s432 = sadd.s32 %s430, %s431
        %s433 = smul.addr %s432, 8
        %s434 = scalar_lea.vmem %s3, %s433
      $region44: #{cossm_forward.14} parent=39 // pred_fallthru
        _
    $region40: #{cossm_forward.14} parent=5 // pred_fallthru
      _
  $region6: #{cossm_forward.14} parent=0 // loop_footer
    %s13 = sadd.s32 1, %s9
  $region7: #{cossm_forward.14} parent=0 // loop_footer_branch
    %8 = sbr.rel target = $region3
  $region8: #{cossm_forward.14} parent=0 // loop_exit
    _

// kernel: cossm_forward.16
$region0: #{cossm_forward.16}
  #allocation0 [shape = 'u32[]', space=smem, size = 0x4, offset = 0x4, fixed_abs, tag = 'smem constant byte address 0x4 - core index']
  #allocation1 [shape = 'u32[144,128]{1,0:T(1,128)}', space=vmem, size = 0x12000, scoped, tag = 'internal scratch']
  %s0 = inlined_call_operand.vmem [shape: f32[2,32,64], index: 0, kind: input, shape index: {}]
  %s1 = inlined_call_operand.vmem [shape: f32[2,64,64], index: 1, kind: input, shape index: {}]
  %s2 = inlined_call_operand.vmem [shape: f32[2,32,64], index: 2, kind: output, shape index: {}]
  %s3 = sld [smem:[#allocation0]]
  $region41: #{cossm_forward.16} parent=0
    _
  %s5 = ssub.s32 1, %s3
  %s6 = scalar_select 0, %s5, %s3
  loop: start=0, step=1, limit=4
  $region2: #{cossm_forward.16} parent=0 // loop_pre_header
    _
  $region3: #{cossm_forward.16} parent=0 // loop_header
    %s8 = sphi 0, %s12
    %p9 = scmp.ge.s32.totalorder %s8, 4
    %s15 = sphi 0, %s34
    %s16 = sphi 0, %s30
    %s17 = sphi 0, %s26
    %s18 = sphi 0, %s15
    %s19 = sphi 0, %s16
    %s20 = sphi 0, %s17
    %s21 = sphi 0, %s18
    %s22 = sphi 0, %s19
    %s23 = sphi 0, %s20
    %s39 = sphi 0, %s41
    %s42 = sphi 0, %s39
    %s43 = sphi 0, %s42
    %s59 = sphi 0, %s43
    %s67 = sphi 0, %s69
    %s70 = sphi 0, %s67
    %s71 = sphi 0, %s70
    %s87 = sphi 0, %s71
    %s97 = sphi 0, %s99
    %s100 = sphi 0, %s97
    %s101 = sphi 0, %s100
    %s117 = sphi 0, %s101
  $region4: #{cossm_forward.16} parent=0 // loop_header_branch
    %11 = sbr.rel (%p9) target = $region8
  $region5: #{cossm_forward.16} parent=0 // loop_body
    %s13 = ssub.s32 %s8, 1
    %s14 = ssub.s32 %s8, 2
    %s24 = sadd.s32 1, %s17
    %p25 = scmp.ge.s32.totalorder %s24, 1
    %s26 = scalar_select %p25, 0, %s24
    %s27 = sadd.s32 1, %s16
    %s28 = scalar_select %p25, %s27, %s16
    %p29 = scmp.ge.s32.totalorder %s28, 1
    %s30 = scalar_select %p29, 0, %s28
    %s31 = sadd.s32 1, %s15
    %s32 = scalar_select %p29, %s31, %s15
    %p33 = scmp.ge.s32.totalorder %s32, 2
    %s34 = scalar_select %p33, 0, %s32
    %s35 = ssub.s32 %s15, %s34
    %s36 = ssub.s32 %s16, %s30
    %s37 = sor.u32 %s35, %s36
    %p38 = scmp.eq.s32.totalorder %s37, 0
    %s40 = sadd.s32 %s39, 1
    %s41 = scalar_select %p38, %s39, %s40
    %p44 = pneg %p38
    %p45 = scmp.eq.s32.totalorder %s8, 1
    %p46 = por %p44, %p45
    %p47 = scmp.ne.s32.totalorder %s39, %s42
    %p48 = scmp.eq.s32.totalorder %s8, 0
    %p49 = por %p47, %p48
    %p50 = scmp.ne.s32.totalorder %s39, %s42
    %p51 = scmp.eq.s32.totalorder %s13, 1
    %p52 = por %p50, %p51
    %p53 = scmp.ne.s32.totalorder %s42, %s43
    %p54 = scmp.eq.s32.totalorder %s13, 0
    %p55 = por %p53, %p54
    %p56 = scmp.ne.s32.totalorder %s42, %s43
    %p57 = scmp.eq.s32.totalorder %s14, 1
    %p58 = por %p56, %p57
    %p60 = scmp.ne.s32.totalorder %s43, %s59
    %p61 = scmp.eq.s32.totalorder %s14, 0
    %p62 = por %p60, %p61
    %s63 = ssub.s32 %s15, %s34
    %s64 = ssub.s32 %s17, %s26
    %s65 = sor.u32 %s63, %s64
    %p66 = scmp.eq.s32.totalorder %s65, 0
    %s68 = sadd.s32 %s67, 1
    %s69 = scalar_select %p66, %s67, %s68
    %p72 = pneg %p66
    %p73 = scmp.eq.s32.totalorder %s8, 1
    %p74 = por %p72, %p73
    %p75 = scmp.ne.s32.totalorder %s67, %s70
    %p76 = scmp.eq.s32.totalorder %s8, 0
    %p77 = por %p75, %p76
    %p78 = scmp.ne.s32.totalorder %s67, %s70
    %p79 = scmp.eq.s32.totalorder %s13, 1
    %p80 = por %p78, %p79
    %p81 = scmp.ne.s32.totalorder %s70, %s71
    %p82 = scmp.eq.s32.totalorder %s13, 0
    %p83 = por %p81, %p82
    %p84 = scmp.ne.s32.totalorder %s70, %s71
    %p85 = scmp.eq.s32.totalorder %s14, 1
    %p86 = por %p84, %p85
    %p88 = scmp.ne.s32.totalorder %s71, %s87
    %p89 = scmp.eq.s32.totalorder %s14, 0
    %p90 = por %p88, %p89
    %s91 = ssub.s32 %s15, %s34
    %s92 = ssub.s32 %s16, %s30
    %s93 = sor.u32 %s91, %s92
    %s94 = ssub.s32 %s17, %s26
    %s95 = sor.u32 %s93, %s94
    %p96 = scmp.eq.s32.totalorder %s95, 0
    %s98 = sadd.s32 %s97, 1
    %s99 = scalar_select %p96, %s97, %s98
    %p102 = pneg %p96
    %p103 = scmp.eq.s32.totalorder %s8, 1
    %p104 = por %p102, %p103
    %p105 = scmp.ne.s32.totalorder %s97, %s100
    %p106 = scmp.eq.s32.totalorder %s8, 0
    %p107 = por %p105, %p106
    %p108 = scmp.ne.s32.totalorder %s97, %s100
    %p109 = scmp.eq.s32.totalorder %s13, 1
    %p110 = por %p108, %p109
    %p111 = scmp.ne.s32.totalorder %s100, %s101
    %p112 = scmp.eq.s32.totalorder %s13, 0
    %p113 = por %p111, %p112
    %p114 = scmp.ne.s32.totalorder %s100, %s101
    %p115 = scmp.eq.s32.totalorder %s14, 1
    %p116 = por %p114, %p115
    %p118 = scmp.ne.s32.totalorder %s101, %s117
    %p119 = scmp.eq.s32.totalorder %s14, 0
    %p120 = por %p118, %p119
    %p121 = scmp.le.s32.totalorder 1, %s8
    %p122 = scmp.lt.s32.totalorder %s8, 3
    %p123 = pnand %p121, %p122
    %p124 = pneg %p123
    // Predicated region
    $region9: #{cossm_forward.16} parent=5 // pred_check
      _
    $region10: #{cossm_forward.16} parent=5 // pred_check_branch
      %126 = sbr.rel (%p123) target = $region12
    $region11: #{cossm_forward.16} parent=5 // pred_region
      %s127 = ssub.s32 %s8, 1
    $region12: #{cossm_forward.16} parent=5 // pred_fallthru
      _
    %p128 = scmp.lt.s32.totalorder %s8, 2
    // Predicated region
    $region13: #{cossm_forward.16} parent=5 // pred_check
      %p129 = pneg %p128
    $region14: #{cossm_forward.16} parent=5 // pred_check_branch
      %131 = sbr.rel (%p129) target = $region16
    $region15: #{cossm_forward.16} parent=5 // pred_region
      // Predicated region
      $region17: #{cossm_forward.16} parent=15 // pred_check
        %p132 = pneg %p49
      $region18: #{cossm_forward.16} parent=15 // pred_check_branch
        %134 = sbr.rel (%p132) target = $region20
      $region19: #{cossm_forward.16} parent=15 // pred_region
        %s135 = smul.u32 4, %s16
        %p136 = scmp.lt.s32.totalorder %s15, 1
        %s137 = scalar_select %p136, %s15, 1
        %p138 = scmp.lt.s32.totalorder %s135, 3
        %s139 = scalar_select %p138, %s135, 3
        %s140 = smul.addr %s137, 4
        %s141 = sadd.s32 %s139, %s140
        %s142 = smul.addr %s141, 8
        %s143 = scalar_lea.vmem %s0, %s142
        %s144 = smul.u32 4, %s16
      $region20: #{cossm_forward.16} parent=15 // pred_fallthru
        _
      // Predicated region
      $region21: #{cossm_forward.16} parent=15 // pred_check
        %p145 = pneg %p77
      $region22: #{cossm_forward.16} parent=15 // pred_check_branch
        %147 = sbr.rel (%p145) target = $region24
      $region23: #{cossm_forward.16} parent=15 // pred_region
        %p148 = scmp.lt.s32.totalorder %s15, 1
        %s149 = scalar_select %p148, %s15, 1
        %p150 = scmp.lt.s32.totalorder %s17, 0
        %s151 = scalar_select %p150, %s17, 0
        %s152 = smul.addr %s149, 8
        %s153 = sadd.s32 %s151, %s152
        %s154 = smul.addr %s153, 8
        %s155 = scalar_lea.vmem %s1, %s154
      $region24: #{cossm_forward.16} parent=15 // pred_fallthru
        _
    $region16: #{cossm_forward.16} parent=5 // pred_fallthru
      _
    %p156 = scmp.le.s32.totalorder 1, %s8
    %p157 = scmp.lt.s32.totalorder %s8, 3
    %p158 = pnand %p156, %p157
    %p159 = pneg %p158
    // Predicated region
    $region25: #{cossm_forward.16} parent=5 // pred_check
      _
    $region26: #{cossm_forward.16} parent=5 // pred_check_branch
      %161 = sbr.rel (%p158) target = $region28
    $region27: #{cossm_forward.16} parent=5 // pred_region
      %s162 = ssub.s32 %s8, 1
      %s163 = smul.u32 4, %s19
      %p164 = scmp.lt.s32.totalorder %s18, 1
      %s165 = scalar_select %p164, %s18, 1
      %p166 = scmp.lt.s32.totalorder %s163, 3
      %s167 = scalar_select %p166, %s163, 3
      %s168 = smul.addr %s165, 4
      %s169 = sadd.s32 %s167, %s168
      %s170 = smul.addr %s169, 8
      %s171 = scalar_lea.vmem %s0, %s170
      %p172 = pneg %p55
      %p173 = pneg %p52
      %p174 = scmp.lt.s32.totalorder %s18, 1
      %s175 = scalar_select %p174, %s18, 1
      %p176 = scmp.lt.s32.totalorder %s20, 0
      %s177 = scalar_select %p176, %s20, 0
      %s178 = smul.addr %s175, 8
      %s179 = sadd.s32 %s177, %s178
      %s180 = smul.addr %s179, 8
      %s181 = scalar_lea.vmem %s1, %s180
      %p182 = pneg %p83
      %p183 = pneg %p80
      %p184 = pneg %p113
      %p185 = pneg %p110
      %s186 = smul.u32 4, %s19
      %p187 = scmp.lt.s32.totalorder %s18, 1
      %s188 = scalar_select %p187, %s18, 1
      %p189 = scmp.lt.s32.totalorder %s186, 3
      %s190 = scalar_select %p189, %s186, 3
      %p191 = scmp.lt.s32.totalorder %s20, 0
      %s192 = scalar_select %p191, %s20, 0
      %s193 = sadd.s32 %s192, %s190
      %s194 = smul.addr %s188, 4
      %s195 = sadd.s32 %s193, %s194
      %s196 = smul.addr %s195, 8
      %s197 = scalar_lea.vmem %s2, %s196
      %s198 = smul.u32 4, %s19
      %p199 = scmp.lt.s32.totalorder %s18, 1
      %s200 = scalar_select %p199, %s18, 1
      %p201 = scmp.lt.s32.totalorder %s198, 3
      %s202 = scalar_select %p201, %s198, 3
      %s203 = smul.addr %s200, 4
      %s204 = sadd.s32 %s202, %s203
      %s205 = smul.addr %s204, 8
      %s206 = scalar_lea.vmem %s0, %s205
      %s207 = smul.u32 4, %s19
      %p208 = scmp.lt.s32.totalorder %s18, 1
      %s209 = scalar_select %p208, %s18, 1
      %p210 = scmp.lt.s32.totalorder %s20, 0
      %s211 = scalar_select %p210, %s20, 0
      %s212 = smul.addr %s209, 8
      %s213 = sadd.s32 %s211, %s212
      %s214 = smul.addr %s213, 8
      %s215 = scalar_lea.vmem %s1, %s214
      %s216 = smul.u32 4, %s19
      %p217 = scmp.lt.s32.totalorder %s18, 1
      %s218 = scalar_select %p217, %s18, 1
      %p219 = scmp.lt.s32.totalorder %s216, 3
      %s220 = scalar_select %p219, %s216, 3
      %p221 = scmp.lt.s32.totalorder %s20, 0
      %s222 = scalar_select %p221, %s20, 0
      %s223 = sadd.s32 %s222, %s220
      %s224 = smul.addr %s218, 4
      %s225 = sadd.s32 %s223, %s224
      %s226 = smul.addr %s225, 8
      %s227 = scalar_lea.vmem %s2, %s226
      %s228 = smul.u32 4, %s19
      %v229 = vld [vmem:[%s206] sm:$0xff]
      %v230 = vld [vmem:[%s206 + $0x8] sm:$0xff]
      %v231 = vld [vmem:[%s206 + $0x10] sm:$0xff]
      %v232 = vld [vmem:[%s206 + $0x18] sm:$0xff]
      %v233 = vld [vmem:[%s215] sm:$0xff]
      %v234 = vld [vmem:[%s215 + $0x8] sm:$0xff]
      %v235 = vld [vmem:[%s215 + $0x10] sm:$0xff]
      %v236 = vld [vmem:[%s215 + $0x18] sm:$0xff]
      %v237 = vld [vmem:[%s215 + $0x20] sm:$0xff]
      %v238 = vld [vmem:[%s215 + $0x28] sm:$0xff]
      %v239 = vld [vmem:[%s215 + $0x30] sm:$0xff]
      %v240 = vld [vmem:[%s215 + $0x38] sm:$0xff]
      %vm241 = vcmask 523264
      %v243 = vsel %vm241, %v229, 0
      %v246 = vsel %vm241, %v230, 0
      %v249 = vsel %vm241, %v231, 0
      %v252 = vsel %vm241, %v232, 0
      %254 = vmatprep.subr.mxu0 0.0
      %255 = vmatpush1.msra.mxu0 %v233
      %256 = vmatprep.subr.mxu0 0.0
      %257 = vmatpush1.msra.mxu0 %v234
      %258 = vmatprep.subr.mxu0 0.0
      %259 = vmatpush1.msra.mxu0 %v235
      %260 = vmatprep.subr.mxu0 0.0
      %261 = vmatpush1.msra.mxu0 %v236
      %262 = vmatprep.subr.mxu0 0.0
      %263 = vmatpush1.msra.mxu0 %v237
      %264 = vmatprep.subr.mxu0 0.0
      %265 = vmatpush1.msra.mxu0 %v238
      %266 = vmatprep.subr.mxu0 0.0
      %267 = vmatpush1.msra.mxu0 %v239
      %268 = vmatprep.subr.mxu0 0.0
      %269 = vmatpush1.msra.mxu0 %v240
      %270 = vmatprep.subr.mxu0 0.0
      %271 = vmatpush1.msra.mxu0 0.0
      %272 = vmatprep.subr.mxu0 0.0
      %273 = vmatpush1.msra.mxu0 0.0
      %274 = vmatprep.subr.mxu0 0.0
      %275 = vmatpush1.msra.mxu0 0.0
      %276 = vmatprep.subr.mxu0 0.0
      %277 = vmatpush1.msra.mxu0 0.0
      %278 = vmatprep.subr.mxu0 0.0
      %279 = vmatpush1.msra.mxu0 0.0
      %280 = vmatprep.subr.mxu0 0.0
      %281 = vmatpush1.msra.mxu0 0.0
      %282 = vmatprep.subr.mxu0 0.0
      %283 = vmatpush1.msra.mxu0 0.0
      %284 = vmatprep.subr.mxu0 0.0
      %285 = vmatpush1.msra.mxu0 0.0
      %286 = vmatprep.subr.mxu0 0.0
      %287 = vmatpush1.msra.mxu0 0.0
      %288 = vmatprep.subr.mxu0 0.0
      %289 = vmatpush1.msra.mxu0 0.0
      %290 = vmatprep.subr.mxu0 0.0
      %291 = vmatpush1.msra.mxu0 0.0
      %292 = vmatprep.subr.mxu0 0.0
      %293 = vmatpush1.msra.mxu0 0.0
      %294 = vmatprep.subr.mxu0 0.0
      %295 = vmatpush1.msra.mxu0 0.0
      %296 = vmatprep.subr.mxu0 0.0
      %297 = vmatpush1.msra.mxu0 0.0
      %298 = vmatprep.subr.mxu0 0.0
      %299 = vmatpush1.msra.mxu0 0.0
      %300 = vmatprep.subr.mxu0 0.0
      %301 = vmatpush1.msra.mxu0 0.0
      %302 = vmatprep.subr.mxu0 0.0
      %303 = vmatpush1.msra.mxu0 0.0
      %304 = vmatprep.subr.mxu0 0.0
      %305 = vmatpush1.msra.mxu0 0.0
      %306 = vmatprep.subr.mxu0 0.0
      %307 = vmatpush1.msra.mxu0 0.0
      %308 = vmatprep.subr.mxu0 0.0
      %309 = vmatpush1.msra.mxu0 0.0
      %310 = vmatprep.subr.mxu0 0.0
      %311 = vmatpush1.msra.mxu0 0.0
      %312 = vmatprep.subr.mxu0 0.0
      %313 = vmatpush1.msra.mxu0 0.0
      %314 = vmatprep.subr.mxu0 0.0
      %315 = vmatpush1.msra.mxu0 0.0
      %316 = vmatprep.subr.mxu0 0.0
      %317 = vmatpush1.msra.mxu0 0.0
      %318 = vmatprep.mubr.f32.mxu0 0.0
      %319 = vmatmul.mubr.f32.gmra.mrb[0].mxu0 %v243
      %v320 = vpop.f32.mrb[0].mxu0
      %v321 = vadd.f32 0.0, %v320
      %v322 = vpop.f32.mrb[0].mxu0
      %323 = vmatprep.mubr.f32.mxu0 0.0
      %324 = vmatmul.mubr.f32.gmra.mrb[0].mxu0 %v246
      %v325 = vpop.f32.mrb[0].mxu0
      %v326 = vadd.f32 0.0, %v325
      %v327 = vpop.f32.mrb[0].mxu0
      %328 = vmatprep.mubr.f32.mxu0 0.0
      %329 = vmatmul.mubr.f32.gmra.mrb[0].mxu0 %v249
      %v330 = vpop.f32.mrb[0].mxu0
      %v331 = vadd.f32 0.0, %v330
      %v332 = vpop.f32.mrb[0].mxu0
      %333 = vmatprep.mubr.f32.mxu0 0.0
      %334 = vmatmul.mubr.f32.gmra.mrb[0].mxu0 %v252
      %v335 = vpop.f32.mrb[0].mxu0
      %v336 = vadd.f32 0.0, %v335
      %v337 = vpop.f32.mrb[0].mxu0
      %338 = vdwg.mxu0
      %339 = vst.msk [vmem:[%s227] sm:$0xff] %vm241, %v321
      %340 = vst.msk [vmem:[%s227 + $0x8] sm:$0xff] %vm241, %v326
      %341 = vst.msk [vmem:[%s227 + $0x10] sm:$0xff] %vm241, %v331
      %342 = vst.msk [vmem:[%s227 + $0x18] sm:$0xff] %vm241, %v336
      %s343 = smul.u32 4, %s19
      %p344 = scmp.lt.s32.totalorder %s18, 1
      %s345 = scalar_select %p344, %s18, 1
      %p346 = scmp.lt.s32.totalorder %s343, 3
      %s347 = scalar_select %p346, %s343, 3
      %p348 = scmp.lt.s32.totalorder %s20, 0
      %s349 = scalar_select %p348, %s20, 0
      %s350 = sadd.s32 %s349, %s347
      %s351 = smul.addr %s345, 4
      %s352 = sadd.s32 %s350, %s351
      %s353 = smul.addr %s352, 8
      %s354 = scalar_lea.vmem %s2, %s353
      // Predicated region
      $region29: #{cossm_forward.16} parent=27 // pred_check
        %p355 = pneg %p110
      $region30: #{cossm_forward.16} parent=27 // pred_check_branch
        %357 = sbr.rel (%p355) target = $region32
      $region31: #{cossm_forward.16} parent=27 // pred_region
        %s358 = smul.u32 4, %s19
      $region32: #{cossm_forward.16} parent=27 // pred_fallthru
        _
    $region28: #{cossm_forward.16} parent=5 // pred_fallthru
      _
    %p359 = scmp.le.s32.totalorder 2, %s8
    // Predicated region
    $region33: #{cossm_forward.16} parent=5 // pred_check
      %p360 = pneg %p359
    $region34: #{cossm_forward.16} parent=5 // pred_check_branch
      %362 = sbr.rel (%p360) target = $region36
    $region35: #{cossm_forward.16} parent=5 // pred_region
      %s363 = ssub.s32 %s8, 2
      // Predicated region
      $region37: #{cossm_forward.16} parent=35 // pred_check
        %p364 = pneg %p116
      $region38: #{cossm_forward.16} parent=35 // pred_check_branch
        %366 = sbr.rel (%p364) target = $region40
      $region39: #{cossm_forward.16} parent=35 // pred_region
        %s367 = smul.u32 4, %s22
        %p368 = scmp.lt.s32.totalorder %s21, 1
        %s369 = scalar_select %p368, %s21, 1
        %p370 = scmp.lt.s32.totalorder %s367, 3
        %s371 = scalar_select %p370, %s367, 3
        %p372 = scmp.lt.s32.totalorder %s23, 0
        %s373 = scalar_select %p372, %s23, 0
        %s374 = sadd.s32 %s373, %s371
        %s375 = smul.addr %s369, 4
        %s376 = sadd.s32 %s374, %s375
        %s377 = smul.addr %s376, 8
        %s378 = scalar_lea.vmem %s2, %s377
      $region40: #{cossm_forward.16} parent=35 // pred_fallthru
        _
    $region36: #{cossm_forward.16} parent=5 // pred_fallthru
      _
  $region6: #{cossm_forward.16} parent=0 // loop_footer
    %s12 = sadd.s32 1, %s8
  $region7: #{cossm_forward.16} parent=0 // loop_footer_branch
    %7 = sbr.rel target = $region3
  $region8: #{cossm_forward.16} parent=0 // loop_exit
    _

// kernel: cossm_forward.13
$region0: #{cossm_forward.13}
  #allocation0 [shape = 'u32[]', space=smem, size = 0x4, offset = 0x4, fixed_abs, tag = 'smem constant byte address 0x4 - core index']
  #allocation1 [shape = 'u32[144,128]{1,0:T(1,128)}', space=vmem, size = 0x12000, scoped, tag = 'internal scratch']
  %s0 = inlined_call_operand.vmem [shape: f32[2,2,22,64], index: 0, kind: input, shape index: {}]
  %s1 = inlined_call_operand.vmem [shape: f32[2,4,64], index: 1, kind: input, shape index: {}]
  %s2 = inlined_call_operand.vmem [shape: f32[2,1,64], index: 2, kind: input, shape index: {}]
  %s3 = inlined_call_operand.vmem [shape: f32[2,2,16,64], index: 3, kind: output, shape index: {}]
  %s4 = sld [smem:[#allocation0]]
  $region45: #{cossm_forward.13} parent=0
    _
  %s6 = ssub.s32 1, %s4
  %s7 = scalar_select 0, %s6, %s4
  loop: start=0, step=1, limit=6
  $region2: #{cossm_forward.13} parent=0 // loop_pre_header
    _
  $region3: #{cossm_forward.13} parent=0 // loop_header
    %s9 = sphi 0, %s13
    %p10 = scmp.ge.s32.totalorder %s9, 6
    %s16 = sphi 0, %s35
    %s17 = sphi 0, %s31
    %s18 = sphi 0, %s27
    %s19 = sphi 0, %s16
    %s20 = sphi 0, %s17
    %s21 = sphi 0, %s18
    %s22 = sphi 0, %s19
    %s23 = sphi 0, %s20
    %s24 = sphi 0, %s21
    %s42 = sphi 0, %s44
    %s45 = sphi 0, %s42
    %s46 = sphi 0, %s45
    %s62 = sphi 0, %s46
    %s70 = sphi 0, %s72
    %s73 = sphi 0, %s70
    %s74 = sphi 0, %s73
    %s90 = sphi 0, %s74
    %s98 = sphi 0, %s100
    %s101 = sphi 0, %s98
    %s102 = sphi 0, %s101
    %s118 = sphi 0, %s102
    %s128 = sphi 0, %s130
    %s131 = sphi 0, %s128
    %s132 = sphi 0, %s131
    %s148 = sphi 0, %s132
  $region4: #{cossm_forward.13} parent=0 // loop_header_branch
    %12 = sbr.rel (%p10) target = $region8
  $region5: #{cossm_forward.13} parent=0 // loop_body
    %s14 = ssub.s32 %s9, 1
    %s15 = ssub.s32 %s9, 2
    %s25 = sadd.s32 1, %s18
    %p26 = scmp.ge.s32.totalorder %s25, 1
    %s27 = scalar_select %p26, 0, %s25
    %s28 = sadd.s32 1, %s17
    %s29 = scalar_select %p26, %s28, %s17
    %p30 = scmp.ge.s32.totalorder %s29, 2
    %s31 = scalar_select %p30, 0, %s29
    %s32 = sadd.s32 1, %s16
    %s33 = scalar_select %p30, %s32, %s16
    %p34 = scmp.ge.s32.totalorder %s33, 2
    %s35 = scalar_select %p34, 0, %s33
    %s36 = ssub.s32 %s16, %s35
    %s37 = ssub.s32 %s17, %s31
    %s38 = sor.u32 %s36, %s37
    %s39 = ssub.s32 %s18, %s27
    %s40 = sor.u32 %s38, %s39
    %p41 = scmp.eq.s32.totalorder %s40, 0
    %s43 = sadd.s32 %s42, 1
    %s44 = scalar_select %p41, %s42, %s43
    %p47 = pneg %p41
    %p48 = scmp.eq.s32.totalorder %s9, 3
    %p49 = por %p47, %p48
    %p50 = scmp.ne.s32.totalorder %s42, %s45
    %p51 = scmp.eq.s32.totalorder %s9, 0
    %p52 = por %p50, %p51
    %p53 = scmp.ne.s32.totalorder %s42, %s45
    %p54 = scmp.eq.s32.totalorder %s14, 3
    %p55 = por %p53, %p54
    %p56 = scmp.ne.s32.totalorder %s45, %s46
    %p57 = scmp.eq.s32.totalorder %s14, 0
    %p58 = por %p56, %p57
    %p59 = scmp.ne.s32.totalorder %s45, %s46
    %p60 = scmp.eq.s32.totalorder %s15, 3
    %p61 = por %p59, %p60
    %p63 = scmp.ne.s32.totalorder %s46, %s62
    %p64 = scmp.eq.s32.totalorder %s15, 0
    %p65 = por %p63, %p64
    %s66 = ssub.s32 %s16, %s35
    %s67 = ssub.s32 %s18, %s27
    %s68 = sor.u32 %s66, %s67
    %p69 = scmp.eq.s32.totalorder %s68, 0
    %s71 = sadd.s32 %s70, 1
    %s72 = scalar_select %p69, %s70, %s71
    %p75 = pneg %p69
    %p76 = scmp.eq.s32.totalorder %s9, 3
    %p77 = por %p75, %p76
    %p78 = scmp.ne.s32.totalorder %s70, %s73
    %p79 = scmp.eq.s32.totalorder %s9, 0
    %p80 = por %p78, %p79
    %p81 = scmp.ne.s32.totalorder %s70, %s73
    %p82 = scmp.eq.s32.totalorder %s14, 3
    %p83 = por %p81, %p82
    %p84 = scmp.ne.s32.totalorder %s73, %s74
    %p85 = scmp.eq.s32.totalorder %s14, 0
    %p86 = por %p84, %p85
    %p87 = scmp.ne.s32.totalorder %s73, %s74
    %p88 = scmp.eq.s32.totalorder %s15, 3
    %p89 = por %p87, %p88
    %p91 = scmp.ne.s32.totalorder %s74, %s90
    %p92 = scmp.eq.s32.totalorder %s15, 0
    %p93 = por %p91, %p92
    %s94 = ssub.s32 %s16, %s35
    %s95 = ssub.s32 %s18, %s27
    %s96 = sor.u32 %s94, %s95
    %p97 = scmp.eq.s32.totalorder %s96, 0
    %s99 = sadd.s32 %s98, 1
    %s100 = scalar_select %p97, %s98, %s99
    %p103 = pneg %p97
    %p104 = scmp.eq.s32.totalorder %s9, 3
    %p105 = por %p103, %p104
    %p106 = scmp.ne.s32.totalorder %s98, %s101
    %p107 = scmp.eq.s32.totalorder %s9, 0
    %p108 = por %p106, %p107
    %p109 = scmp.ne.s32.totalorder %s98, %s101
    %p110 = scmp.eq.s32.totalorder %s14, 3
    %p111 = por %p109, %p110
    %p112 = scmp.ne.s32.totalorder %s101, %s102
    %p113 = scmp.eq.s32.totalorder %s14, 0
    %p114 = por %p112, %p113
    %p115 = scmp.ne.s32.totalorder %s101, %s102
    %p116 = scmp.eq.s32.totalorder %s15, 3
    %p117 = por %p115, %p116
    %p119 = scmp.ne.s32.totalorder %s102, %s118
    %p120 = scmp.eq.s32.totalorder %s15, 0
    %p121 = por %p119, %p120
    %s122 = ssub.s32 %s16, %s35
    %s123 = ssub.s32 %s17, %s31
    %s124 = sor.u32 %s122, %s123
    %s125 = ssub.s32 %s18, %s27
    %s126 = sor.u32 %s124, %s125
    %p127 = scmp.eq.s32.totalorder %s126, 0
    %s129 = sadd.s32 %s128, 1
    %s130 = scalar_select %p127, %s128, %s129
    %p133 = pneg %p127
    %p134 = scmp.eq.s32.totalorder %s9, 3
    %p135 = por %p133, %p134
    %p136 = scmp.ne.s32.totalorder %s128, %s131
    %p137 = scmp.eq.s32.totalorder %s9, 0
    %p138 = por %p136, %p137
    %p139 = scmp.ne.s32.totalorder %s128, %s131
    %p140 = scmp.eq.s32.totalorder %s14, 3
    %p141 = por %p139, %p140
    %p142 = scmp.ne.s32.totalorder %s131, %s132
    %p143 = scmp.eq.s32.totalorder %s14, 0
    %p144 = por %p142, %p143
    %p145 = scmp.ne.s32.totalorder %s131, %s132
    %p146 = scmp.eq.s32.totalorder %s15, 3
    %p147 = por %p145, %p146
    %p149 = scmp.ne.s32.totalorder %s132, %s148
    %p150 = scmp.eq.s32.totalorder %s15, 0
    %p151 = por %p149, %p150
    %p152 = scmp.le.s32.totalorder 1, %s9
    %p153 = scmp.lt.s32.totalorder %s9, 5
    %p154 = pnand %p152, %p153
    %p155 = pneg %p154
    // Predicated region
    $region9: #{cossm_forward.13} parent=5 // pred_check
      _
    $region10: #{cossm_forward.13} parent=5 // pred_check_branch
      %157 = sbr.rel (%p154) target = $region12
    $region11: #{cossm_forward.13} parent=5 // pred_region
      %s158 = ssub.s32 %s9, 1
    $region12: #{cossm_forward.13} parent=5 // pred_fallthru
      _
    %p159 = scmp.lt.s32.totalorder %s9, 4
    // Predicated region
    $region13: #{cossm_forward.13} parent=5 // pred_check
      %p160 = pneg %p159
    $region14: #{cossm_forward.13} parent=5 // pred_check_branch
      %162 = sbr.rel (%p160) target = $region16
    $region15: #{cossm_forward.13} parent=5 // pred_region
      // Predicated region
      $region17: #{cossm_forward.13} parent=15 // pred_check
        %p163 = pneg %p52
      $region18: #{cossm_forward.13} parent=15 // pred_check_branch
        %165 = sbr.rel (%p163) target = $region20
      $region19: #{cossm_forward.13} parent=15 // pred_region
        %p166 = scmp.lt.s32.totalorder %s16, 1
        %s167 = scalar_select %p166, %s16, 1
        %p168 = scmp.lt.s32.totalorder %s17, 1
        %s169 = scalar_select %p168, %s17, 1
        %p170 = scmp.lt.s32.totalorder %s18, 0
        %s171 = scalar_select %p170, %s18, 0
        %s172 = smul.addr %s169, 3
        %s173 = sadd.s32 %s171, %s172
        %s174 = smul.addr %s167, 6
        %s175 = sadd.s32 %s173, %s174
        %s176 = smul.addr %s175, 8
        %s177 = scalar_lea.vmem %s0, %s176
      $region20: #{cossm_forward.13} parent=15 // pred_fallthru
        _
      // Predicated region
      $region21: #{cossm_forward.13} parent=15 // pred_check
        %p178 = pneg %p80
      $region22: #{cossm_forward.13} parent=15 // pred_check_branch
        %180 = sbr.rel (%p178) target = $region24
      $region23: #{cossm_forward.13} parent=15 // pred_region
        %p181 = scmp.lt.s32.totalorder %s16, 1
        %s182 = scalar_select %p181, %s16, 1
        %p183 = scmp.lt.s32.totalorder %s18, 0
        %s184 = scalar_select %p183, %s18, 0
        %s185 = sadd.s32 %s184, %s182
        %s186 = smul.addr %s185, 4
        %s187 = scalar_lea.vmem %s1, %s186
      $region24: #{cossm_forward.13} parent=15 // pred_fallthru
        _
      // Predicated region
      $region25: #{cossm_forward.13} parent=15 // pred_check
        %p188 = pneg %p108
      $region26: #{cossm_forward.13} parent=15 // pred_check_branch
        %190 = sbr.rel (%p188) target = $region28
      $region27: #{cossm_forward.13} parent=15 // pred_region
        %p191 = scmp.lt.s32.totalorder %s16, 1
        %s192 = scalar_select %p191, %s16, 1
        %p193 = scmp.lt.s32.totalorder %s18, 0
        %s194 = scalar_select %p193, %s18, 0
        %s195 = sadd.s32 %s194, %s192
        %s196 = scalar_lea.vmem %s2, %s195
      $region28: #{cossm_forward.13} parent=15 // pred_fallthru
        _
    $region16: #{cossm_forward.13} parent=5 // pred_fallthru
      _
    %p197 = scmp.le.s32.totalorder 1, %s9
    %p198 = scmp.lt.s32.totalorder %s9, 5
    %p199 = pnand %p197, %p198
    %p200 = pneg %p199
    // Predicated region
    $region29: #{cossm_forward.13} parent=5 // pred_check
      _
    $region30: #{cossm_forward.13} parent=5 // pred_check_branch
      %202 = sbr.rel (%p199) target = $region32
    $region31: #{cossm_forward.13} parent=5 // pred_region
      %s203 = ssub.s32 %s9, 1
      %p204 = scmp.lt.s32.totalorder %s19, 1
      %s205 = scalar_select %p204, %s19, 1
      %p206 = scmp.lt.s32.totalorder %s20, 1
      %s207 = scalar_select %p206, %s20, 1
      %p208 = scmp.lt.s32.totalorder %s21, 0
      %s209 = scalar_select %p208, %s21, 0
      %s210 = smul.addr %s207, 3
      %s211 = sadd.s32 %s209, %s210
      %s212 = smul.addr %s205, 6
      %s213 = sadd.s32 %s211, %s212
      %s214 = smul.addr %s213, 8
      %s215 = scalar_lea.vmem %s0, %s214
      %p216 = pneg %p58
      %p217 = pneg %p55
      %p218 = scmp.lt.s32.totalorder %s19, 1
      %s219 = scalar_select %p218, %s19, 1
      %p220 = scmp.lt.s32.totalorder %s21, 0
      %s221 = scalar_select %p220, %s21, 0
      %s222 = sadd.s32 %s221, %s219
      %s223 = smul.addr %s222, 4
      %s224 = scalar_lea.vmem %s1, %s223
      %p225 = pneg %p86
      %p226 = pneg %p83
      %p227 = scmp.lt.s32.totalorder %s19, 1
      %s228 = scalar_select %p227, %s19, 1
      %p229 = scmp.lt.s32.totalorder %s21, 0
      %s230 = scalar_select %p229, %s21, 0
      %s231 = sadd.s32 %s230, %s228
      %s232 = scalar_lea.vmem %s2, %s231
      %p233 = pneg %p114
      %p234 = pneg %p111
      %p235 = pneg %p144
      %p236 = pneg %p141
      %p237 = scmp.lt.s32.totalorder %s19, 1
      %s238 = scalar_select %p237, %s19, 1
      %p239 = scmp.lt.s32.totalorder %s20, 1
      %s240 = scalar_select %p239, %s20, 1
      %p241 = scmp.lt.s32.totalorder %s21, 0
      %s242 = scalar_select %p241, %s21, 0
      %s243 = smul.addr %s240, 2
      %s244 = sadd.s32 %s242, %s243
      %s245 = smul.addr %s238, 4
      %s246 = sadd.s32 %s244, %s245
      %s247 = smul.addr %s246, 8
      %s248 = scalar_lea.vmem %s3, %s247
      %p249 = scmp.lt.s32.totalorder %s19, 1
      %s250 = scalar_select %p249, %s19, 1
      %p251 = scmp.lt.s32.totalorder %s20, 1
      %s252 = scalar_select %p251, %s20, 1
      %p253 = scmp.lt.s32.totalorder %s21, 0
      %s254 = scalar_select %p253, %s21, 0
      %s255 = smul.addr %s252, 3
      %s256 = sadd.s32 %s254, %s255
      %s257 = smul.addr %s250, 6
      %s258 = sadd.s32 %s256, %s257
      %s259 = smul.addr %s258, 8
      %s260 = scalar_lea.vmem %s0, %s259
      %p261 = scmp.lt.s32.totalorder %s19, 1
      %s262 = scalar_select %p261, %s19, 1
      %p263 = scmp.lt.s32.totalorder %s21, 0
      %s264 = scalar_select %p263, %s21, 0
      %s265 = sadd.s32 %s264, %s262
      %s266 = smul.addr %s265, 4
      %s267 = scalar_lea.vmem %s1, %s266
      %p268 = scmp.lt.s32.totalorder %s19, 1
      %s269 = scalar_select %p268, %s19, 1
      %p270 = scmp.lt.s32.totalorder %s21, 0
      %s271 = scalar_select %p270, %s21, 0
      %s272 = sadd.s32 %s271, %s269
      %s273 = scalar_lea.vmem %s2, %s272
      %p274 = scmp.lt.s32.totalorder %s19, 1
      %s275 = scalar_select %p274, %s19, 1
      %p276 = scmp.lt.s32.totalorder %s20, 1
      %s277 = scalar_select %p276, %s20, 1
      %p278 = scmp.lt.s32.totalorder %s21, 0
      %s279 = scalar_select %p278, %s21, 0
      %s280 = smul.addr %s277, 2
      %s281 = sadd.s32 %s279, %s280
      %s282 = smul.addr %s275, 4
      %s283 = sadd.s32 %s281, %s282
      %s284 = smul.addr %s283, 8
      %s285 = scalar_lea.vmem %s3, %s284
      %v286 = vld [vmem:[%s260] sm:$0xff]
      %v287 = vld [vmem:[%s260 + $0x8] sm:$0xff]
      %v288 = vld [vmem:[%s260 + $0x10] sm:$0x3f]
      %v289 = vld [vmem:[%s267] sm:$0x1]
      %v290 = vlaneseq
      %v291 = vshrl.u32 %v290, 7
      %v292 = vsub.s32 0, %v291
      %v293 = vrot.slane %v289, %v292
      %v294 = vmul.f32 %v286, %v293
      %v295 = vmul.f32 %v287, %v293
      %v296 = vld [vmem:[%s267 + $0x1] sm:$0x1]
      %v297 = vlaneseq
      %v298 = vshrl.u32 %v297, 7
      %v299 = vsub.s32 0, %v298
      %v300 = vrot.slane %v296, %v299
      %v301 = vmul.f32 %v286, %v300
      %v302 = vmul.f32 %v287, %v300
      %v303 = vmul.f32 %v288, %v300
      %vm307 = vcmask 1046528
      %v308 = vrot.slane %v301, 1
      %v309 = vrot.slane %v302, 1
      %v310 = vsel %vm307, %v308, %v309
      %v311 = vrot.slane %v303, 1
      %v312 = vsel %vm307, %v309, %v311
      %v315 = vadd.f32 %v294, %v310
      %v316 = vadd.f32 %v295, %v312
      %v317 = vld [vmem:[%s267 + $0x2] sm:$0x1]
      %v318 = vlaneseq
      %v319 = vshrl.u32 %v318, 7
      %v320 = vsub.s32 0, %v319
      %v321 = vrot.slane %v317, %v320
      %v322 = vmul.f32 %v286, %v321
      %v323 = vmul.f32 %v287, %v321
      %v324 = vmul.f32 %v288, %v321
      %vm328 = vcmask 1045504
      %v329 = vrot.slane %v322, 2
      %v330 = vrot.slane %v323, 2
      %v331 = vsel %vm328, %v329, %v330
      %v332 = vrot.slane %v324, 2
      %v333 = vsel %vm328, %v330, %v332
      %v336 = vadd.f32 %v315, %v331
      %v337 = vadd.f32 %v316, %v333
      %v338 = vld [vmem:[%s267 + $0x3] sm:$0x1]
      %v339 = vlaneseq
      %v340 = vshrl.u32 %v339, 7
      %v341 = vsub.s32 0, %v340
      %v342 = vrot.slane %v338, %v341
      %v343 = vmul.f32 %v286, %v342
      %v344 = vmul.f32 %v287, %v342
      %v345 = vmul.f32 %v288, %v342
      %vm349 = vcmask 1044480
      %v350 = vrot.slane %v343, 3
      %v351 = vrot.slane %v344, 3
      %v352 = vsel %vm349, %v350, %v351
      %v353 = vrot.slane %v345, 3
      %v354 = vsel %vm349, %v351, %v353
      %v357 = vadd.f32 %v336, %v352
      %v358 = vadd.f32 %v337, %v354
      %v359 = vld [vmem:[%s273] sm:$0x1]
      %v361 = vlaneseq
      %v362 = vshrl.u32 %v361, 7
      %v363 = vsub.s32 0, %v362
      %v364 = vrot.slane %v359, %v363
      %v366 = vadd.f32 %v357, %v364
      %v367 = vadd.f32 %v358, %v364
      %v368 = vsub.f32 0.0, %v366
      %v369 = vsub.f32 0.0, %v367
      %v370 = vmul.f32 %v368, 1.442695
      %v371 = vpow.pop %v370
      %v372 = vmul.f32 %v369, 1.442695
      %v373 = vpow.pop %v372
      %v374 = vadd.f32 %v371, 1.0
      %v375 = vadd.f32 %v373, 1.0
      %v376 = vrcp.pop %v374
      %v377 = vmul.f32 %v366, %v376
      %v378 = vrcp.pop %v375
      %v379 = vmul.f32 %v367, %v378
      %vm380 = vcmask 523264
      %381 = vst.msk [vmem:[%s285] sm:$0xff] %vm380, %v377
      %382 = vst.msk [vmem:[%s285 + $0x8] sm:$0xff] %vm380, %v379
      %p383 = scmp.lt.s32.totalorder %s19, 1
      %s384 = scalar_select %p383, %s19, 1
      %p385 = scmp.lt.s32.totalorder %s20, 1
      %s386 = scalar_select %p385, %s20, 1
      %p387 = scmp.lt.s32.totalorder %s21, 0
      %s388 = scalar_select %p387, %s21, 0
      %s389 = smul.addr %s386, 2
      %s390 = sadd.s32 %s388, %s389
      %s391 = smul.addr %s384, 4
      %s392 = sadd.s32 %s390, %s391
      %s393 = smul.addr %s392, 8
      %s394 = scalar_lea.vmem %s3, %s393
      // Predicated region
      $region33: #{cossm_forward.13} parent=31 // pred_check
        %p395 = pneg %p141
      $region34: #{cossm_forward.13} parent=31 // pred_check_branch
        %397 = sbr.rel (%p395) target = $region36
      $region35: #{cossm_forward.13} parent=31 // pred_region
        _
      $region36: #{cossm_forward.13} parent=31 // pred_fallthru
        _
    $region32: #{cossm_forward.13} parent=5 // pred_fallthru
      _
    %p398 = scmp.le.s32.totalorder 2, %s9
    // Predicated region
    $region37: #{cossm_forward.13} parent=5 // pred_check
      %p399 = pneg %p398
    $region38: #{cossm_forward.13} parent=5 // pred_check_branch
      %401 = sbr.rel (%p399) target = $region40
    $region39: #{cossm_forward.13} parent=5 // pred_region
      %s402 = ssub.s32 %s9, 2
      // Predicated region
      $region41: #{cossm_forward.13} parent=39 // pred_check
        %p403 = pneg %p147
      $region42: #{cossm_forward.13} parent=39 // pred_check_branch
        %405 = sbr.rel (%p403) target = $region44
      $region43: #{cossm_forward.13} parent=39 // pred_region
        %p406 = scmp.lt.s32.totalorder %s22, 1
        %s407 = scalar_select %p406, %s22, 1
        %p408 = scmp.lt.s32.totalorder %s23, 1
        %s409 = scalar_select %p408, %s23, 1
        %p410 = scmp.lt.s32.totalorder %s24, 0
        %s411 = scalar_select %p410, %s24, 0
        %s412 = smul.addr %s409, 2
        %s413 = sadd.s32 %s411, %s412
        %s414 = smul.addr %s407, 4
        %s415 = sadd.s32 %s413, %s414
        %s416 = smul.addr %s415, 8
        %s417 = scalar_lea.vmem %s3, %s416
      $region44: #{cossm_forward.13} parent=39 // pred_fallthru
        _
    $region40: #{cossm_forward.13} parent=5 // pred_fallthru
      _
  $region6: #{cossm_forward.13} parent=0 // loop_footer
    %s13 = sadd.s32 1, %s9
  $region7: #{cossm_forward.13} parent=0 // loop_footer_branch
    %8 = sbr.rel target = $region3
  $region8: #{cossm_forward.13} parent=0 // loop_exit
    _

// kernel: cossm_forward.21
$region0: #{cossm_forward.21}
  #allocation0 [shape = 'u32[]', space=smem, size = 0x4, offset = 0x4, fixed_abs, tag = 'smem constant byte address 0x4 - core index']
  #allocation1 [shape = 'u32[144,128]{1,0:T(1,128)}', space=vmem, size = 0x12000, scoped, tag = 'internal scratch']
  %s0 = inlined_call_operand.vmem [shape: f32[2,32,64], index: 0, kind: input, shape index: {}]
  %s1 = inlined_call_operand.vmem [shape: f32[2,32,64], index: 1, kind: input, shape index: {}]
  %s2 = inlined_call_operand.vmem [shape: f32[2,64,32], index: 2, kind: input, shape index: {}]
  %s3 = inlined_call_operand.vmem [shape: f32[2,32,32], index: 3, kind: output, shape index: {}]
  %s4 = sld [smem:[#allocation0]]
  $region45: #{cossm_forward.21} parent=0
    _
  %s6 = ssub.s32 1, %s4
  %s7 = scalar_select 0, %s6, %s4
  loop: start=0, step=1, limit=4
  $region2: #{cossm_forward.21} parent=0 // loop_pre_header
    _
  $region3: #{cossm_forward.21} parent=0 // loop_header
    %s9 = sphi 0, %s13
    %p10 = scmp.ge.s32.totalorder %s9, 4
    %s16 = sphi 0, %s35
    %s17 = sphi 0, %s31
    %s18 = sphi 0, %s27
    %s19 = sphi 0, %s16
    %s20 = sphi 0, %s17
    %s21 = sphi 0, %s18
    %s22 = sphi 0, %s19
    %s23 = sphi 0, %s20
    %s24 = sphi 0, %s21
    %s40 = sphi 0, %s42
    %s43 = sphi 0, %s40
    %s44 = sphi 0, %s43
    %s60 = sphi 0, %s44
    %s68 = sphi 0, %s70
    %s71 = sphi 0, %s68
    %s72 = sphi 0, %s71
    %s88 = sphi 0, %s72
    %s96 = sphi 0, %s98
    %s99 = sphi 0, %s96
    %s100 = sphi 0, %s99
    %s116 = sphi 0, %s100
    %s126 = sphi 0, %s128
    %s129 = sphi 0, %s126
    %s130 = sphi 0, %s129
    %s146 = sphi 0, %s130
  $region4: #{cossm_forward.21} parent=0 // loop_header_branch
    %12 = sbr.rel (%p10) target = $region8
  $region5: #{cossm_forward.21} parent=0 // loop_body
    %s14 = ssub.s32 %s9, 1
    %s15 = ssub.s32 %s9, 2
    %s25 = sadd.s32 1, %s18
    %p26 = scmp.ge.s32.totalorder %s25, 1
    %s27 = scalar_select %p26, 0, %s25
    %s28 = sadd.s32 1, %s17
    %s29 = scalar_select %p26, %s28, %s17
    %p30 = scmp.ge.s32.totalorder %s29, 1
    %s31 = scalar_select %p30, 0, %s29
    %s32 = sadd.s32 1, %s16
    %s33 = scalar_select %p30, %s32, %s16
    %p34 = scmp.ge.s32.totalorder %s33, 2
    %s35 = scalar_select %p34, 0, %s33
    %s36 = ssub.s32 %s16, %s35
    %s37 = ssub.s32 %s17, %s31
    %s38 = sor.u32 %s36, %s37
    %p39 = scmp.eq.s32.totalorder %s38, 0
    %s41 = sadd.s32 %s40, 1
    %s42 = scalar_select %p39, %s40, %s41
    %p45 = pneg %p39
    %p46 = scmp.eq.s32.totalorder %s9, 1
    %p47 = por %p45, %p46
    %p48 = scmp.ne.s32.totalorder %s40, %s43
    %p49 = scmp.eq.s32.totalorder %s9, 0
    %p50 = por %p48, %p49
    %p51 = scmp.ne.s32.totalorder %s40, %s43
    %p52 = scmp.eq.s32.totalorder %s14, 1
    %p53 = por %p51, %p52
    %p54 = scmp.ne.s32.totalorder %s43, %s44
    %p55 = scmp.eq.s32.totalorder %s14, 0
    %p56 = por %p54, %p55
    %p57 = scmp.ne.s32.totalorder %s43, %s44
    %p58 = scmp.eq.s32.totalorder %s15, 1
    %p59 = por %p57, %p58
    %p61 = scmp.ne.s32.totalorder %s44, %s60
    %p62 = scmp.eq.s32.totalorder %s15, 0
    %p63 = por %p61, %p62
    %s64 = ssub.s32 %s16, %s35
    %s65 = ssub.s32 %s17, %s31
    %s66 = sor.u32 %s64, %s65
    %p67 = scmp.eq.s32.totalorder %s66, 0
    %s69 = sadd.s32 %s68, 1
    %s70 = scalar_select %p67, %s68, %s69
    %p73 = pneg %p67
    %p74 = scmp.eq.s32.totalorder %s9, 1
    %p75 = por %p73, %p74
    %p76 = scmp.ne.s32.totalorder %s68, %s71
    %p77 = scmp.eq.s32.totalorder %s9, 0
    %p78 = por %p76, %p77
    %p79 = scmp.ne.s32.totalorder %s68, %s71
    %p80 = scmp.eq.s32.totalorder %s14, 1
    %p81 = por %p79, %p80
    %p82 = scmp.ne.s32.totalorder %s71, %s72
    %p83 = scmp.eq.s32.totalorder %s14, 0
    %p84 = por %p82, %p83
    %p85 = scmp.ne.s32.totalorder %s71, %s72
    %p86 = scmp.eq.s32.totalorder %s15, 1
    %p87 = por %p85, %p86
    %p89 = scmp.ne.s32.totalorder %s72, %s88
    %p90 = scmp.eq.s32.totalorder %s15, 0
    %p91 = por %p89, %p90
    %s92 = ssub.s32 %s16, %s35
    %s93 = ssub.s32 %s18, %s27
    %s94 = sor.u32 %s92, %s93
    %p95 = scmp.eq.s32.totalorder %s94, 0
    %s97 = sadd.s32 %s96, 1
    %s98 = scalar_select %p95, %s96, %s97
    %p101 = pneg %p95
    %p102 = scmp.eq.s32.totalorder %s9, 1
    %p103 = por %p101, %p102
    %p104 = scmp.ne.s32.totalorder %s96, %s99
    %p105 = scmp.eq.s32.totalorder %s9, 0
    %p106 = por %p104, %p105
    %p107 = scmp.ne.s32.totalorder %s96, %s99
    %p108 = scmp.eq.s32.totalorder %s14, 1
    %p109 = por %p107, %p108
    %p110 = scmp.ne.s32.totalorder %s99, %s100
    %p111 = scmp.eq.s32.totalorder %s14, 0
    %p112 = por %p110, %p111
    %p113 = scmp.ne.s32.totalorder %s99, %s100
    %p114 = scmp.eq.s32.totalorder %s15, 1
    %p115 = por %p113, %p114
    %p117 = scmp.ne.s32.totalorder %s100, %s116
    %p118 = scmp.eq.s32.totalorder %s15, 0
    %p119 = por %p117, %p118
    %s120 = ssub.s32 %s16, %s35
    %s121 = ssub.s32 %s17, %s31
    %s122 = sor.u32 %s120, %s121
    %s123 = ssub.s32 %s18, %s27
    %s124 = sor.u32 %s122, %s123
    %p125 = scmp.eq.s32.totalorder %s124, 0
    %s127 = sadd.s32 %s126, 1
    %s128 = scalar_select %p125, %s126, %s127
    %p131 = pneg %p125
    %p132 = scmp.eq.s32.totalorder %s9, 1
    %p133 = por %p131, %p132
    %p134 = scmp.ne.s32.totalorder %s126, %s129
    %p135 = scmp.eq.s32.totalorder %s9, 0
    %p136 = por %p134, %p135
    %p137 = scmp.ne.s32.totalorder %s126, %s129
    %p138 = scmp.eq.s32.totalorder %s14, 1
    %p139 = por %p137, %p138
    %p140 = scmp.ne.s32.totalorder %s129, %s130
    %p141 = scmp.eq.s32.totalorder %s14, 0
    %p142 = por %p140, %p141
    %p143 = scmp.ne.s32.totalorder %s129, %s130
    %p144 = scmp.eq.s32.totalorder %s15, 1
    %p145 = por %p143, %p144
    %p147 = scmp.ne.s32.totalorder %s130, %s146
    %p148 = scmp.eq.s32.totalorder %s15, 0
    %p149 = por %p147, %p148
    %p150 = scmp.le.s32.totalorder 1, %s9
    %p151 = scmp.lt.s32.totalorder %s9, 3
    %p152 = pnand %p150, %p151
    %p153 = pneg %p152
    // Predicated region
    $region9: #{cossm_forward.21} parent=5 // pred_check
      _
    $region10: #{cossm_forward.21} parent=5 // pred_check_branch
      %155 = sbr.rel (%p152) target = $region12
    $region11: #{cossm_forward.21} parent=5 // pred_region
      %s156 = ssub.s32 %s9, 1
    $region12: #{cossm_forward.21} parent=5 // pred_fallthru
      _
    %p157 = scmp.lt.s32.totalorder %s9, 2
    // Predicated region
    $region13: #{cossm_forward.21} parent=5 // pred_check
      %p158 = pneg %p157
    $region14: #{cossm_forward.21} parent=5 // pred_check_branch
      %160 = sbr.rel (%p158) target = $region16
    $region15: #{cossm_forward.21} parent=5 // pred_region
      // Predicated region
      $region17: #{cossm_forward.21} parent=15 // pred_check
        %p161 = pneg %p50
      $region18: #{cossm_forward.21} parent=15 // pred_check_branch
        %163 = sbr.rel (%p161) target = $region20
      $region19: #{cossm_forward.21} parent=15 // pred_region
        %s164 = smul.u32 4, %s17
        %p165 = scmp.lt.s32.totalorder %s16, 1
        %s166 = scalar_select %p165, %s16, 1
        %p167 = scmp.lt.s32.totalorder %s164, 3
        %s168 = scalar_select %p167, %s164, 3
        %s169 = smul.addr %s166, 4
        %s170 = sadd.s32 %s168, %s169
        %s171 = smul.addr %s170, 8
        %s172 = scalar_lea.vmem %s0, %s171
        %s173 = smul.u32 4, %s17
      $region20: #{cossm_forward.21} parent=15 // pred_fallthru
        _
      // Predicated region
      $region21: #{cossm_forward.21} parent=15 // pred_check
        %p174 = pneg %p78
      $region22: #{cossm_forward.21} parent=15 // pred_check_branch
        %176 = sbr.rel (%p174) target = $region24
      $region23: #{cossm_forward.21} parent=15 // pred_region
        %s177 = smul.u32 4, %s17
        %p178 = scmp.lt.s32.totalorder %s16, 1
        %s179 = scalar_select %p178, %s16, 1
        %p180 = scmp.lt.s32.totalorder %s177, 3
        %s181 = scalar_select %p180, %s177, 3
        %s182 = smul.addr %s179, 4
        %s183 = sadd.s32 %s181, %s182
        %s184 = smul.addr %s183, 8
        %s185 = scalar_lea.vmem %s1, %s184
        %s186 = smul.u32 4, %s17
      $region24: #{cossm_forward.21} parent=15 // pred_fallthru
        _
      // Predicated region
      $region25: #{cossm_forward.21} parent=15 // pred_check
        %p187 = pneg %p106
      $region26: #{cossm_forward.21} parent=15 // pred_check_branch
        %189 = sbr.rel (%p187) target = $region28
      $region27: #{cossm_forward.21} parent=15 // pred_region
        %p190 = scmp.lt.s32.totalorder %s16, 1
        %s191 = scalar_select %p190, %s16, 1
        %p192 = scmp.lt.s32.totalorder %s18, 0
        %s193 = scalar_select %p192, %s18, 0
        %s194 = smul.addr %s191, 8
        %s195 = sadd.s32 %s193, %s194
        %s196 = smul.addr %s195, 8
        %s197 = scalar_lea.vmem %s2, %s196
      $region28: #{cossm_forward.21} parent=15 // pred_fallthru
        _
    $region16: #{cossm_forward.21} parent=5 // pred_fallthru
      _
    %p198 = scmp.le.s32.totalorder 1, %s9
    %p199 = scmp.lt.s32.totalorder %s9, 3
    %p200 = pnand %p198, %p199
    %p201 = pneg %p200
    // Predicated region
    $region29: #{cossm_forward.21} parent=5 // pred_check
      _
    $region30: #{cossm_forward.21} parent=5 // pred_check_branch
      %203 = sbr.rel (%p200) target = $region32
    $region31: #{cossm_forward.21} parent=5 // pred_region
      %s204 = ssub.s32 %s9, 1
      %s205 = smul.u32 4, %s20
      %p206 = scmp.lt.s32.totalorder %s19, 1
      %s207 = scalar_select %p206, %s19, 1
      %p208 = scmp.lt.s32.totalorder %s205, 3
      %s209 = scalar_select %p208, %s205, 3
      %s210 = smul.addr %s207, 4
      %s211 = sadd.s32 %s209, %s210
      %s212 = smul.addr %s211, 8
      %s213 = scalar_lea.vmem %s0, %s212
      %p214 = pneg %p56
      %p215 = pneg %p53
      %s216 = smul.u32 4, %s20
      %p217 = scmp.lt.s32.totalorder %s19, 1
      %s218 = scalar_select %p217, %s19, 1
      %p219 = scmp.lt.s32.totalorder %s216, 3
      %s220 = scalar_select %p219, %s216, 3
      %s221 = smul.addr %s218, 4
      %s222 = sadd.s32 %s220, %s221
      %s223 = smul.addr %s222, 8
      %s224 = scalar_lea.vmem %s1, %s223
      %p225 = pneg %p84
      %p226 = pneg %p81
      %p227 = scmp.lt.s32.totalorder %s19, 1
      %s228 = scalar_select %p227, %s19, 1
      %p229 = scmp.lt.s32.totalorder %s21, 0
      %s230 = scalar_select %p229, %s21, 0
      %s231 = smul.addr %s228, 8
      %s232 = sadd.s32 %s230, %s231
      %s233 = smul.addr %s232, 8
      %s234 = scalar_lea.vmem %s2, %s233
      %p235 = pneg %p112
      %p236 = pneg %p109
      %p237 = pneg %p142
      %p238 = pneg %p139
      %s239 = smul.u32 4, %s20
      %p240 = scmp.lt.s32.totalorder %s19, 1
      %s241 = scalar_select %p240, %s19, 1
      %p242 = scmp.lt.s32.totalorder %s239, 3
      %s243 = scalar_select %p242, %s239, 3
      %p244 = scmp.lt.s32.totalorder %s21, 0
      %s245 = scalar_select %p244, %s21, 0
      %s246 = sadd.s32 %s245, %s243
      %s247 = smul.addr %s241, 4
      %s248 = sadd.s32 %s246, %s247
      %s249 = smul.addr %s248, 8
      %s250 = scalar_lea.vmem %s3, %s249
      %s251 = smul.u32 4, %s20
      %p252 = scmp.lt.s32.totalorder %s19, 1
      %s253 = scalar_select %p252, %s19, 1
      %p254 = scmp.lt.s32.totalorder %s251, 3
      %s255 = scalar_select %p254, %s251, 3
      %s256 = smul.addr %s253, 4
      %s257 = sadd.s32 %s255, %s256
      %s258 = smul.addr %s257, 8
      %s259 = scalar_lea.vmem %s0, %s258
      %s260 = smul.u32 4, %s20
      %s261 = smul.u32 4, %s20
      %p262 = scmp.lt.s32.totalorder %s19, 1
      %s263 = scalar_select %p262, %s19, 1
      %p264 = scmp.lt.s32.totalorder %s261, 3
      %s265 = scalar_select %p264, %s261, 3
      %s266 = smul.addr %s263, 4
      %s267 = sadd.s32 %s265, %s266
      %s268 = smul.addr %s267, 8
      %s269 = scalar_lea.vmem %s1, %s268
      %s270 = smul.u32 4, %s20
      %p271 = scmp.lt.s32.totalorder %s19, 1
      %s272 = scalar_select %p271, %s19, 1
      %p273 = scmp.lt.s32.totalorder %s21, 0
      %s274 = scalar_select %p273, %s21, 0
      %s275 = smul.addr %s272, 8
      %s276 = sadd.s32 %s274, %s275
      %s277 = smul.addr %s276, 8
      %s278 = scalar_lea.vmem %s2, %s277
      %s279 = smul.u32 4, %s20
      %p280 = scmp.lt.s32.totalorder %s19, 1
      %s281 = scalar_select %p280, %s19, 1
      %p282 = scmp.lt.s32.totalorder %s279, 3
      %s283 = scalar_select %p282, %s279, 3
      %p284 = scmp.lt.s32.totalorder %s21, 0
      %s285 = scalar_select %p284, %s21, 0
      %s286 = sadd.s32 %s285, %s283
      %s287 = smul.addr %s281, 4
      %s288 = sadd.s32 %s286, %s287
      %s289 = smul.addr %s288, 8
      %s290 = scalar_lea.vmem %s3, %s289
      %s291 = smul.u32 4, %s20
      %v292 = vld [vmem:[%s259] sm:$0xff]
      %v293 = vld [vmem:[%s259 + $0x8] sm:$0xff]
      %v294 = vld [vmem:[%s259 + $0x10] sm:$0xff]
      %v295 = vld [vmem:[%s259 + $0x18] sm:$0xff]
      %v296 = vld [vmem:[%s269] sm:$0xff]
      %v297 = vld [vmem:[%s269 + $0x8] sm:$0xff]
      %v298 = vld [vmem:[%s269 + $0x10] sm:$0xff]
      %v299 = vld [vmem:[%s269 + $0x18] sm:$0xff]
      %v300 = vadd.f32 %v292, %v296
      %v301 = vadd.f32 %v293, %v297
      %v302 = vadd.f32 %v294, %v298
      %v303 = vadd.f32 %v295, %v299
      %v304 = vld [vmem:[%s278] sm:$0xff]
      %v305 = vld [vmem:[%s278 + $0x8] sm:$0xff]
      %v306 = vld [vmem:[%s278 + $0x10] sm:$0xff]
      %v307 = vld [vmem:[%s278 + $0x18] sm:$0xff]
      %v308 = vld [vmem:[%s278 + $0x20] sm:$0xff]
      %v309 = vld [vmem:[%s278 + $0x28] sm:$0xff]
      %v310 = vld [vmem:[%s278 + $0x30] sm:$0xff]
      %v311 = vld [vmem:[%s278 + $0x38] sm:$0xff]
      %vm312 = vcmask 523264
      %v314 = vsel %vm312, %v300, 0
      %v317 = vsel %vm312, %v301, 0
      %v320 = vsel %vm312, %v302, 0
      %v323 = vsel %vm312, %v303, 0
      %325 = vmatprep.subr.mxu0 0.0
      %326 = vmatpush1.msra.mxu0 %v304
      %327 = vmatprep.subr.mxu0 0.0
      %328 = vmatpush1.msra.mxu0 %v305
      %329 = vmatprep.subr.mxu0 0.0
      %330 = vmatpush1.msra.mxu0 %v306
      %331 = vmatprep.subr.mxu0 0.0
      %332 = vmatpush1.msra.mxu0 %v307
      %333 = vmatprep.subr.mxu0 0.0
      %334 = vmatpush1.msra.mxu0 %v308
      %335 = vmatprep.subr.mxu0 0.0
      %336 = vmatpush1.msra.mxu0 %v309
      %337 = vmatprep.subr.mxu0 0.0
      %338 = vmatpush1.msra.mxu0 %v310
      %339 = vmatprep.subr.mxu0 0.0
      %340 = vmatpush1.msra.mxu0 %v311
      %341 = vmatprep.subr.mxu0 0.0
      %342 = vmatpush1.msra.mxu0 0.0
      %343 = vmatprep.subr.mxu0 0.0
      %344 = vmatpush1.msra.mxu0 0.0
      %345 = vmatprep.subr.mxu0 0.0
      %346 = vmatpush1.msra.mxu0 0.0
      %347 = vmatprep.subr.mxu0 0.0
      %348 = vmatpush1.msra.mxu0 0.0
      %349 = vmatprep.subr.mxu0 0.0
      %350 = vmatpush1.msra.mxu0 0.0
      %351 = vmatprep.subr.mxu0 0.0
      %352 = vmatpush1.msra.mxu0 0.0
      %353 = vmatprep.subr.mxu0 0.0
      %354 = vmatpush1.msra.mxu0 0.0
      %355 = vmatprep.subr.mxu0 0.0
      %356 = vmatpush1.msra.mxu0 0.0
      %357 = vmatprep.subr.mxu0 0.0
      %358 = vmatpush1.msra.mxu0 0.0
      %359 = vmatprep.subr.mxu0 0.0
      %360 = vmatpush1.msra.mxu0 0.0
      %361 = vmatprep.subr.mxu0 0.0
      %362 = vmatpush1.msra.mxu0 0.0
      %363 = vmatprep.subr.mxu0 0.0
      %364 = vmatpush1.msra.mxu0 0.0
      %365 = vmatprep.subr.mxu0 0.0
      %366 = vmatpush1.msra.mxu0 0.0
      %367 = vmatprep.subr.mxu0 0.0
      %368 = vmatpush1.msra.mxu0 0.0
      %369 = vmatprep.subr.mxu0 0.0
      %370 = vmatpush1.msra.mxu0 0.0
      %371 = vmatprep.subr.mxu0 0.0
      %372 = vmatpush1.msra.mxu0 0.0
      %373 = vmatprep.subr.mxu0 0.0
      %374 = vmatpush1.msra.mxu0 0.0
      %375 = vmatprep.subr.mxu0 0.0
      %376 = vmatpush1.msra.mxu0 0.0
      %377 = vmatprep.subr.mxu0 0.0
      %378 = vmatpush1.msra.mxu0 0.0
      %379 = vmatprep.subr.mxu0 0.0
      %380 = vmatpush1.msra.mxu0 0.0
      %381 = vmatprep.subr.mxu0 0.0
      %382 = vmatpush1.msra.mxu0 0.0
      %383 = vmatprep.subr.mxu0 0.0
      %384 = vmatpush1.msra.mxu0 0.0
      %385 = vmatprep.subr.mxu0 0.0
      %386 = vmatpush1.msra.mxu0 0.0
      %387 = vmatprep.subr.mxu0 0.0
      %388 = vmatpush1.msra.mxu0 0.0
      %389 = vmatprep.mubr.f32.mxu0 0.0
      %390 = vmatmul.mubr.f32.gmra.mrb[0].mxu0 %v314
      %v391 = vpop.f32.mrb[0].mxu0
      %v392 = vadd.f32 0.0, %v391
      %v393 = vpop.f32.mrb[0].mxu0
      %394 = vmatprep.mubr.f32.mxu0 0.0
      %395 = vmatmul.mubr.f32.gmra.mrb[0].mxu0 %v317
      %v396 = vpop.f32.mrb[0].mxu0
      %v397 = vadd.f32 0.0, %v396
      %v398 = vpop.f32.mrb[0].mxu0
      %399 = vmatprep.mubr.f32.mxu0 0.0
      %400 = vmatmul.mubr.f32.gmra.mrb[0].mxu0 %v320
      %v401 = vpop.f32.mrb[0].mxu0
      %v402 = vadd.f32 0.0, %v401
      %v403 = vpop.f32.mrb[0].mxu0
      %404 = vmatprep.mubr.f32.mxu0 0.0
      %405 = vmatmul.mubr.f32.gmra.mrb[0].mxu0 %v323
      %v406 = vpop.f32.mrb[0].mxu0
      %v407 = vadd.f32 0.0, %v406
      %v408 = vpop.f32.mrb[0].mxu0
      %409 = vdwg.mxu0
      %vm410 = vcmask 261120
      %411 = vst.msk [vmem:[%s290] sm:$0xff] %vm410, %v392
      %412 = vst.msk [vmem:[%s290 + $0x8] sm:$0xff] %vm410, %v397
      %413 = vst.msk [vmem:[%s290 + $0x10] sm:$0xff] %vm410, %v402
      %414 = vst.msk [vmem:[%s290 + $0x18] sm:$0xff] %vm410, %v407
      %s415 = smul.u32 4, %s20
      %p416 = scmp.lt.s32.totalorder %s19, 1
      %s417 = scalar_select %p416, %s19, 1
      %p418 = scmp.lt.s32.totalorder %s415, 3
      %s419 = scalar_select %p418, %s415, 3
      %p420 = scmp.lt.s32.totalorder %s21, 0
      %s421 = scalar_select %p420, %s21, 0
      %s422 = sadd.s32 %s421, %s419
      %s423 = smul.addr %s417, 4
      %s424 = sadd.s32 %s422, %s423
      %s425 = smul.addr %s424, 8
      %s426 = scalar_lea.vmem %s3, %s425
      // Predicated region
      $region33: #{cossm_forward.21} parent=31 // pred_check
        %p427 = pneg %p139
      $region34: #{cossm_forward.21} parent=31 // pred_check_branch
        %429 = sbr.rel (%p427) target = $region36
      $region35: #{cossm_forward.21} parent=31 // pred_region
        %s430 = smul.u32 4, %s20
      $region36: #{cossm_forward.21} parent=31 // pred_fallthru
        _
    $region32: #{cossm_forward.21} parent=5 // pred_fallthru
      _
    %p431 = scmp.le.s32.totalorder 2, %s9
    // Predicated region
    $region37: #{cossm_forward.21} parent=5 // pred_check
      %p432 = pneg %p431
    $region38: #{cossm_forward.21} parent=5 // pred_check_branch
      %434 = sbr.rel (%p432) target = $region40
    $region39: #{cossm_forward.21} parent=5 // pred_region
      %s435 = ssub.s32 %s9, 2
      // Predicated region
      $region41: #{cossm_forward.21} parent=39 // pred_check
        %p436 = pneg %p145
      $region42: #{cossm_forward.21} parent=39 // pred_check_branch
        %438 = sbr.rel (%p436) target = $region44
      $region43: #{cossm_forward.21} parent=39 // pred_region
        %s439 = smul.u32 4, %s23
        %p440 = scmp.lt.s32.totalorder %s22, 1
        %s441 = scalar_select %p440, %s22, 1
        %p442 = scmp.lt.s32.totalorder %s439, 3
        %s443 = scalar_select %p442, %s439, 3
        %p444 = scmp.lt.s32.totalorder %s24, 0
        %s445 = scalar_select %p444, %s24, 0
        %s446 = sadd.s32 %s445, %s443
        %s447 = smul.addr %s441, 4
        %s448 = sadd.s32 %s446, %s447
        %s449 = smul.addr %s448, 8
        %s450 = scalar_lea.vmem %s3, %s449
      $region44: #{cossm_forward.21} parent=39 // pred_fallthru
        _
    $region40: #{cossm_forward.21} parent=5 // pred_fallthru
      _
  $region6: #{cossm_forward.21} parent=0 // loop_footer
    %s13 = sadd.s32 1, %s9
  $region7: #{cossm_forward.21} parent=0 // loop_footer_branch
    %8 = sbr.rel target = $region3
  $region8: #{cossm_forward.21} parent=0 // loop_exit
    _

// kernel: cossm_forward.20
$region0: #{cossm_forward.20}
  #allocation0 [shape = 'u32[]', space=smem, size = 0x4, offset = 0x4, fixed_abs, tag = 'smem constant byte address 0x4 - core index']
  #allocation1 [shape = 'u32[144,128]{1,0:T(1,128)}', space=vmem, size = 0x12000, scoped, tag = 'internal scratch']
  #allocation2 [shape = 'f32[16,64]{1,0:T(8,128)}', space=vmem, size = 0x2000, scoped, tag = 'scratch operand']
  %s0 = inlined_call_operand.vmem [shape: f32[2,2,16,64], index: 0, kind: input, shape index: {}]
  %s1 = inlined_call_operand.vmem [shape: f32[2,2,16,64], index: 1, kind: input, shape index: {}]
  %s2 = inlined_call_operand.vmem [shape: f32[2,2,16,32], index: 2, kind: input, shape index: {}]
  %s3 = inlined_call_operand.vmem [shape: f32[2,2,16,64], index: 3, kind: input, shape index: {}]
  %s4 = inlined_call_operand.vmem [shape: f32[1,16,64], index: 4, kind: input, shape index: {}]
  %s5 = inlined_call_operand.vmem [shape: f32[2,1,64], index: 5, kind: input, shape index: {}]
  %s6 = inlined_call_operand.vmem [shape: f32[2,1,64], index: 6, kind: input, shape index: {}]
  %s7 = inlined_call_operand.vmem [shape: f32[2,2,16,64], index: 7, kind: output, shape index: {}]
  %s8 = sld [smem:[#allocation0]]
  $region72: #{cossm_forward.20} parent=0
    _
  %s10 = ssub.s32 1, %s8
  %s11 = scalar_select 0, %s10, %s8
  loop: start=0, step=1, limit=6
  $region2: #{cossm_forward.20} parent=0 // loop_pre_header
    _
  $region3: #{cossm_forward.20} parent=0 // loop_header
    %s13 = sphi 0, %s17
    %p14 = scmp.ge.s32.totalorder %s13, 6
    %s20 = sphi 0, %s46
    %s21 = sphi 0, %s42
    %s22 = sphi 0, %s38
    %s23 = sphi 0, %s34
    %s24 = sphi 0, %s20
    %s25 = sphi 0, %s21
    %s26 = sphi 0, %s22
    %s27 = sphi 0, %s23
    %s28 = sphi 0, %s24
    %s29 = sphi 0, %s25
    %s30 = sphi 0, %s26
    %s31 = sphi 0, %s27
    %s57 = sphi 0, %s59
    %s60 = sphi 0, %s57
    %s61 = sphi 0, %s60
    %s77 = sphi 0, %s61
    %s91 = sphi 0, %s93
    %s94 = sphi 0, %s91
    %s95 = sphi 0, %s94
    %s111 = sphi 0, %s95
    %s123 = sphi 0, %s125
    %s126 = sphi 0, %s123
    %s127 = sphi 0, %s126
    %s143 = sphi 0, %s127
    %s157 = sphi 0, %s159
    %s160 = sphi 0, %s157
    %s161 = sphi 0, %s160
    %s177 = sphi 0, %s161
    %s183 = sphi 0, %s185
    %s186 = sphi 0, %s183
    %s187 = sphi 0, %s186
    %s203 = sphi 0, %s187
    %s211 = sphi 0, %s213
    %s214 = sphi 0, %s211
    %s215 = sphi 0, %s214
    %s231 = sphi 0, %s215
    %s239 = sphi 0, %s241
    %s242 = sphi 0, %s239
    %s243 = sphi 0, %s242
    %s259 = sphi 0, %s243
    %s273 = sphi 0, %s275
    %s276 = sphi 0, %s273
    %s277 = sphi 0, %s276
    %s293 = sphi 0, %s277
  $region4: #{cossm_forward.20} parent=0 // loop_header_branch
    %16 = sbr.rel (%p14) target = $region8
  $region5: #{cossm_forward.20} parent=0 // loop_body
    %s18 = ssub.s32 %s13, 1
    %s19 = ssub.s32 %s13, 2
    %s32 = sadd.s32 1, %s23
    %p33 = scmp.ge.s32.totalorder %s32, 1
    %s34 = scalar_select %p33, 0, %s32
    %s35 = sadd.s32 1, %s22
    %s36 = scalar_select %p33, %s35, %s22
    %p37 = scmp.ge.s32.totalorder %s36, 1
    %s38 = scalar_select %p37, 0, %s36
    %s39 = sadd.s32 1, %s21
    %s40 = scalar_select %p37, %s39, %s21
    %p41 = scmp.ge.s32.totalorder %s40, 2
    %s42 = scalar_select %p41, 0, %s40
    %s43 = sadd.s32 1, %s20
    %s44 = scalar_select %p41, %s43, %s20
    %p45 = scmp.ge.s32.totalorder %s44, 2
    %s46 = scalar_select %p45, 0, %s44
    %s47 = ssub.s32 0, %s23
    %s48 = ssub.s32 0, %s34
    %s49 = ssub.s32 %s20, %s46
    %s50 = ssub.s32 %s21, %s42
    %s51 = sor.u32 %s49, %s50
    %s52 = ssub.s32 %s47, %s48
    %s53 = sor.u32 %s51, %s52
    %s54 = ssub.s32 %s22, %s38
    %s55 = sor.u32 %s53, %s54
    %p56 = scmp.eq.s32.totalorder %s55, 0
    %s58 = sadd.s32 %s57, 1
    %s59 = scalar_select %p56, %s57, %s58
    %p62 = pneg %p56
    %p63 = scmp.eq.s32.totalorder %s13, 3
    %p64 = por %p62, %p63
    %p65 = scmp.ne.s32.totalorder %s57, %s60
    %p66 = scmp.eq.s32.totalorder %s13, 0
    %p67 = por %p65, %p66
    %p68 = scmp.ne.s32.totalorder %s57, %s60
    %p69 = scmp.eq.s32.totalorder %s18, 3
    %p70 = por %p68, %p69
    %p71 = scmp.ne.s32.totalorder %s60, %s61
    %p72 = scmp.eq.s32.totalorder %s18, 0
    %p73 = por %p71, %p72
    %p74 = scmp.ne.s32.totalorder %s60, %s61
    %p75 = scmp.eq.s32.totalorder %s19, 3
    %p76 = por %p74, %p75
    %p78 = scmp.ne.s32.totalorder %s61, %s77
    %p79 = scmp.eq.s32.totalorder %s19, 0
    %p80 = por %p78, %p79
    %s81 = ssub.s32 0, %s23
    %s82 = ssub.s32 0, %s34
    %s83 = ssub.s32 %s20, %s46
    %s84 = ssub.s32 %s21, %s42
    %s85 = sor.u32 %s83, %s84
    %s86 = ssub.s32 %s81, %s82
    %s87 = sor.u32 %s85, %s86
    %s88 = ssub.s32 %s22, %s38
    %s89 = sor.u32 %s87, %s88
    %p90 = scmp.eq.s32.totalorder %s89, 0
    %s92 = sadd.s32 %s91, 1
    %s93 = scalar_select %p90, %s91, %s92
    %p96 = pneg %p90
    %p97 = scmp.eq.s32.totalorder %s13, 3
    %p98 = por %p96, %p97
    %p99 = scmp.ne.s32.totalorder %s91, %s94
    %p100 = scmp.eq.s32.totalorder %s13, 0
    %p101 = por %p99, %p100
    %p102 = scmp.ne.s32.totalorder %s91, %s94
    %p103 = scmp.eq.s32.totalorder %s18, 3
    %p104 = por %p102, %p103
    %p105 = scmp.ne.s32.totalorder %s94, %s95
    %p106 = scmp.eq.s32.totalorder %s18, 0
    %p107 = por %p105, %p106
    %p108 = scmp.ne.s32.totalorder %s94, %s95
    %p109 = scmp.eq.s32.totalorder %s19, 3
    %p110 = por %p108, %p109
    %p112 = scmp.ne.s32.totalorder %s95, %s111
    %p113 = scmp.eq.s32.totalorder %s19, 0
    %p114 = por %p112, %p113
    %s115 = ssub.s32 0, %s23
    %s116 = ssub.s32 0, %s34
    %s117 = ssub.s32 %s20, %s46
    %s118 = ssub.s32 %s21, %s42
    %s119 = sor.u32 %s117, %s118
    %s120 = ssub.s32 %s115, %s116
    %s121 = sor.u32 %s119, %s120
    %p122 = scmp.eq.s32.totalorder %s121, 0
    %s124 = sadd.s32 %s123, 1
    %s125 = scalar_select %p122, %s123, %s124
    %p128 = pneg %p122
    %p129 = scmp.eq.s32.totalorder %s13, 3
    %p130 = por %p128, %p129
    %p131 = scmp.ne.s32.totalorder %s123, %s126
    %p132 = scmp.eq.s32.totalorder %s13, 0
    %p133 = por %p131, %p132
    %p134 = scmp.ne.s32.totalorder %s123, %s126
    %p135 = scmp.eq.s32.totalorder %s18, 3
    %p136 = por %p134, %p135
    %p137 = scmp.ne.s32.totalorder %s126, %s127
    %p138 = scmp.eq.s32.totalorder %s18, 0
    %p139 = por %p137, %p138
    %p140 = scmp.ne.s32.totalorder %s126, %s127
    %p141 = scmp.eq.s32.totalorder %s19, 3
    %p142 = por %p140, %p141
    %p144 = scmp.ne.s32.totalorder %s127, %s143
    %p145 = scmp.eq.s32.totalorder %s19, 0
    %p146 = por %p144, %p145
    %s147 = ssub.s32 0, %s23
    %s148 = ssub.s32 0, %s34
    %s149 = ssub.s32 %s20, %s46
    %s150 = ssub.s32 %s21, %s42
    %s151 = sor.u32 %s149, %s150
    %s152 = ssub.s32 %s147, %s148
    %s153 = sor.u32 %s151, %s152
    %s154 = ssub.s32 %s22, %s38
    %s155 = sor.u32 %s153, %s154
    %p156 = scmp.eq.s32.totalorder %s155, 0
    %s158 = sadd.s32 %s157, 1
    %s159 = scalar_select %p156, %s157, %s158
    %p162 = pneg %p156
    %p163 = scmp.eq.s32.totalorder %s13, 3
    %p164 = por %p162, %p163
    %p165 = scmp.ne.s32.totalorder %s157, %s160
    %p166 = scmp.eq.s32.totalorder %s13, 0
    %p167 = por %p165, %p166
    %p168 = scmp.ne.s32.totalorder %s157, %s160
    %p169 = scmp.eq.s32.totalorder %s18, 3
    %p170 = por %p168, %p169
    %p171 = scmp.ne.s32.totalorder %s160, %s161
    %p172 = scmp.eq.s32.totalorder %s18, 0
    %p173 = por %p171, %p172
    %p174 = scmp.ne.s32.totalorder %s160, %s161
    %p175 = scmp.eq.s32.totalorder %s19, 3
    %p176 = por %p174, %p175
    %p178 = scmp.ne.s32.totalorder %s161, %s177
    %p179 = scmp.eq.s32.totalorder %s19, 0
    %p180 = por %p178, %p179
    %s181 = ssub.s32 %s22, %s38
    %p182 = scmp.eq.s32.totalorder %s181, 0
    %s184 = sadd.s32 %s183, 1
    %s185 = scalar_select %p182, %s183, %s184
    %p188 = pneg %p182
    %p189 = scmp.eq.s32.totalorder %s13, 3
    %p190 = por %p188, %p189
    %p191 = scmp.ne.s32.totalorder %s183, %s186
    %p192 = scmp.eq.s32.totalorder %s13, 0
    %p193 = por %p191, %p192
    %p194 = scmp.ne.s32.totalorder %s183, %s186
    %p195 = scmp.eq.s32.totalorder %s18, 3
    %p196 = por %p194, %p195
    %p197 = scmp.ne.s32.totalorder %s186, %s187
    %p198 = scmp.eq.s32.totalorder %s18, 0
    %p199 = por %p197, %p198
    %p200 = scmp.ne.s32.totalorder %s186, %s187
    %p201 = scmp.eq.s32.totalorder %s19, 3
    %p202 = por %p200, %p201
    %p204 = scmp.ne.s32.totalorder %s187, %s203
    %p205 = scmp.eq.s32.totalorder %s19, 0
    %p206 = por %p204, %p205
    %s207 = ssub.s32 %s20, %s46
    %s208 = ssub.s32 %s22, %s38
    %s209 = sor.u32 %s207, %s208
    %p210 = scmp.eq.s32.totalorder %s209, 0
    %s212 = sadd.s32 %s211, 1
    %s213 = scalar_select %p210, %s211, %s212
    %p216 = pneg %p210
    %p217 = scmp.eq.s32.totalorder %s13, 3
    %p218 = por %p216, %p217
    %p219 = scmp.ne.s32.totalorder %s211, %s214
    %p220 = scmp.eq.s32.totalorder %s13, 0
    %p221 = por %p219, %p220
    %p222 = scmp.ne.s32.totalorder %s211, %s214
    %p223 = scmp.eq.s32.totalorder %s18, 3
    %p224 = por %p222, %p223
    %p225 = scmp.ne.s32.totalorder %s214, %s215
    %p226 = scmp.eq.s32.totalorder %s18, 0
    %p227 = por %p225, %p226
    %p228 = scmp.ne.s32.totalorder %s214, %s215
    %p229 = scmp.eq.s32.totalorder %s19, 3
    %p230 = por %p228, %p229
    %p232 = scmp.ne.s32.totalorder %s215, %s231
    %p233 = scmp.eq.s32.totalorder %s19, 0
    %p234 = por %p232, %p233
    %s235 = ssub.s32 %s20, %s46
    %s236 = ssub.s32 %s22, %s38
    %s237 = sor.u32 %s235, %s236
    %p238 = scmp.eq.s32.totalorder %s237, 0
    %s240 = sadd.s32 %s239, 1
    %s241 = scalar_select %p238, %s239, %s240
    %p244 = pneg %p238
    %p245 = scmp.eq.s32.totalorder %s13, 3
    %p246 = por %p244, %p245
    %p247 = scmp.ne.s32.totalorder %s239, %s242
    %p248 = scmp.eq.s32.totalorder %s13, 0
    %p249 = por %p247, %p248
    %p250 = scmp.ne.s32.totalorder %s239, %s242
    %p251 = scmp.eq.s32.totalorder %s18, 3
    %p252 = por %p250, %p251
    %p253 = scmp.ne.s32.totalorder %s242, %s243
    %p254 = scmp.eq.s32.totalorder %s18, 0
    %p255 = por %p253, %p254
    %p256 = scmp.ne.s32.totalorder %s242, %s243
    %p257 = scmp.eq.s32.totalorder %s19, 3
    %p258 = por %p256, %p257
    %p260 = scmp.ne.s32.totalorder %s243, %s259
    %p261 = scmp.eq.s32.totalorder %s19, 0
    %p262 = por %p260, %p261
    %s263 = ssub.s32 0, %s23
    %s264 = ssub.s32 0, %s34
    %s265 = ssub.s32 %s20, %s46
    %s266 = ssub.s32 %s21, %s42
    %s267 = sor.u32 %s265, %s266
    %s268 = ssub.s32 %s263, %s264
    %s269 = sor.u32 %s267, %s268
    %s270 = ssub.s32 %s22, %s38
    %s271 = sor.u32 %s269, %s270
    %p272 = scmp.eq.s32.totalorder %s271, 0
    %s274 = sadd.s32 %s273, 1
    %s275 = scalar_select %p272, %s273, %s274
    %p278 = pneg %p272
    %p279 = scmp.eq.s32.totalorder %s13, 3
    %p280 = por %p278, %p279
    %p281 = scmp.ne.s32.totalorder %s273, %s276
    %p282 = scmp.eq.s32.totalorder %s13, 0
    %p283 = por %p281, %p282
    %p284 = scmp.ne.s32.totalorder %s273, %s276
    %p285 = scmp.eq.s32.totalorder %s18, 3
    %p286 = por %p284, %p285
    %p287 = scmp.ne.s32.totalorder %s276, %s277
    %p288 = scmp.eq.s32.totalorder %s18, 0
    %p289 = por %p287, %p288
    %p290 = scmp.ne.s32.totalorder %s276, %s277
    %p291 = scmp.eq.s32.totalorder %s19, 3
    %p292 = por %p290, %p291
    %p294 = scmp.ne.s32.totalorder %s277, %s293
    %p295 = scmp.eq.s32.totalorder %s19, 0
    %p296 = por %p294, %p295
    %p297 = scmp.le.s32.totalorder 1, %s13
    %p298 = scmp.lt.s32.totalorder %s13, 5
    %p299 = pnand %p297, %p298
    %p300 = pneg %p299
    // Predicated region
    $region9: #{cossm_forward.20} parent=5 // pred_check
      _
    $region10: #{cossm_forward.20} parent=5 // pred_check_branch
      %302 = sbr.rel (%p299) target = $region12
    $region11: #{cossm_forward.20} parent=5 // pred_region
      %s303 = ssub.s32 %s13, 1
      // Predicated region
      $region13: #{cossm_forward.20} parent=11 // pred_check
        %p304 = pneg %p199
      $region14: #{cossm_forward.20} parent=11 // pred_check_branch
        %306 = sbr.rel (%p304) target = $region16
      $region15: #{cossm_forward.20} parent=11 // pred_region
        %p307 = scmp.lt.s32.totalorder %s26, 0
        %s308 = scalar_select %p307, %s26, 0
        %s309 = smul.addr %s308, 8
        %s310 = scalar_lea.vmem %s4, %s309
      $region16: #{cossm_forward.20} parent=11 // pred_fallthru
        _
    $region12: #{cossm_forward.20} parent=5 // pred_fallthru
      _
    %p311 = scmp.lt.s32.totalorder %s13, 4
    // Predicated region
    $region17: #{cossm_forward.20} parent=5 // pred_check
      %p312 = pneg %p311
    $region18: #{cossm_forward.20} parent=5 // pred_check_branch
      %314 = sbr.rel (%p312) target = $region20
    $region19: #{cossm_forward.20} parent=5 // pred_region
      // Predicated region
      $region21: #{cossm_forward.20} parent=19 // pred_check
        %p315 = pneg %p67
      $region22: #{cossm_forward.20} parent=19 // pred_check_branch
        %317 = sbr.rel (%p315) target = $region24
      $region23: #{cossm_forward.20} parent=19 // pred_region
        %s318 = ssub.s32 0, %s23
        %s319 = smul.u32 2, %s318
        %p320 = scmp.lt.s32.totalorder %s20, 1
        %s321 = scalar_select %p320, %s20, 1
        %p322 = scmp.lt.s32.totalorder %s21, 1
        %s323 = scalar_select %p322, %s21, 1
        %p324 = scmp.lt.s32.totalorder %s319, 1
        %s325 = scalar_select %p324, %s319, 1
        %p326 = scmp.lt.s32.totalorder %s22, 0
        %s327 = scalar_select %p326, %s22, 0
        %s328 = sadd.s32 %s327, %s325
        %s329 = smul.addr %s323, 2
        %s330 = sadd.s32 %s328, %s329
        %s331 = smul.addr %s321, 4
        %s332 = sadd.s32 %s330, %s331
        %s333 = smul.addr %s332, 8
        %s334 = scalar_lea.vmem %s0, %s333
        %s335 = ssub.s32 0, %s23
        %s336 = smul.u32 2, %s335
      $region24: #{cossm_forward.20} parent=19 // pred_fallthru
        _
      // Predicated region
      $region25: #{cossm_forward.20} parent=19 // pred_check
        %p337 = pneg %p101
      $region26: #{cossm_forward.20} parent=19 // pred_check_branch
        %339 = sbr.rel (%p337) target = $region28
      $region27: #{cossm_forward.20} parent=19 // pred_region
        %s340 = ssub.s32 0, %s23
        %s341 = smul.u32 2, %s340
        %p342 = scmp.lt.s32.totalorder %s20, 1
        %s343 = scalar_select %p342, %s20, 1
        %p344 = scmp.lt.s32.totalorder %s21, 1
        %s345 = scalar_select %p344, %s21, 1
        %p346 = scmp.lt.s32.totalorder %s341, 1
        %s347 = scalar_select %p346, %s341, 1
        %p348 = scmp.lt.s32.totalorder %s22, 0
        %s349 = scalar_select %p348, %s22, 0
        %s350 = sadd.s32 %s349, %s347
        %s351 = smul.addr %s345, 2
        %s352 = sadd.s32 %s350, %s351
        %s353 = smul.addr %s343, 4
        %s354 = sadd.s32 %s352, %s353
        %s355 = smul.addr %s354, 8
        %s356 = scalar_lea.vmem %s1, %s355
        %s357 = ssub.s32 0, %s23
        %s358 = smul.u32 2, %s357
      $region28: #{cossm_forward.20} parent=19 // pred_fallthru
        _
      // Predicated region
      $region29: #{cossm_forward.20} parent=19 // pred_check
        %p359 = pneg %p133
      $region30: #{cossm_forward.20} parent=19 // pred_check_branch
        %361 = sbr.rel (%p359) target = $region32
      $region31: #{cossm_forward.20} parent=19 // pred_region
        %s362 = ssub.s32 0, %s23
        %s363 = smul.u32 2, %s362
        %p364 = scmp.lt.s32.totalorder %s20, 1
        %s365 = scalar_select %p364, %s20, 1
        %p366 = scmp.lt.s32.totalorder %s21, 1
        %s367 = scalar_select %p366, %s21, 1
        %p368 = scmp.lt.s32.totalorder %s363, 1
        %s369 = scalar_select %p368, %s363, 1
        %s370 = smul.addr %s367, 2
        %s371 = sadd.s32 %s369, %s370
        %s372 = smul.addr %s365, 4
        %s373 = sadd.s32 %s371, %s372
        %s374 = smul.addr %s373, 8
        %s375 = scalar_lea.vmem %s2, %s374
        %s376 = ssub.s32 0, %s23
        %s377 = smul.u32 2, %s376
      $region32: #{cossm_forward.20} parent=19 // pred_fallthru
        _
      // Predicated region
      $region33: #{cossm_forward.20} parent=19 // pred_check
        %p378 = pneg %p167
      $region34: #{cossm_forward.20} parent=19 // pred_check_branch
        %380 = sbr.rel (%p378) target = $region36
      $region35: #{cossm_forward.20} parent=19 // pred_region
        %s381 = ssub.s32 0, %s23
        %s382 = smul.u32 2, %s381
        %p383 = scmp.lt.s32.totalorder %s20, 1
        %s384 = scalar_select %p383, %s20, 1
        %p385 = scmp.lt.s32.totalorder %s21, 1
        %s386 = scalar_select %p385, %s21, 1
        %p387 = scmp.lt.s32.totalorder %s382, 1
        %s388 = scalar_select %p387, %s382, 1
        %p389 = scmp.lt.s32.totalorder %s22, 0
        %s390 = scalar_select %p389, %s22, 0
        %s391 = sadd.s32 %s390, %s388
        %s392 = smul.addr %s386, 2
        %s393 = sadd.s32 %s391, %s392
        %s394 = smul.addr %s384, 4
        %s395 = sadd.s32 %s393, %s394
        %s396 = smul.addr %s395, 8
        %s397 = scalar_lea.vmem %s3, %s396
        %s398 = ssub.s32 0, %s23
        %s399 = smul.u32 2, %s398
      $region36: #{cossm_forward.20} parent=19 // pred_fallthru
        _
      // Predicated region
      $region37: #{cossm_forward.20} parent=19 // pred_check
        %p400 = pneg %p221
      $region38: #{cossm_forward.20} parent=19 // pred_check_branch
        %402 = sbr.rel (%p400) target = $region40
      $region39: #{cossm_forward.20} parent=19 // pred_region
        %p403 = scmp.lt.s32.totalorder %s20, 1
        %s404 = scalar_select %p403, %s20, 1
        %p405 = scmp.lt.s32.totalorder %s22, 0
        %s406 = scalar_select %p405, %s22, 0
        %s407 = sadd.s32 %s406, %s404
        %s408 = scalar_lea.vmem %s5, %s407
      $region40: #{cossm_forward.20} parent=19 // pred_fallthru
        _
      // Predicated region
      $region41: #{cossm_forward.20} parent=19 // pred_check
        %p409 = pneg %p249
      $region42: #{cossm_forward.20} parent=19 // pred_check_branch
        %411 = sbr.rel (%p409) target = $region44
      $region43: #{cossm_forward.20} parent=19 // pred_region
        %p412 = scmp.lt.s32.totalorder %s20, 1
        %s413 = scalar_select %p412, %s20, 1
        %p414 = scmp.lt.s32.totalorder %s22, 0
        %s415 = scalar_select %p414, %s22, 0
        %s416 = sadd.s32 %s415, %s413
        %s417 = scalar_lea.vmem %s6, %s416
      $region44: #{cossm_forward.20} parent=19 // pred_fallthru
        _
    $region20: #{cossm_forward.20} parent=5 // pred_fallthru
      _
    %p418 = scmp.le.s32.totalorder 1, %s13
    %p419 = scmp.lt.s32.totalorder %s13, 5
    %p420 = pnand %p418, %p419
    %p421 = pneg %p420
    // Predicated region
    $region45: #{cossm_forward.20} parent=5 // pred_check
      _
    $region46: #{cossm_forward.20} parent=5 // pred_check_branch
      %423 = sbr.rel (%p420) target = $region48
    $region47: #{cossm_forward.20} parent=5 // pred_region
      %s424 = ssub.s32 %s13, 1
      %s425 = ssub.s32 0, %s27
      %s426 = smul.u32 2, %s425
      %p427 = scmp.lt.s32.totalorder %s24, 1
      %s428 = scalar_select %p427, %s24, 1
      %p429 = scmp.lt.s32.totalorder %s25, 1
      %s430 = scalar_select %p429, %s25, 1
      %p431 = scmp.lt.s32.totalorder %s426, 1
      %s432 = scalar_select %p431, %s426, 1
      %p433 = scmp.lt.s32.totalorder %s26, 0
      %s434 = scalar_select %p433, %s26, 0
      %s435 = sadd.s32 %s434, %s432
      %s436 = smul.addr %s430, 2
      %s437 = sadd.s32 %s435, %s436
      %s438 = smul.addr %s428, 4
      %s439 = sadd.s32 %s437, %s438
      %s440 = smul.addr %s439, 8
      %s441 = scalar_lea.vmem %s0, %s440
      %p442 = pneg %p73
      %p443 = pneg %p70
      %s444 = ssub.s32 0, %s27
      %s445 = smul.u32 2, %s444
      %p446 = scmp.lt.s32.totalorder %s24, 1
      %s447 = scalar_select %p446, %s24, 1
      %p448 = scmp.lt.s32.totalorder %s25, 1
      %s449 = scalar_select %p448, %s25, 1
      %p450 = scmp.lt.s32.totalorder %s445, 1
      %s451 = scalar_select %p450, %s445, 1
      %p452 = scmp.lt.s32.totalorder %s26, 0
      %s453 = scalar_select %p452, %s26, 0
      %s454 = sadd.s32 %s453, %s451
      %s455 = smul.addr %s449, 2
      %s456 = sadd.s32 %s454, %s455
      %s457 = smul.addr %s447, 4
      %s458 = sadd.s32 %s456, %s457
      %s459 = smul.addr %s458, 8
      %s460 = scalar_lea.vmem %s1, %s459
      %p461 = pneg %p107
      %p462 = pneg %p104
      %s463 = ssub.s32 0, %s27
      %s464 = smul.u32 2, %s463
      %p465 = scmp.lt.s32.totalorder %s24, 1
      %s466 = scalar_select %p465, %s24, 1
      %p467 = scmp.lt.s32.totalorder %s25, 1
      %s468 = scalar_select %p467, %s25, 1
      %p469 = scmp.lt.s32.totalorder %s464, 1
      %s470 = scalar_select %p469, %s464, 1
      %s471 = smul.addr %s468, 2
      %s472 = sadd.s32 %s470, %s471
      %s473 = smul.addr %s466, 4
      %s474 = sadd.s32 %s472, %s473
      %s475 = smul.addr %s474, 8
      %s476 = scalar_lea.vmem %s2, %s475
      %p477 = pneg %p139
      %p478 = pneg %p136
      %s479 = ssub.s32 0, %s27
      %s480 = smul.u32 2, %s479
      %p481 = scmp.lt.s32.totalorder %s24, 1
      %s482 = scalar_select %p481, %s24, 1
      %p483 = scmp.lt.s32.totalorder %s25, 1
      %s484 = scalar_select %p483, %s25, 1
      %p485 = scmp.lt.s32.totalorder %s480, 1
      %s486 = scalar_select %p485, %s480, 1
      %p487 = scmp.lt.s32.totalorder %s26, 0
      %s488 = scalar_select %p487, %s26, 0
      %s489 = sadd.s32 %s488, %s486
      %s490 = smul.addr %s484, 2
      %s491 = sadd.s32 %s489, %s490
      %s492 = smul.addr %s482, 4
      %s493 = sadd.s32 %s491, %s492
      %s494 = smul.addr %s493, 8
      %s495 = scalar_lea.vmem %s3, %s494
      %p496 = pneg %p173
      %p497 = pneg %p170
      %p498 = scmp.lt.s32.totalorder %s26, 0
      %s499 = scalar_select %p498, %s26, 0
      %s500 = smul.addr %s499, 8
      %s501 = scalar_lea.vmem %s4, %s500
      %p502 = pneg %p199
      %p503 = pneg %p196
      %p504 = scmp.lt.s32.totalorder %s24, 1
      %s505 = scalar_select %p504, %s24, 1
      %p506 = scmp.lt.s32.totalorder %s26, 0
      %s507 = scalar_select %p506, %s26, 0
      %s508 = sadd.s32 %s507, %s505
      %s509 = scalar_lea.vmem %s5, %s508
      %p510 = pneg %p227
      %p511 = pneg %p224
      %p512 = scmp.lt.s32.totalorder %s24, 1
      %s513 = scalar_select %p512, %s24, 1
      %p514 = scmp.lt.s32.totalorder %s26, 0
      %s515 = scalar_select %p514, %s26, 0
      %s516 = sadd.s32 %s515, %s513
      %s517 = scalar_lea.vmem %s6, %s516
      %p518 = pneg %p255
      %p519 = pneg %p252
      %p520 = pneg %p289
      %p521 = pneg %p286
      %s522 = ssub.s32 0, %s27
      %s523 = smul.u32 2, %s522
      %p524 = scmp.lt.s32.totalorder %s24, 1
      %s525 = scalar_select %p524, %s24, 1
      %p526 = scmp.lt.s32.totalorder %s25, 1
      %s527 = scalar_select %p526, %s25, 1
      %p528 = scmp.lt.s32.totalorder %s523, 1
      %s529 = scalar_select %p528, %s523, 1
      %p530 = scmp.lt.s32.totalorder %s26, 0
      %s531 = scalar_select %p530, %s26, 0
      %s532 = sadd.s32 %s531, %s529
      %s533 = smul.addr %s527, 2
      %s534 = sadd.s32 %s532, %s533
      %s535 = smul.addr %s525, 4
      %s536 = sadd.s32 %s534, %s535
      %s537 = smul.addr %s536, 8
      %s538 = scalar_lea.vmem %s7, %s537
      %s539 = ssub.s32 0, %s27
      %s540 = smul.u32 2, %s539
      %p541 = scmp.lt.s32.totalorder %s24, 1
      %s542 = scalar_select %p541, %s24, 1
      %p543 = scmp.lt.s32.totalorder %s25, 1
      %s544 = scalar_select %p543, %s25, 1
      %p545 = scmp.lt.s32.totalorder %s540, 1
      %s546 = scalar_select %p545, %s540, 1
      %p547 = scmp.lt.s32.totalorder %s26, 0
      %s548 = scalar_select %p547, %s26, 0
      %s549 = sadd.s32 %s548, %s546
      %s550 = smul.addr %s544, 2
      %s551 = sadd.s32 %s549, %s550
      %s552 = smul.addr %s542, 4
      %s553 = sadd.s32 %s551, %s552
      %s554 = smul.addr %s553, 8
      %s555 = scalar_lea.vmem %s0, %s554
      %s556 = ssub.s32 0, %s27
      %s557 = smul.u32 2, %s556
      %s558 = ssub.s32 0, %s27
      %s559 = smul.u32 2, %s558
      %p560 = scmp.lt.s32.totalorder %s24, 1
      %s561 = scalar_select %p560, %s24, 1
      %p562 = scmp.lt.s32.totalorder %s25, 1
      %s563 = scalar_select %p562, %s25, 1
      %p564 = scmp.lt.s32.totalorder %s559, 1
      %s565 = scalar_select %p564, %s559, 1
      %p566 = scmp.lt.s32.totalorder %s26, 0
      %s567 = scalar_select %p566, %s26, 0
      %s568 = sadd.s32 %s567, %s565
      %s569 = smul.addr %s563, 2
      %s570 = sadd.s32 %s568, %s569
      %s571 = smul.addr %s561, 4
      %s572 = sadd.s32 %s570, %s571
      %s573 = smul.addr %s572, 8
      %s574 = scalar_lea.vmem %s1, %s573
      %s575 = ssub.s32 0, %s27
      %s576 = smul.u32 2, %s575
      %s577 = ssub.s32 0, %s27
      %s578 = smul.u32 2, %s577
      %p579 = scmp.lt.s32.totalorder %s24, 1
      %s580 = scalar_select %p579, %s24, 1
      %p581 = scmp.lt.s32.totalorder %s25, 1
      %s582 = scalar_select %p581, %s25, 1
      %p583 = scmp.lt.s32.totalorder %s578, 1
      %s584 = scalar_select %p583, %s578, 1
      %s585 = smul.addr %s582, 2
      %s586 = sadd.s32 %s584, %s585
      %s587 = smul.addr %s580, 4
      %s588 = sadd.s32 %s586, %s587
      %s589 = smul.addr %s588, 8
      %s590 = scalar_lea.vmem %s2, %s589
      %s591 = ssub.s32 0, %s27
      %s592 = smul.u32 2, %s591
      %s593 = ssub.s32 0, %s27
      %s594 = smul.u32 2, %s593
      %p595 = scmp.lt.s32.totalorder %s24, 1
      %s596 = scalar_select %p595, %s24, 1
      %p597 = scmp.lt.s32.totalorder %s25, 1
      %s598 = scalar_select %p597, %s25, 1
      %p599 = scmp.lt.s32.totalorder %s594, 1
      %s600 = scalar_select %p599, %s594, 1
      %p601 = scmp.lt.s32.totalorder %s26, 0
      %s602 = scalar_select %p601, %s26, 0
      %s603 = sadd.s32 %s602, %s600
      %s604 = smul.addr %s598, 2
      %s605 = sadd.s32 %s603, %s604
      %s606 = smul.addr %s596, 4
      %s607 = sadd.s32 %s605, %s606
      %s608 = smul.addr %s607, 8
      %s609 = scalar_lea.vmem %s3, %s608
      %s610 = ssub.s32 0, %s27
      %s611 = smul.u32 2, %s610
      %p612 = scmp.lt.s32.totalorder %s26, 0
      %s613 = scalar_select %p612, %s26, 0
      %s614 = smul.addr %s613, 8
      %s615 = scalar_lea.vmem %s4, %s614
      %p616 = scmp.lt.s32.totalorder %s24, 1
      %s617 = scalar_select %p616, %s24, 1
      %p618 = scmp.lt.s32.totalorder %s26, 0
      %s619 = scalar_select %p618, %s26, 0
      %s620 = sadd.s32 %s619, %s617
      %s621 = scalar_lea.vmem %s5, %s620
      %p622 = scmp.lt.s32.totalorder %s24, 1
      %s623 = scalar_select %p622, %s24, 1
      %p624 = scmp.lt.s32.totalorder %s26, 0
      %s625 = scalar_select %p624, %s26, 0
      %s626 = sadd.s32 %s625, %s623
      %s627 = scalar_lea.vmem %s6, %s626
      %s628 = ssub.s32 0, %s27
      %s629 = smul.u32 2, %s628
      %p630 = scmp.lt.s32.totalorder %s24, 1
      %s631 = scalar_select %p630, %s24, 1
      %p632 = scmp.lt.s32.totalorder %s25, 1
      %s633 = scalar_select %p632, %s25, 1
      %p634 = scmp.lt.s32.totalorder %s629, 1
      %s635 = scalar_select %p634, %s629, 1
      %p636 = scmp.lt.s32.totalorder %s26, 0
      %s637 = scalar_select %p636, %s26, 0
      %s638 = sadd.s32 %s637, %s635
      %s639 = smul.addr %s633, 2
      %s640 = sadd.s32 %s638, %s639
      %s641 = smul.addr %s631, 4
      %s642 = sadd.s32 %s640, %s641
      %s643 = smul.addr %s642, 8
      %s644 = scalar_lea.vmem %s7, %s643
      %s645 = ssub.s32 0, %s27
      %s646 = smul.u32 2, %s645
      %p647 = scmp.eq.s32.totalorder %s27, 0
      // Predicated region
      $region49: #{cossm_forward.20} parent=47 // pred_check
        %p648 = pneg %p647
      $region50: #{cossm_forward.20} parent=47 // pred_check_branch
        %650 = sbr.rel (%p648) target = $region52
      $region51: #{cossm_forward.20} parent=47 // pred_region
        %vm651 = vcmask 523264
        %652 = vst.msk [vmem:[#allocation2] sm:$0xff] %vm651, 0.0
        %653 = vst.msk [vmem:[#allocation2 + $0x8] sm:$0xff] %vm651, 0.0
      $region52: #{cossm_forward.20} parent=47 // pred_fallthru
        _
      %v654 = vld [vmem:[%s615] sm:$0xff]
      %v655 = vld [vmem:[%s615 + $0x8] sm:$0xff]
      %v656 = vld [vmem:[%s621] sm:$0x1]
      %v657 = vld [vmem:[%s627] sm:$0x1]
      %v658 = vld [vmem:[#allocation2] sm:$0xff]
      %v659 = vld [vmem:[#allocation2 + $0x8] sm:$0xff]
      loop: start=0, step=1, limit=2
      $region53: #{cossm_forward.20} parent=47 // loop_pre_header
        _
      $region54: #{cossm_forward.20} parent=47 // loop_header
        %s661 = sphi 0, %s665
        %p662 = scmp.ge.s32.totalorder %s661, 2
        %v666 = vphi %v658, %v2275
        %v667 = vphi %v659, %v2276
      $region55: #{cossm_forward.20} parent=47 // loop_header_branch
        %664 = sbr.rel (%p662) target = $region59
      $region56: #{cossm_forward.20} parent=47 // loop_body
        %s668 = ssub.s32 1, %s661
        %s669 = smul.u32 %s668, 8
        %s670 = scalar_lea.vmem %s555, %s669
        %v671 = vld [vmem:[%s670] sm:$0xff]
        %s672 = scalar_lea.vmem %s574, %s669
        %v673 = vld [vmem:[%s672] sm:$0xff]
        %s674 = scalar_lea.vmem %s609, %s669
        %v675 = vld [vmem:[%s674] sm:$0xff]
        %s676 = scalar_lea.vmem %s590, %s669
        %v677 = vld [vmem:[%s676] sm:$0xff]
        %v679 = vlaneseq
        %v680 = vshrl.u32 %v679, 7
        %v681 = vsub.s32 0, %v680
        %v682 = vrot.slane %v656, %v681
        %v684 = vadd.f32 %v673, %v682
        %v685 = vmax.f32 %v684, 0.0
        %v686 = vand.u32 2147483647, %v684
        %v687 = vsub.f32 0.0, %v686
        %v688 = vmul.f32 %v687, 1.442695
        %v689 = vpow.pop %v688
        %v690 = vadd.f32 %v689, 1.0
        %v691 = vlog2.pop %v690
        %v692 = vmul.f32 %v691, 0.6931472
        %v693 = vadd.f32 %v685, %v692
        %v694 = vmul.f32 %v693, %v671
        %v695 = vsub.f32 0.0, %v675
        %v696 = vmul.f32 %v695, 1.442695
        %v697 = vpow.pop %v696
        %v698 = vadd.f32 %v697, 1.0
        %v699 = vrcp.pop %v698
        %v700 = vmul.f32 %v675, %v699
        %v701 = vlaneseq
        %v702 = vshrl.u32 %v701, 7
        %v703 = vsub.s32 7, %v702
        %v704 = vrot.slane %v693, %v703
        %v705 = vmul.f32 %v704, %v654
        %v706 = vmul.f32 %v704, %v655
        %v707 = vmul.f32 %v705, 1.442695
        %v708 = vpow.pop %v707
        %v709 = vmul.f32 %v706, 1.442695
        %v710 = vpow.pop %v709
        %v712 = vrot.slane %v677, 7
        %714 = vxpose.xlu0.b32.start [1/16] %v712, 128
        %715 = vxpose.xlu0.b32.cont [2/16] 0.0, 128
        %716 = vxpose.xlu0.b32.cont [3/16] 0.0, 128
        %717 = vxpose.xlu0.b32.cont [4/16] 0.0, 128
        %718 = vxpose.xlu0.b32.cont [5/16] 0.0, 128
        %719 = vxpose.xlu0.b32.cont [6/16] 0.0, 128
        %720 = vxpose.xlu0.b32.cont [7/16] 0.0, 128
        %721 = vxpose.xlu0.b32.cont [8/16] 0.0, 128
        %722 = vxpose.xlu0.b32.cont [9/16] 0.0, 128
        %723 = vxpose.xlu0.b32.cont [10/16] 0.0, 128
        %724 = vxpose.xlu0.b32.cont [11/16] 0.0, 128
        %725 = vxpose.xlu0.b32.cont [12/16] 0.0, 128
        %726 = vxpose.xlu0.b32.cont [13/16] 0.0, 128
        %727 = vxpose.xlu0.b32.cont [14/16] 0.0, 128
        %728 = vxpose.xlu0.b32.cont [15/16] 0.0, 128
        %729 = vxpose.xlu0.b32.end [16/16] 0.0, 128
        %v730 = vpop.trf.xlu0
        %v731 = vpop.trf.xlu0
        %v732 = vpop.trf.xlu0
        %v733 = vpop.trf.xlu0
        %v734 = vpop.trf.xlu0
        %v735 = vpop.trf.xlu0
        %v736 = vpop.trf.xlu0
        %v737 = vpop.trf.xlu0
        %v738 = vpop.trf.xlu0
        %v739 = vpop.trf.xlu0
        %v740 = vpop.trf.xlu0
        %v741 = vpop.trf.xlu0
        %v742 = vpop.trf.xlu0
        %v743 = vpop.trf.xlu0
        %v744 = vpop.trf.xlu0
        %v745 = vpop.trf.xlu0
        %v747 = vrot.slane %v694, 7
        %vm748 = vcmask 7168
        %v750 = vsel %vm748, %v730, 0
        %v753 = vsel %vm748, %v731, 0
        %vm755 = vcmask 1040384
        %v756 = vsel %vm755, %v747, 0
        %758 = vmatprep.subr.mxu0 0.0
        %759 = vmatpush1.msra.mxu0 %v756
        %760 = vmatprep.subr.mxu0 0.0
        %761 = vmatpush1.msra.mxu0 0.0
        %762 = vmatprep.subr.mxu0 0.0
        %763 = vmatpush1.msra.mxu0 0.0
        %764 = vmatprep.subr.mxu0 0.0
        %765 = vmatpush1.msra.mxu0 0.0
        %766 = vmatprep.subr.mxu0 0.0
        %767 = vmatpush1.msra.mxu0 0.0
        %768 = vmatprep.subr.mxu0 0.0
        %769 = vmatpush1.msra.mxu0 0.0
        %770 = vmatprep.subr.mxu0 0.0
        %771 = vmatpush1.msra.mxu0 0.0
        %772 = vmatprep.subr.mxu0 0.0
        %773 = vmatpush1.msra.mxu0 0.0
        %774 = vmatprep.subr.mxu0 0.0
        %775 = vmatpush1.msra.mxu0 0.0
        %776 = vmatprep.subr.mxu0 0.0
        %777 = vmatpush1.msra.mxu0 0.0
        %778 = vmatprep.subr.mxu0 0.0
        %779 = vmatpush1.msra.mxu0 0.0
        %780 = vmatprep.subr.mxu0 0.0
        %781 = vmatpush1.msra.mxu0 0.0
        %782 = vmatprep.subr.mxu0 0.0
        %783 = vmatpush1.msra.mxu0 0.0
        %784 = vmatprep.subr.mxu0 0.0
        %785 = vmatpush1.msra.mxu0 0.0
        %786 = vmatprep.subr.mxu0 0.0
        %787 = vmatpush1.msra.mxu0 0.0
        %788 = vmatprep.subr.mxu0 0.0
        %789 = vmatpush1.msra.mxu0 0.0
        %790 = vmatprep.subr.mxu0 0.0
        %791 = vmatpush1.msra.mxu0 0.0
        %792 = vmatprep.subr.mxu0 0.0
        %793 = vmatpush1.msra.mxu0 0.0
        %794 = vmatprep.subr.mxu0 0.0
        %795 = vmatpush1.msra.mxu0 0.0
        %796 = vmatprep.subr.mxu0 0.0
        %797 = vmatpush1.msra.mxu0 0.0
        %798 = vmatprep.subr.mxu0 0.0
        %799 = vmatpush1.msra.mxu0 0.0
        %800 = vmatprep.subr.mxu0 0.0
        %801 = vmatpush1.msra.mxu0 0.0
        %802 = vmatprep.subr.mxu0 0.0
        %803 = vmatpush1.msra.mxu0 0.0
        %804 = vmatprep.subr.mxu0 0.0
        %805 = vmatpush1.msra.mxu0 0.0
        %806 = vmatprep.subr.mxu0 0.0
        %807 = vmatpush1.msra.mxu0 0.0
        %808 = vmatprep.subr.mxu0 0.0
        %809 = vmatpush1.msra.mxu0 0.0
        %810 = vmatprep.subr.mxu0 0.0
        %811 = vmatpush1.msra.mxu0 0.0
        %812 = vmatprep.subr.mxu0 0.0
        %813 = vmatpush1.msra.mxu0 0.0
        %814 = vmatprep.subr.mxu0 0.0
        %815 = vmatpush1.msra.mxu0 0.0
        %816 = vmatprep.subr.mxu0 0.0
        %817 = vmatpush1.msra.mxu0 0.0
        %818 = vmatprep.subr.mxu0 0.0
        %819 = vmatpush1.msra.mxu0 0.0
        %820 = vmatprep.subr.mxu0 0.0
        %821 = vmatpush1.msra.mxu0 0.0
        %822 = vmatprep.mubr.f32.mxu0 0.0
        %823 = vmatmul.mubr.f32.gmra.mrb[0].mxu0 %v750
        %v824 = vpop.f32.mrb[0].mxu0
        %v825 = vadd.f32 0.0, %v824
        %v826 = vpop.f32.mrb[0].mxu0
        %827 = vmatprep.mubr.f32.mxu0 0.0
        %828 = vmatmul.mubr.f32.gmra.mrb[0].mxu0 %v753
        %v829 = vpop.f32.mrb[0].mxu0
        %v830 = vadd.f32 0.0, %v829
        %v831 = vpop.f32.mrb[0].mxu0
        %832 = vdwg.mxu0
        %v833 = vmul.f32 %v708, %v666
        %v834 = vmul.f32 %v710, %v667
        %v835 = vadd.f32 %v833, %v825
        %v836 = vadd.f32 %v834, %v830
        %837 = vrot.lane.b32.xlu0 %v712, 112
        %v838 = vpop.permute.xlu0 %837
        %vm839 = vcmask 130048
        %v840 = vsel %vm839, %v838, 0
        %842 = vmatprep.subr.mxu0 0.0
        %843 = vmatpush1.msra.mxu0 %v835
        %844 = vmatprep.subr.mxu0 0.0
        %845 = vmatpush1.msra.mxu0 %v836
        %846 = vmatprep.subr.mxu0 0.0
        %847 = vmatpush1.msra.mxu0 0.0
        %848 = vmatprep.subr.mxu0 0.0
        %849 = vmatpush1.msra.mxu0 0.0
        %850 = vmatprep.subr.mxu0 0.0
        %851 = vmatpush1.msra.mxu0 0.0
        %852 = vmatprep.subr.mxu0 0.0
        %853 = vmatpush1.msra.mxu0 0.0
        %854 = vmatprep.subr.mxu0 0.0
        %855 = vmatpush1.msra.mxu0 0.0
        %856 = vmatprep.subr.mxu0 0.0
        %857 = vmatpush1.msra.mxu0 0.0
        %858 = vmatprep.subr.mxu0 0.0
        %859 = vmatpush1.msra.mxu0 0.0
        %860 = vmatprep.subr.mxu0 0.0
        %861 = vmatpush1.msra.mxu0 0.0
        %862 = vmatprep.subr.mxu0 0.0
        %863 = vmatpush1.msra.mxu0 0.0
        %864 = vmatprep.subr.mxu0 0.0
        %865 = vmatpush1.msra.mxu0 0.0
        %866 = vmatprep.subr.mxu0 0.0
        %867 = vmatpush1.msra.mxu0 0.0
        %868 = vmatprep.subr.mxu0 0.0
        %869 = vmatpush1.msra.mxu0 0.0
        %870 = vmatprep.subr.mxu0 0.0
        %871 = vmatpush1.msra.mxu0 0.0
        %872 = vmatprep.subr.mxu0 0.0
        %873 = vmatpush1.msra.mxu0 0.0
        %874 = vmatprep.subr.mxu0 0.0
        %875 = vmatpush1.msra.mxu0 0.0
        %876 = vmatprep.subr.mxu0 0.0
        %877 = vmatpush1.msra.mxu0 0.0
        %878 = vmatprep.subr.mxu0 0.0
        %879 = vmatpush1.msra.mxu0 0.0
        %880 = vmatprep.subr.mxu0 0.0
        %881 = vmatpush1.msra.mxu0 0.0
        %882 = vmatprep.subr.mxu0 0.0
        %883 = vmatpush1.msra.mxu0 0.0
        %884 = vmatprep.subr.mxu0 0.0
        %885 = vmatpush1.msra.mxu0 0.0
        %886 = vmatprep.subr.mxu0 0.0
        %887 = vmatpush1.msra.mxu0 0.0
        %888 = vmatprep.subr.mxu0 0.0
        %889 = vmatpush1.msra.mxu0 0.0
        %890 = vmatprep.subr.mxu0 0.0
        %891 = vmatpush1.msra.mxu0 0.0
        %892 = vmatprep.subr.mxu0 0.0
        %893 = vmatpush1.msra.mxu0 0.0
        %894 = vmatprep.subr.mxu0 0.0
        %895 = vmatpush1.msra.mxu0 0.0
        %896 = vmatprep.subr.mxu0 0.0
        %897 = vmatpush1.msra.mxu0 0.0
        %898 = vmatprep.subr.mxu0 0.0
        %899 = vmatpush1.msra.mxu0 0.0
        %900 = vmatprep.subr.mxu0 0.0
        %901 = vmatpush1.msra.mxu0 0.0
        %902 = vmatprep.subr.mxu0 0.0
        %903 = vmatpush1.msra.mxu0 0.0
        %904 = vmatprep.subr.mxu0 0.0
        %905 = vmatpush1.msra.mxu0 0.0
        %906 = vmatprep.mubr.f32.mxu0 0.0
        %907 = vmatmul.mubr.f32.gmra.mrb[0].mxu0 %v840
        %v908 = vpop.f32.mrb[0].mxu0
        %v909 = vadd.f32 0.0, %v908
        %v910 = vpop.f32.mrb[0].mxu0
        %911 = vdwg.mxu0
        %v912 = vlaneseq
        %v913 = vshrl.u32 %v912, 7
        %v914 = vsub.s32 6, %v913
        %v915 = vrot.slane %v693, %v914
        %v916 = vmul.f32 %v915, %v654
        %v917 = vmul.f32 %v915, %v655
        %v918 = vmul.f32 %v916, 1.442695
        %v919 = vpow.pop %v918
        %v920 = vmul.f32 %v917, 1.442695
        %v921 = vpow.pop %v920
        %v922 = vrot.slane %v677, 6
        %924 = vxpose.xlu0.b32.start [1/16] %v922, 128
        %925 = vxpose.xlu0.b32.cont [2/16] 0.0, 128
        %926 = vxpose.xlu0.b32.cont [3/16] 0.0, 128
        %927 = vxpose.xlu0.b32.cont [4/16] 0.0, 128
        %928 = vxpose.xlu0.b32.cont [5/16] 0.0, 128
        %929 = vxpose.xlu0.b32.cont [6/16] 0.0, 128
        %930 = vxpose.xlu0.b32.cont [7/16] 0.0, 128
        %931 = vxpose.xlu0.b32.cont [8/16] 0.0, 128
        %932 = vxpose.xlu0.b32.cont [9/16] 0.0, 128
        %933 = vxpose.xlu0.b32.cont [10/16] 0.0, 128
        %934 = vxpose.xlu0.b32.cont [11/16] 0.0, 128
        %935 = vxpose.xlu0.b32.cont [12/16] 0.0, 128
        %936 = vxpose.xlu0.b32.cont [13/16] 0.0, 128
        %937 = vxpose.xlu0.b32.cont [14/16] 0.0, 128
        %938 = vxpose.xlu0.b32.cont [15/16] 0.0, 128
        %939 = vxpose.xlu0.b32.end [16/16] 0.0, 128
        %v940 = vpop.trf.xlu0
        %v941 = vpop.trf.xlu0
        %v942 = vpop.trf.xlu0
        %v943 = vpop.trf.xlu0
        %v944 = vpop.trf.xlu0
        %v945 = vpop.trf.xlu0
        %v946 = vpop.trf.xlu0
        %v947 = vpop.trf.xlu0
        %v948 = vpop.trf.xlu0
        %v949 = vpop.trf.xlu0
        %v950 = vpop.trf.xlu0
        %v951 = vpop.trf.xlu0
        %v952 = vpop.trf.xlu0
        %v953 = vpop.trf.xlu0
        %v954 = vpop.trf.xlu0
        %v955 = vpop.trf.xlu0
        %v956 = vrot.slane %v694, 6
        %v958 = vsel %vm748, %v940, 0
        %v961 = vsel %vm748, %v941, 0
        %v963 = vsel %vm755, %v956, 0
        %965 = vmatprep.subr.mxu0 0.0
        %966 = vmatpush1.msra.mxu0 %v963
        %967 = vmatprep.subr.mxu0 0.0
        %968 = vmatpush1.msra.mxu0 0.0
        %969 = vmatprep.subr.mxu0 0.0
        %970 = vmatpush1.msra.mxu0 0.0
        %971 = vmatprep.subr.mxu0 0.0
        %972 = vmatpush1.msra.mxu0 0.0
        %973 = vmatprep.subr.mxu0 0.0
        %974 = vmatpush1.msra.mxu0 0.0
        %975 = vmatprep.subr.mxu0 0.0
        %976 = vmatpush1.msra.mxu0 0.0
        %977 = vmatprep.subr.mxu0 0.0
        %978 = vmatpush1.msra.mxu0 0.0
        %979 = vmatprep.subr.mxu0 0.0
        %980 = vmatpush1.msra.mxu0 0.0
        %981 = vmatprep.subr.mxu0 0.0
        %982 = vmatpush1.msra.mxu0 0.0
        %983 = vmatprep.subr.mxu0 0.0
        %984 = vmatpush1.msra.mxu0 0.0
        %985 = vmatprep.subr.mxu0 0.0
        %986 = vmatpush1.msra.mxu0 0.0
        %987 = vmatprep.subr.mxu0 0.0
        %988 = vmatpush1.msra.mxu0 0.0
        %989 = vmatprep.subr.mxu0 0.0
        %990 = vmatpush1.msra.mxu0 0.0
        %991 = vmatprep.subr.mxu0 0.0
        %992 = vmatpush1.msra.mxu0 0.0
        %993 = vmatprep.subr.mxu0 0.0
        %994 = vmatpush1.msra.mxu0 0.0
        %995 = vmatprep.subr.mxu0 0.0
        %996 = vmatpush1.msra.mxu0 0.0
        %997 = vmatprep.subr.mxu0 0.0
        %998 = vmatpush1.msra.mxu0 0.0
        %999 = vmatprep.subr.mxu0 0.0
        %1000 = vmatpush1.msra.mxu0 0.0
        %1001 = vmatprep.subr.mxu0 0.0
        %1002 = vmatpush1.msra.mxu0 0.0
        %1003 = vmatprep.subr.mxu0 0.0
        %1004 = vmatpush1.msra.mxu0 0.0
        %1005 = vmatprep.subr.mxu0 0.0
        %1006 = vmatpush1.msra.mxu0 0.0
        %1007 = vmatprep.subr.mxu0 0.0
        %1008 = vmatpush1.msra.mxu0 0.0
        %1009 = vmatprep.subr.mxu0 0.0
        %1010 = vmatpush1.msra.mxu0 0.0
        %1011 = vmatprep.subr.mxu0 0.0
        %1012 = vmatpush1.msra.mxu0 0.0
        %1013 = vmatprep.subr.mxu0 0.0
        %1014 = vmatpush1.msra.mxu0 0.0
        %1015 = vmatprep.subr.mxu0 0.0
        %1016 = vmatpush1.msra.mxu0 0.0
        %1017 = vmatprep.subr.mxu0 0.0
        %1018 = vmatpush1.msra.mxu0 0.0
        %1019 = vmatprep.subr.mxu0 0.0
        %1020 = vmatpush1.msra.mxu0 0.0
        %1021 = vmatprep.subr.mxu0 0.0
        %1022 = vmatpush1.msra.mxu0 0.0
        %1023 = vmatprep.subr.mxu0 0.0
        %1024 = vmatpush1.msra.mxu0 0.0
        %1025 = vmatprep.subr.mxu0 0.0
        %1026 = vmatpush1.msra.mxu0 0.0
        %1027 = vmatprep.subr.mxu0 0.0
        %1028 = vmatpush1.msra.mxu0 0.0
        %1029 = vmatprep.mubr.f32.mxu0 0.0
        %1030 = vmatmul.mubr.f32.gmra.mrb[0].mxu0 %v958
        %v1031 = vpop.f32.mrb[0].mxu0
        %v1032 = vadd.f32 0.0, %v1031
        %v1033 = vpop.f32.mrb[0].mxu0
        %1034 = vmatprep.mubr.f32.mxu0 0.0
        %1035 = vmatmul.mubr.f32.gmra.mrb[0].mxu0 %v961
        %v1036 = vpop.f32.mrb[0].mxu0
        %v1037 = vadd.f32 0.0, %v1036
        %v1038 = vpop.f32.mrb[0].mxu0
        %1039 = vdwg.mxu0
        %v1040 = vmul.f32 %v919, %v835
        %v1041 = vmul.f32 %v921, %v836
        %v1042 = vadd.f32 %v1040, %v1032
        %v1043 = vadd.f32 %v1041, %v1037
        %1044 = vrot.lane.b32.xlu0 %v922, 112
        %v1045 = vpop.permute.xlu0 %1044
        %v1046 = vsel %vm839, %v1045, 0
        %1048 = vmatprep.subr.mxu0 0.0
        %1049 = vmatpush1.msra.mxu0 %v1042
        %1050 = vmatprep.subr.mxu0 0.0
        %1051 = vmatpush1.msra.mxu0 %v1043
        %1052 = vmatprep.subr.mxu0 0.0
        %1053 = vmatpush1.msra.mxu0 0.0
        %1054 = vmatprep.subr.mxu0 0.0
        %1055 = vmatpush1.msra.mxu0 0.0
        %1056 = vmatprep.subr.mxu0 0.0
        %1057 = vmatpush1.msra.mxu0 0.0
        %1058 = vmatprep.subr.mxu0 0.0
        %1059 = vmatpush1.msra.mxu0 0.0
        %1060 = vmatprep.subr.mxu0 0.0
        %1061 = vmatpush1.msra.mxu0 0.0
        %1062 = vmatprep.subr.mxu0 0.0
        %1063 = vmatpush1.msra.mxu0 0.0
        %1064 = vmatprep.subr.mxu0 0.0
        %1065 = vmatpush1.msra.mxu0 0.0
        %1066 = vmatprep.subr.mxu0 0.0
        %1067 = vmatpush1.msra.mxu0 0.0
        %1068 = vmatprep.subr.mxu0 0.0
        %1069 = vmatpush1.msra.mxu0 0.0
        %1070 = vmatprep.subr.mxu0 0.0
        %1071 = vmatpush1.msra.mxu0 0.0
        %1072 = vmatprep.subr.mxu0 0.0
        %1073 = vmatpush1.msra.mxu0 0.0
        %1074 = vmatprep.subr.mxu0 0.0
        %1075 = vmatpush1.msra.mxu0 0.0
        %1076 = vmatprep.subr.mxu0 0.0
        %1077 = vmatpush1.msra.mxu0 0.0
        %1078 = vmatprep.subr.mxu0 0.0
        %1079 = vmatpush1.msra.mxu0 0.0
        %1080 = vmatprep.subr.mxu0 0.0
        %1081 = vmatpush1.msra.mxu0 0.0
        %1082 = vmatprep.subr.mxu0 0.0
        %1083 = vmatpush1.msra.mxu0 0.0
        %1084 = vmatprep.subr.mxu0 0.0
        %1085 = vmatpush1.msra.mxu0 0.0
        %1086 = vmatprep.subr.mxu0 0.0
        %1087 = vmatpush1.msra.mxu0 0.0
        %1088 = vmatprep.subr.mxu0 0.0
        %1089 = vmatpush1.msra.mxu0 0.0
        %1090 = vmatprep.subr.mxu0 0.0
        %1091 = vmatpush1.msra.mxu0 0.0
        %1092 = vmatprep.subr.mxu0 0.0
        %1093 = vmatpush1.msra.mxu0 0.0
        %1094 = vmatprep.subr.mxu0 0.0
        %1095 = vmatpush1.msra.mxu0 0.0
        %1096 = vmatprep.subr.mxu0 0.0
        %1097 = vmatpush1.msra.mxu0 0.0
        %1098 = vmatprep.subr.mxu0 0.0
        %1099 = vmatpush1.msra.mxu0 0.0
        %1100 = vmatprep.subr.mxu0 0.0
        %1101 = vmatpush1.msra.mxu0 0.0
        %1102 = vmatprep.subr.mxu0 0.0
        %1103 = vmatpush1.msra.mxu0 0.0
        %1104 = vmatprep.subr.mxu0 0.0
        %1105 = vmatpush1.msra.mxu0 0.0
        %1106 = vmatprep.subr.mxu0 0.0
        %1107 = vmatpush1.msra.mxu0 0.0
        %1108 = vmatprep.subr.mxu0 0.0
        %1109 = vmatpush1.msra.mxu0 0.0
        %1110 = vmatprep.subr.mxu0 0.0
        %1111 = vmatpush1.msra.mxu0 0.0
        %1112 = vmatprep.mubr.f32.mxu0 0.0
        %1113 = vmatmul.mubr.f32.gmra.mrb[0].mxu0 %v1046
        %v1114 = vpop.f32.mrb[0].mxu0
        %v1115 = vadd.f32 0.0, %v1114
        %v1116 = vpop.f32.mrb[0].mxu0
        %1117 = vdwg.mxu0
        %v1118 = vlaneseq
        %v1119 = vshrl.u32 %v1118, 7
        %v1120 = vsub.s32 5, %v1119
        %v1121 = vrot.slane %v693, %v1120
        %v1122 = vmul.f32 %v1121, %v654
        %v1123 = vmul.f32 %v1121, %v655
        %v1124 = vmul.f32 %v1122, 1.442695
        %v1125 = vpow.pop %v1124
        %v1126 = vmul.f32 %v1123, 1.442695
        %v1127 = vpow.pop %v1126
        %v1128 = vrot.slane %v677, 5
        %1130 = vxpose.xlu0.b32.start [1/16] %v1128, 128
        %1131 = vxpose.xlu0.b32.cont [2/16] 0.0, 128
        %1132 = vxpose.xlu0.b32.cont [3/16] 0.0, 128
        %1133 = vxpose.xlu0.b32.cont [4/16] 0.0, 128
        %1134 = vxpose.xlu0.b32.cont [5/16] 0.0, 128
        %1135 = vxpose.xlu0.b32.cont [6/16] 0.0, 128
        %1136 = vxpose.xlu0.b32.cont [7/16] 0.0, 128
        %1137 = vxpose.xlu0.b32.cont [8/16] 0.0, 128
        %1138 = vxpose.xlu0.b32.cont [9/16] 0.0, 128
        %1139 = vxpose.xlu0.b32.cont [10/16] 0.0, 128
        %1140 = vxpose.xlu0.b32.cont [11/16] 0.0, 128
        %1141 = vxpose.xlu0.b32.cont [12/16] 0.0, 128
        %1142 = vxpose.xlu0.b32.cont [13/16] 0.0, 128
        %1143 = vxpose.xlu0.b32.cont [14/16] 0.0, 128
        %1144 = vxpose.xlu0.b32.cont [15/16] 0.0, 128
        %1145 = vxpose.xlu0.b32.end [16/16] 0.0, 128
        %v1146 = vpop.trf.xlu0
        %v1147 = vpop.trf.xlu0
        %v1148 = vpop.trf.xlu0
        %v1149 = vpop.trf.xlu0
        %v1150 = vpop.trf.xlu0
        %v1151 = vpop.trf.xlu0
        %v1152 = vpop.trf.xlu0
        %v1153 = vpop.trf.xlu0
        %v1154 = vpop.trf.xlu0
        %v1155 = vpop.trf.xlu0
        %v1156 = vpop.trf.xlu0
        %v1157 = vpop.trf.xlu0
        %v1158 = vpop.trf.xlu0
        %v1159 = vpop.trf.xlu0
        %v1160 = vpop.trf.xlu0
        %v1161 = vpop.trf.xlu0
        %v1162 = vrot.slane %v694, 5
        %v1164 = vsel %vm748, %v1146, 0
        %v1167 = vsel %vm748, %v1147, 0
        %v1169 = vsel %vm755, %v1162, 0
        %1171 = vmatprep.subr.mxu0 0.0
        %1172 = vmatpush1.msra.mxu0 %v1169
        %1173 = vmatprep.subr.mxu0 0.0
        %1174 = vmatpush1.msra.mxu0 0.0
        %1175 = vmatprep.subr.mxu0 0.0
        %1176 = vmatpush1.msra.mxu0 0.0
        %1177 = vmatprep.subr.mxu0 0.0
        %1178 = vmatpush1.msra.mxu0 0.0
        %1179 = vmatprep.subr.mxu0 0.0
        %1180 = vmatpush1.msra.mxu0 0.0
        %1181 = vmatprep.subr.mxu0 0.0
        %1182 = vmatpush1.msra.mxu0 0.0
        %1183 = vmatprep.subr.mxu0 0.0
        %1184 = vmatpush1.msra.mxu0 0.0
        %1185 = vmatprep.subr.mxu0 0.0
        %1186 = vmatpush1.msra.mxu0 0.0
        %1187 = vmatprep.subr.mxu0 0.0
        %1188 = vmatpush1.msra.mxu0 0.0
        %1189 = vmatprep.subr.mxu0 0.0
        %1190 = vmatpush1.msra.mxu0 0.0
        %1191 = vmatprep.subr.mxu0 0.0
        %1192 = vmatpush1.msra.mxu0 0.0
        %1193 = vmatprep.subr.mxu0 0.0
        %1194 = vmatpush1.msra.mxu0 0.0
        %1195 = vmatprep.subr.mxu0 0.0
        %1196 = vmatpush1.msra.mxu0 0.0
        %1197 = vmatprep.subr.mxu0 0.0
        %1198 = vmatpush1.msra.mxu0 0.0
        %1199 = vmatprep.subr.mxu0 0.0
        %1200 = vmatpush1.msra.mxu0 0.0
        %1201 = vmatprep.subr.mxu0 0.0
        %1202 = vmatpush1.msra.mxu0 0.0
        %1203 = vmatprep.subr.mxu0 0.0
        %1204 = vmatpush1.msra.mxu0 0.0
        %1205 = vmatprep.subr.mxu0 0.0
        %1206 = vmatpush1.msra.mxu0 0.0
        %1207 = vmatprep.subr.mxu0 0.0
        %1208 = vmatpush1.msra.mxu0 0.0
        %1209 = vmatprep.subr.mxu0 0.0
        %1210 = vmatpush1.msra.mxu0 0.0
        %1211 = vmatprep.subr.mxu0 0.0
        %1212 = vmatpush1.msra.mxu0 0.0
        %1213 = vmatprep.subr.mxu0 0.0
        %1214 = vmatpush1.msra.mxu0 0.0
        %1215 = vmatprep.subr.mxu0 0.0
        %1216 = vmatpush1.msra.mxu0 0.0
        %1217 = vmatprep.subr.mxu0 0.0
        %1218 = vmatpush1.msra.mxu0 0.0
        %1219 = vmatprep.subr.mxu0 0.0
        %1220 = vmatpush1.msra.mxu0 0.0
        %1221 = vmatprep.subr.mxu0 0.0
        %1222 = vmatpush1.msra.mxu0 0.0
        %1223 = vmatprep.subr.mxu0 0.0
        %1224 = vmatpush1.msra.mxu0 0.0
        %1225 = vmatprep.subr.mxu0 0.0
        %1226 = vmatpush1.msra.mxu0 0.0
        %1227 = vmatprep.subr.mxu0 0.0
        %1228 = vmatpush1.msra.mxu0 0.0
        %1229 = vmatprep.subr.mxu0 0.0
        %1230 = vmatpush1.msra.mxu0 0.0
        %1231 = vmatprep.subr.mxu0 0.0
        %1232 = vmatpush1.msra.mxu0 0.0
        %1233 = vmatprep.subr.mxu0 0.0
        %1234 = vmatpush1.msra.mxu0 0.0
        %1235 = vmatprep.mubr.f32.mxu0 0.0
        %1236 = vmatmul.mubr.f32.gmra.mrb[0].mxu0 %v1164
        %v1237 = vpop.f32.mrb[0].mxu0
        %v1238 = vadd.f32 0.0, %v1237
        %v1239 = vpop.f32.mrb[0].mxu0
        %1240 = vmatprep.mubr.f32.mxu0 0.0
        %1241 = vmatmul.mubr.f32.gmra.mrb[0].mxu0 %v1167
        %v1242 = vpop.f32.mrb[0].mxu0
        %v1243 = vadd.f32 0.0, %v1242
        %v1244 = vpop.f32.mrb[0].mxu0
        %1245 = vdwg.mxu0
        %v1246 = vmul.f32 %v1125, %v1042
        %v1247 = vmul.f32 %v1127, %v1043
        %v1248 = vadd.f32 %v1246, %v1238
        %v1249 = vadd.f32 %v1247, %v1243
        %1250 = vrot.lane.b32.xlu0 %v1128, 112
        %v1251 = vpop.permute.xlu0 %1250
        %v1252 = vsel %vm839, %v1251, 0
        %1254 = vmatprep.subr.mxu0 0.0
        %1255 = vmatpush1.msra.mxu0 %v1248
        %1256 = vmatprep.subr.mxu0 0.0
        %1257 = vmatpush1.msra.mxu0 %v1249
        %1258 = vmatprep.subr.mxu0 0.0
        %1259 = vmatpush1.msra.mxu0 0.0
        %1260 = vmatprep.subr.mxu0 0.0
        %1261 = vmatpush1.msra.mxu0 0.0
        %1262 = vmatprep.subr.mxu0 0.0
        %1263 = vmatpush1.msra.mxu0 0.0
        %1264 = vmatprep.subr.mxu0 0.0
        %1265 = vmatpush1.msra.mxu0 0.0
        %1266 = vmatprep.subr.mxu0 0.0
        %1267 = vmatpush1.msra.mxu0 0.0
        %1268 = vmatprep.subr.mxu0 0.0
        %1269 = vmatpush1.msra.mxu0 0.0
        %1270 = vmatprep.subr.mxu0 0.0
        %1271 = vmatpush1.msra.mxu0 0.0
        %1272 = vmatprep.subr.mxu0 0.0
        %1273 = vmatpush1.msra.mxu0 0.0
        %1274 = vmatprep.subr.mxu0 0.0
        %1275 = vmatpush1.msra.mxu0 0.0
        %1276 = vmatprep.subr.mxu0 0.0
        %1277 = vmatpush1.msra.mxu0 0.0
        %1278 = vmatprep.subr.mxu0 0.0
        %1279 = vmatpush1.msra.mxu0 0.0
        %1280 = vmatprep.subr.mxu0 0.0
        %1281 = vmatpush1.msra.mxu0 0.0
        %1282 = vmatprep.subr.mxu0 0.0
        %1283 = vmatpush1.msra.mxu0 0.0
        %1284 = vmatprep.subr.mxu0 0.0
        %1285 = vmatpush1.msra.mxu0 0.0
        %1286 = vmatprep.subr.mxu0 0.0
        %1287 = vmatpush1.msra.mxu0 0.0
        %1288 = vmatprep.subr.mxu0 0.0
        %1289 = vmatpush1.msra.mxu0 0.0
        %1290 = vmatprep.subr.mxu0 0.0
        %1291 = vmatpush1.msra.mxu0 0.0
        %1292 = vmatprep.subr.mxu0 0.0
        %1293 = vmatpush1.msra.mxu0 0.0
        %1294 = vmatprep.subr.mxu0 0.0
        %1295 = vmatpush1.msra.mxu0 0.0
        %1296 = vmatprep.subr.mxu0 0.0
        %1297 = vmatpush1.msra.mxu0 0.0
        %1298 = vmatprep.subr.mxu0 0.0
        %1299 = vmatpush1.msra.mxu0 0.0
        %1300 = vmatprep.subr.mxu0 0.0
        %1301 = vmatpush1.msra.mxu0 0.0
        %1302 = vmatprep.subr.mxu0 0.0
        %1303 = vmatpush1.msra.mxu0 0.0
        %1304 = vmatprep.subr.mxu0 0.0
        %1305 = vmatpush1.msra.mxu0 0.0
        %1306 = vmatprep.subr.mxu0 0.0
        %1307 = vmatpush1.msra.mxu0 0.0
        %1308 = vmatprep.subr.mxu0 0.0
        %1309 = vmatpush1.msra.mxu0 0.0
        %1310 = vmatprep.subr.mxu0 0.0
        %1311 = vmatpush1.msra.mxu0 0.0
        %1312 = vmatprep.subr.mxu0 0.0
        %1313 = vmatpush1.msra.mxu0 0.0
        %1314 = vmatprep.subr.mxu0 0.0
        %1315 = vmatpush1.msra.mxu0 0.0
        %1316 = vmatprep.subr.mxu0 0.0
        %1317 = vmatpush1.msra.mxu0 0.0
        %1318 = vmatprep.mubr.f32.mxu0 0.0
        %1319 = vmatmul.mubr.f32.gmra.mrb[0].mxu0 %v1252
        %v1320 = vpop.f32.mrb[0].mxu0
        %v1321 = vadd.f32 0.0, %v1320
        %v1322 = vpop.f32.mrb[0].mxu0
        %1323 = vdwg.mxu0
        %v1324 = vlaneseq
        %v1325 = vshrl.u32 %v1324, 7
        %v1326 = vsub.s32 4, %v1325
        %v1327 = vrot.slane %v693, %v1326
        %v1328 = vmul.f32 %v1327, %v654
        %v1329 = vmul.f32 %v1327, %v655
        %v1330 = vmul.f32 %v1328, 1.442695
        %v1331 = vpow.pop %v1330
        %v1332 = vmul.f32 %v1329, 1.442695
        %v1333 = vpow.pop %v1332
        %v1334 = vrot.slane %v677, 4
        %1336 = vxpose.xlu0.b32.start [1/16] %v1334, 128
        %1337 = vxpose.xlu0.b32.cont [2/16] 0.0, 128
        %1338 = vxpose.xlu0.b32.cont [3/16] 0.0, 128
        %1339 = vxpose.xlu0.b32.cont [4/16] 0.0, 128
        %1340 = vxpose.xlu0.b32.cont [5/16] 0.0, 128
        %1341 = vxpose.xlu0.b32.cont [6/16] 0.0, 128
        %1342 = vxpose.xlu0.b32.cont [7/16] 0.0, 128
        %1343 = vxpose.xlu0.b32.cont [8/16] 0.0, 128
        %1344 = vxpose.xlu0.b32.cont [9/16] 0.0, 128
        %1345 = vxpose.xlu0.b32.cont [10/16] 0.0, 128
        %1346 = vxpose.xlu0.b32.cont [11/16] 0.0, 128
        %1347 = vxpose.xlu0.b32.cont [12/16] 0.0, 128
        %1348 = vxpose.xlu0.b32.cont [13/16] 0.0, 128
        %1349 = vxpose.xlu0.b32.cont [14/16] 0.0, 128
        %1350 = vxpose.xlu0.b32.cont [15/16] 0.0, 128
        %1351 = vxpose.xlu0.b32.end [16/16] 0.0, 128
        %v1352 = vpop.trf.xlu0
        %v1353 = vpop.trf.xlu0
        %v1354 = vpop.trf.xlu0
        %v1355 = vpop.trf.xlu0
        %v1356 = vpop.trf.xlu0
        %v1357 = vpop.trf.xlu0
        %v1358 = vpop.trf.xlu0
        %v1359 = vpop.trf.xlu0
        %v1360 = vpop.trf.xlu0
        %v1361 = vpop.trf.xlu0
        %v1362 = vpop.trf.xlu0
        %v1363 = vpop.trf.xlu0
        %v1364 = vpop.trf.xlu0
        %v1365 = vpop.trf.xlu0
        %v1366 = vpop.trf.xlu0
        %v1367 = vpop.trf.xlu0
        %v1368 = vrot.slane %v694, 4
        %v1370 = vsel %vm748, %v1352, 0
        %v1373 = vsel %vm748, %v1353, 0
        %v1375 = vsel %vm755, %v1368, 0
        %1377 = vmatprep.subr.mxu0 0.0
        %1378 = vmatpush1.msra.mxu0 %v1375
        %1379 = vmatprep.subr.mxu0 0.0
        %1380 = vmatpush1.msra.mxu0 0.0
        %1381 = vmatprep.subr.mxu0 0.0
        %1382 = vmatpush1.msra.mxu0 0.0
        %1383 = vmatprep.subr.mxu0 0.0
        %1384 = vmatpush1.msra.mxu0 0.0
        %1385 = vmatprep.subr.mxu0 0.0
        %1386 = vmatpush1.msra.mxu0 0.0
        %1387 = vmatprep.subr.mxu0 0.0
        %1388 = vmatpush1.msra.mxu0 0.0
        %1389 = vmatprep.subr.mxu0 0.0
        %1390 = vmatpush1.msra.mxu0 0.0
        %1391 = vmatprep.subr.mxu0 0.0
        %1392 = vmatpush1.msra.mxu0 0.0
        %1393 = vmatprep.subr.mxu0 0.0
        %1394 = vmatpush1.msra.mxu0 0.0
        %1395 = vmatprep.subr.mxu0 0.0
        %1396 = vmatpush1.msra.mxu0 0.0
        %1397 = vmatprep.subr.mxu0 0.0
        %1398 = vmatpush1.msra.mxu0 0.0
        %1399 = vmatprep.subr.mxu0 0.0
        %1400 = vmatpush1.msra.mxu0 0.0
        %1401 = vmatprep.subr.mxu0 0.0
        %1402 = vmatpush1.msra.mxu0 0.0
        %1403 = vmatprep.subr.mxu0 0.0
        %1404 = vmatpush1.msra.mxu0 0.0
        %1405 = vmatprep.subr.mxu0 0.0
        %1406 = vmatpush1.msra.mxu0 0.0
        %1407 = vmatprep.subr.mxu0 0.0
        %1408 = vmatpush1.msra.mxu0 0.0
        %1409 = vmatprep.subr.mxu0 0.0
        %1410 = vmatpush1.msra.mxu0 0.0
        %1411 = vmatprep.subr.mxu0 0.0
        %1412 = vmatpush1.msra.mxu0 0.0
        %1413 = vmatprep.subr.mxu0 0.0
        %1414 = vmatpush1.msra.mxu0 0.0
        %1415 = vmatprep.subr.mxu0 0.0
        %1416 = vmatpush1.msra.mxu0 0.0
        %1417 = vmatprep.subr.mxu0 0.0
        %1418 = vmatpush1.msra.mxu0 0.0
        %1419 = vmatprep.subr.mxu0 0.0
        %1420 = vmatpush1.msra.mxu0 0.0
        %1421 = vmatprep.subr.mxu0 0.0
        %1422 = vmatpush1.msra.mxu0 0.0
        %1423 = vmatprep.subr.mxu0 0.0
        %1424 = vmatpush1.msra.mxu0 0.0
        %1425 = vmatprep.subr.mxu0 0.0
        %1426 = vmatpush1.msra.mxu0 0.0
        %1427 = vmatprep.subr.mxu0 0.0
        %1428 = vmatpush1.msra.mxu0 0.0
        %1429 = vmatprep.subr.mxu0 0.0
        %1430 = vmatpush1.msra.mxu0 0.0
        %1431 = vmatprep.subr.mxu0 0.0
        %1432 = vmatpush1.msra.mxu0 0.0
        %1433 = vmatprep.subr.mxu0 0.0
        %1434 = vmatpush1.msra.mxu0 0.0
        %1435 = vmatprep.subr.mxu0 0.0
        %1436 = vmatpush1.msra.mxu0 0.0
        %1437 = vmatprep.subr.mxu0 0.0
        %1438 = vmatpush1.msra.mxu0 0.0
        %1439 = vmatprep.subr.mxu0 0.0
        %1440 = vmatpush1.msra.mxu0 0.0
        %1441 = vmatprep.mubr.f32.mxu0 0.0
        %1442 = vmatmul.mubr.f32.gmra.mrb[0].mxu0 %v1370
        %v1443 = vpop.f32.mrb[0].mxu0
        %v1444 = vadd.f32 0.0, %v1443
        %v1445 = vpop.f32.mrb[0].mxu0
        %1446 = vmatprep.mubr.f32.mxu0 0.0
        %1447 = vmatmul.mubr.f32.gmra.mrb[0].mxu0 %v1373
        %v1448 = vpop.f32.mrb[0].mxu0
        %v1449 = vadd.f32 0.0, %v1448
        %v1450 = vpop.f32.mrb[0].mxu0
        %1451 = vdwg.mxu0
        %v1452 = vmul.f32 %v1331, %v1248
        %v1453 = vmul.f32 %v1333, %v1249
        %v1454 = vadd.f32 %v1452, %v1444
        %v1455 = vadd.f32 %v1453, %v1449
        %1456 = vrot.lane.b32.xlu0 %v1334, 112
        %v1457 = vpop.permute.xlu0 %1456
        %v1458 = vsel %vm839, %v1457, 0
        %1460 = vmatprep.subr.mxu0 0.0
        %1461 = vmatpush1.msra.mxu0 %v1454
        %1462 = vmatprep.subr.mxu0 0.0
        %1463 = vmatpush1.msra.mxu0 %v1455
        %1464 = vmatprep.subr.mxu0 0.0
        %1465 = vmatpush1.msra.mxu0 0.0
        %1466 = vmatprep.subr.mxu0 0.0
        %1467 = vmatpush1.msra.mxu0 0.0
        %1468 = vmatprep.subr.mxu0 0.0
        %1469 = vmatpush1.msra.mxu0 0.0
        %1470 = vmatprep.subr.mxu0 0.0
        %1471 = vmatpush1.msra.mxu0 0.0
        %1472 = vmatprep.subr.mxu0 0.0
        %1473 = vmatpush1.msra.mxu0 0.0
        %1474 = vmatprep.subr.mxu0 0.0
        %1475 = vmatpush1.msra.mxu0 0.0
        %1476 = vmatprep.subr.mxu0 0.0
        %1477 = vmatpush1.msra.mxu0 0.0
        %1478 = vmatprep.subr.mxu0 0.0
        %1479 = vmatpush1.msra.mxu0 0.0
        %1480 = vmatprep.subr.mxu0 0.0
        %1481 = vmatpush1.msra.mxu0 0.0
        %1482 = vmatprep.subr.mxu0 0.0
        %1483 = vmatpush1.msra.mxu0 0.0
        %1484 = vmatprep.subr.mxu0 0.0
        %1485 = vmatpush1.msra.mxu0 0.0
        %1486 = vmatprep.subr.mxu0 0.0
        %1487 = vmatpush1.msra.mxu0 0.0
        %1488 = vmatprep.subr.mxu0 0.0
        %1489 = vmatpush1.msra.mxu0 0.0
        %1490 = vmatprep.subr.mxu0 0.0
        %1491 = vmatpush1.msra.mxu0 0.0
        %1492 = vmatprep.subr.mxu0 0.0
        %1493 = vmatpush1.msra.mxu0 0.0
        %1494 = vmatprep.subr.mxu0 0.0
        %1495 = vmatpush1.msra.mxu0 0.0
        %1496 = vmatprep.subr.mxu0 0.0
        %1497 = vmatpush1.msra.mxu0 0.0
        %1498 = vmatprep.subr.mxu0 0.0
        %1499 = vmatpush1.msra.mxu0 0.0
        %1500 = vmatprep.subr.mxu0 0.0
        %1501 = vmatpush1.msra.mxu0 0.0
        %1502 = vmatprep.subr.mxu0 0.0
        %1503 = vmatpush1.msra.mxu0 0.0
        %1504 = vmatprep.subr.mxu0 0.0
        %1505 = vmatpush1.msra.mxu0 0.0
        %1506 = vmatprep.subr.mxu0 0.0
        %1507 = vmatpush1.msra.mxu0 0.0
        %1508 = vmatprep.subr.mxu0 0.0
        %1509 = vmatpush1.msra.mxu0 0.0
        %1510 = vmatprep.subr.mxu0 0.0
        %1511 = vmatpush1.msra.mxu0 0.0
        %1512 = vmatprep.subr.mxu0 0.0
        %1513 = vmatpush1.msra.mxu0 0.0
        %1514 = vmatprep.subr.mxu0 0.0
        %1515 = vmatpush1.msra.mxu0 0.0
        %1516 = vmatprep.subr.mxu0 0.0
        %1517 = vmatpush1.msra.mxu0 0.0
        %1518 = vmatprep.subr.mxu0 0.0
        %1519 = vmatpush1.msra.mxu0 0.0
        %1520 = vmatprep.subr.mxu0 0.0
        %1521 = vmatpush1.msra.mxu0 0.0
        %1522 = vmatprep.subr.mxu0 0.0
        %1523 = vmatpush1.msra.mxu0 0.0
        %1524 = vmatprep.mubr.f32.mxu0 0.0
        %1525 = vmatmul.mubr.f32.gmra.mrb[0].mxu0 %v1458
        %v1526 = vpop.f32.mrb[0].mxu0
        %v1527 = vadd.f32 0.0, %v1526
        %v1528 = vpop.f32.mrb[0].mxu0
        %1529 = vdwg.mxu0
        %v1530 = vlaneseq
        %v1531 = vshrl.u32 %v1530, 7
        %v1532 = vsub.s32 3, %v1531
        %v1533 = vrot.slane %v693, %v1532
        %v1534 = vmul.f32 %v1533, %v654
        %v1535 = vmul.f32 %v1533, %v655
        %v1536 = vmul.f32 %v1534, 1.442695
        %v1537 = vpow.pop %v1536
        %v1538 = vmul.f32 %v1535, 1.442695
        %v1539 = vpow.pop %v1538
        %v1540 = vrot.slane %v677, 3
        %1542 = vxpose.xlu0.b32.start [1/16] %v1540, 128
        %1543 = vxpose.xlu0.b32.cont [2/16] 0.0, 128
        %1544 = vxpose.xlu0.b32.cont [3/16] 0.0, 128
        %1545 = vxpose.xlu0.b32.cont [4/16] 0.0, 128
        %1546 = vxpose.xlu0.b32.cont [5/16] 0.0, 128
        %1547 = vxpose.xlu0.b32.cont [6/16] 0.0, 128
        %1548 = vxpose.xlu0.b32.cont [7/16] 0.0, 128
        %1549 = vxpose.xlu0.b32.cont [8/16] 0.0, 128
        %1550 = vxpose.xlu0.b32.cont [9/16] 0.0, 128
        %1551 = vxpose.xlu0.b32.cont [10/16] 0.0, 128
        %1552 = vxpose.xlu0.b32.cont [11/16] 0.0, 128
        %1553 = vxpose.xlu0.b32.cont [12/16] 0.0, 128
        %1554 = vxpose.xlu0.b32.cont [13/16] 0.0, 128
        %1555 = vxpose.xlu0.b32.cont [14/16] 0.0, 128
        %1556 = vxpose.xlu0.b32.cont [15/16] 0.0, 128
        %1557 = vxpose.xlu0.b32.end [16/16] 0.0, 128
        %v1558 = vpop.trf.xlu0
        %v1559 = vpop.trf.xlu0
        %v1560 = vpop.trf.xlu0
        %v1561 = vpop.trf.xlu0
        %v1562 = vpop.trf.xlu0
        %v1563 = vpop.trf.xlu0
        %v1564 = vpop.trf.xlu0
        %v1565 = vpop.trf.xlu0
        %v1566 = vpop.trf.xlu0
        %v1567 = vpop.trf.xlu0
        %v1568 = vpop.trf.xlu0
        %v1569 = vpop.trf.xlu0
        %v1570 = vpop.trf.xlu0
        %v1571 = vpop.trf.xlu0
        %v1572 = vpop.trf.xlu0
        %v1573 = vpop.trf.xlu0
        %v1574 = vrot.slane %v694, 3
        %v1576 = vsel %vm748, %v1558, 0
        %v1579 = vsel %vm748, %v1559, 0
        %v1581 = vsel %vm755, %v1574, 0
        %1583 = vmatprep.subr.mxu0 0.0
        %1584 = vmatpush1.msra.mxu0 %v1581
        %1585 = vmatprep.subr.mxu0 0.0
        %1586 = vmatpush1.msra.mxu0 0.0
        %1587 = vmatprep.subr.mxu0 0.0
        %1588 = vmatpush1.msra.mxu0 0.0
        %1589 = vmatprep.subr.mxu0 0.0
        %1590 = vmatpush1.msra.mxu0 0.0
        %1591 = vmatprep.subr.mxu0 0.0
        %1592 = vmatpush1.msra.mxu0 0.0
        %1593 = vmatprep.subr.mxu0 0.0
        %1594 = vmatpush1.msra.mxu0 0.0
        %1595 = vmatprep.subr.mxu0 0.0
        %1596 = vmatpush1.msra.mxu0 0.0
        %1597 = vmatprep.subr.mxu0 0.0
        %1598 = vmatpush1.msra.mxu0 0.0
        %1599 = vmatprep.subr.mxu0 0.0
        %1600 = vmatpush1.msra.mxu0 0.0
        %1601 = vmatprep.subr.mxu0 0.0
        %1602 = vmatpush1.msra.mxu0 0.0
        %1603 = vmatprep.subr.mxu0 0.0
        %1604 = vmatpush1.msra.mxu0 0.0
        %1605 = vmatprep.subr.mxu0 0.0
        %1606 = vmatpush1.msra.mxu0 0.0
        %1607 = vmatprep.subr.mxu0 0.0
        %1608 = vmatpush1.msra.mxu0 0.0
        %1609 = vmatprep.subr.mxu0 0.0
        %1610 = vmatpush1.msra.mxu0 0.0
        %1611 = vmatprep.subr.mxu0 0.0
        %1612 = vmatpush1.msra.mxu0 0.0
        %1613 = vmatprep.subr.mxu0 0.0
        %1614 = vmatpush1.msra.mxu0 0.0
        %1615 = vmatprep.subr.mxu0 0.0
        %1616 = vmatpush1.msra.mxu0 0.0
        %1617 = vmatprep.subr.mxu0 0.0
        %1618 = vmatpush1.msra.mxu0 0.0
        %1619 = vmatprep.subr.mxu0 0.0
        %1620 = vmatpush1.msra.mxu0 0.0
        %1621 = vmatprep.subr.mxu0 0.0
        %1622 = vmatpush1.msra.mxu0 0.0
        %1623 = vmatprep.subr.mxu0 0.0
        %1624 = vmatpush1.msra.mxu0 0.0
        %1625 = vmatprep.subr.mxu0 0.0
        %1626 = vmatpush1.msra.mxu0 0.0
        %1627 = vmatprep.subr.mxu0 0.0
        %1628 = vmatpush1.msra.mxu0 0.0
        %1629 = vmatprep.subr.mxu0 0.0
        %1630 = vmatpush1.msra.mxu0 0.0
        %1631 = vmatprep.subr.mxu0 0.0
        %1632 = vmatpush1.msra.mxu0 0.0
        %1633 = vmatprep.subr.mxu0 0.0
        %1634 = vmatpush1.msra.mxu0 0.0
        %1635 = vmatprep.subr.mxu0 0.0
        %1636 = vmatpush1.msra.mxu0 0.0
        %1637 = vmatprep.subr.mxu0 0.0
        %1638 = vmatpush1.msra.mxu0 0.0
        %1639 = vmatprep.subr.mxu0 0.0
        %1640 = vmatpush1.msra.mxu0 0.0
        %1641 = vmatprep.subr.mxu0 0.0
        %1642 = vmatpush1.msra.mxu0 0.0
        %1643 = vmatprep.subr.mxu0 0.0
        %1644 = vmatpush1.msra.mxu0 0.0
        %1645 = vmatprep.subr.mxu0 0.0
        %1646 = vmatpush1.msra.mxu0 0.0
        %1647 = vmatprep.mubr.f32.mxu0 0.0
        %1648 = vmatmul.mubr.f32.gmra.mrb[0].mxu0 %v1576
        %v1649 = vpop.f32.mrb[0].mxu0
        %v1650 = vadd.f32 0.0, %v1649
        %v1651 = vpop.f32.mrb[0].mxu0
        %1652 = vmatprep.mubr.f32.mxu0 0.0
        %1653 = vmatmul.mubr.f32.gmra.mrb[0].mxu0 %v1579
        %v1654 = vpop.f32.mrb[0].mxu0
        %v1655 = vadd.f32 0.0, %v1654
        %v1656 = vpop.f32.mrb[0].mxu0
        %1657 = vdwg.mxu0
        %v1658 = vmul.f32 %v1537, %v1454
        %v1659 = vmul.f32 %v1539, %v1455
        %v1660 = vadd.f32 %v1658, %v1650
        %v1661 = vadd.f32 %v1659, %v1655
        %1662 = vrot.lane.b32.xlu0 %v1540, 112
        %v1663 = vpop.permute.xlu0 %1662
        %v1664 = vsel %vm839, %v1663, 0
        %1666 = vmatprep.subr.mxu0 0.0
        %1667 = vmatpush1.msra.mxu0 %v1660
        %1668 = vmatprep.subr.mxu0 0.0
        %1669 = vmatpush1.msra.mxu0 %v1661
        %1670 = vmatprep.subr.mxu0 0.0
        %1671 = vmatpush1.msra.mxu0 0.0
        %1672 = vmatprep.subr.mxu0 0.0
        %1673 = vmatpush1.msra.mxu0 0.0
        %1674 = vmatprep.subr.mxu0 0.0
        %1675 = vmatpush1.msra.mxu0 0.0
        %1676 = vmatprep.subr.mxu0 0.0
        %1677 = vmatpush1.msra.mxu0 0.0
        %1678 = vmatprep.subr.mxu0 0.0
        %1679 = vmatpush1.msra.mxu0 0.0
        %1680 = vmatprep.subr.mxu0 0.0
        %1681 = vmatpush1.msra.mxu0 0.0
        %1682 = vmatprep.subr.mxu0 0.0
        %1683 = vmatpush1.msra.mxu0 0.0
        %1684 = vmatprep.subr.mxu0 0.0
        %1685 = vmatpush1.msra.mxu0 0.0
        %1686 = vmatprep.subr.mxu0 0.0
        %1687 = vmatpush1.msra.mxu0 0.0
        %1688 = vmatprep.subr.mxu0 0.0
        %1689 = vmatpush1.msra.mxu0 0.0
        %1690 = vmatprep.subr.mxu0 0.0
        %1691 = vmatpush1.msra.mxu0 0.0
        %1692 = vmatprep.subr.mxu0 0.0
        %1693 = vmatpush1.msra.mxu0 0.0
        %1694 = vmatprep.subr.mxu0 0.0
        %1695 = vmatpush1.msra.mxu0 0.0
        %1696 = vmatprep.subr.mxu0 0.0
        %1697 = vmatpush1.msra.mxu0 0.0
        %1698 = vmatprep.subr.mxu0 0.0
        %1699 = vmatpush1.msra.mxu0 0.0
        %1700 = vmatprep.subr.mxu0 0.0
        %1701 = vmatpush1.msra.mxu0 0.0
        %1702 = vmatprep.subr.mxu0 0.0
        %1703 = vmatpush1.msra.mxu0 0.0
        %1704 = vmatprep.subr.mxu0 0.0
        %1705 = vmatpush1.msra.mxu0 0.0
        %1706 = vmatprep.subr.mxu0 0.0
        %1707 = vmatpush1.msra.mxu0 0.0
        %1708 = vmatprep.subr.mxu0 0.0
        %1709 = vmatpush1.msra.mxu0 0.0
        %1710 = vmatprep.subr.mxu0 0.0
        %1711 = vmatpush1.msra.mxu0 0.0
        %1712 = vmatprep.subr.mxu0 0.0
        %1713 = vmatpush1.msra.mxu0 0.0
        %1714 = vmatprep.subr.mxu0 0.0
        %1715 = vmatpush1.msra.mxu0 0.0
        %1716 = vmatprep.subr.mxu0 0.0
        %1717 = vmatpush1.msra.mxu0 0.0
        %1718 = vmatprep.subr.mxu0 0.0
        %1719 = vmatpush1.msra.mxu0 0.0
        %1720 = vmatprep.subr.mxu0 0.0
        %1721 = vmatpush1.msra.mxu0 0.0
        %1722 = vmatprep.subr.mxu0 0.0
        %1723 = vmatpush1.msra.mxu0 0.0
        %1724 = vmatprep.subr.mxu0 0.0
        %1725 = vmatpush1.msra.mxu0 0.0
        %1726 = vmatprep.subr.mxu0 0.0
        %1727 = vmatpush1.msra.mxu0 0.0
        %1728 = vmatprep.subr.mxu0 0.0
        %1729 = vmatpush1.msra.mxu0 0.0
        %1730 = vmatprep.mubr.f32.mxu0 0.0
        %1731 = vmatmul.mubr.f32.gmra.mrb[0].mxu0 %v1664
        %v1732 = vpop.f32.mrb[0].mxu0
        %v1733 = vadd.f32 0.0, %v1732
        %v1734 = vpop.f32.mrb[0].mxu0
        %1735 = vdwg.mxu0
        %v1736 = vlaneseq
        %v1737 = vshrl.u32 %v1736, 7
        %v1738 = vsub.s32 2, %v1737
        %v1739 = vrot.slane %v693, %v1738
        %v1740 = vmul.f32 %v1739, %v654
        %v1741 = vmul.f32 %v1739, %v655
        %v1742 = vmul.f32 %v1740, 1.442695
        %v1743 = vpow.pop %v1742
        %v1744 = vmul.f32 %v1741, 1.442695
        %v1745 = vpow.pop %v1744
        %v1746 = vrot.slane %v677, 2
        %1748 = vxpose.xlu0.b32.start [1/16] %v1746, 128
        %1749 = vxpose.xlu0.b32.cont [2/16] 0.0, 128
        %1750 = vxpose.xlu0.b32.cont [3/16] 0.0, 128
        %1751 = vxpose.xlu0.b32.cont [4/16] 0.0, 128
        %1752 = vxpose.xlu0.b32.cont [5/16] 0.0, 128
        %1753 = vxpose.xlu0.b32.cont [6/16] 0.0, 128
        %1754 = vxpose.xlu0.b32.cont [7/16] 0.0, 128
        %1755 = vxpose.xlu0.b32.cont [8/16] 0.0, 128
        %1756 = vxpose.xlu0.b32.cont [9/16] 0.0, 128
        %1757 = vxpose.xlu0.b32.cont [10/16] 0.0, 128
        %1758 = vxpose.xlu0.b32.cont [11/16] 0.0, 128
        %1759 = vxpose.xlu0.b32.cont [12/16] 0.0, 128
        %1760 = vxpose.xlu0.b32.cont [13/16] 0.0, 128
        %1761 = vxpose.xlu0.b32.cont [14/16] 0.0, 128
        %1762 = vxpose.xlu0.b32.cont [15/16] 0.0, 128
        %1763 = vxpose.xlu0.b32.end [16/16] 0.0, 128
        %v1764 = vpop.trf.xlu0
        %v1765 = vpop.trf.xlu0
        %v1766 = vpop.trf.xlu0
        %v1767 = vpop.trf.xlu0
        %v1768 = vpop.trf.xlu0
        %v1769 = vpop.trf.xlu0
        %v1770 = vpop.trf.xlu0
        %v1771 = vpop.trf.xlu0
        %v1772 = vpop.trf.xlu0
        %v1773 = vpop.trf.xlu0
        %v1774 = vpop.trf.xlu0
        %v1775 = vpop.trf.xlu0
        %v1776 = vpop.trf.xlu0
        %v1777 = vpop.trf.xlu0
        %v1778 = vpop.trf.xlu0
        %v1779 = vpop.trf.xlu0
        %v1780 = vrot.slane %v694, 2
        %v1782 = vsel %vm748, %v1764, 0
        %v1785 = vsel %vm748, %v1765, 0
        %v1787 = vsel %vm755, %v1780, 0
        %1789 = vmatprep.subr.mxu0 0.0
        %1790 = vmatpush1.msra.mxu0 %v1787
        %1791 = vmatprep.subr.mxu0 0.0
        %1792 = vmatpush1.msra.mxu0 0.0
        %1793 = vmatprep.subr.mxu0 0.0
        %1794 = vmatpush1.msra.mxu0 0.0
        %1795 = vmatprep.subr.mxu0 0.0
        %1796 = vmatpush1.msra.mxu0 0.0
        %1797 = vmatprep.subr.mxu0 0.0
        %1798 = vmatpush1.msra.mxu0 0.0
        %1799 = vmatprep.subr.mxu0 0.0
        %1800 = vmatpush1.msra.mxu0 0.0
        %1801 = vmatprep.subr.mxu0 0.0
        %1802 = vmatpush1.msra.mxu0 0.0
        %1803 = vmatprep.subr.mxu0 0.0
        %1804 = vmatpush1.msra.mxu0 0.0
        %1805 = vmatprep.subr.mxu0 0.0
        %1806 = vmatpush1.msra.mxu0 0.0
        %1807 = vmatprep.subr.mxu0 0.0
        %1808 = vmatpush1.msra.mxu0 0.0
        %1809 = vmatprep.subr.mxu0 0.0
        %1810 = vmatpush1.msra.mxu0 0.0
        %1811 = vmatprep.subr.mxu0 0.0
        %1812 = vmatpush1.msra.mxu0 0.0
        %1813 = vmatprep.subr.mxu0 0.0
        %1814 = vmatpush1.msra.mxu0 0.0
        %1815 = vmatprep.subr.mxu0 0.0
        %1816 = vmatpush1.msra.mxu0 0.0
        %1817 = vmatprep.subr.mxu0 0.0
        %1818 = vmatpush1.msra.mxu0 0.0
        %1819 = vmatprep.subr.mxu0 0.0
        %1820 = vmatpush1.msra.mxu0 0.0
        %1821 = vmatprep.subr.mxu0 0.0
        %1822 = vmatpush1.msra.mxu0 0.0
        %1823 = vmatprep.subr.mxu0 0.0
        %1824 = vmatpush1.msra.mxu0 0.0
        %1825 = vmatprep.subr.mxu0 0.0
        %1826 = vmatpush1.msra.mxu0 0.0
        %1827 = vmatprep.subr.mxu0 0.0
        %1828 = vmatpush1.msra.mxu0 0.0
        %1829 = vmatprep.subr.mxu0 0.0
        %1830 = vmatpush1.msra.mxu0 0.0
        %1831 = vmatprep.subr.mxu0 0.0
        %1832 = vmatpush1.msra.mxu0 0.0
        %1833 = vmatprep.subr.mxu0 0.0
        %1834 = vmatpush1.msra.mxu0 0.0
        %1835 = vmatprep.subr.mxu0 0.0
        %1836 = vmatpush1.msra.mxu0 0.0
        %1837 = vmatprep.subr.mxu0 0.0
        %1838 = vmatpush1.msra.mxu0 0.0
        %1839 = vmatprep.subr.mxu0 0.0
        %1840 = vmatpush1.msra.mxu0 0.0
        %1841 = vmatprep.subr.mxu0 0.0
        %1842 = vmatpush1.msra.mxu0 0.0
        %1843 = vmatprep.subr.mxu0 0.0
        %1844 = vmatpush1.msra.mxu0 0.0
        %1845 = vmatprep.subr.mxu0 0.0
        %1846 = vmatpush1.msra.mxu0 0.0
        %1847 = vmatprep.subr.mxu0 0.0
        %1848 = vmatpush1.msra.mxu0 0.0
        %1849 = vmatprep.subr.mxu0 0.0
        %1850 = vmatpush1.msra.mxu0 0.0
        %1851 = vmatprep.subr.mxu0 0.0
        %1852 = vmatpush1.msra.mxu0 0.0
        %1853 = vmatprep.mubr.f32.mxu0 0.0
        %1854 = vmatmul.mubr.f32.gmra.mrb[0].mxu0 %v1782
        %v1855 = vpop.f32.mrb[0].mxu0
        %v1856 = vadd.f32 0.0, %v1855
        %v1857 = vpop.f32.mrb[0].mxu0
        %1858 = vmatprep.mubr.f32.mxu0 0.0
        %1859 = vmatmul.mubr.f32.gmra.mrb[0].mxu0 %v1785
        %v1860 = vpop.f32.mrb[0].mxu0
        %v1861 = vadd.f32 0.0, %v1860
        %v1862 = vpop.f32.mrb[0].mxu0
        %1863 = vdwg.mxu0
        %v1864 = vmul.f32 %v1743, %v1660
        %v1865 = vmul.f32 %v1745, %v1661
        %v1866 = vadd.f32 %v1864, %v1856
        %v1867 = vadd.f32 %v1865, %v1861
        %1868 = vrot.lane.b32.xlu0 %v1746, 112
        %v1869 = vpop.permute.xlu0 %1868
        %v1870 = vsel %vm839, %v1869, 0
        %1872 = vmatprep.subr.mxu0 0.0
        %1873 = vmatpush1.msra.mxu0 %v1866
        %1874 = vmatprep.subr.mxu0 0.0
        %1875 = vmatpush1.msra.mxu0 %v1867
        %1876 = vmatprep.subr.mxu0 0.0
        %1877 = vmatpush1.msra.mxu0 0.0
        %1878 = vmatprep.subr.mxu0 0.0
        %1879 = vmatpush1.msra.mxu0 0.0
        %1880 = vmatprep.subr.mxu0 0.0
        %1881 = vmatpush1.msra.mxu0 0.0
        %1882 = vmatprep.subr.mxu0 0.0
        %1883 = vmatpush1.msra.mxu0 0.0
        %1884 = vmatprep.subr.mxu0 0.0
        %1885 = vmatpush1.msra.mxu0 0.0
        %1886 = vmatprep.subr.mxu0 0.0
        %1887 = vmatpush1.msra.mxu0 0.0
        %1888 = vmatprep.subr.mxu0 0.0
        %1889 = vmatpush1.msra.mxu0 0.0
        %1890 = vmatprep.subr.mxu0 0.0
        %1891 = vmatpush1.msra.mxu0 0.0
        %1892 = vmatprep.subr.mxu0 0.0
        %1893 = vmatpush1.msra.mxu0 0.0
        %1894 = vmatprep.subr.mxu0 0.0
        %1895 = vmatpush1.msra.mxu0 0.0
        %1896 = vmatprep.subr.mxu0 0.0
        %1897 = vmatpush1.msra.mxu0 0.0
        %1898 = vmatprep.subr.mxu0 0.0
        %1899 = vmatpush1.msra.mxu0 0.0
        %1900 = vmatprep.subr.mxu0 0.0
        %1901 = vmatpush1.msra.mxu0 0.0
        %1902 = vmatprep.subr.mxu0 0.0
        %1903 = vmatpush1.msra.mxu0 0.0
        %1904 = vmatprep.subr.mxu0 0.0
        %1905 = vmatpush1.msra.mxu0 0.0
        %1906 = vmatprep.subr.mxu0 0.0
        %1907 = vmatpush1.msra.mxu0 0.0
        %1908 = vmatprep.subr.mxu0 0.0
        %1909 = vmatpush1.msra.mxu0 0.0
        %1910 = vmatprep.subr.mxu0 0.0
        %1911 = vmatpush1.msra.mxu0 0.0
        %1912 = vmatprep.subr.mxu0 0.0
        %1913 = vmatpush1.msra.mxu0 0.0
        %1914 = vmatprep.subr.mxu0 0.0
        %1915 = vmatpush1.msra.mxu0 0.0
        %1916 = vmatprep.subr.mxu0 0.0
        %1917 = vmatpush1.msra.mxu0 0.0
        %1918 = vmatprep.subr.mxu0 0.0
        %1919 = vmatpush1.msra.mxu0 0.0
        %1920 = vmatprep.subr.mxu0 0.0
        %1921 = vmatpush1.msra.mxu0 0.0
        %1922 = vmatprep.subr.mxu0 0.0
        %1923 = vmatpush1.msra.mxu0 0.0
        %1924 = vmatprep.subr.mxu0 0.0
        %1925 = vmatpush1.msra.mxu0 0.0
        %1926 = vmatprep.subr.mxu0 0.0
        %1927 = vmatpush1.msra.mxu0 0.0
        %1928 = vmatprep.subr.mxu0 0.0
        %1929 = vmatpush1.msra.mxu0 0.0
        %1930 = vmatprep.subr.mxu0 0.0
        %1931 = vmatpush1.msra.mxu0 0.0
        %1932 = vmatprep.subr.mxu0 0.0
        %1933 = vmatpush1.msra.mxu0 0.0
        %1934 = vmatprep.subr.mxu0 0.0
        %1935 = vmatpush1.msra.mxu0 0.0
        %1936 = vmatprep.mubr.f32.mxu0 0.0
        %1937 = vmatmul.mubr.f32.gmra.mrb[0].mxu0 %v1870
        %v1938 = vpop.f32.mrb[0].mxu0
        %v1939 = vadd.f32 0.0, %v1938
        %v1940 = vpop.f32.mrb[0].mxu0
        %1941 = vdwg.mxu0
        %v1942 = vlaneseq
        %v1943 = vshrl.u32 %v1942, 7
        %v1944 = vsub.s32 1, %v1943
        %v1945 = vrot.slane %v693, %v1944
        %v1946 = vmul.f32 %v1945, %v654
        %v1947 = vmul.f32 %v1945, %v655
        %v1948 = vmul.f32 %v1946, 1.442695
        %v1949 = vpow.pop %v1948
        %v1950 = vmul.f32 %v1947, 1.442695
        %v1951 = vpow.pop %v1950
        %v1952 = vrot.slane %v677, 1
        %1954 = vxpose.xlu0.b32.start [1/16] %v1952, 128
        %1955 = vxpose.xlu0.b32.cont [2/16] 0.0, 128
        %1956 = vxpose.xlu0.b32.cont [3/16] 0.0, 128
        %1957 = vxpose.xlu0.b32.cont [4/16] 0.0, 128
        %1958 = vxpose.xlu0.b32.cont [5/16] 0.0, 128
        %1959 = vxpose.xlu0.b32.cont [6/16] 0.0, 128
        %1960 = vxpose.xlu0.b32.cont [7/16] 0.0, 128
        %1961 = vxpose.xlu0.b32.cont [8/16] 0.0, 128
        %1962 = vxpose.xlu0.b32.cont [9/16] 0.0, 128
        %1963 = vxpose.xlu0.b32.cont [10/16] 0.0, 128
        %1964 = vxpose.xlu0.b32.cont [11/16] 0.0, 128
        %1965 = vxpose.xlu0.b32.cont [12/16] 0.0, 128
        %1966 = vxpose.xlu0.b32.cont [13/16] 0.0, 128
        %1967 = vxpose.xlu0.b32.cont [14/16] 0.0, 128
        %1968 = vxpose.xlu0.b32.cont [15/16] 0.0, 128
        %1969 = vxpose.xlu0.b32.end [16/16] 0.0, 128
        %v1970 = vpop.trf.xlu0
        %v1971 = vpop.trf.xlu0
        %v1972 = vpop.trf.xlu0
        %v1973 = vpop.trf.xlu0
        %v1974 = vpop.trf.xlu0
        %v1975 = vpop.trf.xlu0
        %v1976 = vpop.trf.xlu0
        %v1977 = vpop.trf.xlu0
        %v1978 = vpop.trf.xlu0
        %v1979 = vpop.trf.xlu0
        %v1980 = vpop.trf.xlu0
        %v1981 = vpop.trf.xlu0
        %v1982 = vpop.trf.xlu0
        %v1983 = vpop.trf.xlu0
        %v1984 = vpop.trf.xlu0
        %v1985 = vpop.trf.xlu0
        %v1986 = vrot.slane %v694, 1
        %v1988 = vsel %vm748, %v1970, 0
        %v1991 = vsel %vm748, %v1971, 0
        %v1993 = vsel %vm755, %v1986, 0
        %1995 = vmatprep.subr.mxu0 0.0
        %1996 = vmatpush1.msra.mxu0 %v1993
        %1997 = vmatprep.subr.mxu0 0.0
        %1998 = vmatpush1.msra.mxu0 0.0
        %1999 = vmatprep.subr.mxu0 0.0
        %2000 = vmatpush1.msra.mxu0 0.0
        %2001 = vmatprep.subr.mxu0 0.0
        %2002 = vmatpush1.msra.mxu0 0.0
        %2003 = vmatprep.subr.mxu0 0.0
        %2004 = vmatpush1.msra.mxu0 0.0
        %2005 = vmatprep.subr.mxu0 0.0
        %2006 = vmatpush1.msra.mxu0 0.0
        %2007 = vmatprep.subr.mxu0 0.0
        %2008 = vmatpush1.msra.mxu0 0.0
        %2009 = vmatprep.subr.mxu0 0.0
        %2010 = vmatpush1.msra.mxu0 0.0
        %2011 = vmatprep.subr.mxu0 0.0
        %2012 = vmatpush1.msra.mxu0 0.0
        %2013 = vmatprep.subr.mxu0 0.0
        %2014 = vmatpush1.msra.mxu0 0.0
        %2015 = vmatprep.subr.mxu0 0.0
        %2016 = vmatpush1.msra.mxu0 0.0
        %2017 = vmatprep.subr.mxu0 0.0
        %2018 = vmatpush1.msra.mxu0 0.0
        %2019 = vmatprep.subr.mxu0 0.0
        %2020 = vmatpush1.msra.mxu0 0.0
        %2021 = vmatprep.subr.mxu0 0.0
        %2022 = vmatpush1.msra.mxu0 0.0
        %2023 = vmatprep.subr.mxu0 0.0
        %2024 = vmatpush1.msra.mxu0 0.0
        %2025 = vmatprep.subr.mxu0 0.0
        %2026 = vmatpush1.msra.mxu0 0.0
        %2027 = vmatprep.subr.mxu0 0.0
        %2028 = vmatpush1.msra.mxu0 0.0
        %2029 = vmatprep.subr.mxu0 0.0
        %2030 = vmatpush1.msra.mxu0 0.0
        %2031 = vmatprep.subr.mxu0 0.0
        %2032 = vmatpush1.msra.mxu0 0.0
        %2033 = vmatprep.subr.mxu0 0.0
        %2034 = vmatpush1.msra.mxu0 0.0
        %2035 = vmatprep.subr.mxu0 0.0
        %2036 = vmatpush1.msra.mxu0 0.0
        %2037 = vmatprep.subr.mxu0 0.0
        %2038 = vmatpush1.msra.mxu0 0.0
        %2039 = vmatprep.subr.mxu0 0.0
        %2040 = vmatpush1.msra.mxu0 0.0
        %2041 = vmatprep.subr.mxu0 0.0
        %2042 = vmatpush1.msra.mxu0 0.0
        %2043 = vmatprep.subr.mxu0 0.0
        %2044 = vmatpush1.msra.mxu0 0.0
        %2045 = vmatprep.subr.mxu0 0.0
        %2046 = vmatpush1.msra.mxu0 0.0
        %2047 = vmatprep.subr.mxu0 0.0
        %2048 = vmatpush1.msra.mxu0 0.0
        %2049 = vmatprep.subr.mxu0 0.0
        %2050 = vmatpush1.msra.mxu0 0.0
        %2051 = vmatprep.subr.mxu0 0.0
        %2052 = vmatpush1.msra.mxu0 0.0
        %2053 = vmatprep.subr.mxu0 0.0
        %2054 = vmatpush1.msra.mxu0 0.0
        %2055 = vmatprep.subr.mxu0 0.0
        %2056 = vmatpush1.msra.mxu0 0.0
        %2057 = vmatprep.subr.mxu0 0.0
        %2058 = vmatpush1.msra.mxu0 0.0
        %2059 = vmatprep.mubr.f32.mxu0 0.0
        %2060 = vmatmul.mubr.f32.gmra.mrb[0].mxu0 %v1988
        %v2061 = vpop.f32.mrb[0].mxu0
        %v2062 = vadd.f32 0.0, %v2061
        %v2063 = vpop.f32.mrb[0].mxu0
        %2064 = vmatprep.mubr.f32.mxu0 0.0
        %2065 = vmatmul.mubr.f32.gmra.mrb[0].mxu0 %v1991
        %v2066 = vpop.f32.mrb[0].mxu0
        %v2067 = vadd.f32 0.0, %v2066
        %v2068 = vpop.f32.mrb[0].mxu0
        %2069 = vdwg.mxu0
        %v2070 = vmul.f32 %v1949, %v1866
        %v2071 = vmul.f32 %v1951, %v1867
        %v2072 = vadd.f32 %v2070, %v2062
        %v2073 = vadd.f32 %v2071, %v2067
        %2074 = vrot.lane.b32.xlu0 %v1952, 112
        %v2075 = vpop.permute.xlu0 %2074
        %v2076 = vsel %vm839, %v2075, 0
        %2078 = vmatprep.subr.mxu0 0.0
        %2079 = vmatpush1.msra.mxu0 %v2072
        %2080 = vmatprep.subr.mxu0 0.0
        %2081 = vmatpush1.msra.mxu0 %v2073
        %2082 = vmatprep.subr.mxu0 0.0
        %2083 = vmatpush1.msra.mxu0 0.0
        %2084 = vmatprep.subr.mxu0 0.0
        %2085 = vmatpush1.msra.mxu0 0.0
        %2086 = vmatprep.subr.mxu0 0.0
        %2087 = vmatpush1.msra.mxu0 0.0
        %2088 = vmatprep.subr.mxu0 0.0
        %2089 = vmatpush1.msra.mxu0 0.0
        %2090 = vmatprep.subr.mxu0 0.0
        %2091 = vmatpush1.msra.mxu0 0.0
        %2092 = vmatprep.subr.mxu0 0.0
        %2093 = vmatpush1.msra.mxu0 0.0
        %2094 = vmatprep.subr.mxu0 0.0
        %2095 = vmatpush1.msra.mxu0 0.0
        %2096 = vmatprep.subr.mxu0 0.0
        %2097 = vmatpush1.msra.mxu0 0.0
        %2098 = vmatprep.subr.mxu0 0.0
        %2099 = vmatpush1.msra.mxu0 0.0
        %2100 = vmatprep.subr.mxu0 0.0
        %2101 = vmatpush1.msra.mxu0 0.0
        %2102 = vmatprep.subr.mxu0 0.0
        %2103 = vmatpush1.msra.mxu0 0.0
        %2104 = vmatprep.subr.mxu0 0.0
        %2105 = vmatpush1.msra.mxu0 0.0
        %2106 = vmatprep.subr.mxu0 0.0
        %2107 = vmatpush1.msra.mxu0 0.0
        %2108 = vmatprep.subr.mxu0 0.0
        %2109 = vmatpush1.msra.mxu0 0.0
        %2110 = vmatprep.subr.mxu0 0.0
        %2111 = vmatpush1.msra.mxu0 0.0
        %2112 = vmatprep.subr.mxu0 0.0
        %2113 = vmatpush1.msra.mxu0 0.0
        %2114 = vmatprep.subr.mxu0 0.0
        %2115 = vmatpush1.msra.mxu0 0.0
        %2116 = vmatprep.subr.mxu0 0.0
        %2117 = vmatpush1.msra.mxu0 0.0
        %2118 = vmatprep.subr.mxu0 0.0
        %2119 = vmatpush1.msra.mxu0 0.0
        %2120 = vmatprep.subr.mxu0 0.0
        %2121 = vmatpush1.msra.mxu0 0.0
        %2122 = vmatprep.subr.mxu0 0.0
        %2123 = vmatpush1.msra.mxu0 0.0
        %2124 = vmatprep.subr.mxu0 0.0
        %2125 = vmatpush1.msra.mxu0 0.0
        %2126 = vmatprep.subr.mxu0 0.0
        %2127 = vmatpush1.msra.mxu0 0.0
        %2128 = vmatprep.subr.mxu0 0.0
        %2129 = vmatpush1.msra.mxu0 0.0
        %2130 = vmatprep.subr.mxu0 0.0
        %2131 = vmatpush1.msra.mxu0 0.0
        %2132 = vmatprep.subr.mxu0 0.0
        %2133 = vmatpush1.msra.mxu0 0.0
        %2134 = vmatprep.subr.mxu0 0.0
        %2135 = vmatpush1.msra.mxu0 0.0
        %2136 = vmatprep.subr.mxu0 0.0
        %2137 = vmatpush1.msra.mxu0 0.0
        %2138 = vmatprep.subr.mxu0 0.0
        %2139 = vmatpush1.msra.mxu0 0.0
        %2140 = vmatprep.subr.mxu0 0.0
        %2141 = vmatpush1.msra.mxu0 0.0
        %2142 = vmatprep.mubr.f32.mxu0 0.0
        %2143 = vmatmul.mubr.f32.gmra.mrb[0].mxu0 %v2076
        %v2144 = vpop.f32.mrb[0].mxu0
        %v2145 = vadd.f32 0.0, %v2144
        %v2146 = vpop.f32.mrb[0].mxu0
        %2147 = vdwg.mxu0
        %v2148 = vlaneseq
        %v2149 = vshrl.u32 %v2148, 7
        %v2150 = vsub.s32 0, %v2149
        %v2151 = vrot.slane %v693, %v2150
        %v2152 = vmul.f32 %v2151, %v654
        %v2153 = vmul.f32 %v2151, %v655
        %v2154 = vmul.f32 %v2152, 1.442695
        %v2155 = vpow.pop %v2154
        %v2156 = vmul.f32 %v2153, 1.442695
        %v2157 = vpow.pop %v2156
        %2158 = vxpose.xlu0.b32.start [1/16] %v677, 128
        %2159 = vxpose.xlu0.b32.cont [2/16] 0.0, 128
        %2160 = vxpose.xlu0.b32.cont [3/16] 0.0, 128
        %2161 = vxpose.xlu0.b32.cont [4/16] 0.0, 128
        %2162 = vxpose.xlu0.b32.cont [5/16] 0.0, 128
        %2163 = vxpose.xlu0.b32.cont [6/16] 0.0, 128
        %2164 = vxpose.xlu0.b32.cont [7/16] 0.0, 128
        %2165 = vxpose.xlu0.b32.cont [8/16] 0.0, 128
        %2166 = vxpose.xlu0.b32.cont [9/16] 0.0, 128
        %2167 = vxpose.xlu0.b32.cont [10/16] 0.0, 128
        %2168 = vxpose.xlu0.b32.cont [11/16] 0.0, 128
        %2169 = vxpose.xlu0.b32.cont [12/16] 0.0, 128
        %2170 = vxpose.xlu0.b32.cont [13/16] 0.0, 128
        %2171 = vxpose.xlu0.b32.cont [14/16] 0.0, 128
        %2172 = vxpose.xlu0.b32.cont [15/16] 0.0, 128
        %2173 = vxpose.xlu0.b32.end [16/16] 0.0, 128
        %v2174 = vpop.trf.xlu0
        %v2175 = vpop.trf.xlu0
        %v2176 = vpop.trf.xlu0
        %v2177 = vpop.trf.xlu0
        %v2178 = vpop.trf.xlu0
        %v2179 = vpop.trf.xlu0
        %v2180 = vpop.trf.xlu0
        %v2181 = vpop.trf.xlu0
        %v2182 = vpop.trf.xlu0
        %v2183 = vpop.trf.xlu0
        %v2184 = vpop.trf.xlu0
        %v2185 = vpop.trf.xlu0
        %v2186 = vpop.trf.xlu0
        %v2187 = vpop.trf.xlu0
        %v2188 = vpop.trf.xlu0
        %v2189 = vpop.trf.xlu0
        %v2191 = vsel %vm748, %v2174, 0
        %v2194 = vsel %vm748, %v2175, 0
        %v2196 = vsel %vm755, %v694, 0
        %2198 = vmatprep.subr.mxu0 0.0
        %2199 = vmatpush1.msra.mxu0 %v2196
        %2200 = vmatprep.subr.mxu0 0.0
        %2201 = vmatpush1.msra.mxu0 0.0
        %2202 = vmatprep.subr.mxu0 0.0
        %2203 = vmatpush1.msra.mxu0 0.0
        %2204 = vmatprep.subr.mxu0 0.0
        %2205 = vmatpush1.msra.mxu0 0.0
        %2206 = vmatprep.subr.mxu0 0.0
        %2207 = vmatpush1.msra.mxu0 0.0
        %2208 = vmatprep.subr.mxu0 0.0
        %2209 = vmatpush1.msra.mxu0 0.0
        %2210 = vmatprep.subr.mxu0 0.0
        %2211 = vmatpush1.msra.mxu0 0.0
        %2212 = vmatprep.subr.mxu0 0.0
        %2213 = vmatpush1.msra.mxu0 0.0
        %2214 = vmatprep.subr.mxu0 0.0
        %2215 = vmatpush1.msra.mxu0 0.0
        %2216 = vmatprep.subr.mxu0 0.0
        %2217 = vmatpush1.msra.mxu0 0.0
        %2218 = vmatprep.subr.mxu0 0.0
        %2219 = vmatpush1.msra.mxu0 0.0
        %2220 = vmatprep.subr.mxu0 0.0
        %2221 = vmatpush1.msra.mxu0 0.0
        %2222 = vmatprep.subr.mxu0 0.0
        %2223 = vmatpush1.msra.mxu0 0.0
        %2224 = vmatprep.subr.mxu0 0.0
        %2225 = vmatpush1.msra.mxu0 0.0
        %2226 = vmatprep.subr.mxu0 0.0
        %2227 = vmatpush1.msra.mxu0 0.0
        %2228 = vmatprep.subr.mxu0 0.0
        %2229 = vmatpush1.msra.mxu0 0.0
        %2230 = vmatprep.subr.mxu0 0.0
        %2231 = vmatpush1.msra.mxu0 0.0
        %2232 = vmatprep.subr.mxu0 0.0
        %2233 = vmatpush1.msra.mxu0 0.0
        %2234 = vmatprep.subr.mxu0 0.0
        %2235 = vmatpush1.msra.mxu0 0.0
        %2236 = vmatprep.subr.mxu0 0.0
        %2237 = vmatpush1.msra.mxu0 0.0
        %2238 = vmatprep.subr.mxu0 0.0
        %2239 = vmatpush1.msra.mxu0 0.0
        %2240 = vmatprep.subr.mxu0 0.0
        %2241 = vmatpush1.msra.mxu0 0.0
        %2242 = vmatprep.subr.mxu0 0.0
        %2243 = vmatpush1.msra.mxu0 0.0
        %2244 = vmatprep.subr.mxu0 0.0
        %2245 = vmatpush1.msra.mxu0 0.0
        %2246 = vmatprep.subr.mxu0 0.0
        %2247 = vmatpush1.msra.mxu0 0.0
        %2248 = vmatprep.subr.mxu0 0.0
        %2249 = vmatpush1.msra.mxu0 0.0
        %2250 = vmatprep.subr.mxu0 0.0
        %2251 = vmatpush1.msra.mxu0 0.0
        %2252 = vmatprep.subr.mxu0 0.0
        %2253 = vmatpush1.msra.mxu0 0.0
        %2254 = vmatprep.subr.mxu0 0.0
        %2255 = vmatpush1.msra.mxu0 0.0
        %2256 = vmatprep.subr.mxu0 0.0
        %2257 = vmatpush1.msra.mxu0 0.0
        %2258 = vmatprep.subr.mxu0 0.0
        %2259 = vmatpush1.msra.mxu0 0.0
        %2260 = vmatprep.subr.mxu0 0.0
        %2261 = vmatpush1.msra.mxu0 0.0
        %2262 = vmatprep.mubr.f32.mxu0 0.0
        %2263 = vmatmul.mubr.f32.gmra.mrb[0].mxu0 %v2191
        %v2264 = vpop.f32.mrb[0].mxu0
        %v2265 = vadd.f32 0.0, %v2264
        %v2266 = vpop.f32.mrb[0].mxu0
        %2267 = vmatprep.mubr.f32.mxu0 0.0
        %2268 = vmatmul.mubr.f32.gmra.mrb[0].mxu0 %v2194
        %v2269 = vpop.f32.mrb[0].mxu0
        %v2270 = vadd.f32 0.0, %v2269
        %v2271 = vpop.f32.mrb[0].mxu0
        %2272 = vdwg.mxu0
        %v2273 = vmul.f32 %v2155, %v2072
        %v2274 = vmul.f32 %v2157, %v2073
        %v2275 = vadd.f32 %v2273, %v2265
        %v2276 = vadd.f32 %v2274, %v2270
        %2277 = vrot.lane.b32.xlu0 %v677, 112
        %v2278 = vpop.permute.xlu0 %2277
        %v2279 = vsel %vm839, %v2278, 0
        %2281 = vmatprep.subr.mxu0 0.0
        %2282 = vmatpush1.msra.mxu0 %v2275
        %2283 = vmatprep.subr.mxu0 0.0
        %2284 = vmatpush1.msra.mxu0 %v2276
        %2285 = vmatprep.subr.mxu0 0.0
        %2286 = vmatpush1.msra.mxu0 0.0
        %2287 = vmatprep.subr.mxu0 0.0
        %2288 = vmatpush1.msra.mxu0 0.0
        %2289 = vmatprep.subr.mxu0 0.0
        %2290 = vmatpush1.msra.mxu0 0.0
        %2291 = vmatprep.subr.mxu0 0.0
        %2292 = vmatpush1.msra.mxu0 0.0
        %2293 = vmatprep.subr.mxu0 0.0
        %2294 = vmatpush1.msra.mxu0 0.0
        %2295 = vmatprep.subr.mxu0 0.0
        %2296 = vmatpush1.msra.mxu0 0.0
        %2297 = vmatprep.subr.mxu0 0.0
        %2298 = vmatpush1.msra.mxu0 0.0
        %2299 = vmatprep.subr.mxu0 0.0
        %2300 = vmatpush1.msra.mxu0 0.0
        %2301 = vmatprep.subr.mxu0 0.0
        %2302 = vmatpush1.msra.mxu0 0.0
        %2303 = vmatprep.subr.mxu0 0.0
        %2304 = vmatpush1.msra.mxu0 0.0
        %2305 = vmatprep.subr.mxu0 0.0
        %2306 = vmatpush1.msra.mxu0 0.0
        %2307 = vmatprep.subr.mxu0 0.0
        %2308 = vmatpush1.msra.mxu0 0.0
        %2309 = vmatprep.subr.mxu0 0.0
        %2310 = vmatpush1.msra.mxu0 0.0
        %2311 = vmatprep.subr.mxu0 0.0
        %2312 = vmatpush1.msra.mxu0 0.0
        %2313 = vmatprep.subr.mxu0 0.0
        %2314 = vmatpush1.msra.mxu0 0.0
        %2315 = vmatprep.subr.mxu0 0.0
        %2316 = vmatpush1.msra.mxu0 0.0
        %2317 = vmatprep.subr.mxu0 0.0
        %2318 = vmatpush1.msra.mxu0 0.0
        %2319 = vmatprep.subr.mxu0 0.0
        %2320 = vmatpush1.msra.mxu0 0.0
        %2321 = vmatprep.subr.mxu0 0.0
        %2322 = vmatpush1.msra.mxu0 0.0
        %2323 = vmatprep.subr.mxu0 0.0
        %2324 = vmatpush1.msra.mxu0 0.0
        %2325 = vmatprep.subr.mxu0 0.0
        %2326 = vmatpush1.msra.mxu0 0.0
        %2327 = vmatprep.subr.mxu0 0.0
        %2328 = vmatpush1.msra.mxu0 0.0
        %2329 = vmatprep.subr.mxu0 0.0
        %2330 = vmatpush1.msra.mxu0 0.0
        %2331 = vmatprep.subr.mxu0 0.0
        %2332 = vmatpush1.msra.mxu0 0.0
        %2333 = vmatprep.subr.mxu0 0.0
        %2334 = vmatpush1.msra.mxu0 0.0
        %2335 = vmatprep.subr.mxu0 0.0
        %2336 = vmatpush1.msra.mxu0 0.0
        %2337 = vmatprep.subr.mxu0 0.0
        %2338 = vmatpush1.msra.mxu0 0.0
        %2339 = vmatprep.subr.mxu0 0.0
        %2340 = vmatpush1.msra.mxu0 0.0
        %2341 = vmatprep.subr.mxu0 0.0
        %2342 = vmatpush1.msra.mxu0 0.0
        %2343 = vmatprep.subr.mxu0 0.0
        %2344 = vmatpush1.msra.mxu0 0.0
        %2345 = vmatprep.mubr.f32.mxu0 0.0
        %2346 = vmatmul.mubr.f32.gmra.mrb[0].mxu0 %v2279
        %v2347 = vpop.f32.mrb[0].mxu0
        %v2348 = vadd.f32 0.0, %v2347
        %v2349 = vpop.f32.mrb[0].mxu0
        %2350 = vdwg.mxu0
        %v2352 = vrot.slane %v2145, 7
        %v2355 = vrot.slane %v1939, 6
        %v2358 = vrot.slane %v1733, 5
        %v2361 = vrot.slane %v1527, 4
        %v2364 = vrot.slane %v1321, 3
        %v2367 = vrot.slane %v1115, 2
        %v2370 = vrot.slane %v909, 1
        %v2372 = vsel %vm755, %v2348, %v2352
        %vm2373 = vcmask 1041408
        %v2374 = vsel %vm2373, %v2372, %v2355
        %vm2375 = vcmask 1042432
        %v2376 = vsel %vm2375, %v2374, %v2358
        %vm2377 = vcmask 1043456
        %v2378 = vsel %vm2377, %v2376, %v2361
        %vm2379 = vcmask 1044480
        %v2380 = vsel %vm2379, %v2378, %v2364
        %vm2381 = vcmask 1045504
        %v2382 = vsel %vm2381, %v2380, %v2367
        %vm2383 = vcmask 1046528
        %v2384 = vsel %vm2383, %v2382, %v2370
        %v2386 = vlaneseq
        %v2387 = vshrl.u32 %v2386, 7
        %v2388 = vsub.s32 0, %v2387
        %v2389 = vrot.slane %v657, %v2388
        %v2391 = vmul.f32 %v2389, %v671
        %v2392 = vadd.f32 %v2384, %v2391
        %v2393 = vmul.f32 %v2392, %v700
        %s2394 = scalar_lea.vmem %s644, %s669
        %vm2395 = vcmask 523264
        %2396 = vst.msk [vmem:[%s2394] sm:$0xff] %vm2395, %v2393
      $region57: #{cossm_forward.20} parent=47 // loop_footer
        %s665 = sadd.s32 1, %s661
      $region58: #{cossm_forward.20} parent=47 // loop_footer_branch
        %660 = sbr.rel target = $region54
      $region59: #{cossm_forward.20} parent=47 // loop_exit
        _
      %vm2397 = vcmask 523264
      %2398 = vst.msk [vmem:[#allocation2] sm:$0xff] %vm2397, %v666
      %2399 = vst.msk [vmem:[#allocation2 + $0x8] sm:$0xff] %vm2397, %v667
      %s2400 = ssub.s32 0, %s27
      %s2401 = smul.u32 2, %s2400
      %p2402 = scmp.lt.s32.totalorder %s24, 1
      %s2403 = scalar_select %p2402, %s24, 1
      %p2404 = scmp.lt.s32.totalorder %s25, 1
      %s2405 = scalar_select %p2404, %s25, 1
      %p2406 = scmp.lt.s32.totalorder %s2401, 1
      %s2407 = scalar_select %p2406, %s2401, 1
      %p2408 = scmp.lt.s32.totalorder %s26, 0
      %s2409 = scalar_select %p2408, %s26, 0
      %s2410 = sadd.s32 %s2409, %s2407
      %s2411 = smul.addr %s2405, 2
      %s2412 = sadd.s32 %s2410, %s2411
      %s2413 = smul.addr %s2403, 4
      %s2414 = sadd.s32 %s2412, %s2413
      %s2415 = smul.addr %s2414, 8
      %s2416 = scalar_lea.vmem %s7, %s2415
      // Predicated region
      $region60: #{cossm_forward.20} parent=47 // pred_check
        %p2417 = pneg %p286
      $region61: #{cossm_forward.20} parent=47 // pred_check_branch
        %2419 = sbr.rel (%p2417) target = $region63
      $region62: #{cossm_forward.20} parent=47 // pred_region
        %s2420 = ssub.s32 0, %s27
        %s2421 = smul.u32 2, %s2420
      $region63: #{cossm_forward.20} parent=47 // pred_fallthru
        _
    $region48: #{cossm_forward.20} parent=5 // pred_fallthru
      _
    %p2422 = scmp.le.s32.totalorder 2, %s13
    // Predicated region
    $region64: #{cossm_forward.20} parent=5 // pred_check
      %p2423 = pneg %p2422
    $region65: #{cossm_forward.20} parent=5 // pred_check_branch
      %2425 = sbr.rel (%p2423) target = $region67
    $region66: #{cossm_forward.20} parent=5 // pred_region
      %s2426 = ssub.s32 %s13, 2
      // Predicated region
      $region68: #{cossm_forward.20} parent=66 // pred_check
        %p2427 = pneg %p292
      $region69: #{cossm_forward.20} parent=66 // pred_check_branch
        %2429 = sbr.rel (%p2427) target = $region71
      $region70: #{cossm_forward.20} parent=66 // pred_region
        %s2430 = ssub.s32 0, %s31
        %s2431 = smul.u32 2, %s2430
        %p2432 = scmp.lt.s32.totalorder %s28, 1
        %s2433 = scalar_select %p2432, %s28, 1
        %p2434 = scmp.lt.s32.totalorder %s29, 1
        %s2435 = scalar_select %p2434, %s29, 1
        %p2436 = scmp.lt.s32.totalorder %s2431, 1
        %s2437 = scalar_select %p2436, %s2431, 1
        %p2438 = scmp.lt.s32.totalorder %s30, 0
        %s2439 = scalar_select %p2438, %s30, 0
        %s2440 = sadd.s32 %s2439, %s2437
        %s2441 = smul.addr %s2435, 2
        %s2442 = sadd.s32 %s2440, %s2441
        %s2443 = smul.addr %s2433, 4
        %s2444 = sadd.s32 %s2442, %s2443
        %s2445 = smul.addr %s2444, 8
        %s2446 = scalar_lea.vmem %s7, %s2445
      $region71: #{cossm_forward.20} parent=66 // pred_fallthru
        _
    $region67: #{cossm_forward.20} parent=5 // pred_fallthru
      _
  $region6: #{cossm_forward.20} parent=0 // loop_footer
    %s17 = sadd.s32 1, %s13
  $region7: #{cossm_forward.20} parent=0 // loop_footer_branch
    %12 = sbr.rel target = $region3
  $region8: #{cossm_forward.20} parent=0 // loop_exit
    _

// kernel: cossm_forward.19
$region0: #{cossm_forward.19}
  #allocation0 [shape = 'u32[]', space=smem, size = 0x4, offset = 0x4, fixed_abs, tag = 'smem constant byte address 0x4 - core index']
  #allocation1 [shape = 'u32[144,128]{1,0:T(1,128)}', space=vmem, size = 0x12000, scoped, tag = 'internal scratch']
  #allocation2 [shape = 'f32[16,64]{1,0:T(8,128)}', space=vmem, size = 0x2000, scoped, tag = 'scratch operand']
  %s0 = inlined_call_operand.vmem [shape: f32[2,2,16,64], index: 0, kind: input, shape index: {}]
  %s1 = inlined_call_operand.vmem [shape: f32[2,2,16,64], index: 1, kind: input, shape index: {}]
  %s2 = inlined_call_operand.vmem [shape: f32[2,2,16,32], index: 2, kind: input, shape index: {}]
  %s3 = inlined_call_operand.vmem [shape: f32[2,2,16,64], index: 3, kind: input, shape index: {}]
  %s4 = inlined_call_operand.vmem [shape: f32[1,16,64], index: 4, kind: input, shape index: {}]
  %s5 = inlined_call_operand.vmem [shape: f32[2,1,64], index: 5, kind: input, shape index: {}]
  %s6 = inlined_call_operand.vmem [shape: f32[2,1,64], index: 6, kind: input, shape index: {}]
  %s7 = inlined_call_operand.vmem [shape: f32[2,2,16,64], index: 7, kind: output, shape index: {}]
  %s8 = sld [smem:[#allocation0]]
  $region72: #{cossm_forward.19} parent=0
    _
  %s10 = ssub.s32 1, %s8
  %s11 = scalar_select 0, %s10, %s8
  loop: start=0, step=1, limit=6
  $region2: #{cossm_forward.19} parent=0 // loop_pre_header
    _
  $region3: #{cossm_forward.19} parent=0 // loop_header
    %s13 = sphi 0, %s17
    %p14 = scmp.ge.s32.totalorder %s13, 6
    %s20 = sphi 0, %s46
    %s21 = sphi 0, %s42
    %s22 = sphi 0, %s38
    %s23 = sphi 0, %s34
    %s24 = sphi 0, %s20
    %s25 = sphi 0, %s21
    %s26 = sphi 0, %s22
    %s27 = sphi 0, %s23
    %s28 = sphi 0, %s24
    %s29 = sphi 0, %s25
    %s30 = sphi 0, %s26
    %s31 = sphi 0, %s27
    %s55 = sphi 0, %s57
    %s58 = sphi 0, %s55
    %s59 = sphi 0, %s58
    %s75 = sphi 0, %s59
    %s87 = sphi 0, %s89
    %s90 = sphi 0, %s87
    %s91 = sphi 0, %s90
    %s107 = sphi 0, %s91
    %s117 = sphi 0, %s119
    %s120 = sphi 0, %s117
    %s121 = sphi 0, %s120
    %s137 = sphi 0, %s121
    %s149 = sphi 0, %s151
    %s152 = sphi 0, %s149
    %s153 = sphi 0, %s152
    %s169 = sphi 0, %s153
    %s175 = sphi 0, %s177
    %s178 = sphi 0, %s175
    %s179 = sphi 0, %s178
    %s195 = sphi 0, %s179
    %s203 = sphi 0, %s205
    %s206 = sphi 0, %s203
    %s207 = sphi 0, %s206
    %s223 = sphi 0, %s207
    %s231 = sphi 0, %s233
    %s234 = sphi 0, %s231
    %s235 = sphi 0, %s234
    %s251 = sphi 0, %s235
    %s263 = sphi 0, %s265
    %s266 = sphi 0, %s263
    %s267 = sphi 0, %s266
    %s283 = sphi 0, %s267
  $region4: #{cossm_forward.19} parent=0 // loop_header_branch
    %16 = sbr.rel (%p14) target = $region8
  $region5: #{cossm_forward.19} parent=0 // loop_body
    %s18 = ssub.s32 %s13, 1
    %s19 = ssub.s32 %s13, 2
    %s32 = sadd.s32 1, %s23
    %p33 = scmp.ge.s32.totalorder %s32, 1
    %s34 = scalar_select %p33, 0, %s32
    %s35 = sadd.s32 1, %s22
    %s36 = scalar_select %p33, %s35, %s22
    %p37 = scmp.ge.s32.totalorder %s36, 1
    %s38 = scalar_select %p37, 0, %s36
    %s39 = sadd.s32 1, %s21
    %s40 = scalar_select %p37, %s39, %s21
    %p41 = scmp.ge.s32.totalorder %s40, 2
    %s42 = scalar_select %p41, 0, %s40
    %s43 = sadd.s32 1, %s20
    %s44 = scalar_select %p41, %s43, %s20
    %p45 = scmp.ge.s32.totalorder %s44, 2
    %s46 = scalar_select %p45, 0, %s44
    %s47 = ssub.s32 %s20, %s46
    %s48 = ssub.s32 %s21, %s42
    %s49 = sor.u32 %s47, %s48
    %s50 = ssub.s32 %s23, %s34
    %s51 = sor.u32 %s49, %s50
    %s52 = ssub.s32 %s22, %s38
    %s53 = sor.u32 %s51, %s52
    %p54 = scmp.eq.s32.totalorder %s53, 0
    %s56 = sadd.s32 %s55, 1
    %s57 = scalar_select %p54, %s55, %s56
    %p60 = pneg %p54
    %p61 = scmp.eq.s32.totalorder %s13, 3
    %p62 = por %p60, %p61
    %p63 = scmp.ne.s32.totalorder %s55, %s58
    %p64 = scmp.eq.s32.totalorder %s13, 0
    %p65 = por %p63, %p64
    %p66 = scmp.ne.s32.totalorder %s55, %s58
    %p67 = scmp.eq.s32.totalorder %s18, 3
    %p68 = por %p66, %p67
    %p69 = scmp.ne.s32.totalorder %s58, %s59
    %p70 = scmp.eq.s32.totalorder %s18, 0
    %p71 = por %p69, %p70
    %p72 = scmp.ne.s32.totalorder %s58, %s59
    %p73 = scmp.eq.s32.totalorder %s19, 3
    %p74 = por %p72, %p73
    %p76 = scmp.ne.s32.totalorder %s59, %s75
    %p77 = scmp.eq.s32.totalorder %s19, 0
    %p78 = por %p76, %p77
    %s79 = ssub.s32 %s20, %s46
    %s80 = ssub.s32 %s21, %s42
    %s81 = sor.u32 %s79, %s80
    %s82 = ssub.s32 %s23, %s34
    %s83 = sor.u32 %s81, %s82
    %s84 = ssub.s32 %s22, %s38
    %s85 = sor.u32 %s83, %s84
    %p86 = scmp.eq.s32.totalorder %s85, 0
    %s88 = sadd.s32 %s87, 1
    %s89 = scalar_select %p86, %s87, %s88
    %p92 = pneg %p86
    %p93 = scmp.eq.s32.totalorder %s13, 3
    %p94 = por %p92, %p93
    %p95 = scmp.ne.s32.totalorder %s87, %s90
    %p96 = scmp.eq.s32.totalorder %s13, 0
    %p97 = por %p95, %p96
    %p98 = scmp.ne.s32.totalorder %s87, %s90
    %p99 = scmp.eq.s32.totalorder %s18, 3
    %p100 = por %p98, %p99
    %p101 = scmp.ne.s32.totalorder %s90, %s91
    %p102 = scmp.eq.s32.totalorder %s18, 0
    %p103 = por %p101, %p102
    %p104 = scmp.ne.s32.totalorder %s90, %s91
    %p105 = scmp.eq.s32.totalorder %s19, 3
    %p106 = por %p104, %p105
    %p108 = scmp.ne.s32.totalorder %s91, %s107
    %p109 = scmp.eq.s32.totalorder %s19, 0
    %p110 = por %p108, %p109
    %s111 = ssub.s32 %s20, %s46
    %s112 = ssub.s32 %s21, %s42
    %s113 = sor.u32 %s111, %s112
    %s114 = ssub.s32 %s23, %s34
    %s115 = sor.u32 %s113, %s114
    %p116 = scmp.eq.s32.totalorder %s115, 0
    %s118 = sadd.s32 %s117, 1
    %s119 = scalar_select %p116, %s117, %s118
    %p122 = pneg %p116
    %p123 = scmp.eq.s32.totalorder %s13, 3
    %p124 = por %p122, %p123
    %p125 = scmp.ne.s32.totalorder %s117, %s120
    %p126 = scmp.eq.s32.totalorder %s13, 0
    %p127 = por %p125, %p126
    %p128 = scmp.ne.s32.totalorder %s117, %s120
    %p129 = scmp.eq.s32.totalorder %s18, 3
    %p130 = por %p128, %p129
    %p131 = scmp.ne.s32.totalorder %s120, %s121
    %p132 = scmp.eq.s32.totalorder %s18, 0
    %p133 = por %p131, %p132
    %p134 = scmp.ne.s32.totalorder %s120, %s121
    %p135 = scmp.eq.s32.totalorder %s19, 3
    %p136 = por %p134, %p135
    %p138 = scmp.ne.s32.totalorder %s121, %s137
    %p139 = scmp.eq.s32.totalorder %s19, 0
    %p140 = por %p138, %p139
    %s141 = ssub.s32 %s20, %s46
    %s142 = ssub.s32 %s21, %s42
    %s143 = sor.u32 %s141, %s142
    %s144 = ssub.s32 %s23, %s34
    %s145 = sor.u32 %s143, %s144
    %s146 = ssub.s32 %s22, %s38
    %s147 = sor.u32 %s145, %s146
    %p148 = scmp.eq.s32.totalorder %s147, 0
    %s150 = sadd.s32 %s149, 1
    %s151 = scalar_select %p148, %s149, %s150
    %p154 = pneg %p148
    %p155 = scmp.eq.s32.totalorder %s13, 3
    %p156 = por %p154, %p155
    %p157 = scmp.ne.s32.totalorder %s149, %s152
    %p158 = scmp.eq.s32.totalorder %s13, 0
    %p159 = por %p157, %p158
    %p160 = scmp.ne.s32.totalorder %s149, %s152
    %p161 = scmp.eq.s32.totalorder %s18, 3
    %p162 = por %p160, %p161
    %p163 = scmp.ne.s32.totalorder %s152, %s153
    %p164 = scmp.eq.s32.totalorder %s18, 0
    %p165 = por %p163, %p164
    %p166 = scmp.ne.s32.totalorder %s152, %s153
    %p167 = scmp.eq.s32.totalorder %s19, 3
    %p168 = por %p166, %p167
    %p170 = scmp.ne.s32.totalorder %s153, %s169
    %p171 = scmp.eq.s32.totalorder %s19, 0
    %p172 = por %p170, %p171
    %s173 = ssub.s32 %s22, %s38
    %p174 = scmp.eq.s32.totalorder %s173, 0
    %s176 = sadd.s32 %s175, 1
    %s177 = scalar_select %p174, %s175, %s176
    %p180 = pneg %p174
    %p181 = scmp.eq.s32.totalorder %s13, 3
    %p182 = por %p180, %p181
    %p183 = scmp.ne.s32.totalorder %s175, %s178
    %p184 = scmp.eq.s32.totalorder %s13, 0
    %p185 = por %p183, %p184
    %p186 = scmp.ne.s32.totalorder %s175, %s178
    %p187 = scmp.eq.s32.totalorder %s18, 3
    %p188 = por %p186, %p187
    %p189 = scmp.ne.s32.totalorder %s178, %s179
    %p190 = scmp.eq.s32.totalorder %s18, 0
    %p191 = por %p189, %p190
    %p192 = scmp.ne.s32.totalorder %s178, %s179
    %p193 = scmp.eq.s32.totalorder %s19, 3
    %p194 = por %p192, %p193
    %p196 = scmp.ne.s32.totalorder %s179, %s195
    %p197 = scmp.eq.s32.totalorder %s19, 0
    %p198 = por %p196, %p197
    %s199 = ssub.s32 %s20, %s46
    %s200 = ssub.s32 %s22, %s38
    %s201 = sor.u32 %s199, %s200
    %p202 = scmp.eq.s32.totalorder %s201, 0
    %s204 = sadd.s32 %s203, 1
    %s205 = scalar_select %p202, %s203, %s204
    %p208 = pneg %p202
    %p209 = scmp.eq.s32.totalorder %s13, 3
    %p210 = por %p208, %p209
    %p211 = scmp.ne.s32.totalorder %s203, %s206
    %p212 = scmp.eq.s32.totalorder %s13, 0
    %p213 = por %p211, %p212
    %p214 = scmp.ne.s32.totalorder %s203, %s206
    %p215 = scmp.eq.s32.totalorder %s18, 3
    %p216 = por %p214, %p215
    %p217 = scmp.ne.s32.totalorder %s206, %s207
    %p218 = scmp.eq.s32.totalorder %s18, 0
    %p219 = por %p217, %p218
    %p220 = scmp.ne.s32.totalorder %s206, %s207
    %p221 = scmp.eq.s32.totalorder %s19, 3
    %p222 = por %p220, %p221
    %p224 = scmp.ne.s32.totalorder %s207, %s223
    %p225 = scmp.eq.s32.totalorder %s19, 0
    %p226 = por %p224, %p225
    %s227 = ssub.s32 %s20, %s46
    %s228 = ssub.s32 %s22, %s38
    %s229 = sor.u32 %s227, %s228
    %p230 = scmp.eq.s32.totalorder %s229, 0
    %s232 = sadd.s32 %s231, 1
    %s233 = scalar_select %p230, %s231, %s232
    %p236 = pneg %p230
    %p237 = scmp.eq.s32.totalorder %s13, 3
    %p238 = por %p236, %p237
    %p239 = scmp.ne.s32.totalorder %s231, %s234
    %p240 = scmp.eq.s32.totalorder %s13, 0
    %p241 = por %p239, %p240
    %p242 = scmp.ne.s32.totalorder %s231, %s234
    %p243 = scmp.eq.s32.totalorder %s18, 3
    %p244 = por %p242, %p243
    %p245 = scmp.ne.s32.totalorder %s234, %s235
    %p246 = scmp.eq.s32.totalorder %s18, 0
    %p247 = por %p245, %p246
    %p248 = scmp.ne.s32.totalorder %s234, %s235
    %p249 = scmp.eq.s32.totalorder %s19, 3
    %p250 = por %p248, %p249
    %p252 = scmp.ne.s32.totalorder %s235, %s251
    %p253 = scmp.eq.s32.totalorder %s19, 0
    %p254 = por %p252, %p253
    %s255 = ssub.s32 %s20, %s46
    %s256 = ssub.s32 %s21, %s42
    %s257 = sor.u32 %s255, %s256
    %s258 = ssub.s32 %s23, %s34
    %s259 = sor.u32 %s257, %s258
    %s260 = ssub.s32 %s22, %s38
    %s261 = sor.u32 %s259, %s260
    %p262 = scmp.eq.s32.totalorder %s261, 0
    %s264 = sadd.s32 %s263, 1
    %s265 = scalar_select %p262, %s263, %s264
    %p268 = pneg %p262
    %p269 = scmp.eq.s32.totalorder %s13, 3
    %p270 = por %p268, %p269
    %p271 = scmp.ne.s32.totalorder %s263, %s266
    %p272 = scmp.eq.s32.totalorder %s13, 0
    %p273 = por %p271, %p272
    %p274 = scmp.ne.s32.totalorder %s263, %s266
    %p275 = scmp.eq.s32.totalorder %s18, 3
    %p276 = por %p274, %p275
    %p277 = scmp.ne.s32.totalorder %s266, %s267
    %p278 = scmp.eq.s32.totalorder %s18, 0
    %p279 = por %p277, %p278
    %p280 = scmp.ne.s32.totalorder %s266, %s267
    %p281 = scmp.eq.s32.totalorder %s19, 3
    %p282 = por %p280, %p281
    %p284 = scmp.ne.s32.totalorder %s267, %s283
    %p285 = scmp.eq.s32.totalorder %s19, 0
    %p286 = por %p284, %p285
    %p287 = scmp.le.s32.totalorder 1, %s13
    %p288 = scmp.lt.s32.totalorder %s13, 5
    %p289 = pnand %p287, %p288
    %p290 = pneg %p289
    // Predicated region
    $region9: #{cossm_forward.19} parent=5 // pred_check
      _
    $region10: #{cossm_forward.19} parent=5 // pred_check_branch
      %292 = sbr.rel (%p289) target = $region12
    $region11: #{cossm_forward.19} parent=5 // pred_region
      %s293 = ssub.s32 %s13, 1
      // Predicated region
      $region13: #{cossm_forward.19} parent=11 // pred_check
        %p294 = pneg %p191
      $region14: #{cossm_forward.19} parent=11 // pred_check_branch
        %296 = sbr.rel (%p294) target = $region16
      $region15: #{cossm_forward.19} parent=11 // pred_region
        %p297 = scmp.lt.s32.totalorder %s26, 0
        %s298 = scalar_select %p297, %s26, 0
        %s299 = smul.addr %s298, 8
        %s300 = scalar_lea.vmem %s4, %s299
      $region16: #{cossm_forward.19} parent=11 // pred_fallthru
        _
    $region12: #{cossm_forward.19} parent=5 // pred_fallthru
      _
    %p301 = scmp.lt.s32.totalorder %s13, 4
    // Predicated region
    $region17: #{cossm_forward.19} parent=5 // pred_check
      %p302 = pneg %p301
    $region18: #{cossm_forward.19} parent=5 // pred_check_branch
      %304 = sbr.rel (%p302) target = $region20
    $region19: #{cossm_forward.19} parent=5 // pred_region
      // Predicated region
      $region21: #{cossm_forward.19} parent=19 // pred_check
        %p305 = pneg %p65
      $region22: #{cossm_forward.19} parent=19 // pred_check_branch
        %307 = sbr.rel (%p305) target = $region24
      $region23: #{cossm_forward.19} parent=19 // pred_region
        %s308 = smul.u32 2, %s23
        %p309 = scmp.lt.s32.totalorder %s20, 1
        %s310 = scalar_select %p309, %s20, 1
        %p311 = scmp.lt.s32.totalorder %s21, 1
        %s312 = scalar_select %p311, %s21, 1
        %p313 = scmp.lt.s32.totalorder %s308, 1
        %s314 = scalar_select %p313, %s308, 1
        %p315 = scmp.lt.s32.totalorder %s22, 0
        %s316 = scalar_select %p315, %s22, 0
        %s317 = sadd.s32 %s316, %s314
        %s318 = smul.addr %s312, 2
        %s319 = sadd.s32 %s317, %s318
        %s320 = smul.addr %s310, 4
        %s321 = sadd.s32 %s319, %s320
        %s322 = smul.addr %s321, 8
        %s323 = scalar_lea.vmem %s0, %s322
        %s324 = smul.u32 2, %s23
      $region24: #{cossm_forward.19} parent=19 // pred_fallthru
        _
      // Predicated region
      $region25: #{cossm_forward.19} parent=19 // pred_check
        %p325 = pneg %p97
      $region26: #{cossm_forward.19} parent=19 // pred_check_branch
        %327 = sbr.rel (%p325) target = $region28
      $region27: #{cossm_forward.19} parent=19 // pred_region
        %s328 = smul.u32 2, %s23
        %p329 = scmp.lt.s32.totalorder %s20, 1
        %s330 = scalar_select %p329, %s20, 1
        %p331 = scmp.lt.s32.totalorder %s21, 1
        %s332 = scalar_select %p331, %s21, 1
        %p333 = scmp.lt.s32.totalorder %s328, 1
        %s334 = scalar_select %p333, %s328, 1
        %p335 = scmp.lt.s32.totalorder %s22, 0
        %s336 = scalar_select %p335, %s22, 0
        %s337 = sadd.s32 %s336, %s334
        %s338 = smul.addr %s332, 2
        %s339 = sadd.s32 %s337, %s338
        %s340 = smul.addr %s330, 4
        %s341 = sadd.s32 %s339, %s340
        %s342 = smul.addr %s341, 8
        %s343 = scalar_lea.vmem %s1, %s342
        %s344 = smul.u32 2, %s23
      $region28: #{cossm_forward.19} parent=19 // pred_fallthru
        _
      // Predicated region
      $region29: #{cossm_forward.19} parent=19 // pred_check
        %p345 = pneg %p127
      $region30: #{cossm_forward.19} parent=19 // pred_check_branch
        %347 = sbr.rel (%p345) target = $region32
      $region31: #{cossm_forward.19} parent=19 // pred_region
        %s348 = smul.u32 2, %s23
        %p349 = scmp.lt.s32.totalorder %s20, 1
        %s350 = scalar_select %p349, %s20, 1
        %p351 = scmp.lt.s32.totalorder %s21, 1
        %s352 = scalar_select %p351, %s21, 1
        %p353 = scmp.lt.s32.totalorder %s348, 1
        %s354 = scalar_select %p353, %s348, 1
        %s355 = smul.addr %s352, 2
        %s356 = sadd.s32 %s354, %s355
        %s357 = smul.addr %s350, 4
        %s358 = sadd.s32 %s356, %s357
        %s359 = smul.addr %s358, 8
        %s360 = scalar_lea.vmem %s2, %s359
        %s361 = smul.u32 2, %s23
      $region32: #{cossm_forward.19} parent=19 // pred_fallthru
        _
      // Predicated region
      $region33: #{cossm_forward.19} parent=19 // pred_check
        %p362 = pneg %p159
      $region34: #{cossm_forward.19} parent=19 // pred_check_branch
        %364 = sbr.rel (%p362) target = $region36
      $region35: #{cossm_forward.19} parent=19 // pred_region
        %s365 = smul.u32 2, %s23
        %p366 = scmp.lt.s32.totalorder %s20, 1
        %s367 = scalar_select %p366, %s20, 1
        %p368 = scmp.lt.s32.totalorder %s21, 1
        %s369 = scalar_select %p368, %s21, 1
        %p370 = scmp.lt.s32.totalorder %s365, 1
        %s371 = scalar_select %p370, %s365, 1
        %p372 = scmp.lt.s32.totalorder %s22, 0
        %s373 = scalar_select %p372, %s22, 0
        %s374 = sadd.s32 %s373, %s371
        %s375 = smul.addr %s369, 2
        %s376 = sadd.s32 %s374, %s375
        %s377 = smul.addr %s367, 4
        %s378 = sadd.s32 %s376, %s377
        %s379 = smul.addr %s378, 8
        %s380 = scalar_lea.vmem %s3, %s379
        %s381 = smul.u32 2, %s23
      $region36: #{cossm_forward.19} parent=19 // pred_fallthru
        _
      // Predicated region
      $region37: #{cossm_forward.19} parent=19 // pred_check
        %p382 = pneg %p213
      $region38: #{cossm_forward.19} parent=19 // pred_check_branch
        %384 = sbr.rel (%p382) target = $region40
      $region39: #{cossm_forward.19} parent=19 // pred_region
        %p385 = scmp.lt.s32.totalorder %s20, 1
        %s386 = scalar_select %p385, %s20, 1
        %p387 = scmp.lt.s32.totalorder %s22, 0
        %s388 = scalar_select %p387, %s22, 0
        %s389 = sadd.s32 %s388, %s386
        %s390 = scalar_lea.vmem %s5, %s389
      $region40: #{cossm_forward.19} parent=19 // pred_fallthru
        _
      // Predicated region
      $region41: #{cossm_forward.19} parent=19 // pred_check
        %p391 = pneg %p241
      $region42: #{cossm_forward.19} parent=19 // pred_check_branch
        %393 = sbr.rel (%p391) target = $region44
      $region43: #{cossm_forward.19} parent=19 // pred_region
        %p394 = scmp.lt.s32.totalorder %s20, 1
        %s395 = scalar_select %p394, %s20, 1
        %p396 = scmp.lt.s32.totalorder %s22, 0
        %s397 = scalar_select %p396, %s22, 0
        %s398 = sadd.s32 %s397, %s395
        %s399 = scalar_lea.vmem %s6, %s398
      $region44: #{cossm_forward.19} parent=19 // pred_fallthru
        _
    $region20: #{cossm_forward.19} parent=5 // pred_fallthru
      _
    %p400 = scmp.le.s32.totalorder 1, %s13
    %p401 = scmp.lt.s32.totalorder %s13, 5
    %p402 = pnand %p400, %p401
    %p403 = pneg %p402
    // Predicated region
    $region45: #{cossm_forward.19} parent=5 // pred_check
      _
    $region46: #{cossm_forward.19} parent=5 // pred_check_branch
      %405 = sbr.rel (%p402) target = $region48
    $region47: #{cossm_forward.19} parent=5 // pred_region
      %s406 = ssub.s32 %s13, 1
      %s407 = smul.u32 2, %s27
      %p408 = scmp.lt.s32.totalorder %s24, 1
      %s409 = scalar_select %p408, %s24, 1
      %p410 = scmp.lt.s32.totalorder %s25, 1
      %s411 = scalar_select %p410, %s25, 1
      %p412 = scmp.lt.s32.totalorder %s407, 1
      %s413 = scalar_select %p412, %s407, 1
      %p414 = scmp.lt.s32.totalorder %s26, 0
      %s415 = scalar_select %p414, %s26, 0
      %s416 = sadd.s32 %s415, %s413
      %s417 = smul.addr %s411, 2
      %s418 = sadd.s32 %s416, %s417
      %s419 = smul.addr %s409, 4
      %s420 = sadd.s32 %s418, %s419
      %s421 = smul.addr %s420, 8
      %s422 = scalar_lea.vmem %s0, %s421
      %p423 = pneg %p71
      %p424 = pneg %p68
      %s425 = smul.u32 2, %s27
      %p426 = scmp.lt.s32.totalorder %s24, 1
      %s427 = scalar_select %p426, %s24, 1
      %p428 = scmp.lt.s32.totalorder %s25, 1
      %s429 = scalar_select %p428, %s25, 1
      %p430 = scmp.lt.s32.totalorder %s425, 1
      %s431 = scalar_select %p430, %s425, 1
      %p432 = scmp.lt.s32.totalorder %s26, 0
      %s433 = scalar_select %p432, %s26, 0
      %s434 = sadd.s32 %s433, %s431
      %s435 = smul.addr %s429, 2
      %s436 = sadd.s32 %s434, %s435
      %s437 = smul.addr %s427, 4
      %s438 = sadd.s32 %s436, %s437
      %s439 = smul.addr %s438, 8
      %s440 = scalar_lea.vmem %s1, %s439
      %p441 = pneg %p103
      %p442 = pneg %p100
      %s443 = smul.u32 2, %s27
      %p444 = scmp.lt.s32.totalorder %s24, 1
      %s445 = scalar_select %p444, %s24, 1
      %p446 = scmp.lt.s32.totalorder %s25, 1
      %s447 = scalar_select %p446, %s25, 1
      %p448 = scmp.lt.s32.totalorder %s443, 1
      %s449 = scalar_select %p448, %s443, 1
      %s450 = smul.addr %s447, 2
      %s451 = sadd.s32 %s449, %s450
      %s452 = smul.addr %s445, 4
      %s453 = sadd.s32 %s451, %s452
      %s454 = smul.addr %s453, 8
      %s455 = scalar_lea.vmem %s2, %s454
      %p456 = pneg %p133
      %p457 = pneg %p130
      %s458 = smul.u32 2, %s27
      %p459 = scmp.lt.s32.totalorder %s24, 1
      %s460 = scalar_select %p459, %s24, 1
      %p461 = scmp.lt.s32.totalorder %s25, 1
      %s462 = scalar_select %p461, %s25, 1
      %p463 = scmp.lt.s32.totalorder %s458, 1
      %s464 = scalar_select %p463, %s458, 1
      %p465 = scmp.lt.s32.totalorder %s26, 0
      %s466 = scalar_select %p465, %s26, 0
      %s467 = sadd.s32 %s466, %s464
      %s468 = smul.addr %s462, 2
      %s469 = sadd.s32 %s467, %s468
      %s470 = smul.addr %s460, 4
      %s471 = sadd.s32 %s469, %s470
      %s472 = smul.addr %s471, 8
      %s473 = scalar_lea.vmem %s3, %s472
      %p474 = pneg %p165
      %p475 = pneg %p162
      %p476 = scmp.lt.s32.totalorder %s26, 0
      %s477 = scalar_select %p476, %s26, 0
      %s478 = smul.addr %s477, 8
      %s479 = scalar_lea.vmem %s4, %s478
      %p480 = pneg %p191
      %p481 = pneg %p188
      %p482 = scmp.lt.s32.totalorder %s24, 1
      %s483 = scalar_select %p482, %s24, 1
      %p484 = scmp.lt.s32.totalorder %s26, 0
      %s485 = scalar_select %p484, %s26, 0
      %s486 = sadd.s32 %s485, %s483
      %s487 = scalar_lea.vmem %s5, %s486
      %p488 = pneg %p219
      %p489 = pneg %p216
      %p490 = scmp.lt.s32.totalorder %s24, 1
      %s491 = scalar_select %p490, %s24, 1
      %p492 = scmp.lt.s32.totalorder %s26, 0
      %s493 = scalar_select %p492, %s26, 0
      %s494 = sadd.s32 %s493, %s491
      %s495 = scalar_lea.vmem %s6, %s494
      %p496 = pneg %p247
      %p497 = pneg %p244
      %p498 = pneg %p279
      %p499 = pneg %p276
      %s500 = smul.u32 2, %s27
      %p501 = scmp.lt.s32.totalorder %s24, 1
      %s502 = scalar_select %p501, %s24, 1
      %p503 = scmp.lt.s32.totalorder %s25, 1
      %s504 = scalar_select %p503, %s25, 1
      %p505 = scmp.lt.s32.totalorder %s500, 1
      %s506 = scalar_select %p505, %s500, 1
      %p507 = scmp.lt.s32.totalorder %s26, 0
      %s508 = scalar_select %p507, %s26, 0
      %s509 = sadd.s32 %s508, %s506
      %s510 = smul.addr %s504, 2
      %s511 = sadd.s32 %s509, %s510
      %s512 = smul.addr %s502, 4
      %s513 = sadd.s32 %s511, %s512
      %s514 = smul.addr %s513, 8
      %s515 = scalar_lea.vmem %s7, %s514
      %s516 = smul.u32 2, %s27
      %p517 = scmp.lt.s32.totalorder %s24, 1
      %s518 = scalar_select %p517, %s24, 1
      %p519 = scmp.lt.s32.totalorder %s25, 1
      %s520 = scalar_select %p519, %s25, 1
      %p521 = scmp.lt.s32.totalorder %s516, 1
      %s522 = scalar_select %p521, %s516, 1
      %p523 = scmp.lt.s32.totalorder %s26, 0
      %s524 = scalar_select %p523, %s26, 0
      %s525 = sadd.s32 %s524, %s522
      %s526 = smul.addr %s520, 2
      %s527 = sadd.s32 %s525, %s526
      %s528 = smul.addr %s518, 4
      %s529 = sadd.s32 %s527, %s528
      %s530 = smul.addr %s529, 8
      %s531 = scalar_lea.vmem %s0, %s530
      %s532 = smul.u32 2, %s27
      %s533 = smul.u32 2, %s27
      %p534 = scmp.lt.s32.totalorder %s24, 1
      %s535 = scalar_select %p534, %s24, 1
      %p536 = scmp.lt.s32.totalorder %s25, 1
      %s537 = scalar_select %p536, %s25, 1
      %p538 = scmp.lt.s32.totalorder %s533, 1
      %s539 = scalar_select %p538, %s533, 1
      %p540 = scmp.lt.s32.totalorder %s26, 0
      %s541 = scalar_select %p540, %s26, 0
      %s542 = sadd.s32 %s541, %s539
      %s543 = smul.addr %s537, 2
      %s544 = sadd.s32 %s542, %s543
      %s545 = smul.addr %s535, 4
      %s546 = sadd.s32 %s544, %s545
      %s547 = smul.addr %s546, 8
      %s548 = scalar_lea.vmem %s1, %s547
      %s549 = smul.u32 2, %s27
      %s550 = smul.u32 2, %s27
      %p551 = scmp.lt.s32.totalorder %s24, 1
      %s552 = scalar_select %p551, %s24, 1
      %p553 = scmp.lt.s32.totalorder %s25, 1
      %s554 = scalar_select %p553, %s25, 1
      %p555 = scmp.lt.s32.totalorder %s550, 1
      %s556 = scalar_select %p555, %s550, 1
      %s557 = smul.addr %s554, 2
      %s558 = sadd.s32 %s556, %s557
      %s559 = smul.addr %s552, 4
      %s560 = sadd.s32 %s558, %s559
      %s561 = smul.addr %s560, 8
      %s562 = scalar_lea.vmem %s2, %s561
      %s563 = smul.u32 2, %s27
      %s564 = smul.u32 2, %s27
      %p565 = scmp.lt.s32.totalorder %s24, 1
      %s566 = scalar_select %p565, %s24, 1
      %p567 = scmp.lt.s32.totalorder %s25, 1
      %s568 = scalar_select %p567, %s25, 1
      %p569 = scmp.lt.s32.totalorder %s564, 1
      %s570 = scalar_select %p569, %s564, 1
      %p571 = scmp.lt.s32.totalorder %s26, 0
      %s572 = scalar_select %p571, %s26, 0
      %s573 = sadd.s32 %s572, %s570
      %s574 = smul.addr %s568, 2
      %s575 = sadd.s32 %s573, %s574
      %s576 = smul.addr %s566, 4
      %s577 = sadd.s32 %s575, %s576
      %s578 = smul.addr %s577, 8
      %s579 = scalar_lea.vmem %s3, %s578
      %s580 = smul.u32 2, %s27
      %p581 = scmp.lt.s32.totalorder %s26, 0
      %s582 = scalar_select %p581, %s26, 0
      %s583 = smul.addr %s582, 8
      %s584 = scalar_lea.vmem %s4, %s583
      %p585 = scmp.lt.s32.totalorder %s24, 1
      %s586 = scalar_select %p585, %s24, 1
      %p587 = scmp.lt.s32.totalorder %s26, 0
      %s588 = scalar_select %p587, %s26, 0
      %s589 = sadd.s32 %s588, %s586
      %s590 = scalar_lea.vmem %s5, %s589
      %p591 = scmp.lt.s32.totalorder %s24, 1
      %s592 = scalar_select %p591, %s24, 1
      %p593 = scmp.lt.s32.totalorder %s26, 0
      %s594 = scalar_select %p593, %s26, 0
      %s595 = sadd.s32 %s594, %s592
      %s596 = scalar_lea.vmem %s6, %s595
      %s597 = smul.u32 2, %s27
      %p598 = scmp.lt.s32.totalorder %s24, 1
      %s599 = scalar_select %p598, %s24, 1
      %p600 = scmp.lt.s32.totalorder %s25, 1
      %s601 = scalar_select %p600, %s25, 1
      %p602 = scmp.lt.s32.totalorder %s597, 1
      %s603 = scalar_select %p602, %s597, 1
      %p604 = scmp.lt.s32.totalorder %s26, 0
      %s605 = scalar_select %p604, %s26, 0
      %s606 = sadd.s32 %s605, %s603
      %s607 = smul.addr %s601, 2
      %s608 = sadd.s32 %s606, %s607
      %s609 = smul.addr %s599, 4
      %s610 = sadd.s32 %s608, %s609
      %s611 = smul.addr %s610, 8
      %s612 = scalar_lea.vmem %s7, %s611
      %s613 = smul.u32 2, %s27
      %p614 = scmp.eq.s32.totalorder %s27, 0
      // Predicated region
      $region49: #{cossm_forward.19} parent=47 // pred_check
        %p615 = pneg %p614
      $region50: #{cossm_forward.19} parent=47 // pred_check_branch
        %617 = sbr.rel (%p615) target = $region52
      $region51: #{cossm_forward.19} parent=47 // pred_region
        %vm618 = vcmask 523264
        %619 = vst.msk [vmem:[#allocation2] sm:$0xff] %vm618, 0.0
        %620 = vst.msk [vmem:[#allocation2 + $0x8] sm:$0xff] %vm618, 0.0
      $region52: #{cossm_forward.19} parent=47 // pred_fallthru
        _
      %v621 = vld [vmem:[%s584] sm:$0xff]
      %v622 = vld [vmem:[%s584 + $0x8] sm:$0xff]
      %v623 = vld [vmem:[%s590] sm:$0x1]
      %v624 = vld [vmem:[%s596] sm:$0x1]
      %v625 = vld [vmem:[#allocation2] sm:$0xff]
      %v626 = vld [vmem:[#allocation2 + $0x8] sm:$0xff]
      loop: start=0, step=1, limit=2
      $region53: #{cossm_forward.19} parent=47 // loop_pre_header
        _
      $region54: #{cossm_forward.19} parent=47 // loop_header
        %s628 = sphi 0, %s632
        %p629 = scmp.ge.s32.totalorder %s628, 2
        %v633 = vphi %v625, %v2241
        %v634 = vphi %v626, %v2242
      $region55: #{cossm_forward.19} parent=47 // loop_header_branch
        %631 = sbr.rel (%p629) target = $region59
      $region56: #{cossm_forward.19} parent=47 // loop_body
        %s635 = smul.u32 %s628, 8
        %s636 = scalar_lea.vmem %s531, %s635
        %v637 = vld [vmem:[%s636] sm:$0xff]
        %s638 = scalar_lea.vmem %s548, %s635
        %v639 = vld [vmem:[%s638] sm:$0xff]
        %s640 = scalar_lea.vmem %s579, %s635
        %v641 = vld [vmem:[%s640] sm:$0xff]
        %s642 = scalar_lea.vmem %s562, %s635
        %v643 = vld [vmem:[%s642] sm:$0xff]
        %v645 = vlaneseq
        %v646 = vshrl.u32 %v645, 7
        %v647 = vsub.s32 0, %v646
        %v648 = vrot.slane %v623, %v647
        %v650 = vadd.f32 %v639, %v648
        %v651 = vmax.f32 %v650, 0.0
        %v652 = vand.u32 2147483647, %v650
        %v653 = vsub.f32 0.0, %v652
        %v654 = vmul.f32 %v653, 1.442695
        %v655 = vpow.pop %v654
        %v656 = vadd.f32 %v655, 1.0
        %v657 = vlog2.pop %v656
        %v658 = vmul.f32 %v657, 0.6931472
        %v659 = vadd.f32 %v651, %v658
        %v660 = vmul.f32 %v659, %v637
        %v661 = vsub.f32 0.0, %v641
        %v662 = vmul.f32 %v661, 1.442695
        %v663 = vpow.pop %v662
        %v664 = vadd.f32 %v663, 1.0
        %v665 = vrcp.pop %v664
        %v666 = vmul.f32 %v641, %v665
        %v667 = vlaneseq
        %v668 = vshrl.u32 %v667, 7
        %v669 = vsub.s32 0, %v668
        %v670 = vrot.slane %v659, %v669
        %v671 = vmul.f32 %v670, %v621
        %v672 = vmul.f32 %v670, %v622
        %v673 = vmul.f32 %v671, 1.442695
        %v674 = vpow.pop %v673
        %v675 = vmul.f32 %v672, 1.442695
        %v676 = vpow.pop %v675
        %677 = vxpose.xlu0.b32.start [1/16] %v643, 128
        %678 = vxpose.xlu0.b32.cont [2/16] 0.0, 128
        %679 = vxpose.xlu0.b32.cont [3/16] 0.0, 128
        %680 = vxpose.xlu0.b32.cont [4/16] 0.0, 128
        %681 = vxpose.xlu0.b32.cont [5/16] 0.0, 128
        %682 = vxpose.xlu0.b32.cont [6/16] 0.0, 128
        %683 = vxpose.xlu0.b32.cont [7/16] 0.0, 128
        %684 = vxpose.xlu0.b32.cont [8/16] 0.0, 128
        %685 = vxpose.xlu0.b32.cont [9/16] 0.0, 128
        %686 = vxpose.xlu0.b32.cont [10/16] 0.0, 128
        %687 = vxpose.xlu0.b32.cont [11/16] 0.0, 128
        %688 = vxpose.xlu0.b32.cont [12/16] 0.0, 128
        %689 = vxpose.xlu0.b32.cont [13/16] 0.0, 128
        %690 = vxpose.xlu0.b32.cont [14/16] 0.0, 128
        %691 = vxpose.xlu0.b32.cont [15/16] 0.0, 128
        %692 = vxpose.xlu0.b32.end [16/16] 0.0, 128
        %v693 = vpop.trf.xlu0
        %v694 = vpop.trf.xlu0
        %v695 = vpop.trf.xlu0
        %v696 = vpop.trf.xlu0
        %v697 = vpop.trf.xlu0
        %v698 = vpop.trf.xlu0
        %v699 = vpop.trf.xlu0
        %v700 = vpop.trf.xlu0
        %v701 = vpop.trf.xlu0
        %v702 = vpop.trf.xlu0
        %v703 = vpop.trf.xlu0
        %v704 = vpop.trf.xlu0
        %v705 = vpop.trf.xlu0
        %v706 = vpop.trf.xlu0
        %v707 = vpop.trf.xlu0
        %v708 = vpop.trf.xlu0
        %vm709 = vcmask 7168
        %v711 = vsel %vm709, %v693, 0
        %v714 = vsel %vm709, %v694, 0
        %vm716 = vcmask 1040384
        %v718 = vsel %vm716, %v660, 0
        %720 = vmatprep.subr.mxu0 0.0
        %721 = vmatpush1.msra.mxu0 %v718
        %722 = vmatprep.subr.mxu0 0.0
        %723 = vmatpush1.msra.mxu0 0.0
        %724 = vmatprep.subr.mxu0 0.0
        %725 = vmatpush1.msra.mxu0 0.0
        %726 = vmatprep.subr.mxu0 0.0
        %727 = vmatpush1.msra.mxu0 0.0
        %728 = vmatprep.subr.mxu0 0.0
        %729 = vmatpush1.msra.mxu0 0.0
        %730 = vmatprep.subr.mxu0 0.0
        %731 = vmatpush1.msra.mxu0 0.0
        %732 = vmatprep.subr.mxu0 0.0
        %733 = vmatpush1.msra.mxu0 0.0
        %734 = vmatprep.subr.mxu0 0.0
        %735 = vmatpush1.msra.mxu0 0.0
        %736 = vmatprep.subr.mxu0 0.0
        %737 = vmatpush1.msra.mxu0 0.0
        %738 = vmatprep.subr.mxu0 0.0
        %739 = vmatpush1.msra.mxu0 0.0
        %740 = vmatprep.subr.mxu0 0.0
        %741 = vmatpush1.msra.mxu0 0.0
        %742 = vmatprep.subr.mxu0 0.0
        %743 = vmatpush1.msra.mxu0 0.0
        %744 = vmatprep.subr.mxu0 0.0
        %745 = vmatpush1.msra.mxu0 0.0
        %746 = vmatprep.subr.mxu0 0.0
        %747 = vmatpush1.msra.mxu0 0.0
        %748 = vmatprep.subr.mxu0 0.0
        %749 = vmatpush1.msra.mxu0 0.0
        %750 = vmatprep.subr.mxu0 0.0
        %751 = vmatpush1.msra.mxu0 0.0
        %752 = vmatprep.subr.mxu0 0.0
        %753 = vmatpush1.msra.mxu0 0.0
        %754 = vmatprep.subr.mxu0 0.0
        %755 = vmatpush1.msra.mxu0 0.0
        %756 = vmatprep.subr.mxu0 0.0
        %757 = vmatpush1.msra.mxu0 0.0
        %758 = vmatprep.subr.mxu0 0.0
        %759 = vmatpush1.msra.mxu0 0.0
        %760 = vmatprep.subr.mxu0 0.0
        %761 = vmatpush1.msra.mxu0 0.0
        %762 = vmatprep.subr.mxu0 0.0
        %763 = vmatpush1.msra.mxu0 0.0
        %764 = vmatprep.subr.mxu0 0.0
        %765 = vmatpush1.msra.mxu0 0.0
        %766 = vmatprep.subr.mxu0 0.0
        %767 = vmatpush1.msra.mxu0 0.0
        %768 = vmatprep.subr.mxu0 0.0
        %769 = vmatpush1.msra.mxu0 0.0
        %770 = vmatprep.subr.mxu0 0.0
        %771 = vmatpush1.msra.mxu0 0.0
        %772 = vmatprep.subr.mxu0 0.0
        %773 = vmatpush1.msra.mxu0 0.0
        %774 = vmatprep.subr.mxu0 0.0
        %775 = vmatpush1.msra.mxu0 0.0
        %776 = vmatprep.subr.mxu0 0.0
        %777 = vmatpush1.msra.mxu0 0.0
        %778 = vmatprep.subr.mxu0 0.0
        %779 = vmatpush1.msra.mxu0 0.0
        %780 = vmatprep.subr.mxu0 0.0
        %781 = vmatpush1.msra.mxu0 0.0
        %782 = vmatprep.subr.mxu0 0.0
        %783 = vmatpush1.msra.mxu0 0.0
        %784 = vmatprep.mubr.f32.mxu0 0.0
        %785 = vmatmul.mubr.f32.gmra.mrb[0].mxu0 %v711
        %v786 = vpop.f32.mrb[0].mxu0
        %v787 = vadd.f32 0.0, %v786
        %v788 = vpop.f32.mrb[0].mxu0
        %789 = vmatprep.mubr.f32.mxu0 0.0
        %790 = vmatmul.mubr.f32.gmra.mrb[0].mxu0 %v714
        %v791 = vpop.f32.mrb[0].mxu0
        %v792 = vadd.f32 0.0, %v791
        %v793 = vpop.f32.mrb[0].mxu0
        %794 = vdwg.mxu0
        %v795 = vmul.f32 %v674, %v633
        %v796 = vmul.f32 %v676, %v634
        %v797 = vadd.f32 %v795, %v787
        %v798 = vadd.f32 %v796, %v792
        %800 = vrot.lane.b32.xlu0 %v643, 112
        %v801 = vpop.permute.xlu0 %800
        %vm802 = vcmask 130048
        %v803 = vsel %vm802, %v801, 0
        %805 = vmatprep.subr.mxu0 0.0
        %806 = vmatpush1.msra.mxu0 %v797
        %807 = vmatprep.subr.mxu0 0.0
        %808 = vmatpush1.msra.mxu0 %v798
        %809 = vmatprep.subr.mxu0 0.0
        %810 = vmatpush1.msra.mxu0 0.0
        %811 = vmatprep.subr.mxu0 0.0
        %812 = vmatpush1.msra.mxu0 0.0
        %813 = vmatprep.subr.mxu0 0.0
        %814 = vmatpush1.msra.mxu0 0.0
        %815 = vmatprep.subr.mxu0 0.0
        %816 = vmatpush1.msra.mxu0 0.0
        %817 = vmatprep.subr.mxu0 0.0
        %818 = vmatpush1.msra.mxu0 0.0
        %819 = vmatprep.subr.mxu0 0.0
        %820 = vmatpush1.msra.mxu0 0.0
        %821 = vmatprep.subr.mxu0 0.0
        %822 = vmatpush1.msra.mxu0 0.0
        %823 = vmatprep.subr.mxu0 0.0
        %824 = vmatpush1.msra.mxu0 0.0
        %825 = vmatprep.subr.mxu0 0.0
        %826 = vmatpush1.msra.mxu0 0.0
        %827 = vmatprep.subr.mxu0 0.0
        %828 = vmatpush1.msra.mxu0 0.0
        %829 = vmatprep.subr.mxu0 0.0
        %830 = vmatpush1.msra.mxu0 0.0
        %831 = vmatprep.subr.mxu0 0.0
        %832 = vmatpush1.msra.mxu0 0.0
        %833 = vmatprep.subr.mxu0 0.0
        %834 = vmatpush1.msra.mxu0 0.0
        %835 = vmatprep.subr.mxu0 0.0
        %836 = vmatpush1.msra.mxu0 0.0
        %837 = vmatprep.subr.mxu0 0.0
        %838 = vmatpush1.msra.mxu0 0.0
        %839 = vmatprep.subr.mxu0 0.0
        %840 = vmatpush1.msra.mxu0 0.0
        %841 = vmatprep.subr.mxu0 0.0
        %842 = vmatpush1.msra.mxu0 0.0
        %843 = vmatprep.subr.mxu0 0.0
        %844 = vmatpush1.msra.mxu0 0.0
        %845 = vmatprep.subr.mxu0 0.0
        %846 = vmatpush1.msra.mxu0 0.0
        %847 = vmatprep.subr.mxu0 0.0
        %848 = vmatpush1.msra.mxu0 0.0
        %849 = vmatprep.subr.mxu0 0.0
        %850 = vmatpush1.msra.mxu0 0.0
        %851 = vmatprep.subr.mxu0 0.0
        %852 = vmatpush1.msra.mxu0 0.0
        %853 = vmatprep.subr.mxu0 0.0
        %854 = vmatpush1.msra.mxu0 0.0
        %855 = vmatprep.subr.mxu0 0.0
        %856 = vmatpush1.msra.mxu0 0.0
        %857 = vmatprep.subr.mxu0 0.0
        %858 = vmatpush1.msra.mxu0 0.0
        %859 = vmatprep.subr.mxu0 0.0
        %860 = vmatpush1.msra.mxu0 0.0
        %861 = vmatprep.subr.mxu0 0.0
        %862 = vmatpush1.msra.mxu0 0.0
        %863 = vmatprep.subr.mxu0 0.0
        %864 = vmatpush1.msra.mxu0 0.0
        %865 = vmatprep.subr.mxu0 0.0
        %866 = vmatpush1.msra.mxu0 0.0
        %867 = vmatprep.subr.mxu0 0.0
        %868 = vmatpush1.msra.mxu0 0.0
        %869 = vmatprep.mubr.f32.mxu0 0.0
        %870 = vmatmul.mubr.f32.gmra.mrb[0].mxu0 %v803
        %v871 = vpop.f32.mrb[0].mxu0
        %v872 = vadd.f32 0.0, %v871
        %v873 = vpop.f32.mrb[0].mxu0
        %874 = vdwg.mxu0
        %v875 = vlaneseq
        %v876 = vshrl.u32 %v875, 7
        %v877 = vsub.s32 1, %v876
        %v878 = vrot.slane %v659, %v877
        %v879 = vmul.f32 %v878, %v621
        %v880 = vmul.f32 %v878, %v622
        %v881 = vmul.f32 %v879, 1.442695
        %v882 = vpow.pop %v881
        %v883 = vmul.f32 %v880, 1.442695
        %v884 = vpow.pop %v883
        %v885 = vrot.slane %v643, 1
        %887 = vxpose.xlu0.b32.start [1/16] %v885, 128
        %888 = vxpose.xlu0.b32.cont [2/16] 0.0, 128
        %889 = vxpose.xlu0.b32.cont [3/16] 0.0, 128
        %890 = vxpose.xlu0.b32.cont [4/16] 0.0, 128
        %891 = vxpose.xlu0.b32.cont [5/16] 0.0, 128
        %892 = vxpose.xlu0.b32.cont [6/16] 0.0, 128
        %893 = vxpose.xlu0.b32.cont [7/16] 0.0, 128
        %894 = vxpose.xlu0.b32.cont [8/16] 0.0, 128
        %895 = vxpose.xlu0.b32.cont [9/16] 0.0, 128
        %896 = vxpose.xlu0.b32.cont [10/16] 0.0, 128
        %897 = vxpose.xlu0.b32.cont [11/16] 0.0, 128
        %898 = vxpose.xlu0.b32.cont [12/16] 0.0, 128
        %899 = vxpose.xlu0.b32.cont [13/16] 0.0, 128
        %900 = vxpose.xlu0.b32.cont [14/16] 0.0, 128
        %901 = vxpose.xlu0.b32.cont [15/16] 0.0, 128
        %902 = vxpose.xlu0.b32.end [16/16] 0.0, 128
        %v903 = vpop.trf.xlu0
        %v904 = vpop.trf.xlu0
        %v905 = vpop.trf.xlu0
        %v906 = vpop.trf.xlu0
        %v907 = vpop.trf.xlu0
        %v908 = vpop.trf.xlu0
        %v909 = vpop.trf.xlu0
        %v910 = vpop.trf.xlu0
        %v911 = vpop.trf.xlu0
        %v912 = vpop.trf.xlu0
        %v913 = vpop.trf.xlu0
        %v914 = vpop.trf.xlu0
        %v915 = vpop.trf.xlu0
        %v916 = vpop.trf.xlu0
        %v917 = vpop.trf.xlu0
        %v918 = vpop.trf.xlu0
        %v919 = vrot.slane %v660, 1
        %v921 = vsel %vm709, %v903, 0
        %v924 = vsel %vm709, %v904, 0
        %v926 = vsel %vm716, %v919, 0
        %928 = vmatprep.subr.mxu0 0.0
        %929 = vmatpush1.msra.mxu0 %v926
        %930 = vmatprep.subr.mxu0 0.0
        %931 = vmatpush1.msra.mxu0 0.0
        %932 = vmatprep.subr.mxu0 0.0
        %933 = vmatpush1.msra.mxu0 0.0
        %934 = vmatprep.subr.mxu0 0.0
        %935 = vmatpush1.msra.mxu0 0.0
        %936 = vmatprep.subr.mxu0 0.0
        %937 = vmatpush1.msra.mxu0 0.0
        %938 = vmatprep.subr.mxu0 0.0
        %939 = vmatpush1.msra.mxu0 0.0
        %940 = vmatprep.subr.mxu0 0.0
        %941 = vmatpush1.msra.mxu0 0.0
        %942 = vmatprep.subr.mxu0 0.0
        %943 = vmatpush1.msra.mxu0 0.0
        %944 = vmatprep.subr.mxu0 0.0
        %945 = vmatpush1.msra.mxu0 0.0
        %946 = vmatprep.subr.mxu0 0.0
        %947 = vmatpush1.msra.mxu0 0.0
        %948 = vmatprep.subr.mxu0 0.0
        %949 = vmatpush1.msra.mxu0 0.0
        %950 = vmatprep.subr.mxu0 0.0
        %951 = vmatpush1.msra.mxu0 0.0
        %952 = vmatprep.subr.mxu0 0.0
        %953 = vmatpush1.msra.mxu0 0.0
        %954 = vmatprep.subr.mxu0 0.0
        %955 = vmatpush1.msra.mxu0 0.0
        %956 = vmatprep.subr.mxu0 0.0
        %957 = vmatpush1.msra.mxu0 0.0
        %958 = vmatprep.subr.mxu0 0.0
        %959 = vmatpush1.msra.mxu0 0.0
        %960 = vmatprep.subr.mxu0 0.0
        %961 = vmatpush1.msra.mxu0 0.0
        %962 = vmatprep.subr.mxu0 0.0
        %963 = vmatpush1.msra.mxu0 0.0
        %964 = vmatprep.subr.mxu0 0.0
        %965 = vmatpush1.msra.mxu0 0.0
        %966 = vmatprep.subr.mxu0 0.0
        %967 = vmatpush1.msra.mxu0 0.0
        %968 = vmatprep.subr.mxu0 0.0
        %969 = vmatpush1.msra.mxu0 0.0
        %970 = vmatprep.subr.mxu0 0.0
        %971 = vmatpush1.msra.mxu0 0.0
        %972 = vmatprep.subr.mxu0 0.0
        %973 = vmatpush1.msra.mxu0 0.0
        %974 = vmatprep.subr.mxu0 0.0
        %975 = vmatpush1.msra.mxu0 0.0
        %976 = vmatprep.subr.mxu0 0.0
        %977 = vmatpush1.msra.mxu0 0.0
        %978 = vmatprep.subr.mxu0 0.0
        %979 = vmatpush1.msra.mxu0 0.0
        %980 = vmatprep.subr.mxu0 0.0
        %981 = vmatpush1.msra.mxu0 0.0
        %982 = vmatprep.subr.mxu0 0.0
        %983 = vmatpush1.msra.mxu0 0.0
        %984 = vmatprep.subr.mxu0 0.0
        %985 = vmatpush1.msra.mxu0 0.0
        %986 = vmatprep.subr.mxu0 0.0
        %987 = vmatpush1.msra.mxu0 0.0
        %988 = vmatprep.subr.mxu0 0.0
        %989 = vmatpush1.msra.mxu0 0.0
        %990 = vmatprep.subr.mxu0 0.0
        %991 = vmatpush1.msra.mxu0 0.0
        %992 = vmatprep.mubr.f32.mxu0 0.0
        %993 = vmatmul.mubr.f32.gmra.mrb[0].mxu0 %v921
        %v994 = vpop.f32.mrb[0].mxu0
        %v995 = vadd.f32 0.0, %v994
        %v996 = vpop.f32.mrb[0].mxu0
        %997 = vmatprep.mubr.f32.mxu0 0.0
        %998 = vmatmul.mubr.f32.gmra.mrb[0].mxu0 %v924
        %v999 = vpop.f32.mrb[0].mxu0
        %v1000 = vadd.f32 0.0, %v999
        %v1001 = vpop.f32.mrb[0].mxu0
        %1002 = vdwg.mxu0
        %v1003 = vmul.f32 %v882, %v797
        %v1004 = vmul.f32 %v884, %v798
        %v1005 = vadd.f32 %v1003, %v995
        %v1006 = vadd.f32 %v1004, %v1000
        %1007 = vrot.lane.b32.xlu0 %v885, 112
        %v1008 = vpop.permute.xlu0 %1007
        %v1009 = vsel %vm802, %v1008, 0
        %1011 = vmatprep.subr.mxu0 0.0
        %1012 = vmatpush1.msra.mxu0 %v1005
        %1013 = vmatprep.subr.mxu0 0.0
        %1014 = vmatpush1.msra.mxu0 %v1006
        %1015 = vmatprep.subr.mxu0 0.0
        %1016 = vmatpush1.msra.mxu0 0.0
        %1017 = vmatprep.subr.mxu0 0.0
        %1018 = vmatpush1.msra.mxu0 0.0
        %1019 = vmatprep.subr.mxu0 0.0
        %1020 = vmatpush1.msra.mxu0 0.0
        %1021 = vmatprep.subr.mxu0 0.0
        %1022 = vmatpush1.msra.mxu0 0.0
        %1023 = vmatprep.subr.mxu0 0.0
        %1024 = vmatpush1.msra.mxu0 0.0
        %1025 = vmatprep.subr.mxu0 0.0
        %1026 = vmatpush1.msra.mxu0 0.0
        %1027 = vmatprep.subr.mxu0 0.0
        %1028 = vmatpush1.msra.mxu0 0.0
        %1029 = vmatprep.subr.mxu0 0.0
        %1030 = vmatpush1.msra.mxu0 0.0
        %1031 = vmatprep.subr.mxu0 0.0
        %1032 = vmatpush1.msra.mxu0 0.0
        %1033 = vmatprep.subr.mxu0 0.0
        %1034 = vmatpush1.msra.mxu0 0.0
        %1035 = vmatprep.subr.mxu0 0.0
        %1036 = vmatpush1.msra.mxu0 0.0
        %1037 = vmatprep.subr.mxu0 0.0
        %1038 = vmatpush1.msra.mxu0 0.0
        %1039 = vmatprep.subr.mxu0 0.0
        %1040 = vmatpush1.msra.mxu0 0.0
        %1041 = vmatprep.subr.mxu0 0.0
        %1042 = vmatpush1.msra.mxu0 0.0
        %1043 = vmatprep.subr.mxu0 0.0
        %1044 = vmatpush1.msra.mxu0 0.0
        %1045 = vmatprep.subr.mxu0 0.0
        %1046 = vmatpush1.msra.mxu0 0.0
        %1047 = vmatprep.subr.mxu0 0.0
        %1048 = vmatpush1.msra.mxu0 0.0
        %1049 = vmatprep.subr.mxu0 0.0
        %1050 = vmatpush1.msra.mxu0 0.0
        %1051 = vmatprep.subr.mxu0 0.0
        %1052 = vmatpush1.msra.mxu0 0.0
        %1053 = vmatprep.subr.mxu0 0.0
        %1054 = vmatpush1.msra.mxu0 0.0
        %1055 = vmatprep.subr.mxu0 0.0
        %1056 = vmatpush1.msra.mxu0 0.0
        %1057 = vmatprep.subr.mxu0 0.0
        %1058 = vmatpush1.msra.mxu0 0.0
        %1059 = vmatprep.subr.mxu0 0.0
        %1060 = vmatpush1.msra.mxu0 0.0
        %1061 = vmatprep.subr.mxu0 0.0
        %1062 = vmatpush1.msra.mxu0 0.0
        %1063 = vmatprep.subr.mxu0 0.0
        %1064 = vmatpush1.msra.mxu0 0.0
        %1065 = vmatprep.subr.mxu0 0.0
        %1066 = vmatpush1.msra.mxu0 0.0
        %1067 = vmatprep.subr.mxu0 0.0
        %1068 = vmatpush1.msra.mxu0 0.0
        %1069 = vmatprep.subr.mxu0 0.0
        %1070 = vmatpush1.msra.mxu0 0.0
        %1071 = vmatprep.subr.mxu0 0.0
        %1072 = vmatpush1.msra.mxu0 0.0
        %1073 = vmatprep.subr.mxu0 0.0
        %1074 = vmatpush1.msra.mxu0 0.0
        %1075 = vmatprep.mubr.f32.mxu0 0.0
        %1076 = vmatmul.mubr.f32.gmra.mrb[0].mxu0 %v1009
        %v1077 = vpop.f32.mrb[0].mxu0
        %v1078 = vadd.f32 0.0, %v1077
        %v1079 = vpop.f32.mrb[0].mxu0
        %1080 = vdwg.mxu0
        %v1081 = vlaneseq
        %v1082 = vshrl.u32 %v1081, 7
        %v1083 = vsub.s32 2, %v1082
        %v1084 = vrot.slane %v659, %v1083
        %v1085 = vmul.f32 %v1084, %v621
        %v1086 = vmul.f32 %v1084, %v622
        %v1087 = vmul.f32 %v1085, 1.442695
        %v1088 = vpow.pop %v1087
        %v1089 = vmul.f32 %v1086, 1.442695
        %v1090 = vpow.pop %v1089
        %v1091 = vrot.slane %v643, 2
        %1093 = vxpose.xlu0.b32.start [1/16] %v1091, 128
        %1094 = vxpose.xlu0.b32.cont [2/16] 0.0, 128
        %1095 = vxpose.xlu0.b32.cont [3/16] 0.0, 128
        %1096 = vxpose.xlu0.b32.cont [4/16] 0.0, 128
        %1097 = vxpose.xlu0.b32.cont [5/16] 0.0, 128
        %1098 = vxpose.xlu0.b32.cont [6/16] 0.0, 128
        %1099 = vxpose.xlu0.b32.cont [7/16] 0.0, 128
        %1100 = vxpose.xlu0.b32.cont [8/16] 0.0, 128
        %1101 = vxpose.xlu0.b32.cont [9/16] 0.0, 128
        %1102 = vxpose.xlu0.b32.cont [10/16] 0.0, 128
        %1103 = vxpose.xlu0.b32.cont [11/16] 0.0, 128
        %1104 = vxpose.xlu0.b32.cont [12/16] 0.0, 128
        %1105 = vxpose.xlu0.b32.cont [13/16] 0.0, 128
        %1106 = vxpose.xlu0.b32.cont [14/16] 0.0, 128
        %1107 = vxpose.xlu0.b32.cont [15/16] 0.0, 128
        %1108 = vxpose.xlu0.b32.end [16/16] 0.0, 128
        %v1109 = vpop.trf.xlu0
        %v1110 = vpop.trf.xlu0
        %v1111 = vpop.trf.xlu0
        %v1112 = vpop.trf.xlu0
        %v1113 = vpop.trf.xlu0
        %v1114 = vpop.trf.xlu0
        %v1115 = vpop.trf.xlu0
        %v1116 = vpop.trf.xlu0
        %v1117 = vpop.trf.xlu0
        %v1118 = vpop.trf.xlu0
        %v1119 = vpop.trf.xlu0
        %v1120 = vpop.trf.xlu0
        %v1121 = vpop.trf.xlu0
        %v1122 = vpop.trf.xlu0
        %v1123 = vpop.trf.xlu0
        %v1124 = vpop.trf.xlu0
        %v1125 = vrot.slane %v660, 2
        %v1127 = vsel %vm709, %v1109, 0
        %v1130 = vsel %vm709, %v1110, 0
        %v1132 = vsel %vm716, %v1125, 0
        %1134 = vmatprep.subr.mxu0 0.0
        %1135 = vmatpush1.msra.mxu0 %v1132
        %1136 = vmatprep.subr.mxu0 0.0
        %1137 = vmatpush1.msra.mxu0 0.0
        %1138 = vmatprep.subr.mxu0 0.0
        %1139 = vmatpush1.msra.mxu0 0.0
        %1140 = vmatprep.subr.mxu0 0.0
        %1141 = vmatpush1.msra.mxu0 0.0
        %1142 = vmatprep.subr.mxu0 0.0
        %1143 = vmatpush1.msra.mxu0 0.0
        %1144 = vmatprep.subr.mxu0 0.0
        %1145 = vmatpush1.msra.mxu0 0.0
        %1146 = vmatprep.subr.mxu0 0.0
        %1147 = vmatpush1.msra.mxu0 0.0
        %1148 = vmatprep.subr.mxu0 0.0
        %1149 = vmatpush1.msra.mxu0 0.0
        %1150 = vmatprep.subr.mxu0 0.0
        %1151 = vmatpush1.msra.mxu0 0.0
        %1152 = vmatprep.subr.mxu0 0.0
        %1153 = vmatpush1.msra.mxu0 0.0
        %1154 = vmatprep.subr.mxu0 0.0
        %1155 = vmatpush1.msra.mxu0 0.0
        %1156 = vmatprep.subr.mxu0 0.0
        %1157 = vmatpush1.msra.mxu0 0.0
        %1158 = vmatprep.subr.mxu0 0.0
        %1159 = vmatpush1.msra.mxu0 0.0
        %1160 = vmatprep.subr.mxu0 0.0
        %1161 = vmatpush1.msra.mxu0 0.0
        %1162 = vmatprep.subr.mxu0 0.0
        %1163 = vmatpush1.msra.mxu0 0.0
        %1164 = vmatprep.subr.mxu0 0.0
        %1165 = vmatpush1.msra.mxu0 0.0
        %1166 = vmatprep.subr.mxu0 0.0
        %1167 = vmatpush1.msra.mxu0 0.0
        %1168 = vmatprep.subr.mxu0 0.0
        %1169 = vmatpush1.msra.mxu0 0.0
        %1170 = vmatprep.subr.mxu0 0.0
        %1171 = vmatpush1.msra.mxu0 0.0
        %1172 = vmatprep.subr.mxu0 0.0
        %1173 = vmatpush1.msra.mxu0 0.0
        %1174 = vmatprep.subr.mxu0 0.0
        %1175 = vmatpush1.msra.mxu0 0.0
        %1176 = vmatprep.subr.mxu0 0.0
        %1177 = vmatpush1.msra.mxu0 0.0
        %1178 = vmatprep.subr.mxu0 0.0
        %1179 = vmatpush1.msra.mxu0 0.0
        %1180 = vmatprep.subr.mxu0 0.0
        %1181 = vmatpush1.msra.mxu0 0.0
        %1182 = vmatprep.subr.mxu0 0.0
        %1183 = vmatpush1.msra.mxu0 0.0
        %1184 = vmatprep.subr.mxu0 0.0
        %1185 = vmatpush1.msra.mxu0 0.0
        %1186 = vmatprep.subr.mxu0 0.0
        %1187 = vmatpush1.msra.mxu0 0.0
        %1188 = vmatprep.subr.mxu0 0.0
        %1189 = vmatpush1.msra.mxu0 0.0
        %1190 = vmatprep.subr.mxu0 0.0
        %1191 = vmatpush1.msra.mxu0 0.0
        %1192 = vmatprep.subr.mxu0 0.0
        %1193 = vmatpush1.msra.mxu0 0.0
        %1194 = vmatprep.subr.mxu0 0.0
        %1195 = vmatpush1.msra.mxu0 0.0
        %1196 = vmatprep.subr.mxu0 0.0
        %1197 = vmatpush1.msra.mxu0 0.0
        %1198 = vmatprep.mubr.f32.mxu0 0.0
        %1199 = vmatmul.mubr.f32.gmra.mrb[0].mxu0 %v1127
        %v1200 = vpop.f32.mrb[0].mxu0
        %v1201 = vadd.f32 0.0, %v1200
        %v1202 = vpop.f32.mrb[0].mxu0
        %1203 = vmatprep.mubr.f32.mxu0 0.0
        %1204 = vmatmul.mubr.f32.gmra.mrb[0].mxu0 %v1130
        %v1205 = vpop.f32.mrb[0].mxu0
        %v1206 = vadd.f32 0.0, %v1205
        %v1207 = vpop.f32.mrb[0].mxu0
        %1208 = vdwg.mxu0
        %v1209 = vmul.f32 %v1088, %v1005
        %v1210 = vmul.f32 %v1090, %v1006
        %v1211 = vadd.f32 %v1209, %v1201
        %v1212 = vadd.f32 %v1210, %v1206
        %1213 = vrot.lane.b32.xlu0 %v1091, 112
        %v1214 = vpop.permute.xlu0 %1213
        %v1215 = vsel %vm802, %v1214, 0
        %1217 = vmatprep.subr.mxu0 0.0
        %1218 = vmatpush1.msra.mxu0 %v1211
        %1219 = vmatprep.subr.mxu0 0.0
        %1220 = vmatpush1.msra.mxu0 %v1212
        %1221 = vmatprep.subr.mxu0 0.0
        %1222 = vmatpush1.msra.mxu0 0.0
        %1223 = vmatprep.subr.mxu0 0.0
        %1224 = vmatpush1.msra.mxu0 0.0
        %1225 = vmatprep.subr.mxu0 0.0
        %1226 = vmatpush1.msra.mxu0 0.0
        %1227 = vmatprep.subr.mxu0 0.0
        %1228 = vmatpush1.msra.mxu0 0.0
        %1229 = vmatprep.subr.mxu0 0.0
        %1230 = vmatpush1.msra.mxu0 0.0
        %1231 = vmatprep.subr.mxu0 0.0
        %1232 = vmatpush1.msra.mxu0 0.0
        %1233 = vmatprep.subr.mxu0 0.0
        %1234 = vmatpush1.msra.mxu0 0.0
        %1235 = vmatprep.subr.mxu0 0.0
        %1236 = vmatpush1.msra.mxu0 0.0
        %1237 = vmatprep.subr.mxu0 0.0
        %1238 = vmatpush1.msra.mxu0 0.0
        %1239 = vmatprep.subr.mxu0 0.0
        %1240 = vmatpush1.msra.mxu0 0.0
        %1241 = vmatprep.subr.mxu0 0.0
        %1242 = vmatpush1.msra.mxu0 0.0
        %1243 = vmatprep.subr.mxu0 0.0
        %1244 = vmatpush1.msra.mxu0 0.0
        %1245 = vmatprep.subr.mxu0 0.0
        %1246 = vmatpush1.msra.mxu0 0.0
        %1247 = vmatprep.subr.mxu0 0.0
        %1248 = vmatpush1.msra.mxu0 0.0
        %1249 = vmatprep.subr.mxu0 0.0
        %1250 = vmatpush1.msra.mxu0 0.0
        %1251 = vmatprep.subr.mxu0 0.0
        %1252 = vmatpush1.msra.mxu0 0.0
        %1253 = vmatprep.subr.mxu0 0.0
        %1254 = vmatpush1.msra.mxu0 0.0
        %1255 = vmatprep.subr.mxu0 0.0
        %1256 = vmatpush1.msra.mxu0 0.0
        %1257 = vmatprep.subr.mxu0 0.0
        %1258 = vmatpush1.msra.mxu0 0.0
        %1259 = vmatprep.subr.mxu0 0.0
        %1260 = vmatpush1.msra.mxu0 0.0
        %1261 = vmatprep.subr.mxu0 0.0
        %1262 = vmatpush1.msra.mxu0 0.0
        %1263 = vmatprep.subr.mxu0 0.0
        %1264 = vmatpush1.msra.mxu0 0.0
        %1265 = vmatprep.subr.mxu0 0.0
        %1266 = vmatpush1.msra.mxu0 0.0
        %1267 = vmatprep.subr.mxu0 0.0
        %1268 = vmatpush1.msra.mxu0 0.0
        %1269 = vmatprep.subr.mxu0 0.0
        %1270 = vmatpush1.msra.mxu0 0.0
        %1271 = vmatprep.subr.mxu0 0.0
        %1272 = vmatpush1.msra.mxu0 0.0
        %1273 = vmatprep.subr.mxu0 0.0
        %1274 = vmatpush1.msra.mxu0 0.0
        %1275 = vmatprep.subr.mxu0 0.0
        %1276 = vmatpush1.msra.mxu0 0.0
        %1277 = vmatprep.subr.mxu0 0.0
        %1278 = vmatpush1.msra.mxu0 0.0
        %1279 = vmatprep.subr.mxu0 0.0
        %1280 = vmatpush1.msra.mxu0 0.0
        %1281 = vmatprep.mubr.f32.mxu0 0.0
        %1282 = vmatmul.mubr.f32.gmra.mrb[0].mxu0 %v1215
        %v1283 = vpop.f32.mrb[0].mxu0
        %v1284 = vadd.f32 0.0, %v1283
        %v1285 = vpop.f32.mrb[0].mxu0
        %1286 = vdwg.mxu0
        %v1287 = vlaneseq
        %v1288 = vshrl.u32 %v1287, 7
        %v1289 = vsub.s32 3, %v1288
        %v1290 = vrot.slane %v659, %v1289
        %v1291 = vmul.f32 %v1290, %v621
        %v1292 = vmul.f32 %v1290, %v622
        %v1293 = vmul.f32 %v1291, 1.442695
        %v1294 = vpow.pop %v1293
        %v1295 = vmul.f32 %v1292, 1.442695
        %v1296 = vpow.pop %v1295
        %v1297 = vrot.slane %v643, 3
        %1299 = vxpose.xlu0.b32.start [1/16] %v1297, 128
        %1300 = vxpose.xlu0.b32.cont [2/16] 0.0, 128
        %1301 = vxpose.xlu0.b32.cont [3/16] 0.0, 128
        %1302 = vxpose.xlu0.b32.cont [4/16] 0.0, 128
        %1303 = vxpose.xlu0.b32.cont [5/16] 0.0, 128
        %1304 = vxpose.xlu0.b32.cont [6/16] 0.0, 128
        %1305 = vxpose.xlu0.b32.cont [7/16] 0.0, 128
        %1306 = vxpose.xlu0.b32.cont [8/16] 0.0, 128
        %1307 = vxpose.xlu0.b32.cont [9/16] 0.0, 128
        %1308 = vxpose.xlu0.b32.cont [10/16] 0.0, 128
        %1309 = vxpose.xlu0.b32.cont [11/16] 0.0, 128
        %1310 = vxpose.xlu0.b32.cont [12/16] 0.0, 128
        %1311 = vxpose.xlu0.b32.cont [13/16] 0.0, 128
        %1312 = vxpose.xlu0.b32.cont [14/16] 0.0, 128
        %1313 = vxpose.xlu0.b32.cont [15/16] 0.0, 128
        %1314 = vxpose.xlu0.b32.end [16/16] 0.0, 128
        %v1315 = vpop.trf.xlu0
        %v1316 = vpop.trf.xlu0
        %v1317 = vpop.trf.xlu0
        %v1318 = vpop.trf.xlu0
        %v1319 = vpop.trf.xlu0
        %v1320 = vpop.trf.xlu0
        %v1321 = vpop.trf.xlu0
        %v1322 = vpop.trf.xlu0
        %v1323 = vpop.trf.xlu0
        %v1324 = vpop.trf.xlu0
        %v1325 = vpop.trf.xlu0
        %v1326 = vpop.trf.xlu0
        %v1327 = vpop.trf.xlu0
        %v1328 = vpop.trf.xlu0
        %v1329 = vpop.trf.xlu0
        %v1330 = vpop.trf.xlu0
        %v1331 = vrot.slane %v660, 3
        %v1333 = vsel %vm709, %v1315, 0
        %v1336 = vsel %vm709, %v1316, 0
        %v1338 = vsel %vm716, %v1331, 0
        %1340 = vmatprep.subr.mxu0 0.0
        %1341 = vmatpush1.msra.mxu0 %v1338
        %1342 = vmatprep.subr.mxu0 0.0
        %1343 = vmatpush1.msra.mxu0 0.0
        %1344 = vmatprep.subr.mxu0 0.0
        %1345 = vmatpush1.msra.mxu0 0.0
        %1346 = vmatprep.subr.mxu0 0.0
        %1347 = vmatpush1.msra.mxu0 0.0
        %1348 = vmatprep.subr.mxu0 0.0
        %1349 = vmatpush1.msra.mxu0 0.0
        %1350 = vmatprep.subr.mxu0 0.0
        %1351 = vmatpush1.msra.mxu0 0.0
        %1352 = vmatprep.subr.mxu0 0.0
        %1353 = vmatpush1.msra.mxu0 0.0
        %1354 = vmatprep.subr.mxu0 0.0
        %1355 = vmatpush1.msra.mxu0 0.0
        %1356 = vmatprep.subr.mxu0 0.0
        %1357 = vmatpush1.msra.mxu0 0.0
        %1358 = vmatprep.subr.mxu0 0.0
        %1359 = vmatpush1.msra.mxu0 0.0
        %1360 = vmatprep.subr.mxu0 0.0
        %1361 = vmatpush1.msra.mxu0 0.0
        %1362 = vmatprep.subr.mxu0 0.0
        %1363 = vmatpush1.msra.mxu0 0.0
        %1364 = vmatprep.subr.mxu0 0.0
        %1365 = vmatpush1.msra.mxu0 0.0
        %1366 = vmatprep.subr.mxu0 0.0
        %1367 = vmatpush1.msra.mxu0 0.0
        %1368 = vmatprep.subr.mxu0 0.0
        %1369 = vmatpush1.msra.mxu0 0.0
        %1370 = vmatprep.subr.mxu0 0.0
        %1371 = vmatpush1.msra.mxu0 0.0
        %1372 = vmatprep.subr.mxu0 0.0
        %1373 = vmatpush1.msra.mxu0 0.0
        %1374 = vmatprep.subr.mxu0 0.0
        %1375 = vmatpush1.msra.mxu0 0.0
        %1376 = vmatprep.subr.mxu0 0.0
        %1377 = vmatpush1.msra.mxu0 0.0
        %1378 = vmatprep.subr.mxu0 0.0
        %1379 = vmatpush1.msra.mxu0 0.0
        %1380 = vmatprep.subr.mxu0 0.0
        %1381 = vmatpush1.msra.mxu0 0.0
        %1382 = vmatprep.subr.mxu0 0.0
        %1383 = vmatpush1.msra.mxu0 0.0
        %1384 = vmatprep.subr.mxu0 0.0
        %1385 = vmatpush1.msra.mxu0 0.0
        %1386 = vmatprep.subr.mxu0 0.0
        %1387 = vmatpush1.msra.mxu0 0.0
        %1388 = vmatprep.subr.mxu0 0.0
        %1389 = vmatpush1.msra.mxu0 0.0
        %1390 = vmatprep.subr.mxu0 0.0
        %1391 = vmatpush1.msra.mxu0 0.0
        %1392 = vmatprep.subr.mxu0 0.0
        %1393 = vmatpush1.msra.mxu0 0.0
        %1394 = vmatprep.subr.mxu0 0.0
        %1395 = vmatpush1.msra.mxu0 0.0
        %1396 = vmatprep.subr.mxu0 0.0
        %1397 = vmatpush1.msra.mxu0 0.0
        %1398 = vmatprep.subr.mxu0 0.0
        %1399 = vmatpush1.msra.mxu0 0.0
        %1400 = vmatprep.subr.mxu0 0.0
        %1401 = vmatpush1.msra.mxu0 0.0
        %1402 = vmatprep.subr.mxu0 0.0
        %1403 = vmatpush1.msra.mxu0 0.0
        %1404 = vmatprep.mubr.f32.mxu0 0.0
        %1405 = vmatmul.mubr.f32.gmra.mrb[0].mxu0 %v1333
        %v1406 = vpop.f32.mrb[0].mxu0
        %v1407 = vadd.f32 0.0, %v1406
        %v1408 = vpop.f32.mrb[0].mxu0
        %1409 = vmatprep.mubr.f32.mxu0 0.0
        %1410 = vmatmul.mubr.f32.gmra.mrb[0].mxu0 %v1336
        %v1411 = vpop.f32.mrb[0].mxu0
        %v1412 = vadd.f32 0.0, %v1411
        %v1413 = vpop.f32.mrb[0].mxu0
        %1414 = vdwg.mxu0
        %v1415 = vmul.f32 %v1294, %v1211
        %v1416 = vmul.f32 %v1296, %v1212
        %v1417 = vadd.f32 %v1415, %v1407
        %v1418 = vadd.f32 %v1416, %v1412
        %1419 = vrot.lane.b32.xlu0 %v1297, 112
        %v1420 = vpop.permute.xlu0 %1419
        %v1421 = vsel %vm802, %v1420, 0
        %1423 = vmatprep.subr.mxu0 0.0
        %1424 = vmatpush1.msra.mxu0 %v1417
        %1425 = vmatprep.subr.mxu0 0.0
        %1426 = vmatpush1.msra.mxu0 %v1418
        %1427 = vmatprep.subr.mxu0 0.0
        %1428 = vmatpush1.msra.mxu0 0.0
        %1429 = vmatprep.subr.mxu0 0.0
        %1430 = vmatpush1.msra.mxu0 0.0
        %1431 = vmatprep.subr.mxu0 0.0
        %1432 = vmatpush1.msra.mxu0 0.0
        %1433 = vmatprep.subr.mxu0 0.0
        %1434 = vmatpush1.msra.mxu0 0.0
        %1435 = vmatprep.subr.mxu0 0.0
        %1436 = vmatpush1.msra.mxu0 0.0
        %1437 = vmatprep.subr.mxu0 0.0
        %1438 = vmatpush1.msra.mxu0 0.0
        %1439 = vmatprep.subr.mxu0 0.0
        %1440 = vmatpush1.msra.mxu0 0.0
        %1441 = vmatprep.subr.mxu0 0.0
        %1442 = vmatpush1.msra.mxu0 0.0
        %1443 = vmatprep.subr.mxu0 0.0
        %1444 = vmatpush1.msra.mxu0 0.0
        %1445 = vmatprep.subr.mxu0 0.0
        %1446 = vmatpush1.msra.mxu0 0.0
        %1447 = vmatprep.subr.mxu0 0.0
        %1448 = vmatpush1.msra.mxu0 0.0
        %1449 = vmatprep.subr.mxu0 0.0
        %1450 = vmatpush1.msra.mxu0 0.0
        %1451 = vmatprep.subr.mxu0 0.0
        %1452 = vmatpush1.msra.mxu0 0.0
        %1453 = vmatprep.subr.mxu0 0.0
        %1454 = vmatpush1.msra.mxu0 0.0
        %1455 = vmatprep.subr.mxu0 0.0
        %1456 = vmatpush1.msra.mxu0 0.0
        %1457 = vmatprep.subr.mxu0 0.0
        %1458 = vmatpush1.msra.mxu0 0.0
        %1459 = vmatprep.subr.mxu0 0.0
        %1460 = vmatpush1.msra.mxu0 0.0
        %1461 = vmatprep.subr.mxu0 0.0
        %1462 = vmatpush1.msra.mxu0 0.0
        %1463 = vmatprep.subr.mxu0 0.0
        %1464 = vmatpush1.msra.mxu0 0.0
        %1465 = vmatprep.subr.mxu0 0.0
        %1466 = vmatpush1.msra.mxu0 0.0
        %1467 = vmatprep.subr.mxu0 0.0
        %1468 = vmatpush1.msra.mxu0 0.0
        %1469 = vmatprep.subr.mxu0 0.0
        %1470 = vmatpush1.msra.mxu0 0.0
        %1471 = vmatprep.subr.mxu0 0.0
        %1472 = vmatpush1.msra.mxu0 0.0
        %1473 = vmatprep.subr.mxu0 0.0
        %1474 = vmatpush1.msra.mxu0 0.0
        %1475 = vmatprep.subr.mxu0 0.0
        %1476 = vmatpush1.msra.mxu0 0.0
        %1477 = vmatprep.subr.mxu0 0.0
        %1478 = vmatpush1.msra.mxu0 0.0
        %1479 = vmatprep.subr.mxu0 0.0
        %1480 = vmatpush1.msra.mxu0 0.0
        %1481 = vmatprep.subr.mxu0 0.0
        %1482 = vmatpush1.msra.mxu0 0.0
        %1483 = vmatprep.subr.mxu0 0.0
        %1484 = vmatpush1.msra.mxu0 0.0
        %1485 = vmatprep.subr.mxu0 0.0
        %1486 = vmatpush1.msra.mxu0 0.0
        %1487 = vmatprep.mubr.f32.mxu0 0.0
        %1488 = vmatmul.mubr.f32.gmra.mrb[0].mxu0 %v1421
        %v1489 = vpop.f32.mrb[0].mxu0
        %v1490 = vadd.f32 0.0, %v1489
        %v1491 = vpop.f32.mrb[0].mxu0
        %1492 = vdwg.mxu0
        %v1493 = vlaneseq
        %v1494 = vshrl.u32 %v1493, 7
        %v1495 = vsub.s32 4, %v1494
        %v1496 = vrot.slane %v659, %v1495
        %v1497 = vmul.f32 %v1496, %v621
        %v1498 = vmul.f32 %v1496, %v622
        %v1499 = vmul.f32 %v1497, 1.442695
        %v1500 = vpow.pop %v1499
        %v1501 = vmul.f32 %v1498, 1.442695
        %v1502 = vpow.pop %v1501
        %v1503 = vrot.slane %v643, 4
        %1505 = vxpose.xlu0.b32.start [1/16] %v1503, 128
        %1506 = vxpose.xlu0.b32.cont [2/16] 0.0, 128
        %1507 = vxpose.xlu0.b32.cont [3/16] 0.0, 128
        %1508 = vxpose.xlu0.b32.cont [4/16] 0.0, 128
        %1509 = vxpose.xlu0.b32.cont [5/16] 0.0, 128
        %1510 = vxpose.xlu0.b32.cont [6/16] 0.0, 128
        %1511 = vxpose.xlu0.b32.cont [7/16] 0.0, 128
        %1512 = vxpose.xlu0.b32.cont [8/16] 0.0, 128
        %1513 = vxpose.xlu0.b32.cont [9/16] 0.0, 128
        %1514 = vxpose.xlu0.b32.cont [10/16] 0.0, 128
        %1515 = vxpose.xlu0.b32.cont [11/16] 0.0, 128
        %1516 = vxpose.xlu0.b32.cont [12/16] 0.0, 128
        %1517 = vxpose.xlu0.b32.cont [13/16] 0.0, 128
        %1518 = vxpose.xlu0.b32.cont [14/16] 0.0, 128
        %1519 = vxpose.xlu0.b32.cont [15/16] 0.0, 128
        %1520 = vxpose.xlu0.b32.end [16/16] 0.0, 128
        %v1521 = vpop.trf.xlu0
        %v1522 = vpop.trf.xlu0
        %v1523 = vpop.trf.xlu0
        %v1524 = vpop.trf.xlu0
        %v1525 = vpop.trf.xlu0
        %v1526 = vpop.trf.xlu0
        %v1527 = vpop.trf.xlu0
        %v1528 = vpop.trf.xlu0
        %v1529 = vpop.trf.xlu0
        %v1530 = vpop.trf.xlu0
        %v1531 = vpop.trf.xlu0
        %v1532 = vpop.trf.xlu0
        %v1533 = vpop.trf.xlu0
        %v1534 = vpop.trf.xlu0
        %v1535 = vpop.trf.xlu0
        %v1536 = vpop.trf.xlu0
        %v1537 = vrot.slane %v660, 4
        %v1539 = vsel %vm709, %v1521, 0
        %v1542 = vsel %vm709, %v1522, 0
        %v1544 = vsel %vm716, %v1537, 0
        %1546 = vmatprep.subr.mxu0 0.0
        %1547 = vmatpush1.msra.mxu0 %v1544
        %1548 = vmatprep.subr.mxu0 0.0
        %1549 = vmatpush1.msra.mxu0 0.0
        %1550 = vmatprep.subr.mxu0 0.0
        %1551 = vmatpush1.msra.mxu0 0.0
        %1552 = vmatprep.subr.mxu0 0.0
        %1553 = vmatpush1.msra.mxu0 0.0
        %1554 = vmatprep.subr.mxu0 0.0
        %1555 = vmatpush1.msra.mxu0 0.0
        %1556 = vmatprep.subr.mxu0 0.0
        %1557 = vmatpush1.msra.mxu0 0.0
        %1558 = vmatprep.subr.mxu0 0.0
        %1559 = vmatpush1.msra.mxu0 0.0
        %1560 = vmatprep.subr.mxu0 0.0
        %1561 = vmatpush1.msra.mxu0 0.0
        %1562 = vmatprep.subr.mxu0 0.0
        %1563 = vmatpush1.msra.mxu0 0.0
        %1564 = vmatprep.subr.mxu0 0.0
        %1565 = vmatpush1.msra.mxu0 0.0
        %1566 = vmatprep.subr.mxu0 0.0
        %1567 = vmatpush1.msra.mxu0 0.0
        %1568 = vmatprep.subr.mxu0 0.0
        %1569 = vmatpush1.msra.mxu0 0.0
        %1570 = vmatprep.subr.mxu0 0.0
        %1571 = vmatpush1.msra.mxu0 0.0
        %1572 = vmatprep.subr.mxu0 0.0
        %1573 = vmatpush1.msra.mxu0 0.0
        %1574 = vmatprep.subr.mxu0 0.0
        %1575 = vmatpush1.msra.mxu0 0.0
        %1576 = vmatprep.subr.mxu0 0.0
        %1577 = vmatpush1.msra.mxu0 0.0
        %1578 = vmatprep.subr.mxu0 0.0
        %1579 = vmatpush1.msra.mxu0 0.0
        %1580 = vmatprep.subr.mxu0 0.0
        %1581 = vmatpush1.msra.mxu0 0.0
        %1582 = vmatprep.subr.mxu0 0.0
        %1583 = vmatpush1.msra.mxu0 0.0
        %1584 = vmatprep.subr.mxu0 0.0
        %1585 = vmatpush1.msra.mxu0 0.0
        %1586 = vmatprep.subr.mxu0 0.0
        %1587 = vmatpush1.msra.mxu0 0.0
        %1588 = vmatprep.subr.mxu0 0.0
        %1589 = vmatpush1.msra.mxu0 0.0
        %1590 = vmatprep.subr.mxu0 0.0
        %1591 = vmatpush1.msra.mxu0 0.0
        %1592 = vmatprep.subr.mxu0 0.0
        %1593 = vmatpush1.msra.mxu0 0.0
        %1594 = vmatprep.subr.mxu0 0.0
        %1595 = vmatpush1.msra.mxu0 0.0
        %1596 = vmatprep.subr.mxu0 0.0
        %1597 = vmatpush1.msra.mxu0 0.0
        %1598 = vmatprep.subr.mxu0 0.0
        %1599 = vmatpush1.msra.mxu0 0.0
        %1600 = vmatprep.subr.mxu0 0.0
        %1601 = vmatpush1.msra.mxu0 0.0
        %1602 = vmatprep.subr.mxu0 0.0
        %1603 = vmatpush1.msra.mxu0 0.0
        %1604 = vmatprep.subr.mxu0 0.0
        %1605 = vmatpush1.msra.mxu0 0.0
        %1606 = vmatprep.subr.mxu0 0.0
        %1607 = vmatpush1.msra.mxu0 0.0
        %1608 = vmatprep.subr.mxu0 0.0
        %1609 = vmatpush1.msra.mxu0 0.0
        %1610 = vmatprep.mubr.f32.mxu0 0.0
        %1611 = vmatmul.mubr.f32.gmra.mrb[0].mxu0 %v1539
        %v1612 = vpop.f32.mrb[0].mxu0
        %v1613 = vadd.f32 0.0, %v1612
        %v1614 = vpop.f32.mrb[0].mxu0
        %1615 = vmatprep.mubr.f32.mxu0 0.0
        %1616 = vmatmul.mubr.f32.gmra.mrb[0].mxu0 %v1542
        %v1617 = vpop.f32.mrb[0].mxu0
        %v1618 = vadd.f32 0.0, %v1617
        %v1619 = vpop.f32.mrb[0].mxu0
        %1620 = vdwg.mxu0
        %v1621 = vmul.f32 %v1500, %v1417
        %v1622 = vmul.f32 %v1502, %v1418
        %v1623 = vadd.f32 %v1621, %v1613
        %v1624 = vadd.f32 %v1622, %v1618
        %1625 = vrot.lane.b32.xlu0 %v1503, 112
        %v1626 = vpop.permute.xlu0 %1625
        %v1627 = vsel %vm802, %v1626, 0
        %1629 = vmatprep.subr.mxu0 0.0
        %1630 = vmatpush1.msra.mxu0 %v1623
        %1631 = vmatprep.subr.mxu0 0.0
        %1632 = vmatpush1.msra.mxu0 %v1624
        %1633 = vmatprep.subr.mxu0 0.0
        %1634 = vmatpush1.msra.mxu0 0.0
        %1635 = vmatprep.subr.mxu0 0.0
        %1636 = vmatpush1.msra.mxu0 0.0
        %1637 = vmatprep.subr.mxu0 0.0
        %1638 = vmatpush1.msra.mxu0 0.0
        %1639 = vmatprep.subr.mxu0 0.0
        %1640 = vmatpush1.msra.mxu0 0.0
        %1641 = vmatprep.subr.mxu0 0.0
        %1642 = vmatpush1.msra.mxu0 0.0
        %1643 = vmatprep.subr.mxu0 0.0
        %1644 = vmatpush1.msra.mxu0 0.0
        %1645 = vmatprep.subr.mxu0 0.0
        %1646 = vmatpush1.msra.mxu0 0.0
        %1647 = vmatprep.subr.mxu0 0.0
        %1648 = vmatpush1.msra.mxu0 0.0
        %1649 = vmatprep.subr.mxu0 0.0
        %1650 = vmatpush1.msra.mxu0 0.0
        %1651 = vmatprep.subr.mxu0 0.0
        %1652 = vmatpush1.msra.mxu0 0.0
        %1653 = vmatprep.subr.mxu0 0.0
        %1654 = vmatpush1.msra.mxu0 0.0
        %1655 = vmatprep.subr.mxu0 0.0
        %1656 = vmatpush1.msra.mxu0 0.0
        %1657 = vmatprep.subr.mxu0 0.0
        %1658 = vmatpush1.msra.mxu0 0.0
        %1659 = vmatprep.subr.mxu0 0.0
        %1660 = vmatpush1.msra.mxu0 0.0
        %1661 = vmatprep.subr.mxu0 0.0
        %1662 = vmatpush1.msra.mxu0 0.0
        %1663 = vmatprep.subr.mxu0 0.0
        %1664 = vmatpush1.msra.mxu0 0.0
        %1665 = vmatprep.subr.mxu0 0.0
        %1666 = vmatpush1.msra.mxu0 0.0
        %1667 = vmatprep.subr.mxu0 0.0
        %1668 = vmatpush1.msra.mxu0 0.0
        %1669 = vmatprep.subr.mxu0 0.0
        %1670 = vmatpush1.msra.mxu0 0.0
        %1671 = vmatprep.subr.mxu0 0.0
        %1672 = vmatpush1.msra.mxu0 0.0
        %1673 = vmatprep.subr.mxu0 0.0
        %1674 = vmatpush1.msra.mxu0 0.0
        %1675 = vmatprep.subr.mxu0 0.0
        %1676 = vmatpush1.msra.mxu0 0.0
        %1677 = vmatprep.subr.mxu0 0.0
        %1678 = vmatpush1.msra.mxu0 0.0
        %1679 = vmatprep.subr.mxu0 0.0
        %1680 = vmatpush1.msra.mxu0 0.0
        %1681 = vmatprep.subr.mxu0 0.0
        %1682 = vmatpush1.msra.mxu0 0.0
        %1683 = vmatprep.subr.mxu0 0.0
        %1684 = vmatpush1.msra.mxu0 0.0
        %1685 = vmatprep.subr.mxu0 0.0
        %1686 = vmatpush1.msra.mxu0 0.0
        %1687 = vmatprep.subr.mxu0 0.0
        %1688 = vmatpush1.msra.mxu0 0.0
        %1689 = vmatprep.subr.mxu0 0.0
        %1690 = vmatpush1.msra.mxu0 0.0
        %1691 = vmatprep.subr.mxu0 0.0
        %1692 = vmatpush1.msra.mxu0 0.0
        %1693 = vmatprep.mubr.f32.mxu0 0.0
        %1694 = vmatmul.mubr.f32.gmra.mrb[0].mxu0 %v1627
        %v1695 = vpop.f32.mrb[0].mxu0
        %v1696 = vadd.f32 0.0, %v1695
        %v1697 = vpop.f32.mrb[0].mxu0
        %1698 = vdwg.mxu0
        %v1699 = vlaneseq
        %v1700 = vshrl.u32 %v1699, 7
        %v1701 = vsub.s32 5, %v1700
        %v1702 = vrot.slane %v659, %v1701
        %v1703 = vmul.f32 %v1702, %v621
        %v1704 = vmul.f32 %v1702, %v622
        %v1705 = vmul.f32 %v1703, 1.442695
        %v1706 = vpow.pop %v1705
        %v1707 = vmul.f32 %v1704, 1.442695
        %v1708 = vpow.pop %v1707
        %v1709 = vrot.slane %v643, 5
        %1711 = vxpose.xlu0.b32.start [1/16] %v1709, 128
        %1712 = vxpose.xlu0.b32.cont [2/16] 0.0, 128
        %1713 = vxpose.xlu0.b32.cont [3/16] 0.0, 128
        %1714 = vxpose.xlu0.b32.cont [4/16] 0.0, 128
        %1715 = vxpose.xlu0.b32.cont [5/16] 0.0, 128
        %1716 = vxpose.xlu0.b32.cont [6/16] 0.0, 128
        %1717 = vxpose.xlu0.b32.cont [7/16] 0.0, 128
        %1718 = vxpose.xlu0.b32.cont [8/16] 0.0, 128
        %1719 = vxpose.xlu0.b32.cont [9/16] 0.0, 128
        %1720 = vxpose.xlu0.b32.cont [10/16] 0.0, 128
        %1721 = vxpose.xlu0.b32.cont [11/16] 0.0, 128
        %1722 = vxpose.xlu0.b32.cont [12/16] 0.0, 128
        %1723 = vxpose.xlu0.b32.cont [13/16] 0.0, 128
        %1724 = vxpose.xlu0.b32.cont [14/16] 0.0, 128
        %1725 = vxpose.xlu0.b32.cont [15/16] 0.0, 128
        %1726 = vxpose.xlu0.b32.end [16/16] 0.0, 128
        %v1727 = vpop.trf.xlu0
        %v1728 = vpop.trf.xlu0
        %v1729 = vpop.trf.xlu0
        %v1730 = vpop.trf.xlu0
        %v1731 = vpop.trf.xlu0
        %v1732 = vpop.trf.xlu0
        %v1733 = vpop.trf.xlu0
        %v1734 = vpop.trf.xlu0
        %v1735 = vpop.trf.xlu0
        %v1736 = vpop.trf.xlu0
        %v1737 = vpop.trf.xlu0
        %v1738 = vpop.trf.xlu0
        %v1739 = vpop.trf.xlu0
        %v1740 = vpop.trf.xlu0
        %v1741 = vpop.trf.xlu0
        %v1742 = vpop.trf.xlu0
        %v1743 = vrot.slane %v660, 5
        %v1745 = vsel %vm709, %v1727, 0
        %v1748 = vsel %vm709, %v1728, 0
        %v1750 = vsel %vm716, %v1743, 0
        %1752 = vmatprep.subr.mxu0 0.0
        %1753 = vmatpush1.msra.mxu0 %v1750
        %1754 = vmatprep.subr.mxu0 0.0
        %1755 = vmatpush1.msra.mxu0 0.0
        %1756 = vmatprep.subr.mxu0 0.0
        %1757 = vmatpush1.msra.mxu0 0.0
        %1758 = vmatprep.subr.mxu0 0.0
        %1759 = vmatpush1.msra.mxu0 0.0
        %1760 = vmatprep.subr.mxu0 0.0
        %1761 = vmatpush1.msra.mxu0 0.0
        %1762 = vmatprep.subr.mxu0 0.0
        %1763 = vmatpush1.msra.mxu0 0.0
        %1764 = vmatprep.subr.mxu0 0.0
        %1765 = vmatpush1.msra.mxu0 0.0
        %1766 = vmatprep.subr.mxu0 0.0
        %1767 = vmatpush1.msra.mxu0 0.0
        %1768 = vmatprep.subr.mxu0 0.0
        %1769 = vmatpush1.msra.mxu0 0.0
        %1770 = vmatprep.subr.mxu0 0.0
        %1771 = vmatpush1.msra.mxu0 0.0
        %1772 = vmatprep.subr.mxu0 0.0
        %1773 = vmatpush1.msra.mxu0 0.0
        %1774 = vmatprep.subr.mxu0 0.0
        %1775 = vmatpush1.msra.mxu0 0.0
        %1776 = vmatprep.subr.mxu0 0.0
        %1777 = vmatpush1.msra.mxu0 0.0
        %1778 = vmatprep.subr.mxu0 0.0
        %1779 = vmatpush1.msra.mxu0 0.0
        %1780 = vmatprep.subr.mxu0 0.0
        %1781 = vmatpush1.msra.mxu0 0.0
        %1782 = vmatprep.subr.mxu0 0.0
        %1783 = vmatpush1.msra.mxu0 0.0
        %1784 = vmatprep.subr.mxu0 0.0
        %1785 = vmatpush1.msra.mxu0 0.0
        %1786 = vmatprep.subr.mxu0 0.0
        %1787 = vmatpush1.msra.mxu0 0.0
        %1788 = vmatprep.subr.mxu0 0.0
        %1789 = vmatpush1.msra.mxu0 0.0
        %1790 = vmatprep.subr.mxu0 0.0
        %1791 = vmatpush1.msra.mxu0 0.0
        %1792 = vmatprep.subr.mxu0 0.0
        %1793 = vmatpush1.msra.mxu0 0.0
        %1794 = vmatprep.subr.mxu0 0.0
        %1795 = vmatpush1.msra.mxu0 0.0
        %1796 = vmatprep.subr.mxu0 0.0
        %1797 = vmatpush1.msra.mxu0 0.0
        %1798 = vmatprep.subr.mxu0 0.0
        %1799 = vmatpush1.msra.mxu0 0.0
        %1800 = vmatprep.subr.mxu0 0.0
        %1801 = vmatpush1.msra.mxu0 0.0
        %1802 = vmatprep.subr.mxu0 0.0
        %1803 = vmatpush1.msra.mxu0 0.0
        %1804 = vmatprep.subr.mxu0 0.0
        %1805 = vmatpush1.msra.mxu0 0.0
        %1806 = vmatprep.subr.mxu0 0.0
        %1807 = vmatpush1.msra.mxu0 0.0
        %1808 = vmatprep.subr.mxu0 0.0
        %1809 = vmatpush1.msra.mxu0 0.0
        %1810 = vmatprep.subr.mxu0 0.0
        %1811 = vmatpush1.msra.mxu0 0.0
        %1812 = vmatprep.subr.mxu0 0.0
        %1813 = vmatpush1.msra.mxu0 0.0
        %1814 = vmatprep.subr.mxu0 0.0
        %1815 = vmatpush1.msra.mxu0 0.0
        %1816 = vmatprep.mubr.f32.mxu0 0.0
        %1817 = vmatmul.mubr.f32.gmra.mrb[0].mxu0 %v1745
        %v1818 = vpop.f32.mrb[0].mxu0
        %v1819 = vadd.f32 0.0, %v1818
        %v1820 = vpop.f32.mrb[0].mxu0
        %1821 = vmatprep.mubr.f32.mxu0 0.0
        %1822 = vmatmul.mubr.f32.gmra.mrb[0].mxu0 %v1748
        %v1823 = vpop.f32.mrb[0].mxu0
        %v1824 = vadd.f32 0.0, %v1823
        %v1825 = vpop.f32.mrb[0].mxu0
        %1826 = vdwg.mxu0
        %v1827 = vmul.f32 %v1706, %v1623
        %v1828 = vmul.f32 %v1708, %v1624
        %v1829 = vadd.f32 %v1827, %v1819
        %v1830 = vadd.f32 %v1828, %v1824
        %1831 = vrot.lane.b32.xlu0 %v1709, 112
        %v1832 = vpop.permute.xlu0 %1831
        %v1833 = vsel %vm802, %v1832, 0
        %1835 = vmatprep.subr.mxu0 0.0
        %1836 = vmatpush1.msra.mxu0 %v1829
        %1837 = vmatprep.subr.mxu0 0.0
        %1838 = vmatpush1.msra.mxu0 %v1830
        %1839 = vmatprep.subr.mxu0 0.0
        %1840 = vmatpush1.msra.mxu0 0.0
        %1841 = vmatprep.subr.mxu0 0.0
        %1842 = vmatpush1.msra.mxu0 0.0
        %1843 = vmatprep.subr.mxu0 0.0
        %1844 = vmatpush1.msra.mxu0 0.0
        %1845 = vmatprep.subr.mxu0 0.0
        %1846 = vmatpush1.msra.mxu0 0.0
        %1847 = vmatprep.subr.mxu0 0.0
        %1848 = vmatpush1.msra.mxu0 0.0
        %1849 = vmatprep.subr.mxu0 0.0
        %1850 = vmatpush1.msra.mxu0 0.0
        %1851 = vmatprep.subr.mxu0 0.0
        %1852 = vmatpush1.msra.mxu0 0.0
        %1853 = vmatprep.subr.mxu0 0.0
        %1854 = vmatpush1.msra.mxu0 0.0
        %1855 = vmatprep.subr.mxu0 0.0
        %1856 = vmatpush1.msra.mxu0 0.0
        %1857 = vmatprep.subr.mxu0 0.0
        %1858 = vmatpush1.msra.mxu0 0.0
        %1859 = vmatprep.subr.mxu0 0.0
        %1860 = vmatpush1.msra.mxu0 0.0
        %1861 = vmatprep.subr.mxu0 0.0
        %1862 = vmatpush1.msra.mxu0 0.0
        %1863 = vmatprep.subr.mxu0 0.0
        %1864 = vmatpush1.msra.mxu0 0.0
        %1865 = vmatprep.subr.mxu0 0.0
        %1866 = vmatpush1.msra.mxu0 0.0
        %1867 = vmatprep.subr.mxu0 0.0
        %1868 = vmatpush1.msra.mxu0 0.0
        %1869 = vmatprep.subr.mxu0 0.0
        %1870 = vmatpush1.msra.mxu0 0.0
        %1871 = vmatprep.subr.mxu0 0.0
        %1872 = vmatpush1.msra.mxu0 0.0
        %1873 = vmatprep.subr.mxu0 0.0
        %1874 = vmatpush1.msra.mxu0 0.0
        %1875 = vmatprep.subr.mxu0 0.0
        %1876 = vmatpush1.msra.mxu0 0.0
        %1877 = vmatprep.subr.mxu0 0.0
        %1878 = vmatpush1.msra.mxu0 0.0
        %1879 = vmatprep.subr.mxu0 0.0
        %1880 = vmatpush1.msra.mxu0 0.0
        %1881 = vmatprep.subr.mxu0 0.0
        %1882 = vmatpush1.msra.mxu0 0.0
        %1883 = vmatprep.subr.mxu0 0.0
        %1884 = vmatpush1.msra.mxu0 0.0
        %1885 = vmatprep.subr.mxu0 0.0
        %1886 = vmatpush1.msra.mxu0 0.0
        %1887 = vmatprep.subr.mxu0 0.0
        %1888 = vmatpush1.msra.mxu0 0.0
        %1889 = vmatprep.subr.mxu0 0.0
        %1890 = vmatpush1.msra.mxu0 0.0
        %1891 = vmatprep.subr.mxu0 0.0
        %1892 = vmatpush1.msra.mxu0 0.0
        %1893 = vmatprep.subr.mxu0 0.0
        %1894 = vmatpush1.msra.mxu0 0.0
        %1895 = vmatprep.subr.mxu0 0.0
        %1896 = vmatpush1.msra.mxu0 0.0
        %1897 = vmatprep.subr.mxu0 0.0
        %1898 = vmatpush1.msra.mxu0 0.0
        %1899 = vmatprep.mubr.f32.mxu0 0.0
        %1900 = vmatmul.mubr.f32.gmra.mrb[0].mxu0 %v1833
        %v1901 = vpop.f32.mrb[0].mxu0
        %v1902 = vadd.f32 0.0, %v1901
        %v1903 = vpop.f32.mrb[0].mxu0
        %1904 = vdwg.mxu0
        %v1905 = vlaneseq
        %v1906 = vshrl.u32 %v1905, 7
        %v1907 = vsub.s32 6, %v1906
        %v1908 = vrot.slane %v659, %v1907
        %v1909 = vmul.f32 %v1908, %v621
        %v1910 = vmul.f32 %v1908, %v622
        %v1911 = vmul.f32 %v1909, 1.442695
        %v1912 = vpow.pop %v1911
        %v1913 = vmul.f32 %v1910, 1.442695
        %v1914 = vpow.pop %v1913
        %v1915 = vrot.slane %v643, 6
        %1917 = vxpose.xlu0.b32.start [1/16] %v1915, 128
        %1918 = vxpose.xlu0.b32.cont [2/16] 0.0, 128
        %1919 = vxpose.xlu0.b32.cont [3/16] 0.0, 128
        %1920 = vxpose.xlu0.b32.cont [4/16] 0.0, 128
        %1921 = vxpose.xlu0.b32.cont [5/16] 0.0, 128
        %1922 = vxpose.xlu0.b32.cont [6/16] 0.0, 128
        %1923 = vxpose.xlu0.b32.cont [7/16] 0.0, 128
        %1924 = vxpose.xlu0.b32.cont [8/16] 0.0, 128
        %1925 = vxpose.xlu0.b32.cont [9/16] 0.0, 128
        %1926 = vxpose.xlu0.b32.cont [10/16] 0.0, 128
        %1927 = vxpose.xlu0.b32.cont [11/16] 0.0, 128
        %1928 = vxpose.xlu0.b32.cont [12/16] 0.0, 128
        %1929 = vxpose.xlu0.b32.cont [13/16] 0.0, 128
        %1930 = vxpose.xlu0.b32.cont [14/16] 0.0, 128
        %1931 = vxpose.xlu0.b32.cont [15/16] 0.0, 128
        %1932 = vxpose.xlu0.b32.end [16/16] 0.0, 128
        %v1933 = vpop.trf.xlu0
        %v1934 = vpop.trf.xlu0
        %v1935 = vpop.trf.xlu0
        %v1936 = vpop.trf.xlu0
        %v1937 = vpop.trf.xlu0
        %v1938 = vpop.trf.xlu0
        %v1939 = vpop.trf.xlu0
        %v1940 = vpop.trf.xlu0
        %v1941 = vpop.trf.xlu0
        %v1942 = vpop.trf.xlu0
        %v1943 = vpop.trf.xlu0
        %v1944 = vpop.trf.xlu0
        %v1945 = vpop.trf.xlu0
        %v1946 = vpop.trf.xlu0
        %v1947 = vpop.trf.xlu0
        %v1948 = vpop.trf.xlu0
        %v1949 = vrot.slane %v660, 6
        %v1951 = vsel %vm709, %v1933, 0
        %v1954 = vsel %vm709, %v1934, 0
        %v1956 = vsel %vm716, %v1949, 0
        %1958 = vmatprep.subr.mxu0 0.0
        %1959 = vmatpush1.msra.mxu0 %v1956
        %1960 = vmatprep.subr.mxu0 0.0
        %1961 = vmatpush1.msra.mxu0 0.0
        %1962 = vmatprep.subr.mxu0 0.0
        %1963 = vmatpush1.msra.mxu0 0.0
        %1964 = vmatprep.subr.mxu0 0.0
        %1965 = vmatpush1.msra.mxu0 0.0
        %1966 = vmatprep.subr.mxu0 0.0
        %1967 = vmatpush1.msra.mxu0 0.0
        %1968 = vmatprep.subr.mxu0 0.0
        %1969 = vmatpush1.msra.mxu0 0.0
        %1970 = vmatprep.subr.mxu0 0.0
        %1971 = vmatpush1.msra.mxu0 0.0
        %1972 = vmatprep.subr.mxu0 0.0
        %1973 = vmatpush1.msra.mxu0 0.0
        %1974 = vmatprep.subr.mxu0 0.0
        %1975 = vmatpush1.msra.mxu0 0.0
        %1976 = vmatprep.subr.mxu0 0.0
        %1977 = vmatpush1.msra.mxu0 0.0
        %1978 = vmatprep.subr.mxu0 0.0
        %1979 = vmatpush1.msra.mxu0 0.0
        %1980 = vmatprep.subr.mxu0 0.0
        %1981 = vmatpush1.msra.mxu0 0.0
        %1982 = vmatprep.subr.mxu0 0.0
        %1983 = vmatpush1.msra.mxu0 0.0
        %1984 = vmatprep.subr.mxu0 0.0
        %1985 = vmatpush1.msra.mxu0 0.0
        %1986 = vmatprep.subr.mxu0 0.0
        %1987 = vmatpush1.msra.mxu0 0.0
        %1988 = vmatprep.subr.mxu0 0.0
        %1989 = vmatpush1.msra.mxu0 0.0
        %1990 = vmatprep.subr.mxu0 0.0
        %1991 = vmatpush1.msra.mxu0 0.0
        %1992 = vmatprep.subr.mxu0 0.0
        %1993 = vmatpush1.msra.mxu0 0.0
        %1994 = vmatprep.subr.mxu0 0.0
        %1995 = vmatpush1.msra.mxu0 0.0
        %1996 = vmatprep.subr.mxu0 0.0
        %1997 = vmatpush1.msra.mxu0 0.0
        %1998 = vmatprep.subr.mxu0 0.0
        %1999 = vmatpush1.msra.mxu0 0.0
        %2000 = vmatprep.subr.mxu0 0.0
        %2001 = vmatpush1.msra.mxu0 0.0
        %2002 = vmatprep.subr.mxu0 0.0
        %2003 = vmatpush1.msra.mxu0 0.0
        %2004 = vmatprep.subr.mxu0 0.0
        %2005 = vmatpush1.msra.mxu0 0.0
        %2006 = vmatprep.subr.mxu0 0.0
        %2007 = vmatpush1.msra.mxu0 0.0
        %2008 = vmatprep.subr.mxu0 0.0
        %2009 = vmatpush1.msra.mxu0 0.0
        %2010 = vmatprep.subr.mxu0 0.0
        %2011 = vmatpush1.msra.mxu0 0.0
        %2012 = vmatprep.subr.mxu0 0.0
        %2013 = vmatpush1.msra.mxu0 0.0
        %2014 = vmatprep.subr.mxu0 0.0
        %2015 = vmatpush1.msra.mxu0 0.0
        %2016 = vmatprep.subr.mxu0 0.0
        %2017 = vmatpush1.msra.mxu0 0.0
        %2018 = vmatprep.subr.mxu0 0.0
        %2019 = vmatpush1.msra.mxu0 0.0
        %2020 = vmatprep.subr.mxu0 0.0
        %2021 = vmatpush1.msra.mxu0 0.0
        %2022 = vmatprep.mubr.f32.mxu0 0.0
        %2023 = vmatmul.mubr.f32.gmra.mrb[0].mxu0 %v1951
        %v2024 = vpop.f32.mrb[0].mxu0
        %v2025 = vadd.f32 0.0, %v2024
        %v2026 = vpop.f32.mrb[0].mxu0
        %2027 = vmatprep.mubr.f32.mxu0 0.0
        %2028 = vmatmul.mubr.f32.gmra.mrb[0].mxu0 %v1954
        %v2029 = vpop.f32.mrb[0].mxu0
        %v2030 = vadd.f32 0.0, %v2029
        %v2031 = vpop.f32.mrb[0].mxu0
        %2032 = vdwg.mxu0
        %v2033 = vmul.f32 %v1912, %v1829
        %v2034 = vmul.f32 %v1914, %v1830
        %v2035 = vadd.f32 %v2033, %v2025
        %v2036 = vadd.f32 %v2034, %v2030
        %2037 = vrot.lane.b32.xlu0 %v1915, 112
        %v2038 = vpop.permute.xlu0 %2037
        %v2039 = vsel %vm802, %v2038, 0
        %2041 = vmatprep.subr.mxu0 0.0
        %2042 = vmatpush1.msra.mxu0 %v2035
        %2043 = vmatprep.subr.mxu0 0.0
        %2044 = vmatpush1.msra.mxu0 %v2036
        %2045 = vmatprep.subr.mxu0 0.0
        %2046 = vmatpush1.msra.mxu0 0.0
        %2047 = vmatprep.subr.mxu0 0.0
        %2048 = vmatpush1.msra.mxu0 0.0
        %2049 = vmatprep.subr.mxu0 0.0
        %2050 = vmatpush1.msra.mxu0 0.0
        %2051 = vmatprep.subr.mxu0 0.0
        %2052 = vmatpush1.msra.mxu0 0.0
        %2053 = vmatprep.subr.mxu0 0.0
        %2054 = vmatpush1.msra.mxu0 0.0
        %2055 = vmatprep.subr.mxu0 0.0
        %2056 = vmatpush1.msra.mxu0 0.0
        %2057 = vmatprep.subr.mxu0 0.0
        %2058 = vmatpush1.msra.mxu0 0.0
        %2059 = vmatprep.subr.mxu0 0.0
        %2060 = vmatpush1.msra.mxu0 0.0
        %2061 = vmatprep.subr.mxu0 0.0
        %2062 = vmatpush1.msra.mxu0 0.0
        %2063 = vmatprep.subr.mxu0 0.0
        %2064 = vmatpush1.msra.mxu0 0.0
        %2065 = vmatprep.subr.mxu0 0.0
        %2066 = vmatpush1.msra.mxu0 0.0
        %2067 = vmatprep.subr.mxu0 0.0
        %2068 = vmatpush1.msra.mxu0 0.0
        %2069 = vmatprep.subr.mxu0 0.0
        %2070 = vmatpush1.msra.mxu0 0.0
        %2071 = vmatprep.subr.mxu0 0.0
        %2072 = vmatpush1.msra.mxu0 0.0
        %2073 = vmatprep.subr.mxu0 0.0
        %2074 = vmatpush1.msra.mxu0 0.0
        %2075 = vmatprep.subr.mxu0 0.0
        %2076 = vmatpush1.msra.mxu0 0.0
        %2077 = vmatprep.subr.mxu0 0.0
        %2078 = vmatpush1.msra.mxu0 0.0
        %2079 = vmatprep.subr.mxu0 0.0
        %2080 = vmatpush1.msra.mxu0 0.0
        %2081 = vmatprep.subr.mxu0 0.0
        %2082 = vmatpush1.msra.mxu0 0.0
        %2083 = vmatprep.subr.mxu0 0.0
        %2084 = vmatpush1.msra.mxu0 0.0
        %2085 = vmatprep.subr.mxu0 0.0
        %2086 = vmatpush1.msra.mxu0 0.0
        %2087 = vmatprep.subr.mxu0 0.0
        %2088 = vmatpush1.msra.mxu0 0.0
        %2089 = vmatprep.subr.mxu0 0.0
        %2090 = vmatpush1.msra.mxu0 0.0
        %2091 = vmatprep.subr.mxu0 0.0
        %2092 = vmatpush1.msra.mxu0 0.0
        %2093 = vmatprep.subr.mxu0 0.0
        %2094 = vmatpush1.msra.mxu0 0.0
        %2095 = vmatprep.subr.mxu0 0.0
        %2096 = vmatpush1.msra.mxu0 0.0
        %2097 = vmatprep.subr.mxu0 0.0
        %2098 = vmatpush1.msra.mxu0 0.0
        %2099 = vmatprep.subr.mxu0 0.0
        %2100 = vmatpush1.msra.mxu0 0.0
        %2101 = vmatprep.subr.mxu0 0.0
        %2102 = vmatpush1.msra.mxu0 0.0
        %2103 = vmatprep.subr.mxu0 0.0
        %2104 = vmatpush1.msra.mxu0 0.0
        %2105 = vmatprep.mubr.f32.mxu0 0.0
        %2106 = vmatmul.mubr.f32.gmra.mrb[0].mxu0 %v2039
        %v2107 = vpop.f32.mrb[0].mxu0
        %v2108 = vadd.f32 0.0, %v2107
        %v2109 = vpop.f32.mrb[0].mxu0
        %2110 = vdwg.mxu0
        %v2111 = vlaneseq
        %v2112 = vshrl.u32 %v2111, 7
        %v2113 = vsub.s32 7, %v2112
        %v2114 = vrot.slane %v659, %v2113
        %v2115 = vmul.f32 %v2114, %v621
        %v2116 = vmul.f32 %v2114, %v622
        %v2117 = vmul.f32 %v2115, 1.442695
        %v2118 = vpow.pop %v2117
        %v2119 = vmul.f32 %v2116, 1.442695
        %v2120 = vpow.pop %v2119
        %v2121 = vrot.slane %v643, 7
        %2123 = vxpose.xlu0.b32.start [1/16] %v2121, 128
        %2124 = vxpose.xlu0.b32.cont [2/16] 0.0, 128
        %2125 = vxpose.xlu0.b32.cont [3/16] 0.0, 128
        %2126 = vxpose.xlu0.b32.cont [4/16] 0.0, 128
        %2127 = vxpose.xlu0.b32.cont [5/16] 0.0, 128
        %2128 = vxpose.xlu0.b32.cont [6/16] 0.0, 128
        %2129 = vxpose.xlu0.b32.cont [7/16] 0.0, 128
        %2130 = vxpose.xlu0.b32.cont [8/16] 0.0, 128
        %2131 = vxpose.xlu0.b32.cont [9/16] 0.0, 128
        %2132 = vxpose.xlu0.b32.cont [10/16] 0.0, 128
        %2133 = vxpose.xlu0.b32.cont [11/16] 0.0, 128
        %2134 = vxpose.xlu0.b32.cont [12/16] 0.0, 128
        %2135 = vxpose.xlu0.b32.cont [13/16] 0.0, 128
        %2136 = vxpose.xlu0.b32.cont [14/16] 0.0, 128
        %2137 = vxpose.xlu0.b32.cont [15/16] 0.0, 128
        %2138 = vxpose.xlu0.b32.end [16/16] 0.0, 128
        %v2139 = vpop.trf.xlu0
        %v2140 = vpop.trf.xlu0
        %v2141 = vpop.trf.xlu0
        %v2142 = vpop.trf.xlu0
        %v2143 = vpop.trf.xlu0
        %v2144 = vpop.trf.xlu0
        %v2145 = vpop.trf.xlu0
        %v2146 = vpop.trf.xlu0
        %v2147 = vpop.trf.xlu0
        %v2148 = vpop.trf.xlu0
        %v2149 = vpop.trf.xlu0
        %v2150 = vpop.trf.xlu0
        %v2151 = vpop.trf.xlu0
        %v2152 = vpop.trf.xlu0
        %v2153 = vpop.trf.xlu0
        %v2154 = vpop.trf.xlu0
        %v2155 = vrot.slane %v660, 7
        %v2157 = vsel %vm709, %v2139, 0
        %v2160 = vsel %vm709, %v2140, 0
        %v2162 = vsel %vm716, %v2155, 0
        %2164 = vmatprep.subr.mxu0 0.0
        %2165 = vmatpush1.msra.mxu0 %v2162
        %2166 = vmatprep.subr.mxu0 0.0
        %2167 = vmatpush1.msra.mxu0 0.0
        %2168 = vmatprep.subr.mxu0 0.0
        %2169 = vmatpush1.msra.mxu0 0.0
        %2170 = vmatprep.subr.mxu0 0.0
        %2171 = vmatpush1.msra.mxu0 0.0
        %2172 = vmatprep.subr.mxu0 0.0
        %2173 = vmatpush1.msra.mxu0 0.0
        %2174 = vmatprep.subr.mxu0 0.0
        %2175 = vmatpush1.msra.mxu0 0.0
        %2176 = vmatprep.subr.mxu0 0.0
        %2177 = vmatpush1.msra.mxu0 0.0
        %2178 = vmatprep.subr.mxu0 0.0
        %2179 = vmatpush1.msra.mxu0 0.0
        %2180 = vmatprep.subr.mxu0 0.0
        %2181 = vmatpush1.msra.mxu0 0.0
        %2182 = vmatprep.subr.mxu0 0.0
        %2183 = vmatpush1.msra.mxu0 0.0
        %2184 = vmatprep.subr.mxu0 0.0
        %2185 = vmatpush1.msra.mxu0 0.0
        %2186 = vmatprep.subr.mxu0 0.0
        %2187 = vmatpush1.msra.mxu0 0.0
        %2188 = vmatprep.subr.mxu0 0.0
        %2189 = vmatpush1.msra.mxu0 0.0
        %2190 = vmatprep.subr.mxu0 0.0
        %2191 = vmatpush1.msra.mxu0 0.0
        %2192 = vmatprep.subr.mxu0 0.0
        %2193 = vmatpush1.msra.mxu0 0.0
        %2194 = vmatprep.subr.mxu0 0.0
        %2195 = vmatpush1.msra.mxu0 0.0
        %2196 = vmatprep.subr.mxu0 0.0
        %2197 = vmatpush1.msra.mxu0 0.0
        %2198 = vmatprep.subr.mxu0 0.0
        %2199 = vmatpush1.msra.mxu0 0.0
        %2200 = vmatprep.subr.mxu0 0.0
        %2201 = vmatpush1.msra.mxu0 0.0
        %2202 = vmatprep.subr.mxu0 0.0
        %2203 = vmatpush1.msra.mxu0 0.0
        %2204 = vmatprep.subr.mxu0 0.0
        %2205 = vmatpush1.msra.mxu0 0.0
        %2206 = vmatprep.subr.mxu0 0.0
        %2207 = vmatpush1.msra.mxu0 0.0
        %2208 = vmatprep.subr.mxu0 0.0
        %2209 = vmatpush1.msra.mxu0 0.0
        %2210 = vmatprep.subr.mxu0 0.0
        %2211 = vmatpush1.msra.mxu0 0.0
        %2212 = vmatprep.subr.mxu0 0.0
        %2213 = vmatpush1.msra.mxu0 0.0
        %2214 = vmatprep.subr.mxu0 0.0
        %2215 = vmatpush1.msra.mxu0 0.0
        %2216 = vmatprep.subr.mxu0 0.0
        %2217 = vmatpush1.msra.mxu0 0.0
        %2218 = vmatprep.subr.mxu0 0.0
        %2219 = vmatpush1.msra.mxu0 0.0
        %2220 = vmatprep.subr.mxu0 0.0
        %2221 = vmatpush1.msra.mxu0 0.0
        %2222 = vmatprep.subr.mxu0 0.0
        %2223 = vmatpush1.msra.mxu0 0.0
        %2224 = vmatprep.subr.mxu0 0.0
        %2225 = vmatpush1.msra.mxu0 0.0
        %2226 = vmatprep.subr.mxu0 0.0
        %2227 = vmatpush1.msra.mxu0 0.0
        %2228 = vmatprep.mubr.f32.mxu0 0.0
        %2229 = vmatmul.mubr.f32.gmra.mrb[0].mxu0 %v2157
        %v2230 = vpop.f32.mrb[0].mxu0
        %v2231 = vadd.f32 0.0, %v2230
        %v2232 = vpop.f32.mrb[0].mxu0
        %2233 = vmatprep.mubr.f32.mxu0 0.0
        %2234 = vmatmul.mubr.f32.gmra.mrb[0].mxu0 %v2160
        %v2235 = vpop.f32.mrb[0].mxu0
        %v2236 = vadd.f32 0.0, %v2235
        %v2237 = vpop.f32.mrb[0].mxu0
        %2238 = vdwg.mxu0
        %v2239 = vmul.f32 %v2118, %v2035
        %v2240 = vmul.f32 %v2120, %v2036
        %v2241 = vadd.f32 %v2239, %v2231
        %v2242 = vadd.f32 %v2240, %v2236
        %2243 = vrot.lane.b32.xlu0 %v2121, 112
        %v2244 = vpop.permute.xlu0 %2243
        %v2245 = vsel %vm802, %v2244, 0
        %2247 = vmatprep.subr.mxu0 0.0
        %2248 = vmatpush1.msra.mxu0 %v2241
        %2249 = vmatprep.subr.mxu0 0.0
        %2250 = vmatpush1.msra.mxu0 %v2242
        %2251 = vmatprep.subr.mxu0 0.0
        %2252 = vmatpush1.msra.mxu0 0.0
        %2253 = vmatprep.subr.mxu0 0.0
        %2254 = vmatpush1.msra.mxu0 0.0
        %2255 = vmatprep.subr.mxu0 0.0
        %2256 = vmatpush1.msra.mxu0 0.0
        %2257 = vmatprep.subr.mxu0 0.0
        %2258 = vmatpush1.msra.mxu0 0.0
        %2259 = vmatprep.subr.mxu0 0.0
        %2260 = vmatpush1.msra.mxu0 0.0
        %2261 = vmatprep.subr.mxu0 0.0
        %2262 = vmatpush1.msra.mxu0 0.0
        %2263 = vmatprep.subr.mxu0 0.0
        %2264 = vmatpush1.msra.mxu0 0.0
        %2265 = vmatprep.subr.mxu0 0.0
        %2266 = vmatpush1.msra.mxu0 0.0
        %2267 = vmatprep.subr.mxu0 0.0
        %2268 = vmatpush1.msra.mxu0 0.0
        %2269 = vmatprep.subr.mxu0 0.0
        %2270 = vmatpush1.msra.mxu0 0.0
        %2271 = vmatprep.subr.mxu0 0.0
        %2272 = vmatpush1.msra.mxu0 0.0
        %2273 = vmatprep.subr.mxu0 0.0
        %2274 = vmatpush1.msra.mxu0 0.0
        %2275 = vmatprep.subr.mxu0 0.0
        %2276 = vmatpush1.msra.mxu0 0.0
        %2277 = vmatprep.subr.mxu0 0.0
        %2278 = vmatpush1.msra.mxu0 0.0
        %2279 = vmatprep.subr.mxu0 0.0
        %2280 = vmatpush1.msra.mxu0 0.0
        %2281 = vmatprep.subr.mxu0 0.0
        %2282 = vmatpush1.msra.mxu0 0.0
        %2283 = vmatprep.subr.mxu0 0.0
        %2284 = vmatpush1.msra.mxu0 0.0
        %2285 = vmatprep.subr.mxu0 0.0
        %2286 = vmatpush1.msra.mxu0 0.0
        %2287 = vmatprep.subr.mxu0 0.0
        %2288 = vmatpush1.msra.mxu0 0.0
        %2289 = vmatprep.subr.mxu0 0.0
        %2290 = vmatpush1.msra.mxu0 0.0
        %2291 = vmatprep.subr.mxu0 0.0
        %2292 = vmatpush1.msra.mxu0 0.0
        %2293 = vmatprep.subr.mxu0 0.0
        %2294 = vmatpush1.msra.mxu0 0.0
        %2295 = vmatprep.subr.mxu0 0.0
        %2296 = vmatpush1.msra.mxu0 0.0
        %2297 = vmatprep.subr.mxu0 0.0
        %2298 = vmatpush1.msra.mxu0 0.0
        %2299 = vmatprep.subr.mxu0 0.0
        %2300 = vmatpush1.msra.mxu0 0.0
        %2301 = vmatprep.subr.mxu0 0.0
        %2302 = vmatpush1.msra.mxu0 0.0
        %2303 = vmatprep.subr.mxu0 0.0
        %2304 = vmatpush1.msra.mxu0 0.0
        %2305 = vmatprep.subr.mxu0 0.0
        %2306 = vmatpush1.msra.mxu0 0.0
        %2307 = vmatprep.subr.mxu0 0.0
        %2308 = vmatpush1.msra.mxu0 0.0
        %2309 = vmatprep.subr.mxu0 0.0
        %2310 = vmatpush1.msra.mxu0 0.0
        %2311 = vmatprep.mubr.f32.mxu0 0.0
        %2312 = vmatmul.mubr.f32.gmra.mrb[0].mxu0 %v2245
        %v2313 = vpop.f32.mrb[0].mxu0
        %v2314 = vadd.f32 0.0, %v2313
        %v2315 = vpop.f32.mrb[0].mxu0
        %2316 = vdwg.mxu0
        %v2318 = vrot.slane %v1078, 7
        %v2321 = vrot.slane %v1284, 6
        %v2324 = vrot.slane %v1490, 5
        %v2327 = vrot.slane %v1696, 4
        %v2330 = vrot.slane %v1902, 3
        %v2333 = vrot.slane %v2108, 2
        %v2336 = vrot.slane %v2314, 1
        %v2338 = vsel %vm716, %v872, %v2318
        %vm2339 = vcmask 1041408
        %v2340 = vsel %vm2339, %v2338, %v2321
        %vm2341 = vcmask 1042432
        %v2342 = vsel %vm2341, %v2340, %v2324
        %vm2343 = vcmask 1043456
        %v2344 = vsel %vm2343, %v2342, %v2327
        %vm2345 = vcmask 1044480
        %v2346 = vsel %vm2345, %v2344, %v2330
        %vm2347 = vcmask 1045504
        %v2348 = vsel %vm2347, %v2346, %v2333
        %vm2349 = vcmask 1046528
        %v2350 = vsel %vm2349, %v2348, %v2336
        %v2352 = vlaneseq
        %v2353 = vshrl.u32 %v2352, 7
        %v2354 = vsub.s32 0, %v2353
        %v2355 = vrot.slane %v624, %v2354
        %v2357 = vmul.f32 %v2355, %v637
        %v2358 = vadd.f32 %v2350, %v2357
        %v2359 = vmul.f32 %v2358, %v666
        %s2360 = scalar_lea.vmem %s612, %s635
        %vm2361 = vcmask 523264
        %2362 = vst.msk [vmem:[%s2360] sm:$0xff] %vm2361, %v2359
      $region57: #{cossm_forward.19} parent=47 // loop_footer
        %s632 = sadd.s32 1, %s628
      $region58: #{cossm_forward.19} parent=47 // loop_footer_branch
        %627 = sbr.rel target = $region54
      $region59: #{cossm_forward.19} parent=47 // loop_exit
        _
      %vm2363 = vcmask 523264
      %2364 = vst.msk [vmem:[#allocation2] sm:$0xff] %vm2363, %v633
      %2365 = vst.msk [vmem:[#allocation2 + $0x8] sm:$0xff] %vm2363, %v634
      %s2366 = smul.u32 2, %s27
      %p2367 = scmp.lt.s32.totalorder %s24, 1
      %s2368 = scalar_select %p2367, %s24, 1
      %p2369 = scmp.lt.s32.totalorder %s25, 1
      %s2370 = scalar_select %p2369, %s25, 1
      %p2371 = scmp.lt.s32.totalorder %s2366, 1
      %s2372 = scalar_select %p2371, %s2366, 1
      %p2373 = scmp.lt.s32.totalorder %s26, 0
      %s2374 = scalar_select %p2373, %s26, 0
      %s2375 = sadd.s32 %s2374, %s2372
      %s2376 = smul.addr %s2370, 2
      %s2377 = sadd.s32 %s2375, %s2376
      %s2378 = smul.addr %s2368, 4
      %s2379 = sadd.s32 %s2377, %s2378
      %s2380 = smul.addr %s2379, 8
      %s2381 = scalar_lea.vmem %s7, %s2380
      // Predicated region
      $region60: #{cossm_forward.19} parent=47 // pred_check
        %p2382 = pneg %p276
      $region61: #{cossm_forward.19} parent=47 // pred_check_branch
        %2384 = sbr.rel (%p2382) target = $region63
      $region62: #{cossm_forward.19} parent=47 // pred_region
        %s2385 = smul.u32 2, %s27
      $region63: #{cossm_forward.19} parent=47 // pred_fallthru
        _
    $region48: #{cossm_forward.19} parent=5 // pred_fallthru
      _
    %p2386 = scmp.le.s32.totalorder 2, %s13
    // Predicated region
    $region64: #{cossm_forward.19} parent=5 // pred_check
      %p2387 = pneg %p2386
    $region65: #{cossm_forward.19} parent=5 // pred_check_branch
      %2389 = sbr.rel (%p2387) target = $region67
    $region66: #{cossm_forward.19} parent=5 // pred_region
      %s2390 = ssub.s32 %s13, 2
      // Predicated region
      $region68: #{cossm_forward.19} parent=66 // pred_check
        %p2391 = pneg %p282
      $region69: #{cossm_forward.19} parent=66 // pred_check_branch
        %2393 = sbr.rel (%p2391) target = $region71
      $region70: #{cossm_forward.19} parent=66 // pred_region
        %s2394 = smul.u32 2, %s31
        %p2395 = scmp.lt.s32.totalorder %s28, 1
        %s2396 = scalar_select %p2395, %s28, 1
        %p2397 = scmp.lt.s32.totalorder %s29, 1
        %s2398 = scalar_select %p2397, %s29, 1
        %p2399 = scmp.lt.s32.totalorder %s2394, 1
        %s2400 = scalar_select %p2399, %s2394, 1
        %p2401 = scmp.lt.s32.totalorder %s30, 0
        %s2402 = scalar_select %p2401, %s30, 0
        %s2403 = sadd.s32 %s2402, %s2400
        %s2404 = smul.addr %s2398, 2
        %s2405 = sadd.s32 %s2403, %s2404
        %s2406 = smul.addr %s2396, 4
        %s2407 = sadd.s32 %s2405, %s2406
        %s2408 = smul.addr %s2407, 8
        %s2409 = scalar_lea.vmem %s7, %s2408
      $region71: #{cossm_forward.19} parent=66 // pred_fallthru
        _
    $region67: #{cossm_forward.19} parent=5 // pred_fallthru
      _
  $region6: #{cossm_forward.19} parent=0 // loop_footer
    %s17 = sadd.s32 1, %s13
  $region7: #{cossm_forward.19} parent=0 // loop_footer_branch
    %12 = sbr.rel target = $region3
  $region8: #{cossm_forward.19} parent=0 // loop_exit
    _

</llo_original>
